<compile_context>
chip_gen: v5e
topology: v5e:2x2
jax: 0.10.0
libtpu: 0.0.40
codegen_flags: <defaults>
</compile_context>

<pallas_src>
import jax
import jax.numpy as jnp
from jax.experimental import pallas as pl
from jax.experimental.pallas import tpu as pltpu

# ---------------- small, deterministic config ----------------
BATCH = 2
IN_CH = 1
IN_H = IN_W = 16

C1 = 32                  # out_channels_conv1
K1, S1 = 5, 1            # kernel / stride conv1 (padding 0, dilation 1)

NUM_PRIM_TYPES = 4       # num_primaryCaps_types
DIM_PRIM = 8             # dim_primaryCaps = [8, 1]
K2, S2 = 5, 2            # kernel / stride primaryCaps

NUM_CLASSES = 10
DIM_CLASS = 16           # dim_classCaps = [16, 1]
ROUTING_ITERS = 3        # num_routing_iterations (dynamic routing)

H0 = (IN_H - K1) // S1 + 1          # 12
W0 = (IN_W - K1) // S1 + 1          # 12
H1 = (H0 - K2) // S2 + 1            # 4
W1 = (W0 - K2) // S2 + 1            # 4
N_SPATIAL = H1 * W1                 # 16
N_PRIMARY = NUM_PRIM_TYPES * N_SPATIAL   # 64 primary capsules per example
CO = NUM_CLASSES * DIM_CLASS             # 160 flat (class, pose) lanes
N_OFF = K2 * K2                          # 25 primaryCaps kernel offsets

_VMEM = pl.BlockSpec(memory_space=pltpu.MemorySpace.VMEM)


# ---------------- the single fused Pallas kernel ----------------
def _capsnet_kernel(col1_ref, w1_ref, b1_ref, g2_ref, w2_ref, b2_ref,
                    wcls_ref, e_ref, et_ref, rb_ref, rbt_ref,
                    v_ref, act_ref, coup_ref, pact_ref):
    """Fused conv1 -> primaryCaps (+squash) -> classCaps dynamic routing.

    col1_ref : [B*H0*W0, K1*K1]      bf16  im2col patches of the raw input
    w1_ref   : [K1*K1, C1]           bf16  conv1 weights,  b1_ref: [1, C1] f32
    g2_ref   : [N_OFF*B*H1*W1, B*H0*W0] bf16  constant one-hot gather (in-kernel im2col of conv1 out)
    w2_ref   : [N_OFF, C1, TYPES*DIM_PRIM] bf16 primaryCaps conv weights, b2_ref: [1, TYPES*DIM] f32
    wcls_ref : [DIM_PRIM, N_PRIMARY, CO] f32  class-caps transform matrices W[k, n, j*OS0+d]
    e_ref/et_ref : [C, CO] / [CO, C] f32  class<->lane expansion (0/1) and transpose
    rb_ref/rbt_ref: [B*N, B] / [B, B*N] f32 batch expansion / reduction (0/1)
    outputs  : v [B, CO], act [B, C], coup [B*N, C], pact [B*N, 1]
    """
    f32 = jnp.float32
    bf16 = jnp.bfloat16

    # ---- 1. conv1 + ReLU (MXU, bf16 operands, f32 accumulate) -> feat [B*H0*W0, C1]
    feat = jnp.dot(col1_ref[...], w1_ref[...], preferred_element_type=f32)
    feat = jnp.maximum(feat + b1_ref[...], 0.0)

    # ---- 2. primaryCaps conv, VMEM-resident: one-hot gather matmul builds the 25 shifted
    #         row-views of the feature map, then a batched matmul with the per-offset weight
    #         slabs accumulates the conv output.  prim: [B*H1*W1, TYPES*DIM_PRIM]
    gathered = jnp.dot(g2_ref[...], feat.astype(bf16), preferred_element_type=f32)   # [25*P, C1]
    g3 = gathered.reshape(N_OFF, BATCH * N_SPATIAL, C1).astype(bf16)                  # [25, P, C1]
    prim_t = jnp.einsum("tpc,tco->tpo", g3, w2_ref[...], preferred_element_type=f32)  # [25, P, 32]
    prim = jnp.sum(prim_t, axis=0) + b2_ref[...]                                      # [P, 32]

    # ---- 3. rearrange to capsule rows [(b, type, h1, w1), DIM_PRIM] and squash (fused epilogue)
    p_rows = jnp.concatenate(
        [prim[b * N_SPATIAL:(b + 1) * N_SPATIAL, t * DIM_PRIM:(t + 1) * DIM_PRIM]
         for b in range(BATCH) for t in range(NUM_PRIM_TYPES)],
        axis=0)                                                                        # [B*N, 8]
    sq = jnp.sum(p_rows * p_rows, axis=-1, keepdims=True)
    scale = sq / (1.0 + sq) / jnp.sqrt(sq + 1e-8)
    u = p_rows * scale                                                                 # squashed poses
    pact_ref[...] = jnp.sqrt(jnp.sum(u * u, axis=-1, keepdims=True) + 1e-8)            # [B*N, 1]

    # ---- 4. u_hat[b, n, :] = sum_k W[k, n, :] * u[b, n, k]  (VPU broadcast-MAC, whole batch)
    parts = []
    for b in range(BATCH):
        ub = u[b * N_PRIMARY:(b + 1) * N_PRIMARY]                                      # [N, 8]
        acc = jnp.zeros((N_PRIMARY, CO), f32)
        for k in range(DIM_PRIM):
            acc = acc + ub[:, k:k + 1] * wcls_ref[k]
        parts.append(acc)
    u_hat = jnp.concatenate(parts, axis=0)                                             # [B*N, CO]

    # ---- 5. dynamic routing (Sabour et al.) over the whole batch at once ----
    E = e_ref[...]            # [C, CO]
    ET = et_ref[...]          # [CO, C]
    Rb = rb_ref[...]          # [B*N, B]   expands per-batch class poses to every primary capsule
    RbT = rbt_ref[...]        # [B, B*N]   sums over the primary capsules of each batch element

    def squash_flat(s):       # s: [B, CO]; squash each class pose group of DIM_CLASS lanes
        ssq = jnp.dot(s * s, ET, preferred_element_type=f32)                           # [B, C]
        scl = ssq / (1.0 + ssq) / jnp.sqrt(ssq + 1e-8)
        return s * jnp.dot(scl, E, preferred_element_type=f32)

    # iteration 0: logits are all-zero -> coupling uniform 1/C; skip softmax and c@E expansion.
    s = jnp.dot(RbT, u_hat, preferred_element_type=f32) * (1.0 / NUM_CLASSES)          # [B, CO]
    v = squash_flat(s)

    coup = jnp.full((BATCH * N_PRIMARY, NUM_CLASSES), 1.0 / NUM_CLASSES, f32)
    logits = jnp.zeros((BATCH * N_PRIMARY, NUM_CLASSES), f32)
    for _ in range(1, ROUTING_ITERS):
        v_exp = jnp.dot(Rb, v, preferred_element_type=f32)                             # [B*N, CO]
        logits = logits + jnp.dot(u_hat * v_exp, ET, preferred_element_type=f32)       # agreement
        coup = jax.nn.softmax(logits, axis=-1)                                         # [B*N, C]
        c_exp = jnp.dot(coup, E, preferred_element_type=f32)                           # [B*N, CO]
        s = jnp.dot(RbT, c_exp * u_hat, preferred_element_type=f32)                    # [B, CO]
        v = squash_flat(s)

    v_ref[...] = v                                                                     # [B, CO]
    act_ref[...] = jnp.sqrt(jnp.dot(v * v, ET, preferred_element_type=f32) + 1e-8)     # [B, C]
    coup_ref[...] = coup                                                               # [B*N, C]


def _fused_forward(col1, params):
    return pl.pallas_call(
        _capsnet_kernel,
        out_shape=(
            jax.ShapeDtypeStruct((BATCH, CO), jnp.float32),
            jax.ShapeDtypeStruct((BATCH, NUM_CLASSES), jnp.float32),
            jax.ShapeDtypeStruct((BATCH * N_PRIMARY, NUM_CLASSES), jnp.float32),
            jax.ShapeDtypeStruct((BATCH * N_PRIMARY, 1), jnp.float32),
        ),
        in_specs=[_VMEM] * 11,
        out_specs=(_VMEM, _VMEM, _VMEM, _VMEM),
    )(col1, params["w1"], params["b1"], params["g2"], params["w2"], params["b2"],
      params["w_class"], params["E"], params["ET"], params["Rb"], params["RbT"])


# ---------------- glue (input im2col only) ----------------
def _im2col_input(x):
    """x: [b, 1, H, W] NCHW -> [b*H0*W0, K1*K1]; column order (kh, kw).  (IN_CH == 1.)"""
    b = x.shape[0]
    cols = []
    for ki in range(K1):
        for kj in range(K1):
            cols.append(x[:, 0, ki:ki + S1 * H0:S1, kj:kj + S1 * W0:S1])   # [b, H0, W0]
    col = jnp.stack(cols, axis=-1)                                          # [b, H0, W0, K1*K1]
    return col.reshape(b * H0 * W0, K1 * K1)


def vector_caps_net_forward(x, params):
    b = x.shape[0]
    col1 = _im2col_input(x).astype(jnp.bfloat16)                  # one cheap XLA gather on the input
    v_flat, acts, coup, pact = _fused_forward(col1, params)
    out_poses = v_flat.reshape(b, NUM_CLASSES, DIM_CLASS, 1)      # [b, C, os0, os1]
    out_acts = acts                                               # [b, C]
    coupling = coup.reshape(b, N_PRIMARY, NUM_CLASSES)            # [b, num_primary, C]
    primary_acts = pact.reshape(b, NUM_PRIM_TYPES, H1, W1)        # stored attr in torch module
    return out_poses, out_acts, coupling, primary_acts


def make_params():
    key = jax.random.PRNGKey(0)
    k1, k2, k3, k4, k5 = jax.random.split(key, 5)

    # conv1: rows ordered (kh, kw) since input_channels == 1
    w1 = (0.1 * jax.random.normal(k1, (IN_CH * K1 * K1, C1), jnp.float32)).astype(jnp.bfloat16)
    b1 = 0.01 * jax.random.normal(k2, (1, C1), jnp.float32)

    # primaryCaps conv weights per kernel offset: [K2*K2, C1, TYPES*DIM_PRIM]
    w2 = (0.05 * jax.random.normal(k3, (N_OFF, C1, NUM_PRIM_TYPES * DIM_PRIM),
                                   jnp.float32)).astype(jnp.bfloat16)
    b2 = 0.01 * jax.random.normal(k4, (1, NUM_PRIM_TYPES * DIM_PRIM), jnp.float32)

    # classCaps transform matrices W[k, n, j*OS0 + d], n ordered (type, h1, w1)
    w_class = 0.1 * jax.random.normal(k5, (DIM_PRIM, N_PRIMARY, CO), jnp.float32)

    # constant one-hot gather matrix: g2[t*P + p, r] = 1  iff  conv1-output row r is the
    # (S2*h1 + kh, S2*w1 + kw) pixel of batch element b, with p = (b, h1, w1), t = (kh, kw).
    t = jnp.arange(N_OFF)
    p = jnp.arange(BATCH * N_SPATIAL)
    kh, kw = t // K2, t % K2
    bb, h1, w1_ = p // N_SPATIAL, (p % N_SPATIAL) // W1, p % W1
    target = (bb[None, :] * (H0 * W0)
              + (S2 * h1[None, :] + kh[:, None]) * W0
              + (S2 * w1_[None, :] + kw[:, None]))                                   # [N_OFF, P]
    g2 = (target.reshape(-1, 1) == jnp.arange(BATCH * H0 * W0)[None, :]).astype(jnp.bfloat16)

    # class/pose expansion matrix (0/1) and its transpose
    E = jnp.kron(jnp.eye(NUM_CLASSES, dtype=jnp.float32),
                 jnp.ones((1, DIM_CLASS), jnp.float32))                               # [C, CO]
    # batch expansion / reduction matrices (0/1)
    Rb = jnp.kron(jnp.eye(BATCH, dtype=jnp.float32),
                  jnp.ones((N_PRIMARY, 1), jnp.float32))                              # [B*N, B]

    return {"w1": w1, "b1": b1, "w2": w2, "b2": b2, "w_class": w_class,
            "g2": g2, "E": E, "ET": E.T, "Rb": Rb, "RbT": Rb.T}


# TODO(synk): FCDecoder / reconstruction branch not implemented (config.reconstruction != 'FCDecoder' path).

if __name__ == "__main__":
    params = make_params()
    x = jax.random.normal(jax.random.PRNGKey(0), (BATCH, IN_CH, IN_H, IN_W), jnp.float32)

    fwd = jax.jit(vector_caps_net_forward)
    out_poses, out_acts, coupling, primary_acts = fwd(x, params)
    jax.block_until_ready((out_poses, out_acts, coupling, primary_acts))

    assert out_poses.shape == (BATCH, NUM_CLASSES, DIM_CLASS, 1)
    assert out_acts.shape == (BATCH, NUM_CLASSES)
    assert coupling.shape == (BATCH, N_PRIMARY, NUM_CLASSES)
    assert primary_acts.shape == (BATCH, NUM_PRIM_TYPES, H1, W1)
    assert bool(jnp.all(jnp.isfinite(out_poses))) and bool(jnp.all(jnp.isfinite(out_acts)))
    print("KERNEL_OK")
</pallas_src>

<mosaic_0001>
module attributes {stable_mosaic.version = 11 : i64} {
  func.func @_capsnet_kernel(%arg0: memref<288x25xbf16, #tpu.memory_space<vmem>>, %arg1: memref<25x32xbf16, #tpu.memory_space<vmem>>, %arg2: memref<1x32xf32, #tpu.memory_space<vmem>>, %arg3: memref<800x288xbf16, #tpu.memory_space<vmem>>, %arg4: memref<25x32x32xbf16, #tpu.memory_space<vmem>>, %arg5: memref<1x32xf32, #tpu.memory_space<vmem>>, %arg6: memref<8x64x160xf32, #tpu.memory_space<vmem>>, %arg7: memref<10x160xf32, #tpu.memory_space<vmem>>, %arg8: memref<160x10xf32, #tpu.memory_space<vmem>>, %arg9: memref<128x2xf32, #tpu.memory_space<vmem>>, %arg10: memref<2x128xf32, #tpu.memory_space<vmem>>, %arg11: memref<2x160xf32, #tpu.memory_space<vmem>>, %arg12: memref<2x10xf32, #tpu.memory_space<vmem>>, %arg13: memref<128x10xf32, #tpu.memory_space<vmem>>, %arg14: memref<128x1xf32, #tpu.memory_space<vmem>>) attributes {dimension_semantics = [], scalar_prefetch = 0 : i64, scratch_operands = 0 : i64, tpu.core_type = #tpu.core_type<tc>} {
    %c0 = arith.constant 0 : index
    %c0_0 = arith.constant 0 : index
    %0 = vector.load %arg0[%c0, %c0_0] : memref<288x25xbf16, #tpu.memory_space<vmem>>, vector<288x25xbf16>
    %c0_1 = arith.constant 0 : index
    %c0_2 = arith.constant 0 : index
    %1 = vector.load %arg1[%c0_1, %c0_2] : memref<25x32xbf16, #tpu.memory_space<vmem>>, vector<25x32xbf16>
    %cst = arith.constant dense<0.000000e+00> : vector<288x32xf32>
    %2 = tpu.matmul %0, %1, %cst {dimension_numbers = #tpu.dot_dimension_numbers<[1], [0], [0], [1], [0, 0, 1, 1], [], []>} : vector<288x25xbf16>, vector<25x32xbf16>, vector<288x32xf32> -> vector<288x32xf32>
    %c0_3 = arith.constant 0 : index
    %c0_4 = arith.constant 0 : index
    %3 = vector.load %arg2[%c0_3, %c0_4] : memref<1x32xf32, #tpu.memory_space<vmem>>, vector<1x32xf32>
    %4 = vector.broadcast %3 : vector<1x32xf32> to vector<288x32xf32>
    %5 = arith.addf %2, %4 : vector<288x32xf32>
    %cst_5 = arith.constant 0.000000e+00 : f32
    %6 = vector.broadcast %cst_5 : f32 to vector<288x32xf32>
    %7 = arith.maximumf %5, %6 : vector<288x32xf32>
    %c0_6 = arith.constant 0 : index
    %c0_7 = arith.constant 0 : index
    %8 = vector.load %arg3[%c0_6, %c0_7] : memref<800x288xbf16, #tpu.memory_space<vmem>>, vector<800x288xbf16>
    %9 = arith.truncf %7 : vector<288x32xf32> to vector<288x32xbf16>
    %cst_8 = arith.constant dense<0.000000e+00> : vector<800x32xf32>
    %10 = tpu.matmul %8, %9, %cst_8 {dimension_numbers = #tpu.dot_dimension_numbers<[1], [0], [0], [1], [0, 0, 1, 1], [], []>} : vector<800x288xbf16>, vector<288x32xbf16>, vector<800x32xf32> -> vector<800x32xf32>
    %11 = vector.shape_cast %10 : vector<800x32xf32> to vector<25x32x32xf32>
    %12 = arith.truncf %11 : vector<25x32x32xf32> to vector<25x32x32xbf16>
    %c0_9 = arith.constant 0 : index
    %c0_10 = arith.constant 0 : index
    %c0_11 = arith.constant 0 : index
    %13 = vector.load %arg4[%c0_9, %c0_10, %c0_11] : memref<25x32x32xbf16, #tpu.memory_space<vmem>>, vector<25x32x32xbf16>
    "tpu.trace_start"() <{level = 10 : i32, message = "tpc,tco->tpo"}> : () -> ()
    %cst_12 = arith.constant dense<0.000000e+00> : vector<25x32x32xf32>
    %14 = tpu.matmul %12, %13, %cst_12 {dimension_numbers = #tpu.dot_dimension_numbers<[2], [1], [1], [2], [0, 0, 0, 1, 1, 2], [0], [0]>} : vector<25x32x32xbf16>, vector<25x32x32xbf16>, vector<25x32x32xf32> -> vector<25x32x32xf32>
    "tpu.trace_stop"() : () -> ()
    %cst_13 = arith.constant dense<0.000000e+00> : vector<32x32xf32>
    %15 = vector.multi_reduction <add>, %14, %cst_13 [0] : vector<25x32x32xf32> to vector<32x32xf32>
    %c0_14 = arith.constant 0 : index
    %c0_15 = arith.constant 0 : index
    %16 = vector.load %arg5[%c0_14, %c0_15] : memref<1x32xf32, #tpu.memory_space<vmem>>, vector<1x32xf32>
    %17 = vector.broadcast %16 : vector<1x32xf32> to vector<32x32xf32>
    %18 = arith.addf %15, %17 : vector<32x32xf32>
    %19 = vector.extract_strided_slice %18 {offsets = [0, 0], sizes = [16, 8], strides = [1, 1]} : vector<32x32xf32> to vector<16x8xf32>
    %20 = vector.extract_strided_slice %18 {offsets = [0, 8], sizes = [16, 8], strides = [1, 1]} : vector<32x32xf32> to vector<16x8xf32>
    %21 = vector.extract_strided_slice %18 {offsets = [0, 16], sizes = [16, 8], strides = [1, 1]} : vector<32x32xf32> to vector<16x8xf32>
    %22 = vector.extract_strided_slice %18 {offsets = [0, 24], sizes = [16, 8], strides = [1, 1]} : vector<32x32xf32> to vector<16x8xf32>
    %23 = vector.extract_strided_slice %18 {offsets = [16, 0], sizes = [16, 8], strides = [1, 1]} : vector<32x32xf32> to vector<16x8xf32>
    %24 = vector.extract_strided_slice %18 {offsets = [16, 8], sizes = [16, 8], strides = [1, 1]} : vector<32x32xf32> to vector<16x8xf32>
    %25 = vector.extract_strided_slice %18 {offsets = [16, 16], sizes = [16, 8], strides = [1, 1]} : vector<32x32xf32> to vector<16x8xf32>
    %26 = vector.extract_strided_slice %18 {offsets = [16, 24], sizes = [16, 8], strides = [1, 1]} : vector<32x32xf32> to vector<16x8xf32>
    %27 = tpu.concatenate %19, %20, %21, %22, %23, %24, %25, %26 in 0 : vector<16x8xf32>, vector<16x8xf32>, vector<16x8xf32>, vector<16x8xf32>, vector<16x8xf32>, vector<16x8xf32>, vector<16x8xf32>, vector<16x8xf32> -> vector<128x8xf32>
    %28 = arith.mulf %27, %27 : vector<128x8xf32>
    %cst_16 = arith.constant dense<0.000000e+00> : vector<128xf32>
    %29 = vector.multi_reduction <add>, %28, %cst_16 [1] : vector<128x8xf32> to vector<128xf32>
    %30 = vector.shape_cast %29 : vector<128xf32> to vector<128x1xf32>
    %cst_17 = arith.constant 1.000000e+00 : f32
    %31 = vector.broadcast %cst_17 : f32 to vector<128x1xf32>
    %32 = arith.addf %31, %30 : vector<128x1xf32>
    %33 = arith.divf %30, %32 : vector<128x1xf32>
    %cst_18 = arith.constant 9.99999993E-9 : f32
    %34 = vector.broadcast %cst_18 : f32 to vector<128x1xf32>
    %35 = arith.addf %30, %34 : vector<128x1xf32>
    %36 = math.sqrt %35 : vector<128x1xf32>
    %37 = arith.divf %33, %36 : vector<128x1xf32>
    %38 = vector.broadcast %37 : vector<128x1xf32> to vector<128x8xf32>
    %39 = arith.mulf %27, %38 : vector<128x8xf32>
    %40 = arith.mulf %39, %39 : vector<128x8xf32>
    %cst_19 = arith.constant dense<0.000000e+00> : vector<128xf32>
    %41 = vector.multi_reduction <add>, %40, %cst_19 [1] : vector<128x8xf32> to vector<128xf32>
    %42 = vector.shape_cast %41 : vector<128xf32> to vector<128x1xf32>
    %cst_20 = arith.constant 9.99999993E-9 : f32
    %43 = vector.broadcast %cst_20 : f32 to vector<128x1xf32>
    %44 = arith.addf %42, %43 : vector<128x1xf32>
    %45 = math.sqrt %44 : vector<128x1xf32>
    %c0_21 = arith.constant 0 : index
    %c0_22 = arith.constant 0 : index
    %46 = vector.load %arg14[%c0_21, %c0_22] : memref<128x1xf32, #tpu.memory_space<vmem>>, vector<128x1xf32>
    tpu.vector_store %arg14[%c0_21, %c0_22], %45 {strides = array<i32>} : memref<128x1xf32, #tpu.memory_space<vmem>>, vector<128x1xf32>,
    %47 = vector.extract_strided_slice %39 {offsets = [0, 0], sizes = [64, 8], strides = [1, 1]} : vector<128x8xf32> to vector<64x8xf32>
    %cst_23 = arith.constant 0.000000e+00 : f32
    %48 = vector.broadcast %cst_23 : f32 to vector<64x160xf32>
    %49 = vector.extract_strided_slice %47 {offsets = [0, 0], sizes = [64, 1], strides = [1, 1]} : vector<64x8xf32> to vector<64x1xf32>
    %c0_24 = arith.constant 0 : index
    %c0_25 = arith.constant 0 : index
    %c0_26 = arith.constant 0 : index
    %50 = vector.load %arg6[%c0_24, %c0_25, %c0_26] : memref<8x64x160xf32, #tpu.memory_space<vmem>>, vector<1x64x160xf32>
    %51 = vector.shape_cast %50 : vector<1x64x160xf32> to vector<64x160xf32>
    %52 = vector.broadcast %49 : vector<64x1xf32> to vector<64x160xf32>
    %53 = arith.mulf %52, %51 : vector<64x160xf32>
    %54 = arith.addf %48, %53 : vector<64x160xf32>
    %55 = vector.extract_strided_slice %47 {offsets = [0, 1], sizes = [64, 1], strides = [1, 1]} : vector<64x8xf32> to vector<64x1xf32>
    %c1 = arith.constant 1 : index
    %c0_27 = arith.constant 0 : index
    %c0_28 = arith.constant 0 : index
    %56 = vector.load %arg6[%c1, %c0_27, %c0_28] : memref<8x64x160xf32, #tpu.memory_space<vmem>>, vector<1x64x160xf32>
    %57 = vector.shape_cast %56 : vector<1x64x160xf32> to vector<64x160xf32>
    %58 = vector.broadcast %55 : vector<64x1xf32> to vector<64x160xf32>
    %59 = arith.mulf %58, %57 : vector<64x160xf32>
    %60 = arith.addf %54, %59 : vector<64x160xf32>
    %61 = vector.extract_strided_slice %47 {offsets = [0, 2], sizes = [64, 1], strides = [1, 1]} : vector<64x8xf32> to vector<64x1xf32>
    %c2 = arith.constant 2 : index
    %c0_29 = arith.constant 0 : index
    %c0_30 = arith.constant 0 : index
    %62 = vector.load %arg6[%c2, %c0_29, %c0_30] : memref<8x64x160xf32, #tpu.memory_space<vmem>>, vector<1x64x160xf32>
    %63 = vector.shape_cast %62 : vector<1x64x160xf32> to vector<64x160xf32>
    %64 = vector.broadcast %61 : vector<64x1xf32> to vector<64x160xf32>
    %65 = arith.mulf %64, %63 : vector<64x160xf32>
    %66 = arith.addf %60, %65 : vector<64x160xf32>
    %67 = vector.extract_strided_slice %47 {offsets = [0, 3], sizes = [64, 1], strides = [1, 1]} : vector<64x8xf32> to vector<64x1xf32>
    %c3 = arith.constant 3 : index
    %c0_31 = arith.constant 0 : index
    %c0_32 = arith.constant 0 : index
    %68 = vector.load %arg6[%c3, %c0_31, %c0_32] : memref<8x64x160xf32, #tpu.memory_space<vmem>>, vector<1x64x160xf32>
    %69 = vector.shape_cast %68 : vector<1x64x160xf32> to vector<64x160xf32>
    %70 = vector.broadcast %67 : vector<64x1xf32> to vector<64x160xf32>
    %71 = arith.mulf %70, %69 : vector<64x160xf32>
    %72 = arith.addf %66, %71 : vector<64x160xf32>
    %73 = vector.extract_strided_slice %47 {offsets = [0, 4], sizes = [64, 1], strides = [1, 1]} : vector<64x8xf32> to vector<64x1xf32>
    %c4 = arith.constant 4 : index
    %c0_33 = arith.constant 0 : index
    %c0_34 = arith.constant 0 : index
    %74 = vector.load %arg6[%c4, %c0_33, %c0_34] : memref<8x64x160xf32, #tpu.memory_space<vmem>>, vector<1x64x160xf32>
    %75 = vector.shape_cast %74 : vector<1x64x160xf32> to vector<64x160xf32>
    %76 = vector.broadcast %73 : vector<64x1xf32> to vector<64x160xf32>
    %77 = arith.mulf %76, %75 : vector<64x160xf32>
    %78 = arith.addf %72, %77 : vector<64x160xf32>
    %79 = vector.extract_strided_slice %47 {offsets = [0, 5], sizes = [64, 1], strides = [1, 1]} : vector<64x8xf32> to vector<64x1xf32>
    %c5 = arith.constant 5 : index
    %c0_35 = arith.constant 0 : index
    %c0_36 = arith.constant 0 : index
    %80 = vector.load %arg6[%c5, %c0_35, %c0_36] : memref<8x64x160xf32, #tpu.memory_space<vmem>>, vector<1x64x160xf32>
    %81 = vector.shape_cast %80 : vector<1x64x160xf32> to vector<64x160xf32>
    %82 = vector.broadcast %79 : vector<64x1xf32> to vector<64x160xf32>
    %83 = arith.mulf %82, %81 : vector<64x160xf32>
    %84 = arith.addf %78, %83 : vector<64x160xf32>
    %85 = vector.extract_strided_slice %47 {offsets = [0, 6], sizes = [64, 1], strides = [1, 1]} : vector<64x8xf32> to vector<64x1xf32>
    %c6 = arith.constant 6 : index
    %c0_37 = arith.constant 0 : index
    %c0_38 = arith.constant 0 : index
    %86 = vector.load %arg6[%c6, %c0_37, %c0_38] : memref<8x64x160xf32, #tpu.memory_space<vmem>>, vector<1x64x160xf32>
    %87 = vector.shape_cast %86 : vector<1x64x160xf32> to vector<64x160xf32>
    %88 = vector.broadcast %85 : vector<64x1xf32> to vector<64x160xf32>
    %89 = arith.mulf %88, %87 : vector<64x160xf32>
    %90 = arith.addf %84, %89 : vector<64x160xf32>
    %91 = vector.extract_strided_slice %47 {offsets = [0, 7], sizes = [64, 1], strides = [1, 1]} : vector<64x8xf32> to vector<64x1xf32>
    %c7 = arith.constant 7 : index
    %c0_39 = arith.constant 0 : index
    %c0_40 = arith.constant 0 : index
    %92 = vector.load %arg6[%c7, %c0_39, %c0_40] : memref<8x64x160xf32, #tpu.memory_space<vmem>>, vector<1x64x160xf32>
    %93 = vector.shape_cast %92 : vector<1x64x160xf32> to vector<64x160xf32>
    %94 = vector.broadcast %91 : vector<64x1xf32> to vector<64x160xf32>
    %95 = arith.mulf %94, %93 : vector<64x160xf32>
    %96 = arith.addf %90, %95 : vector<64x160xf32>
    %97 = vector.extract_strided_slice %39 {offsets = [64, 0], sizes = [64, 8], strides = [1, 1]} : vector<128x8xf32> to vector<64x8xf32>
    %cst_41 = arith.constant 0.000000e+00 : f32
    %98 = vector.broadcast %cst_41 : f32 to vector<64x160xf32>
    %99 = vector.extract_strided_slice %97 {offsets = [0, 0], sizes = [64, 1], strides = [1, 1]} : vector<64x8xf32> to vector<64x1xf32>
    %c0_42 = arith.constant 0 : index
    %c0_43 = arith.constant 0 : index
    %c0_44 = arith.constant 0 : index
    %100 = vector.load %arg6[%c0_42, %c0_43, %c0_44] : memref<8x64x160xf32, #tpu.memory_space<vmem>>, vector<1x64x160xf32>
    %101 = vector.shape_cast %100 : vector<1x64x160xf32> to vector<64x160xf32>
    %102 = vector.broadcast %99 : vector<64x1xf32> to vector<64x160xf32>
    %103 = arith.mulf %102, %101 : vector<64x160xf32>
    %104 = arith.addf %98, %103 : vector<64x160xf32>
    %105 = vector.extract_strided_slice %97 {offsets = [0, 1], sizes = [64, 1], strides = [1, 1]} : vector<64x8xf32> to vector<64x1xf32>
    %c1_45 = arith.constant 1 : index
    %c0_46 = arith.constant 0 : index
    %c0_47 = arith.constant 0 : index
    %106 = vector.load %arg6[%c1_45, %c0_46, %c0_47] : memref<8x64x160xf32, #tpu.memory_space<vmem>>, vector<1x64x160xf32>
    %107 = vector.shape_cast %106 : vector<1x64x160xf32> to vector<64x160xf32>
    %108 = vector.broadcast %105 : vector<64x1xf32> to vector<64x160xf32>
    %109 = arith.mulf %108, %107 : vector<64x160xf32>
    %110 = arith.addf %104, %109 : vector<64x160xf32>
    %111 = vector.extract_strided_slice %97 {offsets = [0, 2], sizes = [64, 1], strides = [1, 1]} : vector<64x8xf32> to vector<64x1xf32>
    %c2_48 = arith.constant 2 : index
    %c0_49 = arith.constant 0 : index
    %c0_50 = arith.constant 0 : index
    %112 = vector.load %arg6[%c2_48, %c0_49, %c0_50] : memref<8x64x160xf32, #tpu.memory_space<vmem>>, vector<1x64x160xf32>
    %113 = vector.shape_cast %112 : vector<1x64x160xf32> to vector<64x160xf32>
    %114 = vector.broadcast %111 : vector<64x1xf32> to vector<64x160xf32>
    %115 = arith.mulf %114, %113 : vector<64x160xf32>
    %116 = arith.addf %110, %115 : vector<64x160xf32>
    %117 = vector.extract_strided_slice %97 {offsets = [0, 3], sizes = [64, 1], strides = [1, 1]} : vector<64x8xf32> to vector<64x1xf32>
    %c3_51 = arith.constant 3 : index
    %c0_52 = arith.constant 0 : index
    %c0_53 = arith.constant 0 : index
    %118 = vector.load %arg6[%c3_51, %c0_52, %c0_53] : memref<8x64x160xf32, #tpu.memory_space<vmem>>, vector<1x64x160xf32>
    %119 = vector.shape_cast %118 : vector<1x64x160xf32> to vector<64x160xf32>
    %120 = vector.broadcast %117 : vector<64x1xf32> to vector<64x160xf32>
    %121 = arith.mulf %120, %119 : vector<64x160xf32>
    %122 = arith.addf %116, %121 : vector<64x160xf32>
    %123 = vector.extract_strided_slice %97 {offsets = [0, 4], sizes = [64, 1], strides = [1, 1]} : vector<64x8xf32> to vector<64x1xf32>
    %c4_54 = arith.constant 4 : index
    %c0_55 = arith.constant 0 : index
    %c0_56 = arith.constant 0 : index
    %124 = vector.load %arg6[%c4_54, %c0_55, %c0_56] : memref<8x64x160xf32, #tpu.memory_space<vmem>>, vector<1x64x160xf32>
    %125 = vector.shape_cast %124 : vector<1x64x160xf32> to vector<64x160xf32>
    %126 = vector.broadcast %123 : vector<64x1xf32> to vector<64x160xf32>
    %127 = arith.mulf %126, %125 : vector<64x160xf32>
    %128 = arith.addf %122, %127 : vector<64x160xf32>
    %129 = vector.extract_strided_slice %97 {offsets = [0, 5], sizes = [64, 1], strides = [1, 1]} : vector<64x8xf32> to vector<64x1xf32>
    %c5_57 = arith.constant 5 : index
    %c0_58 = arith.constant 0 : index
    %c0_59 = arith.constant 0 : index
    %130 = vector.load %arg6[%c5_57, %c0_58, %c0_59] : memref<8x64x160xf32, #tpu.memory_space<vmem>>, vector<1x64x160xf32>
    %131 = vector.shape_cast %130 : vector<1x64x160xf32> to vector<64x160xf32>
    %132 = vector.broadcast %129 : vector<64x1xf32> to vector<64x160xf32>
    %133 = arith.mulf %132, %131 : vector<64x160xf32>
    %134 = arith.addf %128, %133 : vector<64x160xf32>
    %135 = vector.extract_strided_slice %97 {offsets = [0, 6], sizes = [64, 1], strides = [1, 1]} : vector<64x8xf32> to vector<64x1xf32>
    %c6_60 = arith.constant 6 : index
    %c0_61 = arith.constant 0 : index
    %c0_62 = arith.constant 0 : index
    %136 = vector.load %arg6[%c6_60, %c0_61, %c0_62] : memref<8x64x160xf32, #tpu.memory_space<vmem>>, vector<1x64x160xf32>
    %137 = vector.shape_cast %136 : vector<1x64x160xf32> to vector<64x160xf32>
    %138 = vector.broadcast %135 : vector<64x1xf32> to vector<64x160xf32>
    %139 = arith.mulf %138, %137 : vector<64x160xf32>
    %140 = arith.addf %134, %139 : vector<64x160xf32>
    %141 = vector.extract_strided_slice %97 {offsets = [0, 7], sizes = [64, 1], strides = [1, 1]} : vector<64x8xf32> to vector<64x1xf32>
    %c7_63 = arith.constant 7 : index
    %c0_64 = arith.constant 0 : index
    %c0_65 = arith.constant 0 : index
    %142 = vector.load %arg6[%c7_63, %c0_64, %c0_65] : memref<8x64x160xf32, #tpu.memory_space<vmem>>, vector<1x64x160xf32>
    %143 = vector.shape_cast %142 : vector<1x64x160xf32> to vector<64x160xf32>
    %144 = vector.broadcast %141 : vector<64x1xf32> to vector<64x160xf32>
    %145 = arith.mulf %144, %143 : vector<64x160xf32>
    %146 = arith.addf %140, %145 : vector<64x160xf32>
    %147 = tpu.concatenate %96, %146 in 0 : vector<64x160xf32>, vector<64x160xf32> -> vector<128x160xf32>
    %c0_66 = arith.constant 0 : index
    %c0_67 = arith.constant 0 : index
    %148 = vector.load %arg7[%c0_66, %c0_67] : memref<10x160xf32, #tpu.memory_space<vmem>>, vector<10x160xf32>
    %c0_68 = arith.constant 0 : index
    %c0_69 = arith.constant 0 : index
    %149 = vector.load %arg8[%c0_68, %c0_69] : memref<160x10xf32, #tpu.memory_space<vmem>>, vector<160x10xf32>
    %c0_70 = arith.constant 0 : index
    %c0_71 = arith.constant 0 : index
    %150 = vector.load %arg9[%c0_70, %c0_71] : memref<128x2xf32, #tpu.memory_space<vmem>>, vector<128x2xf32>
    %c0_72 = arith.constant 0 : index
    %c0_73 = arith.constant 0 : index
    %151 = vector.load %arg10[%c0_72, %c0_73] : memref<2x128xf32, #tpu.memory_space<vmem>>, vector<2x128xf32>
    %cst_74 = arith.constant dense<0.000000e+00> : vector<2x160xf32>
    %152 = tpu.matmul %151, %147, %cst_74 {dimension_numbers = #tpu.dot_dimension_numbers<[1], [0], [0], [1], [0, 0, 1, 1], [], []>} : vector<2x128xf32>, vector<128x160xf32>, vector<2x160xf32> -> vector<2x160xf32>
    %cst_75 = arith.constant 1.000000e-01 : f32
    %153 = vector.broadcast %cst_75 : f32 to vector<2x160xf32>
    %154 = arith.mulf %152, %153 : vector<2x160xf32>
    %155 = arith.mulf %154, %154 : vector<2x160xf32>
    %cst_76 = arith.constant dense<0.000000e+00> : vector<2x10xf32>
    %156 = tpu.matmul %155, %149, %cst_76 {dimension_numbers = #tpu.dot_dimension_numbers<[1], [0], [0], [1], [0, 0, 1, 1], [], []>} : vector<2x160xf32>, vector<160x10xf32>, vector<2x10xf32> -> vector<2x10xf32>
    %cst_77 = arith.constant 1.000000e+00 : f32
    %157 = vector.broadcast %cst_77 : f32 to vector<2x10xf32>
    %158 = arith.addf %157, %156 : vector<2x10xf32>
    %159 = arith.divf %156, %158 : vector<2x10xf32>
    %cst_78 = arith.constant 9.99999993E-9 : f32
    %160 = vector.broadcast %cst_78 : f32 to vector<2x10xf32>
    %161 = arith.addf %156, %160 : vector<2x10xf32>
    %162 = math.sqrt %161 : vector<2x10xf32>
    %163 = arith.divf %159, %162 : vector<2x10xf32>
    %cst_79 = arith.constant dense<0.000000e+00> : vector<2x160xf32>
    %164 = tpu.matmul %163, %148, %cst_79 {dimension_numbers = #tpu.dot_dimension_numbers<[1], [0], [0], [1], [0, 0, 1, 1], [], []>} : vector<2x10xf32>, vector<10x160xf32>, vector<2x160xf32> -> vector<2x160xf32>
    %165 = arith.mulf %154, %164 : vector<2x160xf32>
    %cst_80 = arith.constant 0.000000e+00 : f32
    %166 = vector.broadcast %cst_80 : f32 to vector<128x10xf32>
    %cst_81 = arith.constant dense<0.000000e+00> : vector<128x160xf32>
    %167 = tpu.matmul %150, %165, %cst_81 {dimension_numbers = #tpu.dot_dimension_numbers<[1], [0], [0], [1], [0, 0, 1, 1], [], []>} : vector<128x2xf32>, vector<2x160xf32>, vector<128x160xf32> -> vector<128x160xf32>
    %168 = arith.mulf %147, %167 : vector<128x160xf32>
    %cst_82 = arith.constant dense<0.000000e+00> : vector<128x10xf32>
    %169 = tpu.matmul %168, %149, %cst_82 {dimension_numbers = #tpu.dot_dimension_numbers<[1], [0], [0], [1], [0, 0, 1, 1], [], []>} : vector<128x160xf32>, vector<160x10xf32>, vector<128x10xf32> -> vector<128x10xf32>
    %170 = arith.addf %166, %169 : vector<128x10xf32>
    %cst_83 = arith.constant dense<0xFF800000> : vector<128xf32>
    %171 = vector.multi_reduction <maximumf>, %170, %cst_83 [1] : vector<128x10xf32> to vector<128xf32>
    %cst_84 = arith.constant 0xFF800000 : f32
    %172 = vector.broadcast %cst_84 : f32 to vector<128xf32>
    %173 = arith.maximumf %172, %171 : vector<128xf32>
    %174 = vector.shape_cast %173 : vector<128xf32> to vector<128x1xf32>
    %175 = vector.broadcast %174 : vector<128x1xf32> to vector<128x10xf32>
    %176 = arith.subf %170, %175 : vector<128x10xf32>
    %177 = math.exp %176 : vector<128x10xf32>
    %cst_85 = arith.constant dense<0.000000e+00> : vector<128xf32>
    %178 = vector.multi_reduction <add>, %177, %cst_85 [1] : vector<128x10xf32> to vector<128xf32>
    %179 = vector.shape_cast %178 : vector<128xf32> to vector<128x1xf32>
    %180 = vector.broadcast %179 : vector<128x1xf32> to vector<128x10xf32>
    %181 = arith.divf %177, %180 : vector<128x10xf32>
    %cst_86 = arith.constant dense<0.000000e+00> : vector<128x160xf32>
    %182 = tpu.matmul %181, %148, %cst_86 {dimension_numbers = #tpu.dot_dimension_numbers<[1], [0], [0], [1], [0, 0, 1, 1], [], []>} : vector<128x10xf32>, vector<10x160xf32>, vector<128x160xf32> -> vector<128x160xf32>
    %183 = arith.mulf %182, %147 : vector<128x160xf32>
    %cst_87 = arith.constant dense<0.000000e+00> : vector<2x160xf32>
    %184 = tpu.matmul %151, %183, %cst_87 {dimension_numbers = #tpu.dot_dimension_numbers<[1], [0], [0], [1], [0, 0, 1, 1], [], []>} : vector<2x128xf32>, vector<128x160xf32>, vector<2x160xf32> -> vector<2x160xf32>
    %185 = arith.mulf %184, %184 : vector<2x160xf32>
    %cst_88 = arith.constant dense<0.000000e+00> : vector<2x10xf32>
    %186 = tpu.matmul %185, %149, %cst_88 {dimension_numbers = #tpu.dot_dimension_numbers<[1], [0], [0], [1], [0, 0, 1, 1], [], []>} : vector<2x160xf32>, vector<160x10xf32>, vector<2x10xf32> -> vector<2x10xf32>
    %cst_89 = arith.constant 1.000000e+00 : f32
    %187 = vector.broadcast %cst_89 : f32 to vector<2x10xf32>
    %188 = arith.addf %187, %186 : vector<2x10xf32>
    %189 = arith.divf %186, %188 : vector<2x10xf32>
    %cst_90 = arith.constant 9.99999993E-9 : f32
    %190 = vector.broadcast %cst_90 : f32 to vector<2x10xf32>
    %191 = arith.addf %186, %190 : vector<2x10xf32>
    %192 = math.sqrt %191 : vector<2x10xf32>
    %193 = arith.divf %189, %192 : vector<2x10xf32>
    %cst_91 = arith.constant dense<0.000000e+00> : vector<2x160xf32>
    %194 = tpu.matmul %193, %148, %cst_91 {dimension_numbers = #tpu.dot_dimension_numbers<[1], [0], [0], [1], [0, 0, 1, 1], [], []>} : vector<2x10xf32>, vector<10x160xf32>, vector<2x160xf32> -> vector<2x160xf32>
    %195 = arith.mulf %184, %194 : vector<2x160xf32>
    %cst_92 = arith.constant dense<0.000000e+00> : vector<128x160xf32>
    %196 = tpu.matmul %150, %195, %cst_92 {dimension_numbers = #tpu.dot_dimension_numbers<[1], [0], [0], [1], [0, 0, 1, 1], [], []>} : vector<128x2xf32>, vector<2x160xf32>, vector<128x160xf32> -> vector<128x160xf32>
    %197 = arith.mulf %147, %196 : vector<128x160xf32>
    %cst_93 = arith.constant dense<0.000000e+00> : vector<128x10xf32>
    %198 = tpu.matmul %197, %149, %cst_93 {dimension_numbers = #tpu.dot_dimension_numbers<[1], [0], [0], [1], [0, 0, 1, 1], [], []>} : vector<128x160xf32>, vector<160x10xf32>, vector<128x10xf32> -> vector<128x10xf32>
    %199 = arith.addf %170, %198 : vector<128x10xf32>
    %cst_94 = arith.constant dense<0xFF800000> : vector<128xf32>
    %200 = vector.multi_reduction <maximumf>, %199, %cst_94 [1] : vector<128x10xf32> to vector<128xf32>
    %cst_95 = arith.constant 0xFF800000 : f32
    %201 = vector.broadcast %cst_95 : f32 to vector<128xf32>
    %202 = arith.maximumf %201, %200 : vector<128xf32>
    %203 = vector.shape_cast %202 : vector<128xf32> to vector<128x1xf32>
    %204 = vector.broadcast %203 : vector<128x1xf32> to vector<128x10xf32>
    %205 = arith.subf %199, %204 : vector<128x10xf32>
    %206 = math.exp %205 : vector<128x10xf32>
    %cst_96 = arith.constant dense<0.000000e+00> : vector<128xf32>
    %207 = vector.multi_reduction <add>, %206, %cst_96 [1] : vector<128x10xf32> to vector<128xf32>
    %208 = vector.shape_cast %207 : vector<128xf32> to vector<128x1xf32>
    %209 = vector.broadcast %208 : vector<128x1xf32> to vector<128x10xf32>
    %210 = arith.divf %206, %209 : vector<128x10xf32>
    %cst_97 = arith.constant dense<0.000000e+00> : vector<128x160xf32>
    %211 = tpu.matmul %210, %148, %cst_97 {dimension_numbers = #tpu.dot_dimension_numbers<[1], [0], [0], [1], [0, 0, 1, 1], [], []>} : vector<128x10xf32>, vector<10x160xf32>, vector<128x160xf32> -> vector<128x160xf32>
    %212 = arith.mulf %211, %147 : vector<128x160xf32>
    %cst_98 = arith.constant dense<0.000000e+00> : vector<2x160xf32>
    %213 = tpu.matmul %151, %212, %cst_98 {dimension_numbers = #tpu.dot_dimension_numbers<[1], [0], [0], [1], [0, 0, 1, 1], [], []>} : vector<2x128xf32>, vector<128x160xf32>, vector<2x160xf32> -> vector<2x160xf32>
    %214 = arith.mulf %213, %213 : vector<2x160xf32>
    %cst_99 = arith.constant dense<0.000000e+00> : vector<2x10xf32>
    %215 = tpu.matmul %214, %149, %cst_99 {dimension_numbers = #tpu.dot_dimension_numbers<[1], [0], [0], [1], [0, 0, 1, 1], [], []>} : vector<2x160xf32>, vector<160x10xf32>, vector<2x10xf32> -> vector<2x10xf32>
    %cst_100 = arith.constant 1.000000e+00 : f32
    %216 = vector.broadcast %cst_100 : f32 to vector<2x10xf32>
    %217 = arith.addf %216, %215 : vector<2x10xf32>
    %218 = arith.divf %215, %217 : vector<2x10xf32>
    %cst_101 = arith.constant 9.99999993E-9 : f32
    %219 = vector.broadcast %cst_101 : f32 to vector<2x10xf32>
    %220 = arith.addf %215, %219 : vector<2x10xf32>
    %221 = math.sqrt %220 : vector<2x10xf32>
    %222 = arith.divf %218, %221 : vector<2x10xf32>
    %cst_102 = arith.constant dense<0.000000e+00> : vector<2x160xf32>
    %223 = tpu.matmul %222, %148, %cst_102 {dimension_numbers = #tpu.dot_dimension_numbers<[1], [0], [0], [1], [0, 0, 1, 1], [], []>} : vector<2x10xf32>, vector<10x160xf32>, vector<2x160xf32> -> vector<2x160xf32>
    %224 = arith.mulf %213, %223 : vector<2x160xf32>
    %c0_103 = arith.constant 0 : index
    %c0_104 = arith.constant 0 : index
    %225 = vector.load %arg11[%c0_103, %c0_104] : memref<2x160xf32, #tpu.memory_space<vmem>>, vector<2x160xf32>
    tpu.vector_store %arg11[%c0_103, %c0_104], %224 {strides = array<i32>} : memref<2x160xf32, #tpu.memory_space<vmem>>, vector<2x160xf32>,
    %226 = arith.mulf %224, %224 : vector<2x160xf32>
    %cst_105 = arith.constant dense<0.000000e+00> : vector<2x10xf32>
    %227 = tpu.matmul %226, %149, %cst_105 {dimension_numbers = #tpu.dot_dimension_numbers<[1], [0], [0], [1], [0, 0, 1, 1], [], []>} : vector<2x160xf32>, vector<160x10xf32>, vector<2x10xf32> -> vector<2x10xf32>
    %cst_106 = arith.constant 9.99999993E-9 : f32
    %228 = vector.broadcast %cst_106 : f32 to vector<2x10xf32>
    %229 = arith.addf %227, %228 : vector<2x10xf32>
    %230 = math.sqrt %229 : vector<2x10xf32>
    %c0_107 = arith.constant 0 : index
    %c0_108 = arith.constant 0 : index
    %231 = vector.load %arg12[%c0_107, %c0_108] : memref<2x10xf32, #tpu.memory_space<vmem>>, vector<2x10xf32>
    tpu.vector_store %arg12[%c0_107, %c0_108], %230 {strides = array<i32>} : memref<2x10xf32, #tpu.memory_space<vmem>>, vector<2x10xf32>,
    %c0_109 = arith.constant 0 : index
    %c0_110 = arith.constant 0 : index
    %232 = vector.load %arg13[%c0_109, %c0_110] : memref<128x10xf32, #tpu.memory_space<vmem>>, vector<128x10xf32>
    tpu.vector_store %arg13[%c0_109, %c0_110], %210 {strides = array<i32>} : memref<128x10xf32, #tpu.memory_space<vmem>>, vector<128x10xf32>,
    return
  }
}

</mosaic_0001>

<llo_original>
// kernel: vector_caps_net_forward.1
$region0: #{vector_caps_net_forward.1}
  #allocation0 [shape = 'u32[]', space=smem, size = 0x4, offset = 0x4, fixed_abs, tag = 'smem constant byte address 0x4 - core index']
  #allocation1 [shape = 'u32[72,128]{1,0:T(1,128)}', space=vmem, size = 0x9000, scoped, tag = 'internal scratch']
  %s0 = inlined_call_operand.vmem [shape: bf16[288,25], index: 0, kind: input, shape index: {}]
  %s1 = inlined_call_operand.vmem [shape: bf16[25,32], index: 1, kind: input, shape index: {}]
  %s2 = inlined_call_operand.vmem [shape: f32[1,32], index: 2, kind: input, shape index: {}]
  %s3 = inlined_call_operand.vmem [shape: bf16[800,288], index: 3, kind: input, shape index: {}]
  %s4 = inlined_call_operand.vmem [shape: bf16[25,32,32], index: 4, kind: input, shape index: {}]
  %s5 = inlined_call_operand.vmem [shape: f32[1,32], index: 5, kind: input, shape index: {}]
  %s6 = inlined_call_operand.vmem [shape: f32[8,64,160], index: 6, kind: input, shape index: {}]
  %s7 = inlined_call_operand.vmem [shape: f32[10,160], index: 7, kind: input, shape index: {}]
  %s8 = inlined_call_operand.vmem [shape: f32[160,10], index: 8, kind: input, shape index: {}]
  %s9 = inlined_call_operand.vmem [shape: f32[128,2], index: 9, kind: input, shape index: {}]
  %s10 = inlined_call_operand.vmem [shape: f32[2,128], index: 10, kind: input, shape index: {}]
  %s11 = inlined_call_operand.vmem [shape: f32[2,160], index: 11, kind: output, shape index: {0}]
  %s12 = inlined_call_operand.hbm [shape: f32[2,10], index: 12, kind: output, shape index: {1}]
  %s13 = inlined_call_operand.vmem [shape: f32[128,10], index: 13, kind: output, shape index: {2}]
  %s14 = inlined_call_operand.vmem [shape: f32[128,1], index: 14, kind: output, shape index: {3}]
  %15 = xla_tuple %s11, %s12, %s13, %s14
  %s16 = sld [smem:[#allocation0]]
  $region78: #{vector_caps_net_forward.1} parent=0
    _
  %s18 = ssub.s32 1, %s16
  %s19 = scalar_select 0, %s18, %s16
  $region1: #{vector_caps_net_forward.1} parent=0
    #allocation2 [shape = 'u8[1024]{0}', space=vmem, size = 0x400, scoped, tag = 'output window, operand 1, single buffered']
    #allocation3 [shape = 's32[1]{0}', space=sflag, size = 0x4, scoped, tag = 'scoped memory for vector_caps_net_forward.1']
    %20 = vsyncpa [#allocation3], 0
    // Predicated region
    $region2: #{vector_caps_net_forward.1} parent=1 // pred_check
      _
    $region3: #{vector_caps_net_forward.1} parent=1 // pred_check_branch
      %22 = sbr.rel (0) target = $region5
    $region4: #{vector_caps_net_forward.1} parent=1 // pred_region
      _
    $region5: #{vector_caps_net_forward.1} parent=1 // pred_fallthru
      _
    // Predicated region
    $region6: #{vector_caps_net_forward.1} parent=1 // pred_check
      _
    $region7: #{vector_caps_net_forward.1} parent=1 // pred_check_branch
      %24 = sbr.rel (0) target = $region9
    $region8: #{vector_caps_net_forward.1} parent=1 // pred_region
      _
    $region9: #{vector_caps_net_forward.1} parent=1 // pred_fallthru
      _
    // Predicated region
    $region10: #{vector_caps_net_forward.1} parent=1 // pred_check
      _
    $region11: #{vector_caps_net_forward.1} parent=1 // pred_check_branch
      %26 = sbr.rel (0) target = $region13
    $region12: #{vector_caps_net_forward.1} parent=1 // pred_region
      _
    $region13: #{vector_caps_net_forward.1} parent=1 // pred_fallthru
      _
    // Predicated region
    $region14: #{vector_caps_net_forward.1} parent=1 // pred_check
      _
    $region15: #{vector_caps_net_forward.1} parent=1 // pred_check_branch
      %28 = sbr.rel (0) target = $region17
    $region16: #{vector_caps_net_forward.1} parent=1 // pred_region
      _
    $region17: #{vector_caps_net_forward.1} parent=1 // pred_fallthru
      _
    // Predicated region
    $region18: #{vector_caps_net_forward.1} parent=1 // pred_check
      _
    $region19: #{vector_caps_net_forward.1} parent=1 // pred_check_branch
      %30 = sbr.rel (0) target = $region21
    $region20: #{vector_caps_net_forward.1} parent=1 // pred_region
      _
    $region21: #{vector_caps_net_forward.1} parent=1 // pred_fallthru
      _
    // Predicated region
    $region22: #{vector_caps_net_forward.1} parent=1 // pred_check
      _
    $region23: #{vector_caps_net_forward.1} parent=1 // pred_check_branch
      %32 = sbr.rel (0) target = $region25
    $region24: #{vector_caps_net_forward.1} parent=1 // pred_region
      _
    $region25: #{vector_caps_net_forward.1} parent=1 // pred_fallthru
      _
    // Predicated region
    $region26: #{vector_caps_net_forward.1} parent=1 // pred_check
      _
    $region27: #{vector_caps_net_forward.1} parent=1 // pred_check_branch
      %34 = sbr.rel (0) target = $region29
    $region28: #{vector_caps_net_forward.1} parent=1 // pred_region
      _
    $region29: #{vector_caps_net_forward.1} parent=1 // pred_fallthru
      _
    // Predicated region
    $region30: #{vector_caps_net_forward.1} parent=1 // pred_check
      _
    $region31: #{vector_caps_net_forward.1} parent=1 // pred_check_branch
      %36 = sbr.rel (0) target = $region33
    $region32: #{vector_caps_net_forward.1} parent=1 // pred_region
      _
    $region33: #{vector_caps_net_forward.1} parent=1 // pred_fallthru
      _
    // Predicated region
    $region34: #{vector_caps_net_forward.1} parent=1 // pred_check
      _
    $region35: #{vector_caps_net_forward.1} parent=1 // pred_check_branch
      %38 = sbr.rel (0) target = $region37
    $region36: #{vector_caps_net_forward.1} parent=1 // pred_region
      _
    $region37: #{vector_caps_net_forward.1} parent=1 // pred_fallthru
      _
    // Predicated region
    $region38: #{vector_caps_net_forward.1} parent=1 // pred_check
      _
    $region39: #{vector_caps_net_forward.1} parent=1 // pred_check_branch
      %40 = sbr.rel (0) target = $region41
    $region40: #{vector_caps_net_forward.1} parent=1 // pred_region
      _
    $region41: #{vector_caps_net_forward.1} parent=1 // pred_fallthru
      _
    // Predicated region
    $region42: #{vector_caps_net_forward.1} parent=1 // pred_check
      _
    $region43: #{vector_caps_net_forward.1} parent=1 // pred_check_branch
      %42 = sbr.rel (0) target = $region45
    $region44: #{vector_caps_net_forward.1} parent=1 // pred_region
      _
    $region45: #{vector_caps_net_forward.1} parent=1 // pred_fallthru
      _
    %v44 = vld [vmem:[%s0] sm:$0xf]
    %v45 = vld [vmem:[%s0 + $0x4] sm:$0xf]
    %v46 = vld [vmem:[%s0 + $0x8] sm:$0xf]
    %v47 = vld [vmem:[%s0 + $0xc] sm:$0xf]
    %v48 = vld [vmem:[%s0 + $0x10] sm:$0xf]
    %v49 = vld [vmem:[%s0 + $0x14] sm:$0xf]
    %v50 = vld [vmem:[%s0 + $0x18] sm:$0xf]
    %v51 = vld [vmem:[%s0 + $0x1c] sm:$0xf]
    %v52 = vld [vmem:[%s0 + $0x20] sm:$0xf]
    %v53 = vld [vmem:[%s0 + $0x24] sm:$0xf]
    %v54 = vld [vmem:[%s0 + $0x28] sm:$0xf]
    %v55 = vld [vmem:[%s0 + $0x2c] sm:$0xf]
    %v56 = vld [vmem:[%s0 + $0x30] sm:$0xf]
    %v57 = vld [vmem:[%s0 + $0x34] sm:$0xf]
    %v58 = vld [vmem:[%s0 + $0x38] sm:$0xf]
    %v59 = vld [vmem:[%s0 + $0x3c] sm:$0xf]
    %v60 = vld [vmem:[%s0 + $0x40] sm:$0xf]
    %v61 = vld [vmem:[%s0 + $0x44] sm:$0xf]
    %v62 = vld [vmem:[%s0 + $0x48] sm:$0xf]
    %v63 = vld [vmem:[%s0 + $0x4c] sm:$0xf]
    %v64 = vld [vmem:[%s0 + $0x50] sm:$0xf]
    %v65 = vld [vmem:[%s0 + $0x54] sm:$0xf]
    %v66 = vld [vmem:[%s0 + $0x58] sm:$0xf]
    %v67 = vld [vmem:[%s0 + $0x5c] sm:$0xf]
    %v68 = vld [vmem:[%s0 + $0x60] sm:$0xf]
    %v69 = vld [vmem:[%s0 + $0x64] sm:$0xf]
    %v70 = vld [vmem:[%s0 + $0x68] sm:$0xf]
    %v71 = vld [vmem:[%s0 + $0x6c] sm:$0xf]
    %v72 = vld [vmem:[%s0 + $0x70] sm:$0xf]
    %v73 = vld [vmem:[%s0 + $0x74] sm:$0xf]
    %v74 = vld [vmem:[%s0 + $0x78] sm:$0xf]
    %v75 = vld [vmem:[%s0 + $0x7c] sm:$0xf]
    %v76 = vld [vmem:[%s0 + $0x80] sm:$0xf]
    %v77 = vld [vmem:[%s0 + $0x84] sm:$0xf]
    %v78 = vld [vmem:[%s0 + $0x88] sm:$0xf]
    %v79 = vld [vmem:[%s0 + $0x8c] sm:$0xf]
    %v80 = vld [vmem:[%s1] sm:$0xf]
    %v81 = vld [vmem:[%s1 + $0x4] sm:$0xf]
    %v82 = vld [vmem:[%s1 + $0x8] sm:$0xf]
    %v83 = vld [vmem:[%s1 + $0xc] sm:$0x1]
    %v84 = vld [vmem:[%s2] sm:$0x1]
    %v86 = vperm.slane %v84, 0
    %v124 = vunpack.c.l.b16 %v44
    %v125 = vunpack.c.l.b16 %v45
    %v126 = vunpack.c.l.b16 %v46
    %v127 = vunpack.c.l.b16 %v47
    %v128 = vunpack.c.l.b16 %v48
    %v129 = vunpack.c.l.b16 %v49
    %v130 = vunpack.c.l.b16 %v50
    %v131 = vunpack.c.l.b16 %v51
    %v132 = vunpack.c.l.b16 %v52
    %v133 = vunpack.c.l.b16 %v53
    %v134 = vunpack.c.l.b16 %v54
    %v135 = vunpack.c.l.b16 %v55
    %v136 = vunpack.c.l.b16 %v56
    %v137 = vunpack.c.l.b16 %v57
    %v138 = vunpack.c.l.b16 %v58
    %v139 = vunpack.c.l.b16 %v59
    %v140 = vunpack.c.l.b16 %v60
    %v141 = vunpack.c.l.b16 %v61
    %v142 = vunpack.c.l.b16 %v62
    %v143 = vunpack.c.l.b16 %v63
    %v144 = vunpack.c.l.b16 %v64
    %v145 = vunpack.c.l.b16 %v65
    %v146 = vunpack.c.l.b16 %v66
    %v147 = vunpack.c.l.b16 %v67
    %v148 = vunpack.c.l.b16 %v68
    %v149 = vunpack.c.l.b16 %v69
    %v150 = vunpack.c.l.b16 %v70
    %v151 = vunpack.c.l.b16 %v71
    %v152 = vunpack.c.l.b16 %v72
    %v153 = vunpack.c.l.b16 %v73
    %v154 = vunpack.c.l.b16 %v74
    %v155 = vunpack.c.l.b16 %v75
    %v156 = vunpack.c.l.b16 %v76
    %v157 = vunpack.c.l.b16 %v77
    %v158 = vunpack.c.l.b16 %v78
    %v159 = vunpack.c.l.b16 %v79
    %v160 = vpack.c.b16 %v125, %v124
    %v161 = vpack.c.b16 %v127, %v126
    %v162 = vpack.c.b16 %v129, %v128
    %v163 = vpack.c.b16 %v131, %v130
    %v164 = vpack.c.b16 %v133, %v132
    %v165 = vpack.c.b16 %v135, %v134
    %v166 = vpack.c.b16 %v137, %v136
    %v167 = vpack.c.b16 %v139, %v138
    %v168 = vpack.c.b16 %v141, %v140
    %v169 = vpack.c.b16 %v143, %v142
    %v170 = vpack.c.b16 %v145, %v144
    %v171 = vpack.c.b16 %v147, %v146
    %v172 = vpack.c.b16 %v149, %v148
    %v173 = vpack.c.b16 %v151, %v150
    %v174 = vpack.c.b16 %v153, %v152
    %v175 = vpack.c.b16 %v155, %v154
    %v176 = vpack.c.b16 %v157, %v156
    %v177 = vpack.c.b16 %v159, %v158
    %v182 = vunpack.c.l.b16 %v80
    %v183 = vunpack.c.l.b16 %v81
    %v184 = vunpack.c.l.b16 %v82
    %v185 = vunpack.c.l.b16 %v83
    %v186 = vpack.c.b16 %v183, %v182
    %v187 = vpack.c.b16 %v185, %v184
    %vm189 = vcmask 203776
    %v191 = vsel %vm189, %v160, 0
    %v194 = vsel %vm189, %v161, 0
    %v197 = vsel %vm189, %v162, 0
    %v200 = vsel %vm189, %v163, 0
    %v203 = vsel %vm189, %v164, 0
    %v206 = vsel %vm189, %v165, 0
    %v209 = vsel %vm189, %v166, 0
    %v212 = vsel %vm189, %v167, 0
    %v215 = vsel %vm189, %v168, 0
    %v218 = vsel %vm189, %v169, 0
    %v221 = vsel %vm189, %v170, 0
    %v224 = vsel %vm189, %v171, 0
    %v227 = vsel %vm189, %v172, 0
    %v230 = vsel %vm189, %v173, 0
    %v233 = vsel %vm189, %v174, 0
    %v236 = vsel %vm189, %v175, 0
    %v239 = vsel %vm189, %v176, 0
    %v242 = vsel %vm189, %v177, 0
    %vm244 = vcmask 1043456
    %vm245 = vcmask 1044480
    %v246 = vsel %vm244, 4294967295, 65535
    %v247 = vsel %vm245, %v246, 0
    %v249 = vand.u32 %v187, %v247
    %251 = vmatpush.bf16.msra.mxu0 0
    %252 = vmatpush.bf16.msra.mxu0 0
    %253 = vmatpush.bf16.msra.mxu0 0
    %254 = vmatpush.bf16.msra.mxu0 0
    %255 = vmatpush.bf16.msra.mxu0 0
    %256 = vmatpush.bf16.msra.mxu0 0
    %257 = vmatpush.bf16.msra.mxu0 %v249
    %258 = vmatpush.bf16.msra.mxu0 %v186
    %259 = vmatmul.bf16.gmra.mxu0 %v191
    %v260 = vpop.f32.mrf.mxu0
    %v261 = vadd.f32 %v86, %v260
    %v262 = vpop.f32.mrf.mxu0
    %v263 = vadd.f32 %v86, %v262
    %264 = vmatmul.bf16.gmra.mxu0 %v194
    %v265 = vpop.f32.mrf.mxu0
    %v266 = vadd.f32 %v86, %v265
    %v267 = vpop.f32.mrf.mxu0
    %v268 = vadd.f32 %v86, %v267
    %269 = vmatmul.bf16.gmra.mxu0 %v197
    %v270 = vpop.f32.mrf.mxu0
    %v271 = vadd.f32 %v86, %v270
    %v272 = vpop.f32.mrf.mxu0
    %v273 = vadd.f32 %v86, %v272
    %274 = vmatmul.bf16.gmra.mxu0 %v200
    %v275 = vpop.f32.mrf.mxu0
    %v276 = vadd.f32 %v86, %v275
    %v277 = vpop.f32.mrf.mxu0
    %v278 = vadd.f32 %v86, %v277
    %279 = vmatmul.bf16.gmra.mxu0 %v203
    %v280 = vpop.f32.mrf.mxu0
    %v281 = vadd.f32 %v86, %v280
    %v282 = vpop.f32.mrf.mxu0
    %v283 = vadd.f32 %v86, %v282
    %284 = vmatmul.bf16.gmra.mxu0 %v206
    %v285 = vpop.f32.mrf.mxu0
    %v286 = vadd.f32 %v86, %v285
    %v287 = vpop.f32.mrf.mxu0
    %v288 = vadd.f32 %v86, %v287
    %289 = vmatmul.bf16.gmra.mxu0 %v209
    %v290 = vpop.f32.mrf.mxu0
    %v291 = vadd.f32 %v86, %v290
    %v292 = vpop.f32.mrf.mxu0
    %v293 = vadd.f32 %v86, %v292
    %294 = vmatmul.bf16.gmra.mxu0 %v212
    %v295 = vpop.f32.mrf.mxu0
    %v296 = vadd.f32 %v86, %v295
    %v297 = vpop.f32.mrf.mxu0
    %v298 = vadd.f32 %v86, %v297
    %299 = vmatmul.bf16.gmra.mxu0 %v215
    %v300 = vpop.f32.mrf.mxu0
    %v301 = vadd.f32 %v86, %v300
    %v302 = vpop.f32.mrf.mxu0
    %v303 = vadd.f32 %v86, %v302
    %304 = vmatmul.bf16.gmra.mxu0 %v218
    %v305 = vpop.f32.mrf.mxu0
    %v306 = vadd.f32 %v86, %v305
    %v307 = vpop.f32.mrf.mxu0
    %v308 = vadd.f32 %v86, %v307
    %309 = vmatmul.bf16.gmra.mxu0 %v221
    %v310 = vpop.f32.mrf.mxu0
    %v311 = vadd.f32 %v86, %v310
    %v312 = vpop.f32.mrf.mxu0
    %v313 = vadd.f32 %v86, %v312
    %314 = vmatmul.bf16.gmra.mxu0 %v224
    %v315 = vpop.f32.mrf.mxu0
    %v316 = vadd.f32 %v86, %v315
    %v317 = vpop.f32.mrf.mxu0
    %v318 = vadd.f32 %v86, %v317
    %319 = vmatmul.bf16.gmra.mxu0 %v227
    %v320 = vpop.f32.mrf.mxu0
    %v321 = vadd.f32 %v86, %v320
    %v322 = vpop.f32.mrf.mxu0
    %v323 = vadd.f32 %v86, %v322
    %324 = vmatmul.bf16.gmra.mxu0 %v230
    %v325 = vpop.f32.mrf.mxu0
    %v326 = vadd.f32 %v86, %v325
    %v327 = vpop.f32.mrf.mxu0
    %v328 = vadd.f32 %v86, %v327
    %329 = vmatmul.bf16.gmra.mxu0 %v233
    %v330 = vpop.f32.mrf.mxu0
    %v331 = vadd.f32 %v86, %v330
    %v332 = vpop.f32.mrf.mxu0
    %v333 = vadd.f32 %v86, %v332
    %334 = vmatmul.bf16.gmra.mxu0 %v236
    %v335 = vpop.f32.mrf.mxu0
    %v336 = vadd.f32 %v86, %v335
    %v337 = vpop.f32.mrf.mxu0
    %v338 = vadd.f32 %v86, %v337
    %339 = vmatmul.bf16.gmra.mxu0 %v239
    %v340 = vpop.f32.mrf.mxu0
    %v341 = vadd.f32 %v86, %v340
    %v342 = vpop.f32.mrf.mxu0
    %v343 = vadd.f32 %v86, %v342
    %344 = vmatmul.bf16.gmra.mxu0 %v242
    %v345 = vpop.f32.mrf.mxu0
    %v346 = vadd.f32 %v86, %v345
    %v347 = vpop.f32.mrf.mxu0
    %v348 = vadd.f32 %v86, %v347
    %349 = vdwg.mxu0
    %v350 = vmax.f32 %v261, 0.0
    %v351 = vmax.f32 %v263, 0.0
    %v352 = vmax.f32 %v266, 0.0
    %v353 = vmax.f32 %v268, 0.0
    %v354 = vmax.f32 %v271, 0.0
    %v355 = vmax.f32 %v273, 0.0
    %v356 = vmax.f32 %v276, 0.0
    %v357 = vmax.f32 %v278, 0.0
    %v358 = vmax.f32 %v281, 0.0
    %v359 = vmax.f32 %v283, 0.0
    %v360 = vmax.f32 %v286, 0.0
    %v361 = vmax.f32 %v288, 0.0
    %v362 = vmax.f32 %v291, 0.0
    %v363 = vmax.f32 %v293, 0.0
    %v364 = vmax.f32 %v296, 0.0
    %v365 = vmax.f32 %v298, 0.0
    %v366 = vmax.f32 %v301, 0.0
    %v367 = vmax.f32 %v303, 0.0
    %v368 = vmax.f32 %v306, 0.0
    %v369 = vmax.f32 %v308, 0.0
    %v370 = vmax.f32 %v311, 0.0
    %v371 = vmax.f32 %v313, 0.0
    %v372 = vmax.f32 %v316, 0.0
    %v373 = vmax.f32 %v318, 0.0
    %v374 = vmax.f32 %v321, 0.0
    %v375 = vmax.f32 %v323, 0.0
    %v376 = vmax.f32 %v326, 0.0
    %v377 = vmax.f32 %v328, 0.0
    %v378 = vmax.f32 %v331, 0.0
    %v379 = vmax.f32 %v333, 0.0
    %v380 = vmax.f32 %v336, 0.0
    %v381 = vmax.f32 %v338, 0.0
    %v382 = vmax.f32 %v341, 0.0
    %v383 = vmax.f32 %v343, 0.0
    %v384 = vmax.f32 %v346, 0.0
    %v385 = vmax.f32 %v348, 0.0
    %v386 = vld [vmem:[%s3] sm:$0xff]
    %v387 = vld [vmem:[%s3 + $0x8] sm:$0xf]
    %v388 = vld [vmem:[%s3 + $0xc] sm:$0xff]
    %v389 = vld [vmem:[%s3 + $0x14] sm:$0xf]
    %v390 = vld [vmem:[%s3 + $0x18] sm:$0xff]
    %v391 = vld [vmem:[%s3 + $0x20] sm:$0xf]
    %v392 = vld [vmem:[%s3 + $0x24] sm:$0xff]
    %v393 = vld [vmem:[%s3 + $0x2c] sm:$0xf]
    %v394 = vld [vmem:[%s3 + $0x30] sm:$0xff]
    %v395 = vld [vmem:[%s3 + $0x38] sm:$0xf]
    %v396 = vld [vmem:[%s3 + $0x3c] sm:$0xff]
    %v397 = vld [vmem:[%s3 + $0x44] sm:$0xf]
    %v398 = vld [vmem:[%s3 + $0x48] sm:$0xff]
    %v399 = vld [vmem:[%s3 + $0x50] sm:$0xf]
    %v400 = vld [vmem:[%s3 + $0x54] sm:$0xff]
    %v401 = vld [vmem:[%s3 + $0x5c] sm:$0xf]
    %v402 = vld [vmem:[%s3 + $0x60] sm:$0xff]
    %v403 = vld [vmem:[%s3 + $0x68] sm:$0xf]
    %v404 = vld [vmem:[%s3 + $0x6c] sm:$0xff]
    %v405 = vld [vmem:[%s3 + $0x74] sm:$0xf]
    %v406 = vld [vmem:[%s3 + $0x78] sm:$0xff]
    %v407 = vld [vmem:[%s3 + $0x80] sm:$0xf]
    %v408 = vld [vmem:[%s3 + $0x84] sm:$0xff]
    %v409 = vld [vmem:[%s3 + $0x8c] sm:$0xf]
    %v410 = vld [vmem:[%s3 + $0x90] sm:$0xff]
    %v411 = vld [vmem:[%s3 + $0x98] sm:$0xf]
    %v412 = vld [vmem:[%s3 + $0x9c] sm:$0xff]
    %v413 = vld [vmem:[%s3 + $0xa4] sm:$0xf]
    %v414 = vld [vmem:[%s3 + $0xa8] sm:$0xff]
    %v415 = vld [vmem:[%s3 + $0xb0] sm:$0xf]
    %v416 = vld [vmem:[%s3 + $0xb4] sm:$0xff]
    %v417 = vld [vmem:[%s3 + $0xbc] sm:$0xf]
    %v418 = vld [vmem:[%s3 + $0xc0] sm:$0xff]
    %v419 = vld [vmem:[%s3 + $0xc8] sm:$0xf]
    %v420 = vld [vmem:[%s3 + $0xcc] sm:$0xff]
    %v421 = vld [vmem:[%s3 + $0xd4] sm:$0xf]
    %v422 = vld [vmem:[%s3 + $0xd8] sm:$0xff]
    %v423 = vld [vmem:[%s3 + $0xe0] sm:$0xf]
    %v424 = vld [vmem:[%s3 + $0xe4] sm:$0xff]
    %v425 = vld [vmem:[%s3 + $0xec] sm:$0xf]
    %v426 = vld [vmem:[%s3 + $0xf0] sm:$0xff]
    %v427 = vld [vmem:[%s3 + $0xf8] sm:$0xf]
    %v428 = vld [vmem:[%s3 + $0xfc] sm:$0xff]
    %v429 = vld [vmem:[%s3 + $0x104] sm:$0xf]
    %v430 = vld [vmem:[%s3 + $0x108] sm:$0xff]
    %v431 = vld [vmem:[%s3 + $0x110] sm:$0xf]
    %v432 = vld [vmem:[%s3 + $0x114] sm:$0xff]
    %v433 = vld [vmem:[%s3 + $0x11c] sm:$0xf]
    %v434 = vld [vmem:[%s3 + $0x120] sm:$0xff]
    %v435 = vld [vmem:[%s3 + $0x128] sm:$0xf]
    %v436 = vld [vmem:[%s3 + $0x12c] sm:$0xff]
    %v437 = vld [vmem:[%s3 + $0x134] sm:$0xf]
    %v438 = vld [vmem:[%s3 + $0x138] sm:$0xff]
    %v439 = vld [vmem:[%s3 + $0x140] sm:$0xf]
    %v440 = vld [vmem:[%s3 + $0x144] sm:$0xff]
    %v441 = vld [vmem:[%s3 + $0x14c] sm:$0xf]
    %v442 = vld [vmem:[%s3 + $0x150] sm:$0xff]
    %v443 = vld [vmem:[%s3 + $0x158] sm:$0xf]
    %v444 = vld [vmem:[%s3 + $0x15c] sm:$0xff]
    %v445 = vld [vmem:[%s3 + $0x164] sm:$0xf]
    %v446 = vld [vmem:[%s3 + $0x168] sm:$0xff]
    %v447 = vld [vmem:[%s3 + $0x170] sm:$0xf]
    %v448 = vld [vmem:[%s3 + $0x174] sm:$0xff]
    %v449 = vld [vmem:[%s3 + $0x17c] sm:$0xf]
    %v450 = vld [vmem:[%s3 + $0x180] sm:$0xff]
    %v451 = vld [vmem:[%s3 + $0x188] sm:$0xf]
    %v452 = vld [vmem:[%s3 + $0x18c] sm:$0xff]
    %v453 = vld [vmem:[%s3 + $0x194] sm:$0xf]
    %v454 = vld [vmem:[%s3 + $0x198] sm:$0xff]
    %v455 = vld [vmem:[%s3 + $0x1a0] sm:$0xf]
    %v456 = vld [vmem:[%s3 + $0x1a4] sm:$0xff]
    %v457 = vld [vmem:[%s3 + $0x1ac] sm:$0xf]
    %v458 = vld [vmem:[%s3 + $0x1b0] sm:$0xff]
    %v459 = vld [vmem:[%s3 + $0x1b8] sm:$0xf]
    %v460 = vld [vmem:[%s3 + $0x1bc] sm:$0xff]
    %v461 = vld [vmem:[%s3 + $0x1c4] sm:$0xf]
    %v462 = vld [vmem:[%s3 + $0x1c8] sm:$0xff]
    %v463 = vld [vmem:[%s3 + $0x1d0] sm:$0xf]
    %v464 = vld [vmem:[%s3 + $0x1d4] sm:$0xff]
    %v465 = vld [vmem:[%s3 + $0x1dc] sm:$0xf]
    %v466 = vld [vmem:[%s3 + $0x1e0] sm:$0xff]
    %v467 = vld [vmem:[%s3 + $0x1e8] sm:$0xf]
    %v468 = vld [vmem:[%s3 + $0x1ec] sm:$0xff]
    %v469 = vld [vmem:[%s3 + $0x1f4] sm:$0xf]
    %v470 = vld [vmem:[%s3 + $0x1f8] sm:$0xff]
    %v471 = vld [vmem:[%s3 + $0x200] sm:$0xf]
    %v472 = vld [vmem:[%s3 + $0x204] sm:$0xff]
    %v473 = vld [vmem:[%s3 + $0x20c] sm:$0xf]
    %v474 = vld [vmem:[%s3 + $0x210] sm:$0xff]
    %v475 = vld [vmem:[%s3 + $0x218] sm:$0xf]
    %v476 = vld [vmem:[%s3 + $0x21c] sm:$0xff]
    %v477 = vld [vmem:[%s3 + $0x224] sm:$0xf]
    %v478 = vld [vmem:[%s3 + $0x228] sm:$0xff]
    %v479 = vld [vmem:[%s3 + $0x230] sm:$0xf]
    %v480 = vld [vmem:[%s3 + $0x234] sm:$0xff]
    %v481 = vld [vmem:[%s3 + $0x23c] sm:$0xf]
    %v482 = vld [vmem:[%s3 + $0x240] sm:$0xff]
    %v483 = vld [vmem:[%s3 + $0x248] sm:$0xf]
    %v484 = vld [vmem:[%s3 + $0x24c] sm:$0xff]
    %v485 = vld [vmem:[%s3 + $0x254] sm:$0xf]
    %v486 = vld [vmem:[%s3 + $0x258] sm:$0xff]
    %v487 = vld [vmem:[%s3 + $0x260] sm:$0xf]
    %v488 = vld [vmem:[%s3 + $0x264] sm:$0xff]
    %v489 = vld [vmem:[%s3 + $0x26c] sm:$0xf]
    %v490 = vld [vmem:[%s3 + $0x270] sm:$0xff]
    %v491 = vld [vmem:[%s3 + $0x278] sm:$0xf]
    %v492 = vld [vmem:[%s3 + $0x27c] sm:$0xff]
    %v493 = vld [vmem:[%s3 + $0x284] sm:$0xf]
    %v494 = vld [vmem:[%s3 + $0x288] sm:$0xff]
    %v495 = vld [vmem:[%s3 + $0x290] sm:$0xf]
    %v496 = vld [vmem:[%s3 + $0x294] sm:$0xff]
    %v497 = vld [vmem:[%s3 + $0x29c] sm:$0xf]
    %v498 = vld [vmem:[%s3 + $0x2a0] sm:$0xff]
    %v499 = vld [vmem:[%s3 + $0x2a8] sm:$0xf]
    %v500 = vld [vmem:[%s3 + $0x2ac] sm:$0xff]
    %v501 = vld [vmem:[%s3 + $0x2b4] sm:$0xf]
    %v502 = vld [vmem:[%s3 + $0x2b8] sm:$0xff]
    %v503 = vld [vmem:[%s3 + $0x2c0] sm:$0xf]
    %v504 = vld [vmem:[%s3 + $0x2c4] sm:$0xff]
    %v505 = vld [vmem:[%s3 + $0x2cc] sm:$0xf]
    %v506 = vld [vmem:[%s3 + $0x2d0] sm:$0xff]
    %v507 = vld [vmem:[%s3 + $0x2d8] sm:$0xf]
    %v508 = vld [vmem:[%s3 + $0x2dc] sm:$0xff]
    %v509 = vld [vmem:[%s3 + $0x2e4] sm:$0xf]
    %v510 = vld [vmem:[%s3 + $0x2e8] sm:$0xff]
    %v511 = vld [vmem:[%s3 + $0x2f0] sm:$0xf]
    %v512 = vld [vmem:[%s3 + $0x2f4] sm:$0xff]
    %v513 = vld [vmem:[%s3 + $0x2fc] sm:$0xf]
    %v514 = vld [vmem:[%s3 + $0x300] sm:$0xff]
    %v515 = vld [vmem:[%s3 + $0x308] sm:$0xf]
    %v516 = vld [vmem:[%s3 + $0x30c] sm:$0xff]
    %v517 = vld [vmem:[%s3 + $0x314] sm:$0xf]
    %v518 = vld [vmem:[%s3 + $0x318] sm:$0xff]
    %v519 = vld [vmem:[%s3 + $0x320] sm:$0xf]
    %v520 = vld [vmem:[%s3 + $0x324] sm:$0xff]
    %v521 = vld [vmem:[%s3 + $0x32c] sm:$0xf]
    %v522 = vld [vmem:[%s3 + $0x330] sm:$0xff]
    %v523 = vld [vmem:[%s3 + $0x338] sm:$0xf]
    %v524 = vld [vmem:[%s3 + $0x33c] sm:$0xff]
    %v525 = vld [vmem:[%s3 + $0x344] sm:$0xf]
    %v526 = vld [vmem:[%s3 + $0x348] sm:$0xff]
    %v527 = vld [vmem:[%s3 + $0x350] sm:$0xf]
    %v528 = vld [vmem:[%s3 + $0x354] sm:$0xff]
    %v529 = vld [vmem:[%s3 + $0x35c] sm:$0xf]
    %v530 = vld [vmem:[%s3 + $0x360] sm:$0xff]
    %v531 = vld [vmem:[%s3 + $0x368] sm:$0xf]
    %v532 = vld [vmem:[%s3 + $0x36c] sm:$0xff]
    %v533 = vld [vmem:[%s3 + $0x374] sm:$0xf]
    %v534 = vld [vmem:[%s3 + $0x378] sm:$0xff]
    %v535 = vld [vmem:[%s3 + $0x380] sm:$0xf]
    %v536 = vld [vmem:[%s3 + $0x384] sm:$0xff]
    %v537 = vld [vmem:[%s3 + $0x38c] sm:$0xf]
    %v538 = vld [vmem:[%s3 + $0x390] sm:$0xff]
    %v539 = vld [vmem:[%s3 + $0x398] sm:$0xf]
    %v540 = vld [vmem:[%s3 + $0x39c] sm:$0xff]
    %v541 = vld [vmem:[%s3 + $0x3a4] sm:$0xf]
    %v542 = vld [vmem:[%s3 + $0x3a8] sm:$0xff]
    %v543 = vld [vmem:[%s3 + $0x3b0] sm:$0xf]
    %v544 = vld [vmem:[%s3 + $0x3b4] sm:$0xff]
    %v545 = vld [vmem:[%s3 + $0x3bc] sm:$0xf]
    %v546 = vld [vmem:[%s3 + $0x3c0] sm:$0xff]
    %v547 = vld [vmem:[%s3 + $0x3c8] sm:$0xf]
    %v548 = vld [vmem:[%s3 + $0x3cc] sm:$0xff]
    %v549 = vld [vmem:[%s3 + $0x3d4] sm:$0xf]
    %v550 = vld [vmem:[%s3 + $0x3d8] sm:$0xff]
    %v551 = vld [vmem:[%s3 + $0x3e0] sm:$0xf]
    %v552 = vld [vmem:[%s3 + $0x3e4] sm:$0xff]
    %v553 = vld [vmem:[%s3 + $0x3ec] sm:$0xf]
    %v554 = vld [vmem:[%s3 + $0x3f0] sm:$0xff]
    %v555 = vld [vmem:[%s3 + $0x3f8] sm:$0xf]
    %v556 = vld [vmem:[%s3 + $0x3fc] sm:$0xff]
    %v557 = vld [vmem:[%s3 + $0x404] sm:$0xf]
    %v558 = vld [vmem:[%s3 + $0x408] sm:$0xff]
    %v559 = vld [vmem:[%s3 + $0x410] sm:$0xf]
    %v560 = vld [vmem:[%s3 + $0x414] sm:$0xff]
    %v561 = vld [vmem:[%s3 + $0x41c] sm:$0xf]
    %v562 = vld [vmem:[%s3 + $0x420] sm:$0xff]
    %v563 = vld [vmem:[%s3 + $0x428] sm:$0xf]
    %v564 = vld [vmem:[%s3 + $0x42c] sm:$0xff]
    %v565 = vld [vmem:[%s3 + $0x434] sm:$0xf]
    %v566 = vld [vmem:[%s3 + $0x438] sm:$0xff]
    %v567 = vld [vmem:[%s3 + $0x440] sm:$0xf]
    %v568 = vld [vmem:[%s3 + $0x444] sm:$0xff]
    %v569 = vld [vmem:[%s3 + $0x44c] sm:$0xf]
    %v570 = vld [vmem:[%s3 + $0x450] sm:$0xff]
    %v571 = vld [vmem:[%s3 + $0x458] sm:$0xf]
    %v572 = vld [vmem:[%s3 + $0x45c] sm:$0xff]
    %v573 = vld [vmem:[%s3 + $0x464] sm:$0xf]
    %v574 = vld [vmem:[%s3 + $0x468] sm:$0xff]
    %v575 = vld [vmem:[%s3 + $0x470] sm:$0xf]
    %v576 = vld [vmem:[%s3 + $0x474] sm:$0xff]
    %v577 = vld [vmem:[%s3 + $0x47c] sm:$0xf]
    %v578 = vld [vmem:[%s3 + $0x480] sm:$0xff]
    %v579 = vld [vmem:[%s3 + $0x488] sm:$0xf]
    %v580 = vld [vmem:[%s3 + $0x48c] sm:$0xff]
    %v581 = vld [vmem:[%s3 + $0x494] sm:$0xf]
    %v582 = vld [vmem:[%s3 + $0x498] sm:$0xff]
    %v583 = vld [vmem:[%s3 + $0x4a0] sm:$0xf]
    %v584 = vld [vmem:[%s3 + $0x4a4] sm:$0xff]
    %v585 = vld [vmem:[%s3 + $0x4ac] sm:$0xf]
    %v586 = vpack.c.bf16 %v351, %v350
    %v587 = vpack.c.bf16 %v353, %v352
    %v588 = vpack.c.bf16 %v355, %v354
    %v589 = vpack.c.bf16 %v357, %v356
    %v590 = vpack.c.bf16 %v359, %v358
    %v591 = vpack.c.bf16 %v361, %v360
    %v592 = vpack.c.bf16 %v363, %v362
    %v593 = vpack.c.bf16 %v365, %v364
    %v594 = vpack.c.bf16 %v367, %v366
    %v595 = vpack.c.bf16 %v369, %v368
    %v596 = vpack.c.bf16 %v371, %v370
    %v597 = vpack.c.bf16 %v373, %v372
    %v598 = vpack.c.bf16 %v375, %v374
    %v599 = vpack.c.bf16 %v377, %v376
    %v600 = vpack.c.bf16 %v379, %v378
    %v601 = vpack.c.bf16 %v381, %v380
    %v602 = vpack.c.bf16 %v383, %v382
    %v603 = vpack.c.bf16 %v385, %v384
    %v804 = vunpack.c.l.b16 %v386
    %v805 = vunpack.c.h.b16 %v386
    %v806 = vunpack.c.l.b16 %v387
    %v807 = vunpack.c.l.b16 %v388
    %v808 = vunpack.c.h.b16 %v388
    %v809 = vunpack.c.l.b16 %v389
    %v810 = vunpack.c.l.b16 %v390
    %v811 = vunpack.c.h.b16 %v390
    %v812 = vunpack.c.l.b16 %v391
    %v813 = vunpack.c.l.b16 %v392
    %v814 = vunpack.c.h.b16 %v392
    %v815 = vunpack.c.l.b16 %v393
    %v816 = vunpack.c.l.b16 %v394
    %v817 = vunpack.c.h.b16 %v394
    %v818 = vunpack.c.l.b16 %v395
    %v819 = vunpack.c.l.b16 %v396
    %v820 = vunpack.c.h.b16 %v396
    %v821 = vunpack.c.l.b16 %v397
    %v822 = vunpack.c.l.b16 %v398
    %v823 = vunpack.c.h.b16 %v398
    %v824 = vunpack.c.l.b16 %v399
    %v825 = vunpack.c.l.b16 %v400
    %v826 = vunpack.c.h.b16 %v400
    %v827 = vunpack.c.l.b16 %v401
    %v828 = vunpack.c.l.b16 %v402
    %v829 = vunpack.c.h.b16 %v402
    %v830 = vunpack.c.l.b16 %v403
    %v831 = vunpack.c.l.b16 %v404
    %v832 = vunpack.c.h.b16 %v404
    %v833 = vunpack.c.l.b16 %v405
    %v834 = vunpack.c.l.b16 %v406
    %v835 = vunpack.c.h.b16 %v406
    %v836 = vunpack.c.l.b16 %v407
    %v837 = vunpack.c.l.b16 %v408
    %v838 = vunpack.c.h.b16 %v408
    %v839 = vunpack.c.l.b16 %v409
    %v840 = vunpack.c.l.b16 %v410
    %v841 = vunpack.c.h.b16 %v410
    %v842 = vunpack.c.l.b16 %v411
    %v843 = vunpack.c.l.b16 %v412
    %v844 = vunpack.c.h.b16 %v412
    %v845 = vunpack.c.l.b16 %v413
    %v846 = vunpack.c.l.b16 %v414
    %v847 = vunpack.c.h.b16 %v414
    %v848 = vunpack.c.l.b16 %v415
    %v849 = vunpack.c.l.b16 %v416
    %v850 = vunpack.c.h.b16 %v416
    %v851 = vunpack.c.l.b16 %v417
    %v852 = vunpack.c.l.b16 %v418
    %v853 = vunpack.c.h.b16 %v418
    %v854 = vunpack.c.l.b16 %v419
    %v855 = vunpack.c.l.b16 %v420
    %v856 = vunpack.c.h.b16 %v420
    %v857 = vunpack.c.l.b16 %v421
    %v858 = vunpack.c.l.b16 %v422
    %v859 = vunpack.c.h.b16 %v422
    %v860 = vunpack.c.l.b16 %v423
    %v861 = vunpack.c.l.b16 %v424
    %v862 = vunpack.c.h.b16 %v424
    %v863 = vunpack.c.l.b16 %v425
    %v864 = vunpack.c.l.b16 %v426
    %v865 = vunpack.c.h.b16 %v426
    %v866 = vunpack.c.l.b16 %v427
    %v867 = vunpack.c.l.b16 %v428
    %v868 = vunpack.c.h.b16 %v428
    %v869 = vunpack.c.l.b16 %v429
    %v870 = vunpack.c.l.b16 %v430
    %v871 = vunpack.c.h.b16 %v430
    %v872 = vunpack.c.l.b16 %v431
    %v873 = vunpack.c.l.b16 %v432
    %v874 = vunpack.c.h.b16 %v432
    %v875 = vunpack.c.l.b16 %v433
    %v876 = vunpack.c.l.b16 %v434
    %v877 = vunpack.c.h.b16 %v434
    %v878 = vunpack.c.l.b16 %v435
    %v879 = vunpack.c.l.b16 %v436
    %v880 = vunpack.c.h.b16 %v436
    %v881 = vunpack.c.l.b16 %v437
    %v882 = vunpack.c.l.b16 %v438
    %v883 = vunpack.c.h.b16 %v438
    %v884 = vunpack.c.l.b16 %v439
    %v885 = vunpack.c.l.b16 %v440
    %v886 = vunpack.c.h.b16 %v440
    %v887 = vunpack.c.l.b16 %v441
    %v888 = vunpack.c.l.b16 %v442
    %v889 = vunpack.c.h.b16 %v442
    %v890 = vunpack.c.l.b16 %v443
    %v891 = vunpack.c.l.b16 %v444
    %v892 = vunpack.c.h.b16 %v444
    %v893 = vunpack.c.l.b16 %v445
    %v894 = vunpack.c.l.b16 %v446
    %v895 = vunpack.c.h.b16 %v446
    %v896 = vunpack.c.l.b16 %v447
    %v897 = vunpack.c.l.b16 %v448
    %v898 = vunpack.c.h.b16 %v448
    %v899 = vunpack.c.l.b16 %v449
    %v900 = vunpack.c.l.b16 %v450
    %v901 = vunpack.c.h.b16 %v450
    %v902 = vunpack.c.l.b16 %v451
    %v903 = vunpack.c.l.b16 %v452
    %v904 = vunpack.c.h.b16 %v452
    %v905 = vunpack.c.l.b16 %v453
    %v906 = vunpack.c.l.b16 %v454
    %v907 = vunpack.c.h.b16 %v454
    %v908 = vunpack.c.l.b16 %v455
    %v909 = vunpack.c.l.b16 %v456
    %v910 = vunpack.c.h.b16 %v456
    %v911 = vunpack.c.l.b16 %v457
    %v912 = vunpack.c.l.b16 %v458
    %v913 = vunpack.c.h.b16 %v458
    %v914 = vunpack.c.l.b16 %v459
    %v915 = vunpack.c.l.b16 %v460
    %v916 = vunpack.c.h.b16 %v460
    %v917 = vunpack.c.l.b16 %v461
    %v918 = vunpack.c.l.b16 %v462
    %v919 = vunpack.c.h.b16 %v462
    %v920 = vunpack.c.l.b16 %v463
    %v921 = vunpack.c.l.b16 %v464
    %v922 = vunpack.c.h.b16 %v464
    %v923 = vunpack.c.l.b16 %v465
    %v924 = vunpack.c.l.b16 %v466
    %v925 = vunpack.c.h.b16 %v466
    %v926 = vunpack.c.l.b16 %v467
    %v927 = vunpack.c.l.b16 %v468
    %v928 = vunpack.c.h.b16 %v468
    %v929 = vunpack.c.l.b16 %v469
    %v930 = vunpack.c.l.b16 %v470
    %v931 = vunpack.c.h.b16 %v470
    %v932 = vunpack.c.l.b16 %v471
    %v933 = vunpack.c.l.b16 %v472
    %v934 = vunpack.c.h.b16 %v472
    %v935 = vunpack.c.l.b16 %v473
    %v936 = vunpack.c.l.b16 %v474
    %v937 = vunpack.c.h.b16 %v474
    %v938 = vunpack.c.l.b16 %v475
    %v939 = vunpack.c.l.b16 %v476
    %v940 = vunpack.c.h.b16 %v476
    %v941 = vunpack.c.l.b16 %v477
    %v942 = vunpack.c.l.b16 %v478
    %v943 = vunpack.c.h.b16 %v478
    %v944 = vunpack.c.l.b16 %v479
    %v945 = vunpack.c.l.b16 %v480
    %v946 = vunpack.c.h.b16 %v480
    %v947 = vunpack.c.l.b16 %v481
    %v948 = vunpack.c.l.b16 %v482
    %v949 = vunpack.c.h.b16 %v482
    %v950 = vunpack.c.l.b16 %v483
    %v951 = vunpack.c.l.b16 %v484
    %v952 = vunpack.c.h.b16 %v484
    %v953 = vunpack.c.l.b16 %v485
    %v954 = vunpack.c.l.b16 %v486
    %v955 = vunpack.c.h.b16 %v486
    %v956 = vunpack.c.l.b16 %v487
    %v957 = vunpack.c.l.b16 %v488
    %v958 = vunpack.c.h.b16 %v488
    %v959 = vunpack.c.l.b16 %v489
    %v960 = vunpack.c.l.b16 %v490
    %v961 = vunpack.c.h.b16 %v490
    %v962 = vunpack.c.l.b16 %v491
    %v963 = vunpack.c.l.b16 %v492
    %v964 = vunpack.c.h.b16 %v492
    %v965 = vunpack.c.l.b16 %v493
    %v966 = vunpack.c.l.b16 %v494
    %v967 = vunpack.c.h.b16 %v494
    %v968 = vunpack.c.l.b16 %v495
    %v969 = vunpack.c.l.b16 %v496
    %v970 = vunpack.c.h.b16 %v496
    %v971 = vunpack.c.l.b16 %v497
    %v972 = vunpack.c.l.b16 %v498
    %v973 = vunpack.c.h.b16 %v498
    %v974 = vunpack.c.l.b16 %v499
    %v975 = vunpack.c.l.b16 %v500
    %v976 = vunpack.c.h.b16 %v500
    %v977 = vunpack.c.l.b16 %v501
    %v978 = vunpack.c.l.b16 %v502
    %v979 = vunpack.c.h.b16 %v502
    %v980 = vunpack.c.l.b16 %v503
    %v981 = vunpack.c.l.b16 %v504
    %v982 = vunpack.c.h.b16 %v504
    %v983 = vunpack.c.l.b16 %v505
    %v984 = vunpack.c.l.b16 %v506
    %v985 = vunpack.c.h.b16 %v506
    %v986 = vunpack.c.l.b16 %v507
    %v987 = vunpack.c.l.b16 %v508
    %v988 = vunpack.c.h.b16 %v508
    %v989 = vunpack.c.l.b16 %v509
    %v990 = vunpack.c.l.b16 %v510
    %v991 = vunpack.c.h.b16 %v510
    %v992 = vunpack.c.l.b16 %v511
    %v993 = vunpack.c.l.b16 %v512
    %v994 = vunpack.c.h.b16 %v512
    %v995 = vunpack.c.l.b16 %v513
    %v996 = vunpack.c.l.b16 %v514
    %v997 = vunpack.c.h.b16 %v514
    %v998 = vunpack.c.l.b16 %v515
    %v999 = vunpack.c.l.b16 %v516
    %v1000 = vunpack.c.h.b16 %v516
    %v1001 = vunpack.c.l.b16 %v517
    %v1002 = vunpack.c.l.b16 %v518
    %v1003 = vunpack.c.h.b16 %v518
    %v1004 = vunpack.c.l.b16 %v519
    %v1005 = vunpack.c.l.b16 %v520
    %v1006 = vunpack.c.h.b16 %v520
    %v1007 = vunpack.c.l.b16 %v521
    %v1008 = vunpack.c.l.b16 %v522
    %v1009 = vunpack.c.h.b16 %v522
    %v1010 = vunpack.c.l.b16 %v523
    %v1011 = vunpack.c.l.b16 %v524
    %v1012 = vunpack.c.h.b16 %v524
    %v1013 = vunpack.c.l.b16 %v525
    %v1014 = vunpack.c.l.b16 %v526
    %v1015 = vunpack.c.h.b16 %v526
    %v1016 = vunpack.c.l.b16 %v527
    %v1017 = vunpack.c.l.b16 %v528
    %v1018 = vunpack.c.h.b16 %v528
    %v1019 = vunpack.c.l.b16 %v529
    %v1020 = vunpack.c.l.b16 %v530
    %v1021 = vunpack.c.h.b16 %v530
    %v1022 = vunpack.c.l.b16 %v531
    %v1023 = vunpack.c.l.b16 %v532
    %v1024 = vunpack.c.h.b16 %v532
    %v1025 = vunpack.c.l.b16 %v533
    %v1026 = vunpack.c.l.b16 %v534
    %v1027 = vunpack.c.h.b16 %v534
    %v1028 = vunpack.c.l.b16 %v535
    %v1029 = vunpack.c.l.b16 %v536
    %v1030 = vunpack.c.h.b16 %v536
    %v1031 = vunpack.c.l.b16 %v537
    %v1032 = vunpack.c.l.b16 %v538
    %v1033 = vunpack.c.h.b16 %v538
    %v1034 = vunpack.c.l.b16 %v539
    %v1035 = vunpack.c.l.b16 %v540
    %v1036 = vunpack.c.h.b16 %v540
    %v1037 = vunpack.c.l.b16 %v541
    %v1038 = vunpack.c.l.b16 %v542
    %v1039 = vunpack.c.h.b16 %v542
    %v1040 = vunpack.c.l.b16 %v543
    %v1041 = vunpack.c.l.b16 %v544
    %v1042 = vunpack.c.h.b16 %v544
    %v1043 = vunpack.c.l.b16 %v545
    %v1044 = vunpack.c.l.b16 %v546
    %v1045 = vunpack.c.h.b16 %v546
    %v1046 = vunpack.c.l.b16 %v547
    %v1047 = vunpack.c.l.b16 %v548
    %v1048 = vunpack.c.h.b16 %v548
    %v1049 = vunpack.c.l.b16 %v549
    %v1050 = vunpack.c.l.b16 %v550
    %v1051 = vunpack.c.h.b16 %v550
    %v1052 = vunpack.c.l.b16 %v551
    %v1053 = vunpack.c.l.b16 %v552
    %v1054 = vunpack.c.h.b16 %v552
    %v1055 = vunpack.c.l.b16 %v553
    %v1056 = vunpack.c.l.b16 %v554
    %v1057 = vunpack.c.h.b16 %v554
    %v1058 = vunpack.c.l.b16 %v555
    %v1059 = vunpack.c.l.b16 %v556
    %v1060 = vunpack.c.h.b16 %v556
    %v1061 = vunpack.c.l.b16 %v557
    %v1062 = vunpack.c.l.b16 %v558
    %v1063 = vunpack.c.h.b16 %v558
    %v1064 = vunpack.c.l.b16 %v559
    %v1065 = vunpack.c.l.b16 %v560
    %v1066 = vunpack.c.h.b16 %v560
    %v1067 = vunpack.c.l.b16 %v561
    %v1068 = vunpack.c.l.b16 %v562
    %v1069 = vunpack.c.h.b16 %v562
    %v1070 = vunpack.c.l.b16 %v563
    %v1071 = vunpack.c.l.b16 %v564
    %v1072 = vunpack.c.h.b16 %v564
    %v1073 = vunpack.c.l.b16 %v565
    %v1074 = vunpack.c.l.b16 %v566
    %v1075 = vunpack.c.h.b16 %v566
    %v1076 = vunpack.c.l.b16 %v567
    %v1077 = vunpack.c.l.b16 %v568
    %v1078 = vunpack.c.h.b16 %v568
    %v1079 = vunpack.c.l.b16 %v569
    %v1080 = vunpack.c.l.b16 %v570
    %v1081 = vunpack.c.h.b16 %v570
    %v1082 = vunpack.c.l.b16 %v571
    %v1083 = vunpack.c.l.b16 %v572
    %v1084 = vunpack.c.h.b16 %v572
    %v1085 = vunpack.c.l.b16 %v573
    %v1086 = vunpack.c.l.b16 %v574
    %v1087 = vunpack.c.h.b16 %v574
    %v1088 = vunpack.c.l.b16 %v575
    %v1089 = vunpack.c.l.b16 %v576
    %v1090 = vunpack.c.h.b16 %v576
    %v1091 = vunpack.c.l.b16 %v577
    %v1092 = vunpack.c.l.b16 %v578
    %v1093 = vunpack.c.h.b16 %v578
    %v1094 = vunpack.c.l.b16 %v579
    %v1095 = vunpack.c.l.b16 %v580
    %v1096 = vunpack.c.h.b16 %v580
    %v1097 = vunpack.c.l.b16 %v581
    %v1098 = vunpack.c.l.b16 %v582
    %v1099 = vunpack.c.h.b16 %v582
    %v1100 = vunpack.c.l.b16 %v583
    %v1101 = vunpack.c.l.b16 %v584
    %v1102 = vunpack.c.h.b16 %v584
    %v1103 = vunpack.c.l.b16 %v585
    %v1104 = vpack.c.b16 %v807, %v804
    %v1105 = vpack.c.b16 %v808, %v805
    %v1106 = vpack.c.b16 %v809, %v806
    %v1107 = vpack.c.b16 %v813, %v810
    %v1108 = vpack.c.b16 %v814, %v811
    %v1109 = vpack.c.b16 %v815, %v812
    %v1110 = vpack.c.b16 %v819, %v816
    %v1111 = vpack.c.b16 %v820, %v817
    %v1112 = vpack.c.b16 %v821, %v818
    %v1113 = vpack.c.b16 %v825, %v822
    %v1114 = vpack.c.b16 %v826, %v823
    %v1115 = vpack.c.b16 %v827, %v824
    %v1116 = vpack.c.b16 %v831, %v828
    %v1117 = vpack.c.b16 %v832, %v829
    %v1118 = vpack.c.b16 %v833, %v830
    %v1119 = vpack.c.b16 %v837, %v834
    %v1120 = vpack.c.b16 %v838, %v835
    %v1121 = vpack.c.b16 %v839, %v836
    %v1122 = vpack.c.b16 %v843, %v840
    %v1123 = vpack.c.b16 %v844, %v841
    %v1124 = vpack.c.b16 %v845, %v842
    %v1125 = vpack.c.b16 %v849, %v846
    %v1126 = vpack.c.b16 %v850, %v847
    %v1127 = vpack.c.b16 %v851, %v848
    %v1128 = vpack.c.b16 %v855, %v852
    %v1129 = vpack.c.b16 %v856, %v853
    %v1130 = vpack.c.b16 %v857, %v854
    %v1131 = vpack.c.b16 %v861, %v858
    %v1132 = vpack.c.b16 %v862, %v859
    %v1133 = vpack.c.b16 %v863, %v860
    %v1134 = vpack.c.b16 %v867, %v864
    %v1135 = vpack.c.b16 %v868, %v865
    %v1136 = vpack.c.b16 %v869, %v866
    %v1137 = vpack.c.b16 %v873, %v870
    %v1138 = vpack.c.b16 %v874, %v871
    %v1139 = vpack.c.b16 %v875, %v872
    %v1140 = vpack.c.b16 %v879, %v876
    %v1141 = vpack.c.b16 %v880, %v877
    %v1142 = vpack.c.b16 %v881, %v878
    %v1143 = vpack.c.b16 %v885, %v882
    %v1144 = vpack.c.b16 %v886, %v883
    %v1145 = vpack.c.b16 %v887, %v884
    %v1146 = vpack.c.b16 %v891, %v888
    %v1147 = vpack.c.b16 %v892, %v889
    %v1148 = vpack.c.b16 %v893, %v890
    %v1149 = vpack.c.b16 %v897, %v894
    %v1150 = vpack.c.b16 %v898, %v895
    %v1151 = vpack.c.b16 %v899, %v896
    %v1152 = vpack.c.b16 %v903, %v900
    %v1153 = vpack.c.b16 %v904, %v901
    %v1154 = vpack.c.b16 %v905, %v902
    %v1155 = vpack.c.b16 %v909, %v906
    %v1156 = vpack.c.b16 %v910, %v907
    %v1157 = vpack.c.b16 %v911, %v908
    %v1158 = vpack.c.b16 %v915, %v912
    %v1159 = vpack.c.b16 %v916, %v913
    %v1160 = vpack.c.b16 %v917, %v914
    %v1161 = vpack.c.b16 %v921, %v918
    %v1162 = vpack.c.b16 %v922, %v919
    %v1163 = vpack.c.b16 %v923, %v920
    %v1164 = vpack.c.b16 %v927, %v924
    %v1165 = vpack.c.b16 %v928, %v925
    %v1166 = vpack.c.b16 %v929, %v926
    %v1167 = vpack.c.b16 %v933, %v930
    %v1168 = vpack.c.b16 %v934, %v931
    %v1169 = vpack.c.b16 %v935, %v932
    %v1170 = vpack.c.b16 %v939, %v936
    %v1171 = vpack.c.b16 %v940, %v937
    %v1172 = vpack.c.b16 %v941, %v938
    %v1173 = vpack.c.b16 %v945, %v942
    %v1174 = vpack.c.b16 %v946, %v943
    %v1175 = vpack.c.b16 %v947, %v944
    %v1176 = vpack.c.b16 %v951, %v948
    %v1177 = vpack.c.b16 %v952, %v949
    %v1178 = vpack.c.b16 %v953, %v950
    %v1179 = vpack.c.b16 %v957, %v954
    %v1180 = vpack.c.b16 %v958, %v955
    %v1181 = vpack.c.b16 %v959, %v956
    %v1182 = vpack.c.b16 %v963, %v960
    %v1183 = vpack.c.b16 %v964, %v961
    %v1184 = vpack.c.b16 %v965, %v962
    %v1185 = vpack.c.b16 %v969, %v966
    %v1186 = vpack.c.b16 %v970, %v967
    %v1187 = vpack.c.b16 %v971, %v968
    %v1188 = vpack.c.b16 %v975, %v972
    %v1189 = vpack.c.b16 %v976, %v973
    %v1190 = vpack.c.b16 %v977, %v974
    %v1191 = vpack.c.b16 %v981, %v978
    %v1192 = vpack.c.b16 %v982, %v979
    %v1193 = vpack.c.b16 %v983, %v980
    %v1194 = vpack.c.b16 %v987, %v984
    %v1195 = vpack.c.b16 %v988, %v985
    %v1196 = vpack.c.b16 %v989, %v986
    %v1197 = vpack.c.b16 %v993, %v990
    %v1198 = vpack.c.b16 %v994, %v991
    %v1199 = vpack.c.b16 %v995, %v992
    %v1200 = vpack.c.b16 %v999, %v996
    %v1201 = vpack.c.b16 %v1000, %v997
    %v1202 = vpack.c.b16 %v1001, %v998
    %v1203 = vpack.c.b16 %v1005, %v1002
    %v1204 = vpack.c.b16 %v1006, %v1003
    %v1205 = vpack.c.b16 %v1007, %v1004
    %v1206 = vpack.c.b16 %v1011, %v1008
    %v1207 = vpack.c.b16 %v1012, %v1009
    %v1208 = vpack.c.b16 %v1013, %v1010
    %v1209 = vpack.c.b16 %v1017, %v1014
    %v1210 = vpack.c.b16 %v1018, %v1015
    %v1211 = vpack.c.b16 %v1019, %v1016
    %v1212 = vpack.c.b16 %v1023, %v1020
    %v1213 = vpack.c.b16 %v1024, %v1021
    %v1214 = vpack.c.b16 %v1025, %v1022
    %v1215 = vpack.c.b16 %v1029, %v1026
    %v1216 = vpack.c.b16 %v1030, %v1027
    %v1217 = vpack.c.b16 %v1031, %v1028
    %v1218 = vpack.c.b16 %v1035, %v1032
    %v1219 = vpack.c.b16 %v1036, %v1033
    %v1220 = vpack.c.b16 %v1037, %v1034
    %v1221 = vpack.c.b16 %v1041, %v1038
    %v1222 = vpack.c.b16 %v1042, %v1039
    %v1223 = vpack.c.b16 %v1043, %v1040
    %v1224 = vpack.c.b16 %v1047, %v1044
    %v1225 = vpack.c.b16 %v1048, %v1045
    %v1226 = vpack.c.b16 %v1049, %v1046
    %v1227 = vpack.c.b16 %v1053, %v1050
    %v1228 = vpack.c.b16 %v1054, %v1051
    %v1229 = vpack.c.b16 %v1055, %v1052
    %v1230 = vpack.c.b16 %v1059, %v1056
    %v1231 = vpack.c.b16 %v1060, %v1057
    %v1232 = vpack.c.b16 %v1061, %v1058
    %v1233 = vpack.c.b16 %v1065, %v1062
    %v1234 = vpack.c.b16 %v1066, %v1063
    %v1235 = vpack.c.b16 %v1067, %v1064
    %v1236 = vpack.c.b16 %v1071, %v1068
    %v1237 = vpack.c.b16 %v1072, %v1069
    %v1238 = vpack.c.b16 %v1073, %v1070
    %v1239 = vpack.c.b16 %v1077, %v1074
    %v1240 = vpack.c.b16 %v1078, %v1075
    %v1241 = vpack.c.b16 %v1079, %v1076
    %v1242 = vpack.c.b16 %v1083, %v1080
    %v1243 = vpack.c.b16 %v1084, %v1081
    %v1244 = vpack.c.b16 %v1085, %v1082
    %v1245 = vpack.c.b16 %v1089, %v1086
    %v1246 = vpack.c.b16 %v1090, %v1087
    %v1247 = vpack.c.b16 %v1091, %v1088
    %v1248 = vpack.c.b16 %v1095, %v1092
    %v1249 = vpack.c.b16 %v1096, %v1093
    %v1250 = vpack.c.b16 %v1097, %v1094
    %v1251 = vpack.c.b16 %v1101, %v1098
    %v1252 = vpack.c.b16 %v1102, %v1099
    %v1253 = vpack.c.b16 %v1103, %v1100
    %vm1354 = vcmask 261120
    %v1356 = vsel %vm1354, %v1106, 0
    %v1359 = vsel %vm1354, %v1109, 0
    %v1362 = vsel %vm1354, %v1112, 0
    %v1365 = vsel %vm1354, %v1115, 0
    %v1368 = vsel %vm1354, %v1118, 0
    %v1371 = vsel %vm1354, %v1121, 0
    %v1374 = vsel %vm1354, %v1124, 0
    %v1377 = vsel %vm1354, %v1127, 0
    %v1380 = vsel %vm1354, %v1130, 0
    %v1383 = vsel %vm1354, %v1133, 0
    %v1386 = vsel %vm1354, %v1136, 0
    %v1389 = vsel %vm1354, %v1139, 0
    %v1392 = vsel %vm1354, %v1142, 0
    %v1395 = vsel %vm1354, %v1145, 0
    %v1398 = vsel %vm1354, %v1148, 0
    %v1401 = vsel %vm1354, %v1151, 0
    %v1404 = vsel %vm1354, %v1154, 0
    %v1407 = vsel %vm1354, %v1157, 0
    %v1410 = vsel %vm1354, %v1160, 0
    %v1413 = vsel %vm1354, %v1163, 0
    %v1416 = vsel %vm1354, %v1166, 0
    %v1419 = vsel %vm1354, %v1169, 0
    %v1422 = vsel %vm1354, %v1172, 0
    %v1425 = vsel %vm1354, %v1175, 0
    %v1428 = vsel %vm1354, %v1178, 0
    %v1431 = vsel %vm1354, %v1181, 0
    %v1434 = vsel %vm1354, %v1184, 0
    %v1437 = vsel %vm1354, %v1187, 0
    %v1440 = vsel %vm1354, %v1190, 0
    %v1443 = vsel %vm1354, %v1193, 0
    %v1446 = vsel %vm1354, %v1196, 0
    %v1449 = vsel %vm1354, %v1199, 0
    %v1452 = vsel %vm1354, %v1202, 0
    %v1455 = vsel %vm1354, %v1205, 0
    %v1458 = vsel %vm1354, %v1208, 0
    %v1461 = vsel %vm1354, %v1211, 0
    %v1464 = vsel %vm1354, %v1214, 0
    %v1467 = vsel %vm1354, %v1217, 0
    %v1470 = vsel %vm1354, %v1220, 0
    %v1473 = vsel %vm1354, %v1223, 0
    %v1476 = vsel %vm1354, %v1226, 0
    %v1479 = vsel %vm1354, %v1229, 0
    %v1482 = vsel %vm1354, %v1232, 0
    %v1485 = vsel %vm1354, %v1235, 0
    %v1488 = vsel %vm1354, %v1238, 0
    %v1491 = vsel %vm1354, %v1241, 0
    %v1494 = vsel %vm1354, %v1244, 0
    %v1497 = vsel %vm1354, %v1247, 0
    %v1500 = vsel %vm1354, %v1250, 0
    %v1503 = vsel %vm1354, %v1253, 0
    %1505 = vmatpush.bf16.msra.mxu0 %v593
    %1506 = vmatpush.bf16.msra.mxu0 %v592
    %1507 = vmatpush.bf16.msra.mxu0 %v591
    %1508 = vmatpush.bf16.msra.mxu0 %v590
    %1509 = vmatpush.bf16.msra.mxu0 %v589
    %1510 = vmatpush.bf16.msra.mxu0 %v588
    %1511 = vmatpush.bf16.msra.mxu0 %v587
    %1512 = vmatpush.bf16.msra.mxu0 %v586
    %1513 = vmatmul.bf16.gmra.mxu0 %v1104
    %v1514 = vpop.f32.mrf.mxu0
    %v1515 = vadd.f32 0.0, %v1514
    %v1516 = vpop.f32.mrf.mxu0
    %v1517 = vadd.f32 0.0, %v1516
    %1518 = vmatmul.bf16.gmra.mxu0 %v1107
    %v1519 = vpop.f32.mrf.mxu0
    %v1520 = vadd.f32 0.0, %v1519
    %v1521 = vpop.f32.mrf.mxu0
    %v1522 = vadd.f32 0.0, %v1521
    %1523 = vmatmul.bf16.gmra.mxu0 %v1110
    %v1524 = vpop.f32.mrf.mxu0
    %v1525 = vadd.f32 0.0, %v1524
    %v1526 = vpop.f32.mrf.mxu0
    %v1527 = vadd.f32 0.0, %v1526
    %1528 = vmatmul.bf16.gmra.mxu0 %v1113
    %v1529 = vpop.f32.mrf.mxu0
    %v1530 = vadd.f32 0.0, %v1529
    %v1531 = vpop.f32.mrf.mxu0
    %v1532 = vadd.f32 0.0, %v1531
    %1533 = vmatmul.bf16.gmra.mxu0 %v1116
    %v1534 = vpop.f32.mrf.mxu0
    %v1535 = vadd.f32 0.0, %v1534
    %v1536 = vpop.f32.mrf.mxu0
    %v1537 = vadd.f32 0.0, %v1536
    %1538 = vmatmul.bf16.gmra.mxu0 %v1119
    %v1539 = vpop.f32.mrf.mxu0
    %v1540 = vadd.f32 0.0, %v1539
    %v1541 = vpop.f32.mrf.mxu0
    %v1542 = vadd.f32 0.0, %v1541
    %1543 = vmatmul.bf16.gmra.mxu0 %v1122
    %v1544 = vpop.f32.mrf.mxu0
    %v1545 = vadd.f32 0.0, %v1544
    %v1546 = vpop.f32.mrf.mxu0
    %v1547 = vadd.f32 0.0, %v1546
    %1548 = vmatmul.bf16.gmra.mxu0 %v1125
    %v1549 = vpop.f32.mrf.mxu0
    %v1550 = vadd.f32 0.0, %v1549
    %v1551 = vpop.f32.mrf.mxu0
    %v1552 = vadd.f32 0.0, %v1551
    %1553 = vmatmul.bf16.gmra.mxu0 %v1128
    %v1554 = vpop.f32.mrf.mxu0
    %v1555 = vadd.f32 0.0, %v1554
    %v1556 = vpop.f32.mrf.mxu0
    %v1557 = vadd.f32 0.0, %v1556
    %1558 = vmatmul.bf16.gmra.mxu0 %v1131
    %v1559 = vpop.f32.mrf.mxu0
    %v1560 = vadd.f32 0.0, %v1559
    %v1561 = vpop.f32.mrf.mxu0
    %v1562 = vadd.f32 0.0, %v1561
    %1563 = vmatmul.bf16.gmra.mxu0 %v1134
    %v1564 = vpop.f32.mrf.mxu0
    %v1565 = vadd.f32 0.0, %v1564
    %v1566 = vpop.f32.mrf.mxu0
    %v1567 = vadd.f32 0.0, %v1566
    %1568 = vmatmul.bf16.gmra.mxu0 %v1137
    %v1569 = vpop.f32.mrf.mxu0
    %v1570 = vadd.f32 0.0, %v1569
    %v1571 = vpop.f32.mrf.mxu0
    %v1572 = vadd.f32 0.0, %v1571
    %1573 = vmatmul.bf16.gmra.mxu0 %v1140
    %v1574 = vpop.f32.mrf.mxu0
    %v1575 = vadd.f32 0.0, %v1574
    %v1576 = vpop.f32.mrf.mxu0
    %v1577 = vadd.f32 0.0, %v1576
    %1578 = vmatmul.bf16.gmra.mxu0 %v1143
    %v1579 = vpop.f32.mrf.mxu0
    %v1580 = vadd.f32 0.0, %v1579
    %v1581 = vpop.f32.mrf.mxu0
    %v1582 = vadd.f32 0.0, %v1581
    %1583 = vmatmul.bf16.gmra.mxu0 %v1146
    %v1584 = vpop.f32.mrf.mxu0
    %v1585 = vadd.f32 0.0, %v1584
    %v1586 = vpop.f32.mrf.mxu0
    %v1587 = vadd.f32 0.0, %v1586
    %1588 = vmatmul.bf16.gmra.mxu0 %v1149
    %v1589 = vpop.f32.mrf.mxu0
    %v1590 = vadd.f32 0.0, %v1589
    %v1591 = vpop.f32.mrf.mxu0
    %v1592 = vadd.f32 0.0, %v1591
    %1593 = vmatmul.bf16.gmra.mxu0 %v1152
    %v1594 = vpop.f32.mrf.mxu0
    %v1595 = vadd.f32 0.0, %v1594
    %v1596 = vpop.f32.mrf.mxu0
    %v1597 = vadd.f32 0.0, %v1596
    %1598 = vmatmul.bf16.gmra.mxu0 %v1155
    %v1599 = vpop.f32.mrf.mxu0
    %v1600 = vadd.f32 0.0, %v1599
    %v1601 = vpop.f32.mrf.mxu0
    %v1602 = vadd.f32 0.0, %v1601
    %1603 = vmatmul.bf16.gmra.mxu0 %v1158
    %v1604 = vpop.f32.mrf.mxu0
    %v1605 = vadd.f32 0.0, %v1604
    %v1606 = vpop.f32.mrf.mxu0
    %v1607 = vadd.f32 0.0, %v1606
    %1608 = vmatmul.bf16.gmra.mxu0 %v1161
    %v1609 = vpop.f32.mrf.mxu0
    %v1610 = vadd.f32 0.0, %v1609
    %v1611 = vpop.f32.mrf.mxu0
    %v1612 = vadd.f32 0.0, %v1611
    %1613 = vmatmul.bf16.gmra.mxu0 %v1164
    %v1614 = vpop.f32.mrf.mxu0
    %v1615 = vadd.f32 0.0, %v1614
    %v1616 = vpop.f32.mrf.mxu0
    %v1617 = vadd.f32 0.0, %v1616
    %1618 = vmatmul.bf16.gmra.mxu0 %v1167
    %v1619 = vpop.f32.mrf.mxu0
    %v1620 = vadd.f32 0.0, %v1619
    %v1621 = vpop.f32.mrf.mxu0
    %v1622 = vadd.f32 0.0, %v1621
    %1623 = vmatmul.bf16.gmra.mxu0 %v1170
    %v1624 = vpop.f32.mrf.mxu0
    %v1625 = vadd.f32 0.0, %v1624
    %v1626 = vpop.f32.mrf.mxu0
    %v1627 = vadd.f32 0.0, %v1626
    %1628 = vmatmul.bf16.gmra.mxu0 %v1173
    %v1629 = vpop.f32.mrf.mxu0
    %v1630 = vadd.f32 0.0, %v1629
    %v1631 = vpop.f32.mrf.mxu0
    %v1632 = vadd.f32 0.0, %v1631
    %1633 = vmatmul.bf16.gmra.mxu0 %v1176
    %v1634 = vpop.f32.mrf.mxu0
    %v1635 = vadd.f32 0.0, %v1634
    %v1636 = vpop.f32.mrf.mxu0
    %v1637 = vadd.f32 0.0, %v1636
    %1638 = vmatmul.bf16.gmra.mxu0 %v1179
    %v1639 = vpop.f32.mrf.mxu0
    %v1640 = vadd.f32 0.0, %v1639
    %v1641 = vpop.f32.mrf.mxu0
    %v1642 = vadd.f32 0.0, %v1641
    %1643 = vmatmul.bf16.gmra.mxu0 %v1182
    %v1644 = vpop.f32.mrf.mxu0
    %v1645 = vadd.f32 0.0, %v1644
    %v1646 = vpop.f32.mrf.mxu0
    %v1647 = vadd.f32 0.0, %v1646
    %1648 = vmatmul.bf16.gmra.mxu0 %v1185
    %v1649 = vpop.f32.mrf.mxu0
    %v1650 = vadd.f32 0.0, %v1649
    %v1651 = vpop.f32.mrf.mxu0
    %v1652 = vadd.f32 0.0, %v1651
    %1653 = vmatmul.bf16.gmra.mxu0 %v1188
    %v1654 = vpop.f32.mrf.mxu0
    %v1655 = vadd.f32 0.0, %v1654
    %v1656 = vpop.f32.mrf.mxu0
    %v1657 = vadd.f32 0.0, %v1656
    %1658 = vmatmul.bf16.gmra.mxu0 %v1191
    %v1659 = vpop.f32.mrf.mxu0
    %v1660 = vadd.f32 0.0, %v1659
    %v1661 = vpop.f32.mrf.mxu0
    %v1662 = vadd.f32 0.0, %v1661
    %1663 = vmatmul.bf16.gmra.mxu0 %v1194
    %v1664 = vpop.f32.mrf.mxu0
    %v1665 = vadd.f32 0.0, %v1664
    %v1666 = vpop.f32.mrf.mxu0
    %v1667 = vadd.f32 0.0, %v1666
    %1668 = vmatmul.bf16.gmra.mxu0 %v1197
    %v1669 = vpop.f32.mrf.mxu0
    %v1670 = vadd.f32 0.0, %v1669
    %v1671 = vpop.f32.mrf.mxu0
    %v1672 = vadd.f32 0.0, %v1671
    %1673 = vmatmul.bf16.gmra.mxu0 %v1200
    %v1674 = vpop.f32.mrf.mxu0
    %v1675 = vadd.f32 0.0, %v1674
    %v1676 = vpop.f32.mrf.mxu0
    %v1677 = vadd.f32 0.0, %v1676
    %1678 = vmatmul.bf16.gmra.mxu0 %v1203
    %v1679 = vpop.f32.mrf.mxu0
    %v1680 = vadd.f32 0.0, %v1679
    %v1681 = vpop.f32.mrf.mxu0
    %v1682 = vadd.f32 0.0, %v1681
    %1683 = vmatmul.bf16.gmra.mxu0 %v1206
    %v1684 = vpop.f32.mrf.mxu0
    %v1685 = vadd.f32 0.0, %v1684
    %v1686 = vpop.f32.mrf.mxu0
    %v1687 = vadd.f32 0.0, %v1686
    %1688 = vmatmul.bf16.gmra.mxu0 %v1209
    %v1689 = vpop.f32.mrf.mxu0
    %v1690 = vadd.f32 0.0, %v1689
    %v1691 = vpop.f32.mrf.mxu0
    %v1692 = vadd.f32 0.0, %v1691
    %1693 = vmatmul.bf16.gmra.mxu0 %v1212
    %v1694 = vpop.f32.mrf.mxu0
    %v1695 = vadd.f32 0.0, %v1694
    %v1696 = vpop.f32.mrf.mxu0
    %v1697 = vadd.f32 0.0, %v1696
    %1698 = vmatmul.bf16.gmra.mxu0 %v1215
    %v1699 = vpop.f32.mrf.mxu0
    %v1700 = vadd.f32 0.0, %v1699
    %v1701 = vpop.f32.mrf.mxu0
    %v1702 = vadd.f32 0.0, %v1701
    %1703 = vmatmul.bf16.gmra.mxu0 %v1218
    %v1704 = vpop.f32.mrf.mxu0
    %v1705 = vadd.f32 0.0, %v1704
    %v1706 = vpop.f32.mrf.mxu0
    %v1707 = vadd.f32 0.0, %v1706
    %1708 = vmatmul.bf16.gmra.mxu0 %v1221
    %v1709 = vpop.f32.mrf.mxu0
    %v1710 = vadd.f32 0.0, %v1709
    %v1711 = vpop.f32.mrf.mxu0
    %v1712 = vadd.f32 0.0, %v1711
    %1713 = vmatmul.bf16.gmra.mxu0 %v1224
    %v1714 = vpop.f32.mrf.mxu0
    %v1715 = vadd.f32 0.0, %v1714
    %v1716 = vpop.f32.mrf.mxu0
    %v1717 = vadd.f32 0.0, %v1716
    %1718 = vmatmul.bf16.gmra.mxu0 %v1227
    %v1719 = vpop.f32.mrf.mxu0
    %v1720 = vadd.f32 0.0, %v1719
    %v1721 = vpop.f32.mrf.mxu0
    %v1722 = vadd.f32 0.0, %v1721
    %1723 = vmatmul.bf16.gmra.mxu0 %v1230
    %v1724 = vpop.f32.mrf.mxu0
    %v1725 = vadd.f32 0.0, %v1724
    %v1726 = vpop.f32.mrf.mxu0
    %v1727 = vadd.f32 0.0, %v1726
    %1728 = vmatmul.bf16.gmra.mxu0 %v1233
    %v1729 = vpop.f32.mrf.mxu0
    %v1730 = vadd.f32 0.0, %v1729
    %v1731 = vpop.f32.mrf.mxu0
    %v1732 = vadd.f32 0.0, %v1731
    %1733 = vmatmul.bf16.gmra.mxu0 %v1236
    %v1734 = vpop.f32.mrf.mxu0
    %v1735 = vadd.f32 0.0, %v1734
    %v1736 = vpop.f32.mrf.mxu0
    %v1737 = vadd.f32 0.0, %v1736
    %1738 = vmatmul.bf16.gmra.mxu0 %v1239
    %v1739 = vpop.f32.mrf.mxu0
    %v1740 = vadd.f32 0.0, %v1739
    %v1741 = vpop.f32.mrf.mxu0
    %v1742 = vadd.f32 0.0, %v1741
    %1743 = vmatmul.bf16.gmra.mxu0 %v1242
    %v1744 = vpop.f32.mrf.mxu0
    %v1745 = vadd.f32 0.0, %v1744
    %v1746 = vpop.f32.mrf.mxu0
    %v1747 = vadd.f32 0.0, %v1746
    %1748 = vmatmul.bf16.gmra.mxu0 %v1245
    %v1749 = vpop.f32.mrf.mxu0
    %v1750 = vadd.f32 0.0, %v1749
    %v1751 = vpop.f32.mrf.mxu0
    %v1752 = vadd.f32 0.0, %v1751
    %1753 = vmatmul.bf16.gmra.mxu0 %v1248
    %v1754 = vpop.f32.mrf.mxu0
    %v1755 = vadd.f32 0.0, %v1754
    %v1756 = vpop.f32.mrf.mxu0
    %v1757 = vadd.f32 0.0, %v1756
    %1758 = vmatmul.bf16.gmra.mxu0 %v1251
    %v1759 = vpop.f32.mrf.mxu0
    %v1760 = vadd.f32 0.0, %v1759
    %v1761 = vpop.f32.mrf.mxu0
    %v1762 = vadd.f32 0.0, %v1761
    %1763 = vdwg.mxu0
    %1764 = vmatpush.bf16.msra.mxu0 %v601
    %1765 = vmatpush.bf16.msra.mxu0 %v600
    %1766 = vmatpush.bf16.msra.mxu0 %v599
    %1767 = vmatpush.bf16.msra.mxu0 %v598
    %1768 = vmatpush.bf16.msra.mxu0 %v597
    %1769 = vmatpush.bf16.msra.mxu0 %v596
    %1770 = vmatpush.bf16.msra.mxu0 %v595
    %1771 = vmatpush.bf16.msra.mxu0 %v594
    %1772 = vmatmul.bf16.gmra.mxu0 %v1105
    %v1773 = vpop.f32.mrf.mxu0
    %v1774 = vadd.f32 %v1515, %v1773
    %v1775 = vpop.f32.mrf.mxu0
    %v1776 = vadd.f32 %v1517, %v1775
    %1777 = vmatmul.bf16.gmra.mxu0 %v1108
    %v1778 = vpop.f32.mrf.mxu0
    %v1779 = vadd.f32 %v1520, %v1778
    %v1780 = vpop.f32.mrf.mxu0
    %v1781 = vadd.f32 %v1522, %v1780
    %1782 = vmatmul.bf16.gmra.mxu0 %v1111
    %v1783 = vpop.f32.mrf.mxu0
    %v1784 = vadd.f32 %v1525, %v1783
    %v1785 = vpop.f32.mrf.mxu0
    %v1786 = vadd.f32 %v1527, %v1785
    %1787 = vmatmul.bf16.gmra.mxu0 %v1114
    %v1788 = vpop.f32.mrf.mxu0
    %v1789 = vadd.f32 %v1530, %v1788
    %v1790 = vpop.f32.mrf.mxu0
    %v1791 = vadd.f32 %v1532, %v1790
    %1792 = vmatmul.bf16.gmra.mxu0 %v1117
    %v1793 = vpop.f32.mrf.mxu0
    %v1794 = vadd.f32 %v1535, %v1793
    %v1795 = vpop.f32.mrf.mxu0
    %v1796 = vadd.f32 %v1537, %v1795
    %1797 = vmatmul.bf16.gmra.mxu0 %v1120
    %v1798 = vpop.f32.mrf.mxu0
    %v1799 = vadd.f32 %v1540, %v1798
    %v1800 = vpop.f32.mrf.mxu0
    %v1801 = vadd.f32 %v1542, %v1800
    %1802 = vmatmul.bf16.gmra.mxu0 %v1123
    %v1803 = vpop.f32.mrf.mxu0
    %v1804 = vadd.f32 %v1545, %v1803
    %v1805 = vpop.f32.mrf.mxu0
    %v1806 = vadd.f32 %v1547, %v1805
    %1807 = vmatmul.bf16.gmra.mxu0 %v1126
    %v1808 = vpop.f32.mrf.mxu0
    %v1809 = vadd.f32 %v1550, %v1808
    %v1810 = vpop.f32.mrf.mxu0
    %v1811 = vadd.f32 %v1552, %v1810
    %1812 = vmatmul.bf16.gmra.mxu0 %v1129
    %v1813 = vpop.f32.mrf.mxu0
    %v1814 = vadd.f32 %v1555, %v1813
    %v1815 = vpop.f32.mrf.mxu0
    %v1816 = vadd.f32 %v1557, %v1815
    %1817 = vmatmul.bf16.gmra.mxu0 %v1132
    %v1818 = vpop.f32.mrf.mxu0
    %v1819 = vadd.f32 %v1560, %v1818
    %v1820 = vpop.f32.mrf.mxu0
    %v1821 = vadd.f32 %v1562, %v1820
    %1822 = vmatmul.bf16.gmra.mxu0 %v1135
    %v1823 = vpop.f32.mrf.mxu0
    %v1824 = vadd.f32 %v1565, %v1823
    %v1825 = vpop.f32.mrf.mxu0
    %v1826 = vadd.f32 %v1567, %v1825
    %1827 = vmatmul.bf16.gmra.mxu0 %v1138
    %v1828 = vpop.f32.mrf.mxu0
    %v1829 = vadd.f32 %v1570, %v1828
    %v1830 = vpop.f32.mrf.mxu0
    %v1831 = vadd.f32 %v1572, %v1830
    %1832 = vmatmul.bf16.gmra.mxu0 %v1141
    %v1833 = vpop.f32.mrf.mxu0
    %v1834 = vadd.f32 %v1575, %v1833
    %v1835 = vpop.f32.mrf.mxu0
    %v1836 = vadd.f32 %v1577, %v1835
    %1837 = vmatmul.bf16.gmra.mxu0 %v1144
    %v1838 = vpop.f32.mrf.mxu0
    %v1839 = vadd.f32 %v1580, %v1838
    %v1840 = vpop.f32.mrf.mxu0
    %v1841 = vadd.f32 %v1582, %v1840
    %1842 = vmatmul.bf16.gmra.mxu0 %v1147
    %v1843 = vpop.f32.mrf.mxu0
    %v1844 = vadd.f32 %v1585, %v1843
    %v1845 = vpop.f32.mrf.mxu0
    %v1846 = vadd.f32 %v1587, %v1845
    %1847 = vmatmul.bf16.gmra.mxu0 %v1150
    %v1848 = vpop.f32.mrf.mxu0
    %v1849 = vadd.f32 %v1590, %v1848
    %v1850 = vpop.f32.mrf.mxu0
    %v1851 = vadd.f32 %v1592, %v1850
    %1852 = vmatmul.bf16.gmra.mxu0 %v1153
    %v1853 = vpop.f32.mrf.mxu0
    %v1854 = vadd.f32 %v1595, %v1853
    %v1855 = vpop.f32.mrf.mxu0
    %v1856 = vadd.f32 %v1597, %v1855
    %1857 = vmatmul.bf16.gmra.mxu0 %v1156
    %v1858 = vpop.f32.mrf.mxu0
    %v1859 = vadd.f32 %v1600, %v1858
    %v1860 = vpop.f32.mrf.mxu0
    %v1861 = vadd.f32 %v1602, %v1860
    %1862 = vmatmul.bf16.gmra.mxu0 %v1159
    %v1863 = vpop.f32.mrf.mxu0
    %v1864 = vadd.f32 %v1605, %v1863
    %v1865 = vpop.f32.mrf.mxu0
    %v1866 = vadd.f32 %v1607, %v1865
    %1867 = vmatmul.bf16.gmra.mxu0 %v1162
    %v1868 = vpop.f32.mrf.mxu0
    %v1869 = vadd.f32 %v1610, %v1868
    %v1870 = vpop.f32.mrf.mxu0
    %v1871 = vadd.f32 %v1612, %v1870
    %1872 = vmatmul.bf16.gmra.mxu0 %v1165
    %v1873 = vpop.f32.mrf.mxu0
    %v1874 = vadd.f32 %v1615, %v1873
    %v1875 = vpop.f32.mrf.mxu0
    %v1876 = vadd.f32 %v1617, %v1875
    %1877 = vmatmul.bf16.gmra.mxu0 %v1168
    %v1878 = vpop.f32.mrf.mxu0
    %v1879 = vadd.f32 %v1620, %v1878
    %v1880 = vpop.f32.mrf.mxu0
    %v1881 = vadd.f32 %v1622, %v1880
    %1882 = vmatmul.bf16.gmra.mxu0 %v1171
    %v1883 = vpop.f32.mrf.mxu0
    %v1884 = vadd.f32 %v1625, %v1883
    %v1885 = vpop.f32.mrf.mxu0
    %v1886 = vadd.f32 %v1627, %v1885
    %1887 = vmatmul.bf16.gmra.mxu0 %v1174
    %v1888 = vpop.f32.mrf.mxu0
    %v1889 = vadd.f32 %v1630, %v1888
    %v1890 = vpop.f32.mrf.mxu0
    %v1891 = vadd.f32 %v1632, %v1890
    %1892 = vmatmul.bf16.gmra.mxu0 %v1177
    %v1893 = vpop.f32.mrf.mxu0
    %v1894 = vadd.f32 %v1635, %v1893
    %v1895 = vpop.f32.mrf.mxu0
    %v1896 = vadd.f32 %v1637, %v1895
    %1897 = vmatmul.bf16.gmra.mxu0 %v1180
    %v1898 = vpop.f32.mrf.mxu0
    %v1899 = vadd.f32 %v1640, %v1898
    %v1900 = vpop.f32.mrf.mxu0
    %v1901 = vadd.f32 %v1642, %v1900
    %1902 = vmatmul.bf16.gmra.mxu0 %v1183
    %v1903 = vpop.f32.mrf.mxu0
    %v1904 = vadd.f32 %v1645, %v1903
    %v1905 = vpop.f32.mrf.mxu0
    %v1906 = vadd.f32 %v1647, %v1905
    %1907 = vmatmul.bf16.gmra.mxu0 %v1186
    %v1908 = vpop.f32.mrf.mxu0
    %v1909 = vadd.f32 %v1650, %v1908
    %v1910 = vpop.f32.mrf.mxu0
    %v1911 = vadd.f32 %v1652, %v1910
    %1912 = vmatmul.bf16.gmra.mxu0 %v1189
    %v1913 = vpop.f32.mrf.mxu0
    %v1914 = vadd.f32 %v1655, %v1913
    %v1915 = vpop.f32.mrf.mxu0
    %v1916 = vadd.f32 %v1657, %v1915
    %1917 = vmatmul.bf16.gmra.mxu0 %v1192
    %v1918 = vpop.f32.mrf.mxu0
    %v1919 = vadd.f32 %v1660, %v1918
    %v1920 = vpop.f32.mrf.mxu0
    %v1921 = vadd.f32 %v1662, %v1920
    %1922 = vmatmul.bf16.gmra.mxu0 %v1195
    %v1923 = vpop.f32.mrf.mxu0
    %v1924 = vadd.f32 %v1665, %v1923
    %v1925 = vpop.f32.mrf.mxu0
    %v1926 = vadd.f32 %v1667, %v1925
    %1927 = vmatmul.bf16.gmra.mxu0 %v1198
    %v1928 = vpop.f32.mrf.mxu0
    %v1929 = vadd.f32 %v1670, %v1928
    %v1930 = vpop.f32.mrf.mxu0
    %v1931 = vadd.f32 %v1672, %v1930
    %1932 = vmatmul.bf16.gmra.mxu0 %v1201
    %v1933 = vpop.f32.mrf.mxu0
    %v1934 = vadd.f32 %v1675, %v1933
    %v1935 = vpop.f32.mrf.mxu0
    %v1936 = vadd.f32 %v1677, %v1935
    %1937 = vmatmul.bf16.gmra.mxu0 %v1204
    %v1938 = vpop.f32.mrf.mxu0
    %v1939 = vadd.f32 %v1680, %v1938
    %v1940 = vpop.f32.mrf.mxu0
    %v1941 = vadd.f32 %v1682, %v1940
    %1942 = vmatmul.bf16.gmra.mxu0 %v1207
    %v1943 = vpop.f32.mrf.mxu0
    %v1944 = vadd.f32 %v1685, %v1943
    %v1945 = vpop.f32.mrf.mxu0
    %v1946 = vadd.f32 %v1687, %v1945
    %1947 = vmatmul.bf16.gmra.mxu0 %v1210
    %v1948 = vpop.f32.mrf.mxu0
    %v1949 = vadd.f32 %v1690, %v1948
    %v1950 = vpop.f32.mrf.mxu0
    %v1951 = vadd.f32 %v1692, %v1950
    %1952 = vmatmul.bf16.gmra.mxu0 %v1213
    %v1953 = vpop.f32.mrf.mxu0
    %v1954 = vadd.f32 %v1695, %v1953
    %v1955 = vpop.f32.mrf.mxu0
    %v1956 = vadd.f32 %v1697, %v1955
    %1957 = vmatmul.bf16.gmra.mxu0 %v1216
    %v1958 = vpop.f32.mrf.mxu0
    %v1959 = vadd.f32 %v1700, %v1958
    %v1960 = vpop.f32.mrf.mxu0
    %v1961 = vadd.f32 %v1702, %v1960
    %1962 = vmatmul.bf16.gmra.mxu0 %v1219
    %v1963 = vpop.f32.mrf.mxu0
    %v1964 = vadd.f32 %v1705, %v1963
    %v1965 = vpop.f32.mrf.mxu0
    %v1966 = vadd.f32 %v1707, %v1965
    %1967 = vmatmul.bf16.gmra.mxu0 %v1222
    %v1968 = vpop.f32.mrf.mxu0
    %v1969 = vadd.f32 %v1710, %v1968
    %v1970 = vpop.f32.mrf.mxu0
    %v1971 = vadd.f32 %v1712, %v1970
    %1972 = vmatmul.bf16.gmra.mxu0 %v1225
    %v1973 = vpop.f32.mrf.mxu0
    %v1974 = vadd.f32 %v1715, %v1973
    %v1975 = vpop.f32.mrf.mxu0
    %v1976 = vadd.f32 %v1717, %v1975
    %1977 = vmatmul.bf16.gmra.mxu0 %v1228
    %v1978 = vpop.f32.mrf.mxu0
    %v1979 = vadd.f32 %v1720, %v1978
    %v1980 = vpop.f32.mrf.mxu0
    %v1981 = vadd.f32 %v1722, %v1980
    %1982 = vmatmul.bf16.gmra.mxu0 %v1231
    %v1983 = vpop.f32.mrf.mxu0
    %v1984 = vadd.f32 %v1725, %v1983
    %v1985 = vpop.f32.mrf.mxu0
    %v1986 = vadd.f32 %v1727, %v1985
    %1987 = vmatmul.bf16.gmra.mxu0 %v1234
    %v1988 = vpop.f32.mrf.mxu0
    %v1989 = vadd.f32 %v1730, %v1988
    %v1990 = vpop.f32.mrf.mxu0
    %v1991 = vadd.f32 %v1732, %v1990
    %1992 = vmatmul.bf16.gmra.mxu0 %v1237
    %v1993 = vpop.f32.mrf.mxu0
    %v1994 = vadd.f32 %v1735, %v1993
    %v1995 = vpop.f32.mrf.mxu0
    %v1996 = vadd.f32 %v1737, %v1995
    %1997 = vmatmul.bf16.gmra.mxu0 %v1240
    %v1998 = vpop.f32.mrf.mxu0
    %v1999 = vadd.f32 %v1740, %v1998
    %v2000 = vpop.f32.mrf.mxu0
    %v2001 = vadd.f32 %v1742, %v2000
    %2002 = vmatmul.bf16.gmra.mxu0 %v1243
    %v2003 = vpop.f32.mrf.mxu0
    %v2004 = vadd.f32 %v1745, %v2003
    %v2005 = vpop.f32.mrf.mxu0
    %v2006 = vadd.f32 %v1747, %v2005
    %2007 = vmatmul.bf16.gmra.mxu0 %v1246
    %v2008 = vpop.f32.mrf.mxu0
    %v2009 = vadd.f32 %v1750, %v2008
    %v2010 = vpop.f32.mrf.mxu0
    %v2011 = vadd.f32 %v1752, %v2010
    %2012 = vmatmul.bf16.gmra.mxu0 %v1249
    %v2013 = vpop.f32.mrf.mxu0
    %v2014 = vadd.f32 %v1755, %v2013
    %v2015 = vpop.f32.mrf.mxu0
    %v2016 = vadd.f32 %v1757, %v2015
    %2017 = vmatmul.bf16.gmra.mxu0 %v1252
    %v2018 = vpop.f32.mrf.mxu0
    %v2019 = vadd.f32 %v1760, %v2018
    %v2020 = vpop.f32.mrf.mxu0
    %v2021 = vadd.f32 %v1762, %v2020
    %2022 = vdwg.mxu0
    %2023 = vmatpush.bf16.msra.mxu0 0
    %2024 = vmatpush.bf16.msra.mxu0 0
    %2025 = vmatpush.bf16.msra.mxu0 0
    %2026 = vmatpush.bf16.msra.mxu0 0
    %2027 = vmatpush.bf16.msra.mxu0 0
    %2028 = vmatpush.bf16.msra.mxu0 0
    %2029 = vmatpush.bf16.msra.mxu0 %v603
    %2030 = vmatpush.bf16.msra.mxu0 %v602
    %2031 = vmatmul.bf16.gmra.mxu0 %v1356
    %v2032 = vpop.f32.mrf.mxu0
    %v2033 = vadd.f32 %v1774, %v2032
    %v2034 = vpop.f32.mrf.mxu0
    %v2035 = vadd.f32 %v1776, %v2034
    %2036 = vmatmul.bf16.gmra.mxu0 %v1359
    %v2037 = vpop.f32.mrf.mxu0
    %v2038 = vadd.f32 %v1779, %v2037
    %v2039 = vpop.f32.mrf.mxu0
    %v2040 = vadd.f32 %v1781, %v2039
    %2041 = vmatmul.bf16.gmra.mxu0 %v1362
    %v2042 = vpop.f32.mrf.mxu0
    %v2043 = vadd.f32 %v1784, %v2042
    %v2044 = vpop.f32.mrf.mxu0
    %v2045 = vadd.f32 %v1786, %v2044
    %2046 = vmatmul.bf16.gmra.mxu0 %v1365
    %v2047 = vpop.f32.mrf.mxu0
    %v2048 = vadd.f32 %v1789, %v2047
    %v2049 = vpop.f32.mrf.mxu0
    %v2050 = vadd.f32 %v1791, %v2049
    %2051 = vmatmul.bf16.gmra.mxu0 %v1368
    %v2052 = vpop.f32.mrf.mxu0
    %v2053 = vadd.f32 %v1794, %v2052
    %v2054 = vpop.f32.mrf.mxu0
    %v2055 = vadd.f32 %v1796, %v2054
    %2056 = vmatmul.bf16.gmra.mxu0 %v1371
    %v2057 = vpop.f32.mrf.mxu0
    %v2058 = vadd.f32 %v1799, %v2057
    %v2059 = vpop.f32.mrf.mxu0
    %v2060 = vadd.f32 %v1801, %v2059
    %2061 = vmatmul.bf16.gmra.mxu0 %v1374
    %v2062 = vpop.f32.mrf.mxu0
    %v2063 = vadd.f32 %v1804, %v2062
    %v2064 = vpop.f32.mrf.mxu0
    %v2065 = vadd.f32 %v1806, %v2064
    %2066 = vmatmul.bf16.gmra.mxu0 %v1377
    %v2067 = vpop.f32.mrf.mxu0
    %v2068 = vadd.f32 %v1809, %v2067
    %v2069 = vpop.f32.mrf.mxu0
    %v2070 = vadd.f32 %v1811, %v2069
    %2071 = vmatmul.bf16.gmra.mxu0 %v1380
    %v2072 = vpop.f32.mrf.mxu0
    %v2073 = vadd.f32 %v1814, %v2072
    %v2074 = vpop.f32.mrf.mxu0
    %v2075 = vadd.f32 %v1816, %v2074
    %2076 = vmatmul.bf16.gmra.mxu0 %v1383
    %v2077 = vpop.f32.mrf.mxu0
    %v2078 = vadd.f32 %v1819, %v2077
    %v2079 = vpop.f32.mrf.mxu0
    %v2080 = vadd.f32 %v1821, %v2079
    %2081 = vmatmul.bf16.gmra.mxu0 %v1386
    %v2082 = vpop.f32.mrf.mxu0
    %v2083 = vadd.f32 %v1824, %v2082
    %v2084 = vpop.f32.mrf.mxu0
    %v2085 = vadd.f32 %v1826, %v2084
    %2086 = vmatmul.bf16.gmra.mxu0 %v1389
    %v2087 = vpop.f32.mrf.mxu0
    %v2088 = vadd.f32 %v1829, %v2087
    %v2089 = vpop.f32.mrf.mxu0
    %v2090 = vadd.f32 %v1831, %v2089
    %2091 = vmatmul.bf16.gmra.mxu0 %v1392
    %v2092 = vpop.f32.mrf.mxu0
    %v2093 = vadd.f32 %v1834, %v2092
    %v2094 = vpop.f32.mrf.mxu0
    %v2095 = vadd.f32 %v1836, %v2094
    %2096 = vmatmul.bf16.gmra.mxu0 %v1395
    %v2097 = vpop.f32.mrf.mxu0
    %v2098 = vadd.f32 %v1839, %v2097
    %v2099 = vpop.f32.mrf.mxu0
    %v2100 = vadd.f32 %v1841, %v2099
    %2101 = vmatmul.bf16.gmra.mxu0 %v1398
    %v2102 = vpop.f32.mrf.mxu0
    %v2103 = vadd.f32 %v1844, %v2102
    %v2104 = vpop.f32.mrf.mxu0
    %v2105 = vadd.f32 %v1846, %v2104
    %2106 = vmatmul.bf16.gmra.mxu0 %v1401
    %v2107 = vpop.f32.mrf.mxu0
    %v2108 = vadd.f32 %v1849, %v2107
    %v2109 = vpop.f32.mrf.mxu0
    %v2110 = vadd.f32 %v1851, %v2109
    %2111 = vmatmul.bf16.gmra.mxu0 %v1404
    %v2112 = vpop.f32.mrf.mxu0
    %v2113 = vadd.f32 %v1854, %v2112
    %v2114 = vpop.f32.mrf.mxu0
    %v2115 = vadd.f32 %v1856, %v2114
    %2116 = vmatmul.bf16.gmra.mxu0 %v1407
    %v2117 = vpop.f32.mrf.mxu0
    %v2118 = vadd.f32 %v1859, %v2117
    %v2119 = vpop.f32.mrf.mxu0
    %v2120 = vadd.f32 %v1861, %v2119
    %2121 = vmatmul.bf16.gmra.mxu0 %v1410
    %v2122 = vpop.f32.mrf.mxu0
    %v2123 = vadd.f32 %v1864, %v2122
    %v2124 = vpop.f32.mrf.mxu0
    %v2125 = vadd.f32 %v1866, %v2124
    %2126 = vmatmul.bf16.gmra.mxu0 %v1413
    %v2127 = vpop.f32.mrf.mxu0
    %v2128 = vadd.f32 %v1869, %v2127
    %v2129 = vpop.f32.mrf.mxu0
    %v2130 = vadd.f32 %v1871, %v2129
    %2131 = vmatmul.bf16.gmra.mxu0 %v1416
    %v2132 = vpop.f32.mrf.mxu0
    %v2133 = vadd.f32 %v1874, %v2132
    %v2134 = vpop.f32.mrf.mxu0
    %v2135 = vadd.f32 %v1876, %v2134
    %2136 = vmatmul.bf16.gmra.mxu0 %v1419
    %v2137 = vpop.f32.mrf.mxu0
    %v2138 = vadd.f32 %v1879, %v2137
    %v2139 = vpop.f32.mrf.mxu0
    %v2140 = vadd.f32 %v1881, %v2139
    %2141 = vmatmul.bf16.gmra.mxu0 %v1422
    %v2142 = vpop.f32.mrf.mxu0
    %v2143 = vadd.f32 %v1884, %v2142
    %v2144 = vpop.f32.mrf.mxu0
    %v2145 = vadd.f32 %v1886, %v2144
    %2146 = vmatmul.bf16.gmra.mxu0 %v1425
    %v2147 = vpop.f32.mrf.mxu0
    %v2148 = vadd.f32 %v1889, %v2147
    %v2149 = vpop.f32.mrf.mxu0
    %v2150 = vadd.f32 %v1891, %v2149
    %2151 = vmatmul.bf16.gmra.mxu0 %v1428
    %v2152 = vpop.f32.mrf.mxu0
    %v2153 = vadd.f32 %v1894, %v2152
    %v2154 = vpop.f32.mrf.mxu0
    %v2155 = vadd.f32 %v1896, %v2154
    %2156 = vmatmul.bf16.gmra.mxu0 %v1431
    %v2157 = vpop.f32.mrf.mxu0
    %v2158 = vadd.f32 %v1899, %v2157
    %v2159 = vpop.f32.mrf.mxu0
    %v2160 = vadd.f32 %v1901, %v2159
    %2161 = vmatmul.bf16.gmra.mxu0 %v1434
    %v2162 = vpop.f32.mrf.mxu0
    %v2163 = vadd.f32 %v1904, %v2162
    %v2164 = vpop.f32.mrf.mxu0
    %v2165 = vadd.f32 %v1906, %v2164
    %2166 = vmatmul.bf16.gmra.mxu0 %v1437
    %v2167 = vpop.f32.mrf.mxu0
    %v2168 = vadd.f32 %v1909, %v2167
    %v2169 = vpop.f32.mrf.mxu0
    %v2170 = vadd.f32 %v1911, %v2169
    %2171 = vmatmul.bf16.gmra.mxu0 %v1440
    %v2172 = vpop.f32.mrf.mxu0
    %v2173 = vadd.f32 %v1914, %v2172
    %v2174 = vpop.f32.mrf.mxu0
    %v2175 = vadd.f32 %v1916, %v2174
    %2176 = vmatmul.bf16.gmra.mxu0 %v1443
    %v2177 = vpop.f32.mrf.mxu0
    %v2178 = vadd.f32 %v1919, %v2177
    %v2179 = vpop.f32.mrf.mxu0
    %v2180 = vadd.f32 %v1921, %v2179
    %2181 = vmatmul.bf16.gmra.mxu0 %v1446
    %v2182 = vpop.f32.mrf.mxu0
    %v2183 = vadd.f32 %v1924, %v2182
    %v2184 = vpop.f32.mrf.mxu0
    %v2185 = vadd.f32 %v1926, %v2184
    %2186 = vmatmul.bf16.gmra.mxu0 %v1449
    %v2187 = vpop.f32.mrf.mxu0
    %v2188 = vadd.f32 %v1929, %v2187
    %v2189 = vpop.f32.mrf.mxu0
    %v2190 = vadd.f32 %v1931, %v2189
    %2191 = vmatmul.bf16.gmra.mxu0 %v1452
    %v2192 = vpop.f32.mrf.mxu0
    %v2193 = vadd.f32 %v1934, %v2192
    %v2194 = vpop.f32.mrf.mxu0
    %v2195 = vadd.f32 %v1936, %v2194
    %2196 = vmatmul.bf16.gmra.mxu0 %v1455
    %v2197 = vpop.f32.mrf.mxu0
    %v2198 = vadd.f32 %v1939, %v2197
    %v2199 = vpop.f32.mrf.mxu0
    %v2200 = vadd.f32 %v1941, %v2199
    %2201 = vmatmul.bf16.gmra.mxu0 %v1458
    %v2202 = vpop.f32.mrf.mxu0
    %v2203 = vadd.f32 %v1944, %v2202
    %v2204 = vpop.f32.mrf.mxu0
    %v2205 = vadd.f32 %v1946, %v2204
    %2206 = vmatmul.bf16.gmra.mxu0 %v1461
    %v2207 = vpop.f32.mrf.mxu0
    %v2208 = vadd.f32 %v1949, %v2207
    %v2209 = vpop.f32.mrf.mxu0
    %v2210 = vadd.f32 %v1951, %v2209
    %2211 = vmatmul.bf16.gmra.mxu0 %v1464
    %v2212 = vpop.f32.mrf.mxu0
    %v2213 = vadd.f32 %v1954, %v2212
    %v2214 = vpop.f32.mrf.mxu0
    %v2215 = vadd.f32 %v1956, %v2214
    %2216 = vmatmul.bf16.gmra.mxu0 %v1467
    %v2217 = vpop.f32.mrf.mxu0
    %v2218 = vadd.f32 %v1959, %v2217
    %v2219 = vpop.f32.mrf.mxu0
    %v2220 = vadd.f32 %v1961, %v2219
    %2221 = vmatmul.bf16.gmra.mxu0 %v1470
    %v2222 = vpop.f32.mrf.mxu0
    %v2223 = vadd.f32 %v1964, %v2222
    %v2224 = vpop.f32.mrf.mxu0
    %v2225 = vadd.f32 %v1966, %v2224
    %2226 = vmatmul.bf16.gmra.mxu0 %v1473
    %v2227 = vpop.f32.mrf.mxu0
    %v2228 = vadd.f32 %v1969, %v2227
    %v2229 = vpop.f32.mrf.mxu0
    %v2230 = vadd.f32 %v1971, %v2229
    %2231 = vmatmul.bf16.gmra.mxu0 %v1476
    %v2232 = vpop.f32.mrf.mxu0
    %v2233 = vadd.f32 %v1974, %v2232
    %v2234 = vpop.f32.mrf.mxu0
    %v2235 = vadd.f32 %v1976, %v2234
    %2236 = vmatmul.bf16.gmra.mxu0 %v1479
    %v2237 = vpop.f32.mrf.mxu0
    %v2238 = vadd.f32 %v1979, %v2237
    %v2239 = vpop.f32.mrf.mxu0
    %v2240 = vadd.f32 %v1981, %v2239
    %2241 = vmatmul.bf16.gmra.mxu0 %v1482
    %v2242 = vpop.f32.mrf.mxu0
    %v2243 = vadd.f32 %v1984, %v2242
    %v2244 = vpop.f32.mrf.mxu0
    %v2245 = vadd.f32 %v1986, %v2244
    %2246 = vmatmul.bf16.gmra.mxu0 %v1485
    %v2247 = vpop.f32.mrf.mxu0
    %v2248 = vadd.f32 %v1989, %v2247
    %v2249 = vpop.f32.mrf.mxu0
    %v2250 = vadd.f32 %v1991, %v2249
    %2251 = vmatmul.bf16.gmra.mxu0 %v1488
    %v2252 = vpop.f32.mrf.mxu0
    %v2253 = vadd.f32 %v1994, %v2252
    %v2254 = vpop.f32.mrf.mxu0
    %v2255 = vadd.f32 %v1996, %v2254
    %2256 = vmatmul.bf16.gmra.mxu0 %v1491
    %v2257 = vpop.f32.mrf.mxu0
    %v2258 = vadd.f32 %v1999, %v2257
    %v2259 = vpop.f32.mrf.mxu0
    %v2260 = vadd.f32 %v2001, %v2259
    %2261 = vmatmul.bf16.gmra.mxu0 %v1494
    %v2262 = vpop.f32.mrf.mxu0
    %v2263 = vadd.f32 %v2004, %v2262
    %v2264 = vpop.f32.mrf.mxu0
    %v2265 = vadd.f32 %v2006, %v2264
    %2266 = vmatmul.bf16.gmra.mxu0 %v1497
    %v2267 = vpop.f32.mrf.mxu0
    %v2268 = vadd.f32 %v2009, %v2267
    %v2269 = vpop.f32.mrf.mxu0
    %v2270 = vadd.f32 %v2011, %v2269
    %2271 = vmatmul.bf16.gmra.mxu0 %v1500
    %v2272 = vpop.f32.mrf.mxu0
    %v2273 = vadd.f32 %v2014, %v2272
    %v2274 = vpop.f32.mrf.mxu0
    %v2275 = vadd.f32 %v2016, %v2274
    %2276 = vmatmul.bf16.gmra.mxu0 %v1503
    %v2277 = vpop.f32.mrf.mxu0
    %v2278 = vadd.f32 %v2019, %v2277
    %v2279 = vpop.f32.mrf.mxu0
    %v2280 = vadd.f32 %v2021, %v2279
    %2281 = vdwg.mxu0
    %v2282 = vpack.c.bf16 %v2033, %v2033
    %v2283 = vpack.c.bf16 %v2035, %v2035
    %v2284 = vpack.c.bf16 %v2038, %v2038
    %v2285 = vpack.c.bf16 %v2040, %v2040
    %v2286 = vpack.c.bf16 %v2043, %v2043
    %v2287 = vpack.c.bf16 %v2045, %v2045
    %v2288 = vpack.c.bf16 %v2048, %v2048
    %v2289 = vpack.c.bf16 %v2050, %v2050
    %v2290 = vpack.c.bf16 %v2053, %v2053
    %v2291 = vpack.c.bf16 %v2055, %v2055
    %v2292 = vpack.c.bf16 %v2058, %v2058
    %v2293 = vpack.c.bf16 %v2060, %v2060
    %v2294 = vpack.c.bf16 %v2063, %v2063
    %v2295 = vpack.c.bf16 %v2065, %v2065
    %v2296 = vpack.c.bf16 %v2068, %v2068
    %v2297 = vpack.c.bf16 %v2070, %v2070
    %v2298 = vpack.c.bf16 %v2073, %v2073
    %v2299 = vpack.c.bf16 %v2075, %v2075
    %v2300 = vpack.c.bf16 %v2078, %v2078
    %v2301 = vpack.c.bf16 %v2080, %v2080
    %v2302 = vpack.c.bf16 %v2083, %v2083
    %v2303 = vpack.c.bf16 %v2085, %v2085
    %v2304 = vpack.c.bf16 %v2088, %v2088
    %v2305 = vpack.c.bf16 %v2090, %v2090
    %v2306 = vpack.c.bf16 %v2093, %v2093
    %v2307 = vpack.c.bf16 %v2095, %v2095
    %v2308 = vpack.c.bf16 %v2098, %v2098
    %v2309 = vpack.c.bf16 %v2100, %v2100
    %v2310 = vpack.c.bf16 %v2103, %v2103
    %v2311 = vpack.c.bf16 %v2105, %v2105
    %v2312 = vpack.c.bf16 %v2108, %v2108
    %v2313 = vpack.c.bf16 %v2110, %v2110
    %v2314 = vpack.c.bf16 %v2113, %v2113
    %v2315 = vpack.c.bf16 %v2115, %v2115
    %v2316 = vpack.c.bf16 %v2118, %v2118
    %v2317 = vpack.c.bf16 %v2120, %v2120
    %v2318 = vpack.c.bf16 %v2123, %v2123
    %v2319 = vpack.c.bf16 %v2125, %v2125
    %v2320 = vpack.c.bf16 %v2128, %v2128
    %v2321 = vpack.c.bf16 %v2130, %v2130
    %v2322 = vpack.c.bf16 %v2133, %v2133
    %v2323 = vpack.c.bf16 %v2135, %v2135
    %v2324 = vpack.c.bf16 %v2138, %v2138
    %v2325 = vpack.c.bf16 %v2140, %v2140
    %v2326 = vpack.c.bf16 %v2143, %v2143
    %v2327 = vpack.c.bf16 %v2145, %v2145
    %v2328 = vpack.c.bf16 %v2148, %v2148
    %v2329 = vpack.c.bf16 %v2150, %v2150
    %v2330 = vpack.c.bf16 %v2153, %v2153
    %v2331 = vpack.c.bf16 %v2155, %v2155
    %v2332 = vpack.c.bf16 %v2158, %v2158
    %v2333 = vpack.c.bf16 %v2160, %v2160
    %v2334 = vpack.c.bf16 %v2163, %v2163
    %v2335 = vpack.c.bf16 %v2165, %v2165
    %v2336 = vpack.c.bf16 %v2168, %v2168
    %v2337 = vpack.c.bf16 %v2170, %v2170
    %v2338 = vpack.c.bf16 %v2173, %v2173
    %v2339 = vpack.c.bf16 %v2175, %v2175
    %v2340 = vpack.c.bf16 %v2178, %v2178
    %v2341 = vpack.c.bf16 %v2180, %v2180
    %v2342 = vpack.c.bf16 %v2183, %v2183
    %v2343 = vpack.c.bf16 %v2185, %v2185
    %v2344 = vpack.c.bf16 %v2188, %v2188
    %v2345 = vpack.c.bf16 %v2190, %v2190
    %v2346 = vpack.c.bf16 %v2193, %v2193
    %v2347 = vpack.c.bf16 %v2195, %v2195
    %v2348 = vpack.c.bf16 %v2198, %v2198
    %v2349 = vpack.c.bf16 %v2200, %v2200
    %v2350 = vpack.c.bf16 %v2203, %v2203
    %v2351 = vpack.c.bf16 %v2205, %v2205
    %v2352 = vpack.c.bf16 %v2208, %v2208
    %v2353 = vpack.c.bf16 %v2210, %v2210
    %v2354 = vpack.c.bf16 %v2213, %v2213
    %v2355 = vpack.c.bf16 %v2215, %v2215
    %v2356 = vpack.c.bf16 %v2218, %v2218
    %v2357 = vpack.c.bf16 %v2220, %v2220
    %v2358 = vpack.c.bf16 %v2223, %v2223
    %v2359 = vpack.c.bf16 %v2225, %v2225
    %v2360 = vpack.c.bf16 %v2228, %v2228
    %v2361 = vpack.c.bf16 %v2230, %v2230
    %v2362 = vpack.c.bf16 %v2233, %v2233
    %v2363 = vpack.c.bf16 %v2235, %v2235
    %v2364 = vpack.c.bf16 %v2238, %v2238
    %v2365 = vpack.c.bf16 %v2240, %v2240
    %v2366 = vpack.c.bf16 %v2243, %v2243
    %v2367 = vpack.c.bf16 %v2245, %v2245
    %v2368 = vpack.c.bf16 %v2248, %v2248
    %v2369 = vpack.c.bf16 %v2250, %v2250
    %v2370 = vpack.c.bf16 %v2253, %v2253
    %v2371 = vpack.c.bf16 %v2255, %v2255
    %v2372 = vpack.c.bf16 %v2258, %v2258
    %v2373 = vpack.c.bf16 %v2260, %v2260
    %v2374 = vpack.c.bf16 %v2263, %v2263
    %v2375 = vpack.c.bf16 %v2265, %v2265
    %v2376 = vpack.c.bf16 %v2268, %v2268
    %v2377 = vpack.c.bf16 %v2270, %v2270
    %v2378 = vpack.c.bf16 %v2273, %v2273
    %v2379 = vpack.c.bf16 %v2275, %v2275
    %v2380 = vpack.c.bf16 %v2278, %v2278
    %v2381 = vpack.c.bf16 %v2280, %v2280
    %v2382 = vld [vmem:[%s4] sm:$0xf]
    %v2383 = vld [vmem:[%s4 + $0x4] sm:$0xf]
    %v2384 = vld [vmem:[%s4 + $0x8] sm:$0xf]
    %v2385 = vld [vmem:[%s4 + $0xc] sm:$0xf]
    %v2386 = vld [vmem:[%s4 + $0x10] sm:$0xf]
    %v2387 = vld [vmem:[%s4 + $0x14] sm:$0xf]
    %v2388 = vld [vmem:[%s4 + $0x18] sm:$0xf]
    %v2389 = vld [vmem:[%s4 + $0x1c] sm:$0xf]
    %v2390 = vld [vmem:[%s4 + $0x20] sm:$0xf]
    %v2391 = vld [vmem:[%s4 + $0x24] sm:$0xf]
    %v2392 = vld [vmem:[%s4 + $0x28] sm:$0xf]
    %v2393 = vld [vmem:[%s4 + $0x2c] sm:$0xf]
    %v2394 = vld [vmem:[%s4 + $0x30] sm:$0xf]
    %v2395 = vld [vmem:[%s4 + $0x34] sm:$0xf]
    %v2396 = vld [vmem:[%s4 + $0x38] sm:$0xf]
    %v2397 = vld [vmem:[%s4 + $0x3c] sm:$0xf]
    %v2398 = vld [vmem:[%s4 + $0x40] sm:$0xf]
    %v2399 = vld [vmem:[%s4 + $0x44] sm:$0xf]
    %v2400 = vld [vmem:[%s4 + $0x48] sm:$0xf]
    %v2401 = vld [vmem:[%s4 + $0x4c] sm:$0xf]
    %v2402 = vld [vmem:[%s4 + $0x50] sm:$0xf]
    %v2403 = vld [vmem:[%s4 + $0x54] sm:$0xf]
    %v2404 = vld [vmem:[%s4 + $0x58] sm:$0xf]
    %v2405 = vld [vmem:[%s4 + $0x5c] sm:$0xf]
    %v2406 = vld [vmem:[%s4 + $0x60] sm:$0xf]
    %v2407 = vld [vmem:[%s4 + $0x64] sm:$0xf]
    %v2408 = vld [vmem:[%s4 + $0x68] sm:$0xf]
    %v2409 = vld [vmem:[%s4 + $0x6c] sm:$0xf]
    %v2410 = vld [vmem:[%s4 + $0x70] sm:$0xf]
    %v2411 = vld [vmem:[%s4 + $0x74] sm:$0xf]
    %v2412 = vld [vmem:[%s4 + $0x78] sm:$0xf]
    %v2413 = vld [vmem:[%s4 + $0x7c] sm:$0xf]
    %v2414 = vld [vmem:[%s4 + $0x80] sm:$0xf]
    %v2415 = vld [vmem:[%s4 + $0x84] sm:$0xf]
    %v2416 = vld [vmem:[%s4 + $0x88] sm:$0xf]
    %v2417 = vld [vmem:[%s4 + $0x8c] sm:$0xf]
    %v2418 = vld [vmem:[%s4 + $0x90] sm:$0xf]
    %v2419 = vld [vmem:[%s4 + $0x94] sm:$0xf]
    %v2420 = vld [vmem:[%s4 + $0x98] sm:$0xf]
    %v2421 = vld [vmem:[%s4 + $0x9c] sm:$0xf]
    %v2422 = vld [vmem:[%s4 + $0xa0] sm:$0xf]
    %v2423 = vld [vmem:[%s4 + $0xa4] sm:$0xf]
    %v2424 = vld [vmem:[%s4 + $0xa8] sm:$0xf]
    %v2425 = vld [vmem:[%s4 + $0xac] sm:$0xf]
    %v2426 = vld [vmem:[%s4 + $0xb0] sm:$0xf]
    %v2427 = vld [vmem:[%s4 + $0xb4] sm:$0xf]
    %v2428 = vld [vmem:[%s4 + $0xb8] sm:$0xf]
    %v2429 = vld [vmem:[%s4 + $0xbc] sm:$0xf]
    %v2430 = vld [vmem:[%s4 + $0xc0] sm:$0xf]
    %v2431 = vld [vmem:[%s4 + $0xc4] sm:$0xf]
    %v2432 = vld [vmem:[%s4 + $0xc8] sm:$0xf]
    %v2433 = vld [vmem:[%s4 + $0xcc] sm:$0xf]
    %v2434 = vld [vmem:[%s4 + $0xd0] sm:$0xf]
    %v2435 = vld [vmem:[%s4 + $0xd4] sm:$0xf]
    %v2436 = vld [vmem:[%s4 + $0xd8] sm:$0xf]
    %v2437 = vld [vmem:[%s4 + $0xdc] sm:$0xf]
    %v2438 = vld [vmem:[%s4 + $0xe0] sm:$0xf]
    %v2439 = vld [vmem:[%s4 + $0xe4] sm:$0xf]
    %v2440 = vld [vmem:[%s4 + $0xe8] sm:$0xf]
    %v2441 = vld [vmem:[%s4 + $0xec] sm:$0xf]
    %v2442 = vld [vmem:[%s4 + $0xf0] sm:$0xf]
    %v2443 = vld [vmem:[%s4 + $0xf4] sm:$0xf]
    %v2444 = vld [vmem:[%s4 + $0xf8] sm:$0xf]
    %v2445 = vld [vmem:[%s4 + $0xfc] sm:$0xf]
    %v2446 = vld [vmem:[%s4 + $0x100] sm:$0xf]
    %v2447 = vld [vmem:[%s4 + $0x104] sm:$0xf]
    %v2448 = vld [vmem:[%s4 + $0x108] sm:$0xf]
    %v2449 = vld [vmem:[%s4 + $0x10c] sm:$0xf]
    %v2450 = vld [vmem:[%s4 + $0x110] sm:$0xf]
    %v2451 = vld [vmem:[%s4 + $0x114] sm:$0xf]
    %v2452 = vld [vmem:[%s4 + $0x118] sm:$0xf]
    %v2453 = vld [vmem:[%s4 + $0x11c] sm:$0xf]
    %v2454 = vld [vmem:[%s4 + $0x120] sm:$0xf]
    %v2455 = vld [vmem:[%s4 + $0x124] sm:$0xf]
    %v2456 = vld [vmem:[%s4 + $0x128] sm:$0xf]
    %v2457 = vld [vmem:[%s4 + $0x12c] sm:$0xf]
    %v2458 = vld [vmem:[%s4 + $0x130] sm:$0xf]
    %v2459 = vld [vmem:[%s4 + $0x134] sm:$0xf]
    %v2460 = vld [vmem:[%s4 + $0x138] sm:$0xf]
    %v2461 = vld [vmem:[%s4 + $0x13c] sm:$0xf]
    %v2462 = vld [vmem:[%s4 + $0x140] sm:$0xf]
    %v2463 = vld [vmem:[%s4 + $0x144] sm:$0xf]
    %v2464 = vld [vmem:[%s4 + $0x148] sm:$0xf]
    %v2465 = vld [vmem:[%s4 + $0x14c] sm:$0xf]
    %v2466 = vld [vmem:[%s4 + $0x150] sm:$0xf]
    %v2467 = vld [vmem:[%s4 + $0x154] sm:$0xf]
    %v2468 = vld [vmem:[%s4 + $0x158] sm:$0xf]
    %v2469 = vld [vmem:[%s4 + $0x15c] sm:$0xf]
    %v2470 = vld [vmem:[%s4 + $0x160] sm:$0xf]
    %v2471 = vld [vmem:[%s4 + $0x164] sm:$0xf]
    %v2472 = vld [vmem:[%s4 + $0x168] sm:$0xf]
    %v2473 = vld [vmem:[%s4 + $0x16c] sm:$0xf]
    %v2474 = vld [vmem:[%s4 + $0x170] sm:$0xf]
    %v2475 = vld [vmem:[%s4 + $0x174] sm:$0xf]
    %v2476 = vld [vmem:[%s4 + $0x178] sm:$0xf]
    %v2477 = vld [vmem:[%s4 + $0x17c] sm:$0xf]
    %v2478 = vld [vmem:[%s4 + $0x180] sm:$0xf]
    %v2479 = vld [vmem:[%s4 + $0x184] sm:$0xf]
    %v2480 = vld [vmem:[%s4 + $0x188] sm:$0xf]
    %v2481 = vld [vmem:[%s4 + $0x18c] sm:$0xf]
    %v2486 = vunpack.c.l.b16 %v2282
    %v2487 = vunpack.c.l.b16 %v2283
    %v2488 = vunpack.c.l.b16 %v2284
    %v2489 = vunpack.c.l.b16 %v2285
    %v2490 = vpack.c.b16 %v2487, %v2486
    %v2491 = vpack.c.b16 %v2489, %v2488
    %v2496 = vunpack.c.l.b16 %v2382
    %v2497 = vunpack.c.l.b16 %v2383
    %v2498 = vunpack.c.l.b16 %v2384
    %v2499 = vunpack.c.l.b16 %v2385
    %v2500 = vpack.c.b16 %v2497, %v2496
    %v2501 = vpack.c.b16 %v2499, %v2498
    %v2505 = vsel %vm1354, %v2490, 0
    %v2508 = vsel %vm1354, %v2491, 0
    %2510 = vmatpush.bf16.msra.mxu0 0
    %2511 = vmatpush.bf16.msra.mxu0 0
    %2512 = vmatpush.bf16.msra.mxu0 0
    %2513 = vmatpush.bf16.msra.mxu0 0
    %2514 = vmatpush.bf16.msra.mxu0 0
    %2515 = vmatpush.bf16.msra.mxu0 0
    %2516 = vmatpush.bf16.msra.mxu0 %v2501
    %2517 = vmatpush.bf16.msra.mxu0 %v2500
    %2518 = vmatmul.bf16.gmra.mxu0 %v2505
    %v2519 = vpop.f32.mrf.mxu0
    %v2520 = vadd.f32 0.0, %v2519
    %v2521 = vpop.f32.mrf.mxu0
    %v2522 = vadd.f32 0.0, %v2521
    %2523 = vmatmul.bf16.gmra.mxu0 %v2508
    %v2524 = vpop.f32.mrf.mxu0
    %v2525 = vadd.f32 0.0, %v2524
    %v2526 = vpop.f32.mrf.mxu0
    %v2527 = vadd.f32 0.0, %v2526
    %2528 = vdwg.mxu0
    %v2533 = vunpack.c.l.b16 %v2286
    %v2534 = vunpack.c.l.b16 %v2287
    %v2535 = vunpack.c.l.b16 %v2288
    %v2536 = vunpack.c.l.b16 %v2289
    %v2537 = vpack.c.b16 %v2534, %v2533
    %v2538 = vpack.c.b16 %v2536, %v2535
    %v2543 = vunpack.c.l.b16 %v2386
    %v2544 = vunpack.c.l.b16 %v2387
    %v2545 = vunpack.c.l.b16 %v2388
    %v2546 = vunpack.c.l.b16 %v2389
    %v2547 = vpack.c.b16 %v2544, %v2543
    %v2548 = vpack.c.b16 %v2546, %v2545
    %v2552 = vsel %vm1354, %v2537, 0
    %v2555 = vsel %vm1354, %v2538, 0
    %2557 = vmatpush.bf16.msra.mxu0 0
    %2558 = vmatpush.bf16.msra.mxu0 0
    %2559 = vmatpush.bf16.msra.mxu0 0
    %2560 = vmatpush.bf16.msra.mxu0 0
    %2561 = vmatpush.bf16.msra.mxu0 0
    %2562 = vmatpush.bf16.msra.mxu0 0
    %2563 = vmatpush.bf16.msra.mxu0 %v2548
    %2564 = vmatpush.bf16.msra.mxu0 %v2547
    %2565 = vmatmul.bf16.gmra.mxu0 %v2552
    %v2566 = vpop.f32.mrf.mxu0
    %v2567 = vadd.f32 0.0, %v2566
    %v2568 = vpop.f32.mrf.mxu0
    %v2569 = vadd.f32 0.0, %v2568
    %2570 = vmatmul.bf16.gmra.mxu0 %v2555
    %v2571 = vpop.f32.mrf.mxu0
    %v2572 = vadd.f32 0.0, %v2571
    %v2573 = vpop.f32.mrf.mxu0
    %v2574 = vadd.f32 0.0, %v2573
    %2575 = vdwg.mxu0
    %v2580 = vunpack.c.l.b16 %v2290
    %v2581 = vunpack.c.l.b16 %v2291
    %v2582 = vunpack.c.l.b16 %v2292
    %v2583 = vunpack.c.l.b16 %v2293
    %v2584 = vpack.c.b16 %v2581, %v2580
    %v2585 = vpack.c.b16 %v2583, %v2582
    %v2590 = vunpack.c.l.b16 %v2390
    %v2591 = vunpack.c.l.b16 %v2391
    %v2592 = vunpack.c.l.b16 %v2392
    %v2593 = vunpack.c.l.b16 %v2393
    %v2594 = vpack.c.b16 %v2591, %v2590
    %v2595 = vpack.c.b16 %v2593, %v2592
    %v2599 = vsel %vm1354, %v2584, 0
    %v2602 = vsel %vm1354, %v2585, 0
    %2604 = vmatpush.bf16.msra.mxu0 0
    %2605 = vmatpush.bf16.msra.mxu0 0
    %2606 = vmatpush.bf16.msra.mxu0 0
    %2607 = vmatpush.bf16.msra.mxu0 0
    %2608 = vmatpush.bf16.msra.mxu0 0
    %2609 = vmatpush.bf16.msra.mxu0 0
    %2610 = vmatpush.bf16.msra.mxu0 %v2595
    %2611 = vmatpush.bf16.msra.mxu0 %v2594
    %2612 = vmatmul.bf16.gmra.mxu0 %v2599
    %v2613 = vpop.f32.mrf.mxu0
    %v2614 = vadd.f32 0.0, %v2613
    %v2615 = vpop.f32.mrf.mxu0
    %v2616 = vadd.f32 0.0, %v2615
    %2617 = vmatmul.bf16.gmra.mxu0 %v2602
    %v2618 = vpop.f32.mrf.mxu0
    %v2619 = vadd.f32 0.0, %v2618
    %v2620 = vpop.f32.mrf.mxu0
    %v2621 = vadd.f32 0.0, %v2620
    %2622 = vdwg.mxu0
    %v2627 = vunpack.c.l.b16 %v2294
    %v2628 = vunpack.c.l.b16 %v2295
    %v2629 = vunpack.c.l.b16 %v2296
    %v2630 = vunpack.c.l.b16 %v2297
    %v2631 = vpack.c.b16 %v2628, %v2627
    %v2632 = vpack.c.b16 %v2630, %v2629
    %v2637 = vunpack.c.l.b16 %v2394
    %v2638 = vunpack.c.l.b16 %v2395
    %v2639 = vunpack.c.l.b16 %v2396
    %v2640 = vunpack.c.l.b16 %v2397
    %v2641 = vpack.c.b16 %v2638, %v2637
    %v2642 = vpack.c.b16 %v2640, %v2639
    %v2646 = vsel %vm1354, %v2631, 0
    %v2649 = vsel %vm1354, %v2632, 0
    %2651 = vmatpush.bf16.msra.mxu0 0
    %2652 = vmatpush.bf16.msra.mxu0 0
    %2653 = vmatpush.bf16.msra.mxu0 0
    %2654 = vmatpush.bf16.msra.mxu0 0
    %2655 = vmatpush.bf16.msra.mxu0 0
    %2656 = vmatpush.bf16.msra.mxu0 0
    %2657 = vmatpush.bf16.msra.mxu0 %v2642
    %2658 = vmatpush.bf16.msra.mxu0 %v2641
    %2659 = vmatmul.bf16.gmra.mxu0 %v2646
    %v2660 = vpop.f32.mrf.mxu0
    %v2661 = vadd.f32 0.0, %v2660
    %v2662 = vpop.f32.mrf.mxu0
    %v2663 = vadd.f32 0.0, %v2662
    %2664 = vmatmul.bf16.gmra.mxu0 %v2649
    %v2665 = vpop.f32.mrf.mxu0
    %v2666 = vadd.f32 0.0, %v2665
    %v2667 = vpop.f32.mrf.mxu0
    %v2668 = vadd.f32 0.0, %v2667
    %2669 = vdwg.mxu0
    %v2674 = vunpack.c.l.b16 %v2298
    %v2675 = vunpack.c.l.b16 %v2299
    %v2676 = vunpack.c.l.b16 %v2300
    %v2677 = vunpack.c.l.b16 %v2301
    %v2678 = vpack.c.b16 %v2675, %v2674
    %v2679 = vpack.c.b16 %v2677, %v2676
    %v2684 = vunpack.c.l.b16 %v2398
    %v2685 = vunpack.c.l.b16 %v2399
    %v2686 = vunpack.c.l.b16 %v2400
    %v2687 = vunpack.c.l.b16 %v2401
    %v2688 = vpack.c.b16 %v2685, %v2684
    %v2689 = vpack.c.b16 %v2687, %v2686
    %v2693 = vsel %vm1354, %v2678, 0
    %v2696 = vsel %vm1354, %v2679, 0
    %2698 = vmatpush.bf16.msra.mxu0 0
    %2699 = vmatpush.bf16.msra.mxu0 0
    %2700 = vmatpush.bf16.msra.mxu0 0
    %2701 = vmatpush.bf16.msra.mxu0 0
    %2702 = vmatpush.bf16.msra.mxu0 0
    %2703 = vmatpush.bf16.msra.mxu0 0
    %2704 = vmatpush.bf16.msra.mxu0 %v2689
    %2705 = vmatpush.bf16.msra.mxu0 %v2688
    %2706 = vmatmul.bf16.gmra.mxu0 %v2693
    %v2707 = vpop.f32.mrf.mxu0
    %v2708 = vadd.f32 0.0, %v2707
    %v2709 = vpop.f32.mrf.mxu0
    %v2710 = vadd.f32 0.0, %v2709
    %2711 = vmatmul.bf16.gmra.mxu0 %v2696
    %v2712 = vpop.f32.mrf.mxu0
    %v2713 = vadd.f32 0.0, %v2712
    %v2714 = vpop.f32.mrf.mxu0
    %v2715 = vadd.f32 0.0, %v2714
    %2716 = vdwg.mxu0
    %v2721 = vunpack.c.l.b16 %v2302
    %v2722 = vunpack.c.l.b16 %v2303
    %v2723 = vunpack.c.l.b16 %v2304
    %v2724 = vunpack.c.l.b16 %v2305
    %v2725 = vpack.c.b16 %v2722, %v2721
    %v2726 = vpack.c.b16 %v2724, %v2723
    %v2731 = vunpack.c.l.b16 %v2402
    %v2732 = vunpack.c.l.b16 %v2403
    %v2733 = vunpack.c.l.b16 %v2404
    %v2734 = vunpack.c.l.b16 %v2405
    %v2735 = vpack.c.b16 %v2732, %v2731
    %v2736 = vpack.c.b16 %v2734, %v2733
    %v2740 = vsel %vm1354, %v2725, 0
    %v2743 = vsel %vm1354, %v2726, 0
    %2745 = vmatpush.bf16.msra.mxu0 0
    %2746 = vmatpush.bf16.msra.mxu0 0
    %2747 = vmatpush.bf16.msra.mxu0 0
    %2748 = vmatpush.bf16.msra.mxu0 0
    %2749 = vmatpush.bf16.msra.mxu0 0
    %2750 = vmatpush.bf16.msra.mxu0 0
    %2751 = vmatpush.bf16.msra.mxu0 %v2736
    %2752 = vmatpush.bf16.msra.mxu0 %v2735
    %2753 = vmatmul.bf16.gmra.mxu0 %v2740
    %v2754 = vpop.f32.mrf.mxu0
    %v2755 = vadd.f32 0.0, %v2754
    %v2756 = vpop.f32.mrf.mxu0
    %v2757 = vadd.f32 0.0, %v2756
    %2758 = vmatmul.bf16.gmra.mxu0 %v2743
    %v2759 = vpop.f32.mrf.mxu0
    %v2760 = vadd.f32 0.0, %v2759
    %v2761 = vpop.f32.mrf.mxu0
    %v2762 = vadd.f32 0.0, %v2761
    %2763 = vdwg.mxu0
    %v2768 = vunpack.c.l.b16 %v2306
    %v2769 = vunpack.c.l.b16 %v2307
    %v2770 = vunpack.c.l.b16 %v2308
    %v2771 = vunpack.c.l.b16 %v2309
    %v2772 = vpack.c.b16 %v2769, %v2768
    %v2773 = vpack.c.b16 %v2771, %v2770
    %v2778 = vunpack.c.l.b16 %v2406
    %v2779 = vunpack.c.l.b16 %v2407
    %v2780 = vunpack.c.l.b16 %v2408
    %v2781 = vunpack.c.l.b16 %v2409
    %v2782 = vpack.c.b16 %v2779, %v2778
    %v2783 = vpack.c.b16 %v2781, %v2780
    %v2787 = vsel %vm1354, %v2772, 0
    %v2790 = vsel %vm1354, %v2773, 0
    %2792 = vmatpush.bf16.msra.mxu0 0
    %2793 = vmatpush.bf16.msra.mxu0 0
    %2794 = vmatpush.bf16.msra.mxu0 0
    %2795 = vmatpush.bf16.msra.mxu0 0
    %2796 = vmatpush.bf16.msra.mxu0 0
    %2797 = vmatpush.bf16.msra.mxu0 0
    %2798 = vmatpush.bf16.msra.mxu0 %v2783
    %2799 = vmatpush.bf16.msra.mxu0 %v2782
    %2800 = vmatmul.bf16.gmra.mxu0 %v2787
    %v2801 = vpop.f32.mrf.mxu0
    %v2802 = vadd.f32 0.0, %v2801
    %v2803 = vpop.f32.mrf.mxu0
    %v2804 = vadd.f32 0.0, %v2803
    %2805 = vmatmul.bf16.gmra.mxu0 %v2790
    %v2806 = vpop.f32.mrf.mxu0
    %v2807 = vadd.f32 0.0, %v2806
    %v2808 = vpop.f32.mrf.mxu0
    %v2809 = vadd.f32 0.0, %v2808
    %2810 = vdwg.mxu0
    %v2815 = vunpack.c.l.b16 %v2310
    %v2816 = vunpack.c.l.b16 %v2311
    %v2817 = vunpack.c.l.b16 %v2312
    %v2818 = vunpack.c.l.b16 %v2313
    %v2819 = vpack.c.b16 %v2816, %v2815
    %v2820 = vpack.c.b16 %v2818, %v2817
    %v2825 = vunpack.c.l.b16 %v2410
    %v2826 = vunpack.c.l.b16 %v2411
    %v2827 = vunpack.c.l.b16 %v2412
    %v2828 = vunpack.c.l.b16 %v2413
    %v2829 = vpack.c.b16 %v2826, %v2825
    %v2830 = vpack.c.b16 %v2828, %v2827
    %v2834 = vsel %vm1354, %v2819, 0
    %v2837 = vsel %vm1354, %v2820, 0
    %2839 = vmatpush.bf16.msra.mxu0 0
    %2840 = vmatpush.bf16.msra.mxu0 0
    %2841 = vmatpush.bf16.msra.mxu0 0
    %2842 = vmatpush.bf16.msra.mxu0 0
    %2843 = vmatpush.bf16.msra.mxu0 0
    %2844 = vmatpush.bf16.msra.mxu0 0
    %2845 = vmatpush.bf16.msra.mxu0 %v2830
    %2846 = vmatpush.bf16.msra.mxu0 %v2829
    %2847 = vmatmul.bf16.gmra.mxu0 %v2834
    %v2848 = vpop.f32.mrf.mxu0
    %v2849 = vadd.f32 0.0, %v2848
    %v2850 = vpop.f32.mrf.mxu0
    %v2851 = vadd.f32 0.0, %v2850
    %2852 = vmatmul.bf16.gmra.mxu0 %v2837
    %v2853 = vpop.f32.mrf.mxu0
    %v2854 = vadd.f32 0.0, %v2853
    %v2855 = vpop.f32.mrf.mxu0
    %v2856 = vadd.f32 0.0, %v2855
    %2857 = vdwg.mxu0
    %v2862 = vunpack.c.l.b16 %v2314
    %v2863 = vunpack.c.l.b16 %v2315
    %v2864 = vunpack.c.l.b16 %v2316
    %v2865 = vunpack.c.l.b16 %v2317
    %v2866 = vpack.c.b16 %v2863, %v2862
    %v2867 = vpack.c.b16 %v2865, %v2864
    %v2872 = vunpack.c.l.b16 %v2414
    %v2873 = vunpack.c.l.b16 %v2415
    %v2874 = vunpack.c.l.b16 %v2416
    %v2875 = vunpack.c.l.b16 %v2417
    %v2876 = vpack.c.b16 %v2873, %v2872
    %v2877 = vpack.c.b16 %v2875, %v2874
    %v2881 = vsel %vm1354, %v2866, 0
    %v2884 = vsel %vm1354, %v2867, 0
    %2886 = vmatpush.bf16.msra.mxu0 0
    %2887 = vmatpush.bf16.msra.mxu0 0
    %2888 = vmatpush.bf16.msra.mxu0 0
    %2889 = vmatpush.bf16.msra.mxu0 0
    %2890 = vmatpush.bf16.msra.mxu0 0
    %2891 = vmatpush.bf16.msra.mxu0 0
    %2892 = vmatpush.bf16.msra.mxu0 %v2877
    %2893 = vmatpush.bf16.msra.mxu0 %v2876
    %2894 = vmatmul.bf16.gmra.mxu0 %v2881
    %v2895 = vpop.f32.mrf.mxu0
    %v2896 = vadd.f32 0.0, %v2895
    %v2897 = vpop.f32.mrf.mxu0
    %v2898 = vadd.f32 0.0, %v2897
    %2899 = vmatmul.bf16.gmra.mxu0 %v2884
    %v2900 = vpop.f32.mrf.mxu0
    %v2901 = vadd.f32 0.0, %v2900
    %v2902 = vpop.f32.mrf.mxu0
    %v2903 = vadd.f32 0.0, %v2902
    %2904 = vdwg.mxu0
    %v2909 = vunpack.c.l.b16 %v2318
    %v2910 = vunpack.c.l.b16 %v2319
    %v2911 = vunpack.c.l.b16 %v2320
    %v2912 = vunpack.c.l.b16 %v2321
    %v2913 = vpack.c.b16 %v2910, %v2909
    %v2914 = vpack.c.b16 %v2912, %v2911
    %v2919 = vunpack.c.l.b16 %v2418
    %v2920 = vunpack.c.l.b16 %v2419
    %v2921 = vunpack.c.l.b16 %v2420
    %v2922 = vunpack.c.l.b16 %v2421
    %v2923 = vpack.c.b16 %v2920, %v2919
    %v2924 = vpack.c.b16 %v2922, %v2921
    %v2928 = vsel %vm1354, %v2913, 0
    %v2931 = vsel %vm1354, %v2914, 0
    %2933 = vmatpush.bf16.msra.mxu0 0
    %2934 = vmatpush.bf16.msra.mxu0 0
    %2935 = vmatpush.bf16.msra.mxu0 0
    %2936 = vmatpush.bf16.msra.mxu0 0
    %2937 = vmatpush.bf16.msra.mxu0 0
    %2938 = vmatpush.bf16.msra.mxu0 0
    %2939 = vmatpush.bf16.msra.mxu0 %v2924
    %2940 = vmatpush.bf16.msra.mxu0 %v2923
    %2941 = vmatmul.bf16.gmra.mxu0 %v2928
    %v2942 = vpop.f32.mrf.mxu0
    %v2943 = vadd.f32 0.0, %v2942
    %v2944 = vpop.f32.mrf.mxu0
    %v2945 = vadd.f32 0.0, %v2944
    %2946 = vmatmul.bf16.gmra.mxu0 %v2931
    %v2947 = vpop.f32.mrf.mxu0
    %v2948 = vadd.f32 0.0, %v2947
    %v2949 = vpop.f32.mrf.mxu0
    %v2950 = vadd.f32 0.0, %v2949
    %2951 = vdwg.mxu0
    %v2956 = vunpack.c.l.b16 %v2322
    %v2957 = vunpack.c.l.b16 %v2323
    %v2958 = vunpack.c.l.b16 %v2324
    %v2959 = vunpack.c.l.b16 %v2325
    %v2960 = vpack.c.b16 %v2957, %v2956
    %v2961 = vpack.c.b16 %v2959, %v2958
    %v2966 = vunpack.c.l.b16 %v2422
    %v2967 = vunpack.c.l.b16 %v2423
    %v2968 = vunpack.c.l.b16 %v2424
    %v2969 = vunpack.c.l.b16 %v2425
    %v2970 = vpack.c.b16 %v2967, %v2966
    %v2971 = vpack.c.b16 %v2969, %v2968
    %v2975 = vsel %vm1354, %v2960, 0
    %v2978 = vsel %vm1354, %v2961, 0
    %2980 = vmatpush.bf16.msra.mxu0 0
    %2981 = vmatpush.bf16.msra.mxu0 0
    %2982 = vmatpush.bf16.msra.mxu0 0
    %2983 = vmatpush.bf16.msra.mxu0 0
    %2984 = vmatpush.bf16.msra.mxu0 0
    %2985 = vmatpush.bf16.msra.mxu0 0
    %2986 = vmatpush.bf16.msra.mxu0 %v2971
    %2987 = vmatpush.bf16.msra.mxu0 %v2970
    %2988 = vmatmul.bf16.gmra.mxu0 %v2975
    %v2989 = vpop.f32.mrf.mxu0
    %v2990 = vadd.f32 0.0, %v2989
    %v2991 = vpop.f32.mrf.mxu0
    %v2992 = vadd.f32 0.0, %v2991
    %2993 = vmatmul.bf16.gmra.mxu0 %v2978
    %v2994 = vpop.f32.mrf.mxu0
    %v2995 = vadd.f32 0.0, %v2994
    %v2996 = vpop.f32.mrf.mxu0
    %v2997 = vadd.f32 0.0, %v2996
    %2998 = vdwg.mxu0
    %v3003 = vunpack.c.l.b16 %v2326
    %v3004 = vunpack.c.l.b16 %v2327
    %v3005 = vunpack.c.l.b16 %v2328
    %v3006 = vunpack.c.l.b16 %v2329
    %v3007 = vpack.c.b16 %v3004, %v3003
    %v3008 = vpack.c.b16 %v3006, %v3005
    %v3013 = vunpack.c.l.b16 %v2426
    %v3014 = vunpack.c.l.b16 %v2427
    %v3015 = vunpack.c.l.b16 %v2428
    %v3016 = vunpack.c.l.b16 %v2429
    %v3017 = vpack.c.b16 %v3014, %v3013
    %v3018 = vpack.c.b16 %v3016, %v3015
    %v3022 = vsel %vm1354, %v3007, 0
    %v3025 = vsel %vm1354, %v3008, 0
    %3027 = vmatpush.bf16.msra.mxu0 0
    %3028 = vmatpush.bf16.msra.mxu0 0
    %3029 = vmatpush.bf16.msra.mxu0 0
    %3030 = vmatpush.bf16.msra.mxu0 0
    %3031 = vmatpush.bf16.msra.mxu0 0
    %3032 = vmatpush.bf16.msra.mxu0 0
    %3033 = vmatpush.bf16.msra.mxu0 %v3018
    %3034 = vmatpush.bf16.msra.mxu0 %v3017
    %3035 = vmatmul.bf16.gmra.mxu0 %v3022
    %v3036 = vpop.f32.mrf.mxu0
    %v3037 = vadd.f32 0.0, %v3036
    %v3038 = vpop.f32.mrf.mxu0
    %v3039 = vadd.f32 0.0, %v3038
    %3040 = vmatmul.bf16.gmra.mxu0 %v3025
    %v3041 = vpop.f32.mrf.mxu0
    %v3042 = vadd.f32 0.0, %v3041
    %v3043 = vpop.f32.mrf.mxu0
    %v3044 = vadd.f32 0.0, %v3043
    %3045 = vdwg.mxu0
    %v3050 = vunpack.c.l.b16 %v2330
    %v3051 = vunpack.c.l.b16 %v2331
    %v3052 = vunpack.c.l.b16 %v2332
    %v3053 = vunpack.c.l.b16 %v2333
    %v3054 = vpack.c.b16 %v3051, %v3050
    %v3055 = vpack.c.b16 %v3053, %v3052
    %v3060 = vunpack.c.l.b16 %v2430
    %v3061 = vunpack.c.l.b16 %v2431
    %v3062 = vunpack.c.l.b16 %v2432
    %v3063 = vunpack.c.l.b16 %v2433
    %v3064 = vpack.c.b16 %v3061, %v3060
    %v3065 = vpack.c.b16 %v3063, %v3062
    %v3069 = vsel %vm1354, %v3054, 0
    %v3072 = vsel %vm1354, %v3055, 0
    %3074 = vmatpush.bf16.msra.mxu0 0
    %3075 = vmatpush.bf16.msra.mxu0 0
    %3076 = vmatpush.bf16.msra.mxu0 0
    %3077 = vmatpush.bf16.msra.mxu0 0
    %3078 = vmatpush.bf16.msra.mxu0 0
    %3079 = vmatpush.bf16.msra.mxu0 0
    %3080 = vmatpush.bf16.msra.mxu0 %v3065
    %3081 = vmatpush.bf16.msra.mxu0 %v3064
    %3082 = vmatmul.bf16.gmra.mxu0 %v3069
    %v3083 = vpop.f32.mrf.mxu0
    %v3084 = vadd.f32 0.0, %v3083
    %v3085 = vpop.f32.mrf.mxu0
    %v3086 = vadd.f32 0.0, %v3085
    %3087 = vmatmul.bf16.gmra.mxu0 %v3072
    %v3088 = vpop.f32.mrf.mxu0
    %v3089 = vadd.f32 0.0, %v3088
    %v3090 = vpop.f32.mrf.mxu0
    %v3091 = vadd.f32 0.0, %v3090
    %3092 = vdwg.mxu0
    %v3097 = vunpack.c.l.b16 %v2334
    %v3098 = vunpack.c.l.b16 %v2335
    %v3099 = vunpack.c.l.b16 %v2336
    %v3100 = vunpack.c.l.b16 %v2337
    %v3101 = vpack.c.b16 %v3098, %v3097
    %v3102 = vpack.c.b16 %v3100, %v3099
    %v3107 = vunpack.c.l.b16 %v2434
    %v3108 = vunpack.c.l.b16 %v2435
    %v3109 = vunpack.c.l.b16 %v2436
    %v3110 = vunpack.c.l.b16 %v2437
    %v3111 = vpack.c.b16 %v3108, %v3107
    %v3112 = vpack.c.b16 %v3110, %v3109
    %v3116 = vsel %vm1354, %v3101, 0
    %v3119 = vsel %vm1354, %v3102, 0
    %3121 = vmatpush.bf16.msra.mxu0 0
    %3122 = vmatpush.bf16.msra.mxu0 0
    %3123 = vmatpush.bf16.msra.mxu0 0
    %3124 = vmatpush.bf16.msra.mxu0 0
    %3125 = vmatpush.bf16.msra.mxu0 0
    %3126 = vmatpush.bf16.msra.mxu0 0
    %3127 = vmatpush.bf16.msra.mxu0 %v3112
    %3128 = vmatpush.bf16.msra.mxu0 %v3111
    %3129 = vmatmul.bf16.gmra.mxu0 %v3116
    %v3130 = vpop.f32.mrf.mxu0
    %v3131 = vadd.f32 0.0, %v3130
    %v3132 = vpop.f32.mrf.mxu0
    %v3133 = vadd.f32 0.0, %v3132
    %3134 = vmatmul.bf16.gmra.mxu0 %v3119
    %v3135 = vpop.f32.mrf.mxu0
    %v3136 = vadd.f32 0.0, %v3135
    %v3137 = vpop.f32.mrf.mxu0
    %v3138 = vadd.f32 0.0, %v3137
    %3139 = vdwg.mxu0
    %v3144 = vunpack.c.l.b16 %v2338
    %v3145 = vunpack.c.l.b16 %v2339
    %v3146 = vunpack.c.l.b16 %v2340
    %v3147 = vunpack.c.l.b16 %v2341
    %v3148 = vpack.c.b16 %v3145, %v3144
    %v3149 = vpack.c.b16 %v3147, %v3146
    %v3154 = vunpack.c.l.b16 %v2438
    %v3155 = vunpack.c.l.b16 %v2439
    %v3156 = vunpack.c.l.b16 %v2440
    %v3157 = vunpack.c.l.b16 %v2441
    %v3158 = vpack.c.b16 %v3155, %v3154
    %v3159 = vpack.c.b16 %v3157, %v3156
    %v3163 = vsel %vm1354, %v3148, 0
    %v3166 = vsel %vm1354, %v3149, 0
    %3168 = vmatpush.bf16.msra.mxu0 0
    %3169 = vmatpush.bf16.msra.mxu0 0
    %3170 = vmatpush.bf16.msra.mxu0 0
    %3171 = vmatpush.bf16.msra.mxu0 0
    %3172 = vmatpush.bf16.msra.mxu0 0
    %3173 = vmatpush.bf16.msra.mxu0 0
    %3174 = vmatpush.bf16.msra.mxu0 %v3159
    %3175 = vmatpush.bf16.msra.mxu0 %v3158
    %3176 = vmatmul.bf16.gmra.mxu0 %v3163
    %v3177 = vpop.f32.mrf.mxu0
    %v3178 = vadd.f32 0.0, %v3177
    %v3179 = vpop.f32.mrf.mxu0
    %v3180 = vadd.f32 0.0, %v3179
    %3181 = vmatmul.bf16.gmra.mxu0 %v3166
    %v3182 = vpop.f32.mrf.mxu0
    %v3183 = vadd.f32 0.0, %v3182
    %v3184 = vpop.f32.mrf.mxu0
    %v3185 = vadd.f32 0.0, %v3184
    %3186 = vdwg.mxu0
    %v3191 = vunpack.c.l.b16 %v2342
    %v3192 = vunpack.c.l.b16 %v2343
    %v3193 = vunpack.c.l.b16 %v2344
    %v3194 = vunpack.c.l.b16 %v2345
    %v3195 = vpack.c.b16 %v3192, %v3191
    %v3196 = vpack.c.b16 %v3194, %v3193
    %v3201 = vunpack.c.l.b16 %v2442
    %v3202 = vunpack.c.l.b16 %v2443
    %v3203 = vunpack.c.l.b16 %v2444
    %v3204 = vunpack.c.l.b16 %v2445
    %v3205 = vpack.c.b16 %v3202, %v3201
    %v3206 = vpack.c.b16 %v3204, %v3203
    %v3210 = vsel %vm1354, %v3195, 0
    %v3213 = vsel %vm1354, %v3196, 0
    %3215 = vmatpush.bf16.msra.mxu0 0
    %3216 = vmatpush.bf16.msra.mxu0 0
    %3217 = vmatpush.bf16.msra.mxu0 0
    %3218 = vmatpush.bf16.msra.mxu0 0
    %3219 = vmatpush.bf16.msra.mxu0 0
    %3220 = vmatpush.bf16.msra.mxu0 0
    %3221 = vmatpush.bf16.msra.mxu0 %v3206
    %3222 = vmatpush.bf16.msra.mxu0 %v3205
    %3223 = vmatmul.bf16.gmra.mxu0 %v3210
    %v3224 = vpop.f32.mrf.mxu0
    %v3225 = vadd.f32 0.0, %v3224
    %v3226 = vpop.f32.mrf.mxu0
    %v3227 = vadd.f32 0.0, %v3226
    %3228 = vmatmul.bf16.gmra.mxu0 %v3213
    %v3229 = vpop.f32.mrf.mxu0
    %v3230 = vadd.f32 0.0, %v3229
    %v3231 = vpop.f32.mrf.mxu0
    %v3232 = vadd.f32 0.0, %v3231
    %3233 = vdwg.mxu0
    %v3238 = vunpack.c.l.b16 %v2346
    %v3239 = vunpack.c.l.b16 %v2347
    %v3240 = vunpack.c.l.b16 %v2348
    %v3241 = vunpack.c.l.b16 %v2349
    %v3242 = vpack.c.b16 %v3239, %v3238
    %v3243 = vpack.c.b16 %v3241, %v3240
    %v3248 = vunpack.c.l.b16 %v2446
    %v3249 = vunpack.c.l.b16 %v2447
    %v3250 = vunpack.c.l.b16 %v2448
    %v3251 = vunpack.c.l.b16 %v2449
    %v3252 = vpack.c.b16 %v3249, %v3248
    %v3253 = vpack.c.b16 %v3251, %v3250
    %v3257 = vsel %vm1354, %v3242, 0
    %v3260 = vsel %vm1354, %v3243, 0
    %3262 = vmatpush.bf16.msra.mxu0 0
    %3263 = vmatpush.bf16.msra.mxu0 0
    %3264 = vmatpush.bf16.msra.mxu0 0
    %3265 = vmatpush.bf16.msra.mxu0 0
    %3266 = vmatpush.bf16.msra.mxu0 0
    %3267 = vmatpush.bf16.msra.mxu0 0
    %3268 = vmatpush.bf16.msra.mxu0 %v3253
    %3269 = vmatpush.bf16.msra.mxu0 %v3252
    %3270 = vmatmul.bf16.gmra.mxu0 %v3257
    %v3271 = vpop.f32.mrf.mxu0
    %v3272 = vadd.f32 0.0, %v3271
    %v3273 = vpop.f32.mrf.mxu0
    %v3274 = vadd.f32 0.0, %v3273
    %3275 = vmatmul.bf16.gmra.mxu0 %v3260
    %v3276 = vpop.f32.mrf.mxu0
    %v3277 = vadd.f32 0.0, %v3276
    %v3278 = vpop.f32.mrf.mxu0
    %v3279 = vadd.f32 0.0, %v3278
    %3280 = vdwg.mxu0
    %v3285 = vunpack.c.l.b16 %v2350
    %v3286 = vunpack.c.l.b16 %v2351
    %v3287 = vunpack.c.l.b16 %v2352
    %v3288 = vunpack.c.l.b16 %v2353
    %v3289 = vpack.c.b16 %v3286, %v3285
    %v3290 = vpack.c.b16 %v3288, %v3287
    %v3295 = vunpack.c.l.b16 %v2450
    %v3296 = vunpack.c.l.b16 %v2451
    %v3297 = vunpack.c.l.b16 %v2452
    %v3298 = vunpack.c.l.b16 %v2453
    %v3299 = vpack.c.b16 %v3296, %v3295
    %v3300 = vpack.c.b16 %v3298, %v3297
    %v3304 = vsel %vm1354, %v3289, 0
    %v3307 = vsel %vm1354, %v3290, 0
    %3309 = vmatpush.bf16.msra.mxu0 0
    %3310 = vmatpush.bf16.msra.mxu0 0
    %3311 = vmatpush.bf16.msra.mxu0 0
    %3312 = vmatpush.bf16.msra.mxu0 0
    %3313 = vmatpush.bf16.msra.mxu0 0
    %3314 = vmatpush.bf16.msra.mxu0 0
    %3315 = vmatpush.bf16.msra.mxu0 %v3300
    %3316 = vmatpush.bf16.msra.mxu0 %v3299
    %3317 = vmatmul.bf16.gmra.mxu0 %v3304
    %v3318 = vpop.f32.mrf.mxu0
    %v3319 = vadd.f32 0.0, %v3318
    %v3320 = vpop.f32.mrf.mxu0
    %v3321 = vadd.f32 0.0, %v3320
    %3322 = vmatmul.bf16.gmra.mxu0 %v3307
    %v3323 = vpop.f32.mrf.mxu0
    %v3324 = vadd.f32 0.0, %v3323
    %v3325 = vpop.f32.mrf.mxu0
    %v3326 = vadd.f32 0.0, %v3325
    %3327 = vdwg.mxu0
    %v3332 = vunpack.c.l.b16 %v2354
    %v3333 = vunpack.c.l.b16 %v2355
    %v3334 = vunpack.c.l.b16 %v2356
    %v3335 = vunpack.c.l.b16 %v2357
    %v3336 = vpack.c.b16 %v3333, %v3332
    %v3337 = vpack.c.b16 %v3335, %v3334
    %v3342 = vunpack.c.l.b16 %v2454
    %v3343 = vunpack.c.l.b16 %v2455
    %v3344 = vunpack.c.l.b16 %v2456
    %v3345 = vunpack.c.l.b16 %v2457
    %v3346 = vpack.c.b16 %v3343, %v3342
    %v3347 = vpack.c.b16 %v3345, %v3344
    %v3351 = vsel %vm1354, %v3336, 0
    %v3354 = vsel %vm1354, %v3337, 0
    %3356 = vmatpush.bf16.msra.mxu0 0
    %3357 = vmatpush.bf16.msra.mxu0 0
    %3358 = vmatpush.bf16.msra.mxu0 0
    %3359 = vmatpush.bf16.msra.mxu0 0
    %3360 = vmatpush.bf16.msra.mxu0 0
    %3361 = vmatpush.bf16.msra.mxu0 0
    %3362 = vmatpush.bf16.msra.mxu0 %v3347
    %3363 = vmatpush.bf16.msra.mxu0 %v3346
    %3364 = vmatmul.bf16.gmra.mxu0 %v3351
    %v3365 = vpop.f32.mrf.mxu0
    %v3366 = vadd.f32 0.0, %v3365
    %v3367 = vpop.f32.mrf.mxu0
    %v3368 = vadd.f32 0.0, %v3367
    %3369 = vmatmul.bf16.gmra.mxu0 %v3354
    %v3370 = vpop.f32.mrf.mxu0
    %v3371 = vadd.f32 0.0, %v3370
    %v3372 = vpop.f32.mrf.mxu0
    %v3373 = vadd.f32 0.0, %v3372
    %3374 = vdwg.mxu0
    %v3379 = vunpack.c.l.b16 %v2358
    %v3380 = vunpack.c.l.b16 %v2359
    %v3381 = vunpack.c.l.b16 %v2360
    %v3382 = vunpack.c.l.b16 %v2361
    %v3383 = vpack.c.b16 %v3380, %v3379
    %v3384 = vpack.c.b16 %v3382, %v3381
    %v3389 = vunpack.c.l.b16 %v2458
    %v3390 = vunpack.c.l.b16 %v2459
    %v3391 = vunpack.c.l.b16 %v2460
    %v3392 = vunpack.c.l.b16 %v2461
    %v3393 = vpack.c.b16 %v3390, %v3389
    %v3394 = vpack.c.b16 %v3392, %v3391
    %v3398 = vsel %vm1354, %v3383, 0
    %v3401 = vsel %vm1354, %v3384, 0
    %3403 = vmatpush.bf16.msra.mxu0 0
    %3404 = vmatpush.bf16.msra.mxu0 0
    %3405 = vmatpush.bf16.msra.mxu0 0
    %3406 = vmatpush.bf16.msra.mxu0 0
    %3407 = vmatpush.bf16.msra.mxu0 0
    %3408 = vmatpush.bf16.msra.mxu0 0
    %3409 = vmatpush.bf16.msra.mxu0 %v3394
    %3410 = vmatpush.bf16.msra.mxu0 %v3393
    %3411 = vmatmul.bf16.gmra.mxu0 %v3398
    %v3412 = vpop.f32.mrf.mxu0
    %v3413 = vadd.f32 0.0, %v3412
    %v3414 = vpop.f32.mrf.mxu0
    %v3415 = vadd.f32 0.0, %v3414
    %3416 = vmatmul.bf16.gmra.mxu0 %v3401
    %v3417 = vpop.f32.mrf.mxu0
    %v3418 = vadd.f32 0.0, %v3417
    %v3419 = vpop.f32.mrf.mxu0
    %v3420 = vadd.f32 0.0, %v3419
    %3421 = vdwg.mxu0
    %v3426 = vunpack.c.l.b16 %v2362
    %v3427 = vunpack.c.l.b16 %v2363
    %v3428 = vunpack.c.l.b16 %v2364
    %v3429 = vunpack.c.l.b16 %v2365
    %v3430 = vpack.c.b16 %v3427, %v3426
    %v3431 = vpack.c.b16 %v3429, %v3428
    %v3436 = vunpack.c.l.b16 %v2462
    %v3437 = vunpack.c.l.b16 %v2463
    %v3438 = vunpack.c.l.b16 %v2464
    %v3439 = vunpack.c.l.b16 %v2465
    %v3440 = vpack.c.b16 %v3437, %v3436
    %v3441 = vpack.c.b16 %v3439, %v3438
    %v3445 = vsel %vm1354, %v3430, 0
    %v3448 = vsel %vm1354, %v3431, 0
    %3450 = vmatpush.bf16.msra.mxu0 0
    %3451 = vmatpush.bf16.msra.mxu0 0
    %3452 = vmatpush.bf16.msra.mxu0 0
    %3453 = vmatpush.bf16.msra.mxu0 0
    %3454 = vmatpush.bf16.msra.mxu0 0
    %3455 = vmatpush.bf16.msra.mxu0 0
    %3456 = vmatpush.bf16.msra.mxu0 %v3441
    %3457 = vmatpush.bf16.msra.mxu0 %v3440
    %3458 = vmatmul.bf16.gmra.mxu0 %v3445
    %v3459 = vpop.f32.mrf.mxu0
    %v3460 = vadd.f32 0.0, %v3459
    %v3461 = vpop.f32.mrf.mxu0
    %v3462 = vadd.f32 0.0, %v3461
    %3463 = vmatmul.bf16.gmra.mxu0 %v3448
    %v3464 = vpop.f32.mrf.mxu0
    %v3465 = vadd.f32 0.0, %v3464
    %v3466 = vpop.f32.mrf.mxu0
    %v3467 = vadd.f32 0.0, %v3466
    %3468 = vdwg.mxu0
    %v3473 = vunpack.c.l.b16 %v2366
    %v3474 = vunpack.c.l.b16 %v2367
    %v3475 = vunpack.c.l.b16 %v2368
    %v3476 = vunpack.c.l.b16 %v2369
    %v3477 = vpack.c.b16 %v3474, %v3473
    %v3478 = vpack.c.b16 %v3476, %v3475
    %v3483 = vunpack.c.l.b16 %v2466
    %v3484 = vunpack.c.l.b16 %v2467
    %v3485 = vunpack.c.l.b16 %v2468
    %v3486 = vunpack.c.l.b16 %v2469
    %v3487 = vpack.c.b16 %v3484, %v3483
    %v3488 = vpack.c.b16 %v3486, %v3485
    %v3492 = vsel %vm1354, %v3477, 0
    %v3495 = vsel %vm1354, %v3478, 0
    %3497 = vmatpush.bf16.msra.mxu0 0
    %3498 = vmatpush.bf16.msra.mxu0 0
    %3499 = vmatpush.bf16.msra.mxu0 0
    %3500 = vmatpush.bf16.msra.mxu0 0
    %3501 = vmatpush.bf16.msra.mxu0 0
    %3502 = vmatpush.bf16.msra.mxu0 0
    %3503 = vmatpush.bf16.msra.mxu0 %v3488
    %3504 = vmatpush.bf16.msra.mxu0 %v3487
    %3505 = vmatmul.bf16.gmra.mxu0 %v3492
    %v3506 = vpop.f32.mrf.mxu0
    %v3507 = vadd.f32 0.0, %v3506
    %v3508 = vpop.f32.mrf.mxu0
    %v3509 = vadd.f32 0.0, %v3508
    %3510 = vmatmul.bf16.gmra.mxu0 %v3495
    %v3511 = vpop.f32.mrf.mxu0
    %v3512 = vadd.f32 0.0, %v3511
    %v3513 = vpop.f32.mrf.mxu0
    %v3514 = vadd.f32 0.0, %v3513
    %3515 = vdwg.mxu0
    %v3520 = vunpack.c.l.b16 %v2370
    %v3521 = vunpack.c.l.b16 %v2371
    %v3522 = vunpack.c.l.b16 %v2372
    %v3523 = vunpack.c.l.b16 %v2373
    %v3524 = vpack.c.b16 %v3521, %v3520
    %v3525 = vpack.c.b16 %v3523, %v3522
    %v3530 = vunpack.c.l.b16 %v2470
    %v3531 = vunpack.c.l.b16 %v2471
    %v3532 = vunpack.c.l.b16 %v2472
    %v3533 = vunpack.c.l.b16 %v2473
    %v3534 = vpack.c.b16 %v3531, %v3530
    %v3535 = vpack.c.b16 %v3533, %v3532
    %v3539 = vsel %vm1354, %v3524, 0
    %v3542 = vsel %vm1354, %v3525, 0
    %3544 = vmatpush.bf16.msra.mxu0 0
    %3545 = vmatpush.bf16.msra.mxu0 0
    %3546 = vmatpush.bf16.msra.mxu0 0
    %3547 = vmatpush.bf16.msra.mxu0 0
    %3548 = vmatpush.bf16.msra.mxu0 0
    %3549 = vmatpush.bf16.msra.mxu0 0
    %3550 = vmatpush.bf16.msra.mxu0 %v3535
    %3551 = vmatpush.bf16.msra.mxu0 %v3534
    %3552 = vmatmul.bf16.gmra.mxu0 %v3539
    %v3553 = vpop.f32.mrf.mxu0
    %v3554 = vadd.f32 0.0, %v3553
    %v3555 = vpop.f32.mrf.mxu0
    %v3556 = vadd.f32 0.0, %v3555
    %3557 = vmatmul.bf16.gmra.mxu0 %v3542
    %v3558 = vpop.f32.mrf.mxu0
    %v3559 = vadd.f32 0.0, %v3558
    %v3560 = vpop.f32.mrf.mxu0
    %v3561 = vadd.f32 0.0, %v3560
    %3562 = vdwg.mxu0
    %v3567 = vunpack.c.l.b16 %v2374
    %v3568 = vunpack.c.l.b16 %v2375
    %v3569 = vunpack.c.l.b16 %v2376
    %v3570 = vunpack.c.l.b16 %v2377
    %v3571 = vpack.c.b16 %v3568, %v3567
    %v3572 = vpack.c.b16 %v3570, %v3569
    %v3577 = vunpack.c.l.b16 %v2474
    %v3578 = vunpack.c.l.b16 %v2475
    %v3579 = vunpack.c.l.b16 %v2476
    %v3580 = vunpack.c.l.b16 %v2477
    %v3581 = vpack.c.b16 %v3578, %v3577
    %v3582 = vpack.c.b16 %v3580, %v3579
    %v3586 = vsel %vm1354, %v3571, 0
    %v3589 = vsel %vm1354, %v3572, 0
    %3591 = vmatpush.bf16.msra.mxu0 0
    %3592 = vmatpush.bf16.msra.mxu0 0
    %3593 = vmatpush.bf16.msra.mxu0 0
    %3594 = vmatpush.bf16.msra.mxu0 0
    %3595 = vmatpush.bf16.msra.mxu0 0
    %3596 = vmatpush.bf16.msra.mxu0 0
    %3597 = vmatpush.bf16.msra.mxu0 %v3582
    %3598 = vmatpush.bf16.msra.mxu0 %v3581
    %3599 = vmatmul.bf16.gmra.mxu0 %v3586
    %v3600 = vpop.f32.mrf.mxu0
    %v3601 = vadd.f32 0.0, %v3600
    %v3602 = vpop.f32.mrf.mxu0
    %v3603 = vadd.f32 0.0, %v3602
    %3604 = vmatmul.bf16.gmra.mxu0 %v3589
    %v3605 = vpop.f32.mrf.mxu0
    %v3606 = vadd.f32 0.0, %v3605
    %v3607 = vpop.f32.mrf.mxu0
    %v3608 = vadd.f32 0.0, %v3607
    %3609 = vdwg.mxu0
    %v3614 = vunpack.c.l.b16 %v2378
    %v3615 = vunpack.c.l.b16 %v2379
    %v3616 = vunpack.c.l.b16 %v2380
    %v3617 = vunpack.c.l.b16 %v2381
    %v3618 = vpack.c.b16 %v3615, %v3614
    %v3619 = vpack.c.b16 %v3617, %v3616
    %v3624 = vunpack.c.l.b16 %v2478
    %v3625 = vunpack.c.l.b16 %v2479
    %v3626 = vunpack.c.l.b16 %v2480
    %v3627 = vunpack.c.l.b16 %v2481
    %v3628 = vpack.c.b16 %v3625, %v3624
    %v3629 = vpack.c.b16 %v3627, %v3626
    %v3633 = vsel %vm1354, %v3618, 0
    %v3636 = vsel %vm1354, %v3619, 0
    %3638 = vmatpush.bf16.msra.mxu0 0
    %3639 = vmatpush.bf16.msra.mxu0 0
    %3640 = vmatpush.bf16.msra.mxu0 0
    %3641 = vmatpush.bf16.msra.mxu0 0
    %3642 = vmatpush.bf16.msra.mxu0 0
    %3643 = vmatpush.bf16.msra.mxu0 0
    %3644 = vmatpush.bf16.msra.mxu0 %v3629
    %3645 = vmatpush.bf16.msra.mxu0 %v3628
    %3646 = vmatmul.bf16.gmra.mxu0 %v3633
    %v3647 = vpop.f32.mrf.mxu0
    %v3648 = vadd.f32 0.0, %v3647
    %v3649 = vpop.f32.mrf.mxu0
    %v3650 = vadd.f32 0.0, %v3649
    %3651 = vmatmul.bf16.gmra.mxu0 %v3636
    %v3652 = vpop.f32.mrf.mxu0
    %v3653 = vadd.f32 0.0, %v3652
    %v3654 = vpop.f32.mrf.mxu0
    %v3655 = vadd.f32 0.0, %v3654
    %3656 = vdwg.mxu0
    %v3657 = vsel %vm1354, %v2520, 0.0
    %v3658 = vsel %vm1354, %v2567, 0.0
    %v3659 = vadd.f32 %v3657, %v3658
    %v3660 = vsel %vm1354, %v2614, 0.0
    %v3661 = vadd.f32 %v3659, %v3660
    %v3662 = vsel %vm1354, %v2661, 0.0
    %v3663 = vadd.f32 %v3661, %v3662
    %v3664 = vsel %vm1354, %v2708, 0.0
    %v3665 = vadd.f32 %v3663, %v3664
    %v3666 = vsel %vm1354, %v2755, 0.0
    %v3667 = vadd.f32 %v3665, %v3666
    %v3668 = vsel %vm1354, %v2802, 0.0
    %v3669 = vadd.f32 %v3667, %v3668
    %v3670 = vsel %vm1354, %v2849, 0.0
    %v3671 = vadd.f32 %v3669, %v3670
    %v3672 = vsel %vm1354, %v2896, 0.0
    %v3673 = vadd.f32 %v3671, %v3672
    %v3674 = vsel %vm1354, %v2943, 0.0
    %v3675 = vadd.f32 %v3673, %v3674
    %v3676 = vsel %vm1354, %v2990, 0.0
    %v3677 = vadd.f32 %v3675, %v3676
    %v3678 = vsel %vm1354, %v3037, 0.0
    %v3679 = vadd.f32 %v3677, %v3678
    %v3680 = vsel %vm1354, %v3084, 0.0
    %v3681 = vadd.f32 %v3679, %v3680
    %v3682 = vsel %vm1354, %v3131, 0.0
    %v3683 = vadd.f32 %v3681, %v3682
    %v3684 = vsel %vm1354, %v3178, 0.0
    %v3685 = vadd.f32 %v3683, %v3684
    %v3686 = vsel %vm1354, %v3225, 0.0
    %v3687 = vadd.f32 %v3685, %v3686
    %v3688 = vsel %vm1354, %v3272, 0.0
    %v3689 = vadd.f32 %v3687, %v3688
    %v3690 = vsel %vm1354, %v3319, 0.0
    %v3691 = vadd.f32 %v3689, %v3690
    %v3692 = vsel %vm1354, %v3366, 0.0
    %v3693 = vadd.f32 %v3691, %v3692
    %v3694 = vsel %vm1354, %v3413, 0.0
    %v3695 = vadd.f32 %v3693, %v3694
    %v3696 = vsel %vm1354, %v3460, 0.0
    %v3697 = vadd.f32 %v3695, %v3696
    %v3698 = vsel %vm1354, %v3507, 0.0
    %v3699 = vadd.f32 %v3697, %v3698
    %v3700 = vsel %vm1354, %v3554, 0.0
    %v3701 = vadd.f32 %v3699, %v3700
    %v3702 = vsel %vm1354, %v3601, 0.0
    %v3703 = vadd.f32 %v3701, %v3702
    %v3704 = vsel %vm1354, %v3648, 0.0
    %v3705 = vadd.f32 %v3703, %v3704
    %v3706 = vsel %vm1354, %v2522, 0.0
    %v3707 = vsel %vm1354, %v2569, 0.0
    %v3708 = vadd.f32 %v3706, %v3707
    %v3709 = vsel %vm1354, %v2616, 0.0
    %v3710 = vadd.f32 %v3708, %v3709
    %v3711 = vsel %vm1354, %v2663, 0.0
    %v3712 = vadd.f32 %v3710, %v3711
    %v3713 = vsel %vm1354, %v2710, 0.0
    %v3714 = vadd.f32 %v3712, %v3713
    %v3715 = vsel %vm1354, %v2757, 0.0
    %v3716 = vadd.f32 %v3714, %v3715
    %v3717 = vsel %vm1354, %v2804, 0.0
    %v3718 = vadd.f32 %v3716, %v3717
    %v3719 = vsel %vm1354, %v2851, 0.0
    %v3720 = vadd.f32 %v3718, %v3719
    %v3721 = vsel %vm1354, %v2898, 0.0
    %v3722 = vadd.f32 %v3720, %v3721
    %v3723 = vsel %vm1354, %v2945, 0.0
    %v3724 = vadd.f32 %v3722, %v3723
    %v3725 = vsel %vm1354, %v2992, 0.0
    %v3726 = vadd.f32 %v3724, %v3725
    %v3727 = vsel %vm1354, %v3039, 0.0
    %v3728 = vadd.f32 %v3726, %v3727
    %v3729 = vsel %vm1354, %v3086, 0.0
    %v3730 = vadd.f32 %v3728, %v3729
    %v3731 = vsel %vm1354, %v3133, 0.0
    %v3732 = vadd.f32 %v3730, %v3731
    %v3733 = vsel %vm1354, %v3180, 0.0
    %v3734 = vadd.f32 %v3732, %v3733
    %v3735 = vsel %vm1354, %v3227, 0.0
    %v3736 = vadd.f32 %v3734, %v3735
    %v3737 = vsel %vm1354, %v3274, 0.0
    %v3738 = vadd.f32 %v3736, %v3737
    %v3739 = vsel %vm1354, %v3321, 0.0
    %v3740 = vadd.f32 %v3738, %v3739
    %v3741 = vsel %vm1354, %v3368, 0.0
    %v3742 = vadd.f32 %v3740, %v3741
    %v3743 = vsel %vm1354, %v3415, 0.0
    %v3744 = vadd.f32 %v3742, %v3743
    %v3745 = vsel %vm1354, %v3462, 0.0
    %v3746 = vadd.f32 %v3744, %v3745
    %v3747 = vsel %vm1354, %v3509, 0.0
    %v3748 = vadd.f32 %v3746, %v3747
    %v3749 = vsel %vm1354, %v3556, 0.0
    %v3750 = vadd.f32 %v3748, %v3749
    %v3751 = vsel %vm1354, %v3603, 0.0
    %v3752 = vadd.f32 %v3750, %v3751
    %v3753 = vsel %vm1354, %v3650, 0.0
    %v3754 = vadd.f32 %v3752, %v3753
    %v3755 = vsel %vm1354, %v2525, 0.0
    %v3756 = vsel %vm1354, %v2572, 0.0
    %v3757 = vadd.f32 %v3755, %v3756
    %v3758 = vsel %vm1354, %v2619, 0.0
    %v3759 = vadd.f32 %v3757, %v3758
    %v3760 = vsel %vm1354, %v2666, 0.0
    %v3761 = vadd.f32 %v3759, %v3760
    %v3762 = vsel %vm1354, %v2713, 0.0
    %v3763 = vadd.f32 %v3761, %v3762
    %v3764 = vsel %vm1354, %v2760, 0.0
    %v3765 = vadd.f32 %v3763, %v3764
    %v3766 = vsel %vm1354, %v2807, 0.0
    %v3767 = vadd.f32 %v3765, %v3766
    %v3768 = vsel %vm1354, %v2854, 0.0
    %v3769 = vadd.f32 %v3767, %v3768
    %v3770 = vsel %vm1354, %v2901, 0.0
    %v3771 = vadd.f32 %v3769, %v3770
    %v3772 = vsel %vm1354, %v2948, 0.0
    %v3773 = vadd.f32 %v3771, %v3772
    %v3774 = vsel %vm1354, %v2995, 0.0
    %v3775 = vadd.f32 %v3773, %v3774
    %v3776 = vsel %vm1354, %v3042, 0.0
    %v3777 = vadd.f32 %v3775, %v3776
    %v3778 = vsel %vm1354, %v3089, 0.0
    %v3779 = vadd.f32 %v3777, %v3778
    %v3780 = vsel %vm1354, %v3136, 0.0
    %v3781 = vadd.f32 %v3779, %v3780
    %v3782 = vsel %vm1354, %v3183, 0.0
    %v3783 = vadd.f32 %v3781, %v3782
    %v3784 = vsel %vm1354, %v3230, 0.0
    %v3785 = vadd.f32 %v3783, %v3784
    %v3786 = vsel %vm1354, %v3277, 0.0
    %v3787 = vadd.f32 %v3785, %v3786
    %v3788 = vsel %vm1354, %v3324, 0.0
    %v3789 = vadd.f32 %v3787, %v3788
    %v3790 = vsel %vm1354, %v3371, 0.0
    %v3791 = vadd.f32 %v3789, %v3790
    %v3792 = vsel %vm1354, %v3418, 0.0
    %v3793 = vadd.f32 %v3791, %v3792
    %v3794 = vsel %vm1354, %v3465, 0.0
    %v3795 = vadd.f32 %v3793, %v3794
    %v3796 = vsel %vm1354, %v3512, 0.0
    %v3797 = vadd.f32 %v3795, %v3796
    %v3798 = vsel %vm1354, %v3559, 0.0
    %v3799 = vadd.f32 %v3797, %v3798
    %v3800 = vsel %vm1354, %v3606, 0.0
    %v3801 = vadd.f32 %v3799, %v3800
    %v3802 = vsel %vm1354, %v3653, 0.0
    %v3803 = vadd.f32 %v3801, %v3802
    %v3804 = vsel %vm1354, %v2527, 0.0
    %v3805 = vsel %vm1354, %v2574, 0.0
    %v3806 = vadd.f32 %v3804, %v3805
    %v3807 = vsel %vm1354, %v2621, 0.0
    %v3808 = vadd.f32 %v3806, %v3807
    %v3809 = vsel %vm1354, %v2668, 0.0
    %v3810 = vadd.f32 %v3808, %v3809
    %v3811 = vsel %vm1354, %v2715, 0.0
    %v3812 = vadd.f32 %v3810, %v3811
    %v3813 = vsel %vm1354, %v2762, 0.0
    %v3814 = vadd.f32 %v3812, %v3813
    %v3815 = vsel %vm1354, %v2809, 0.0
    %v3816 = vadd.f32 %v3814, %v3815
    %v3817 = vsel %vm1354, %v2856, 0.0
    %v3818 = vadd.f32 %v3816, %v3817
    %v3819 = vsel %vm1354, %v2903, 0.0
    %v3820 = vadd.f32 %v3818, %v3819
    %v3821 = vsel %vm1354, %v2950, 0.0
    %v3822 = vadd.f32 %v3820, %v3821
    %v3823 = vsel %vm1354, %v2997, 0.0
    %v3824 = vadd.f32 %v3822, %v3823
    %v3825 = vsel %vm1354, %v3044, 0.0
    %v3826 = vadd.f32 %v3824, %v3825
    %v3827 = vsel %vm1354, %v3091, 0.0
    %v3828 = vadd.f32 %v3826, %v3827
    %v3829 = vsel %vm1354, %v3138, 0.0
    %v3830 = vadd.f32 %v3828, %v3829
    %v3831 = vsel %vm1354, %v3185, 0.0
    %v3832 = vadd.f32 %v3830, %v3831
    %v3833 = vsel %vm1354, %v3232, 0.0
    %v3834 = vadd.f32 %v3832, %v3833
    %v3835 = vsel %vm1354, %v3279, 0.0
    %v3836 = vadd.f32 %v3834, %v3835
    %v3837 = vsel %vm1354, %v3326, 0.0
    %v3838 = vadd.f32 %v3836, %v3837
    %v3839 = vsel %vm1354, %v3373, 0.0
    %v3840 = vadd.f32 %v3838, %v3839
    %v3841 = vsel %vm1354, %v3420, 0.0
    %v3842 = vadd.f32 %v3840, %v3841
    %v3843 = vsel %vm1354, %v3467, 0.0
    %v3844 = vadd.f32 %v3842, %v3843
    %v3845 = vsel %vm1354, %v3514, 0.0
    %v3846 = vadd.f32 %v3844, %v3845
    %v3847 = vsel %vm1354, %v3561, 0.0
    %v3848 = vadd.f32 %v3846, %v3847
    %v3849 = vsel %vm1354, %v3608, 0.0
    %v3850 = vadd.f32 %v3848, %v3849
    %v3851 = vsel %vm1354, %v3655, 0.0
    %v3852 = vadd.f32 %v3850, %v3851
    %v3853 = vld [vmem:[%s5] sm:$0x1]
    %v3855 = vperm.slane %v3853, 0
    %v3857 = vadd.f32 %v3705, %v3855
    %v3858 = vadd.f32 %v3754, %v3855
    %v3859 = vadd.f32 %v3803, %v3855
    %v3860 = vadd.f32 %v3852, %v3855
    %3863 = vrot.lane.b32.xlu0 %v3857, 120
    %v3864 = vpop.permute.xlu0 %3863
    %3865 = vrot.lane.b32.xlu0 %v3858, 120
    %v3866 = vpop.permute.xlu0 %3865
    %3869 = vrot.lane.b32.xlu0 %v3857, 112
    %v3870 = vpop.permute.xlu0 %3869
    %3871 = vrot.lane.b32.xlu0 %v3858, 112
    %v3872 = vpop.permute.xlu0 %3871
    %3875 = vrot.lane.b32.xlu0 %v3857, 104
    %v3876 = vpop.permute.xlu0 %3875
    %3877 = vrot.lane.b32.xlu0 %v3858, 104
    %v3878 = vpop.permute.xlu0 %3877
    %3883 = vrot.lane.b32.xlu0 %v3859, 120
    %v3884 = vpop.permute.xlu0 %3883
    %3885 = vrot.lane.b32.xlu0 %v3860, 120
    %v3886 = vpop.permute.xlu0 %3885
    %3889 = vrot.lane.b32.xlu0 %v3859, 112
    %v3890 = vpop.permute.xlu0 %3889
    %3891 = vrot.lane.b32.xlu0 %v3860, 112
    %v3892 = vpop.permute.xlu0 %3891
    %3895 = vrot.lane.b32.xlu0 %v3859, 104
    %v3896 = vpop.permute.xlu0 %3895
    %3897 = vrot.lane.b32.xlu0 %v3860, 104
    %v3898 = vpop.permute.xlu0 %3897
    %v3901 = vmul.f32 %v3857, %v3857
    %v3902 = vmul.f32 %v3858, %v3858
    %v3903 = vmul.f32 %v3864, %v3864
    %v3904 = vmul.f32 %v3866, %v3866
    %v3905 = vmul.f32 %v3870, %v3870
    %v3906 = vmul.f32 %v3872, %v3872
    %v3907 = vmul.f32 %v3876, %v3876
    %v3908 = vmul.f32 %v3878, %v3878
    %v3909 = vmul.f32 %v3859, %v3859
    %v3910 = vmul.f32 %v3860, %v3860
    %v3911 = vmul.f32 %v3884, %v3884
    %v3912 = vmul.f32 %v3886, %v3886
    %v3913 = vmul.f32 %v3890, %v3890
    %v3914 = vmul.f32 %v3892, %v3892
    %v3915 = vmul.f32 %v3896, %v3896
    %v3916 = vmul.f32 %v3898, %v3898
    %vm3917 = vcmask 64512
    %v3918 = vsel %vm3917, %v3901, 0.0
    %3919 = vadd.xlane.f32.xlu0 %v3918
    %v3920 = vpop.xlane.xlu0 %3919
    %v3921 = vsel %vm3917, %v3902, 0.0
    %3922 = vadd.xlane.f32.xlu0 %v3921
    %v3923 = vpop.xlane.xlu0 %3922
    %v3924 = vsel %vm3917, %v3903, 0.0
    %3925 = vadd.xlane.f32.xlu0 %v3924
    %v3926 = vpop.xlane.xlu0 %3925
    %v3927 = vsel %vm3917, %v3904, 0.0
    %3928 = vadd.xlane.f32.xlu0 %v3927
    %v3929 = vpop.xlane.xlu0 %3928
    %v3930 = vsel %vm3917, %v3905, 0.0
    %3931 = vadd.xlane.f32.xlu0 %v3930
    %v3932 = vpop.xlane.xlu0 %3931
    %v3933 = vsel %vm3917, %v3906, 0.0
    %3934 = vadd.xlane.f32.xlu0 %v3933
    %v3935 = vpop.xlane.xlu0 %3934
    %v3936 = vsel %vm3917, %v3907, 0.0
    %3937 = vadd.xlane.f32.xlu0 %v3936
    %v3938 = vpop.xlane.xlu0 %3937
    %v3939 = vsel %vm3917, %v3908, 0.0
    %3940 = vadd.xlane.f32.xlu0 %v3939
    %v3941 = vpop.xlane.xlu0 %3940
    %v3942 = vsel %vm3917, %v3909, 0.0
    %3943 = vadd.xlane.f32.xlu0 %v3942
    %v3944 = vpop.xlane.xlu0 %3943
    %v3945 = vsel %vm3917, %v3910, 0.0
    %3946 = vadd.xlane.f32.xlu0 %v3945
    %v3947 = vpop.xlane.xlu0 %3946
    %v3948 = vsel %vm3917, %v3911, 0.0
    %3949 = vadd.xlane.f32.xlu0 %v3948
    %v3950 = vpop.xlane.xlu0 %3949
    %v3951 = vsel %vm3917, %v3912, 0.0
    %3952 = vadd.xlane.f32.xlu0 %v3951
    %v3953 = vpop.xlane.xlu0 %3952
    %v3954 = vsel %vm3917, %v3913, 0.0
    %3955 = vadd.xlane.f32.xlu0 %v3954
    %v3956 = vpop.xlane.xlu0 %3955
    %v3957 = vsel %vm3917, %v3914, 0.0
    %3958 = vadd.xlane.f32.xlu0 %v3957
    %v3959 = vpop.xlane.xlu0 %3958
    %v3960 = vsel %vm3917, %v3915, 0.0
    %3961 = vadd.xlane.f32.xlu0 %v3960
    %v3962 = vpop.xlane.xlu0 %3961
    %v3963 = vsel %vm3917, %v3916, 0.0
    %3964 = vadd.xlane.f32.xlu0 %v3963
    %v3965 = vpop.xlane.xlu0 %3964
    %v3966 = vadd.f32 %v3920, 1.0
    %v3967 = vadd.f32 %v3923, 1.0
    %v3968 = vadd.f32 %v3926, 1.0
    %v3969 = vadd.f32 %v3929, 1.0
    %v3970 = vadd.f32 %v3932, 1.0
    %v3971 = vadd.f32 %v3935, 1.0
    %v3972 = vadd.f32 %v3938, 1.0
    %v3973 = vadd.f32 %v3941, 1.0
    %v3974 = vadd.f32 %v3944, 1.0
    %v3975 = vadd.f32 %v3947, 1.0
    %v3976 = vadd.f32 %v3950, 1.0
    %v3977 = vadd.f32 %v3953, 1.0
    %v3978 = vadd.f32 %v3956, 1.0
    %v3979 = vadd.f32 %v3959, 1.0
    %v3980 = vadd.f32 %v3962, 1.0
    %v3981 = vadd.f32 %v3965, 1.0
    %v3982 = vrcp.pop %v3966
    %v3983 = vmul.f32 %v3966, %v3982
    %v3984 = vsub.f32 1.0, %v3983
    %v3985 = vmul.f32 %v3982, %v3984
    %v3986 = vadd.f32 %v3982, %v3985
    %vm3987 = vweird.f32 %v3966
    %vm3988 = vweird.f32 %v3982
    %vm3989 = vmor %vm3987, %vm3988
    %v3990 = vsel %vm3989, %v3982, %v3986
    %v3991 = vand.u32 2147483647, %v3966
    %vm3992 = vcmp.eq.f32.partialorder %v3991, 8.507059e+37
    %v3993 = vand.u32 %v3966, 2147483648
    %v3994 = vor.u32 1.1754944e-38, %v3993
    %v3995 = vsel %vm3992, %v3994, %v3990
    %v3996 = vmul.f32 %v3920, %v3995
    %v3997 = vrcp.pop %v3967
    %v3998 = vmul.f32 %v3967, %v3997
    %v3999 = vsub.f32 1.0, %v3998
    %v4000 = vmul.f32 %v3997, %v3999
    %v4001 = vadd.f32 %v3997, %v4000
    %vm4002 = vweird.f32 %v3967
    %vm4003 = vweird.f32 %v3997
    %vm4004 = vmor %vm4002, %vm4003
    %v4005 = vsel %vm4004, %v3997, %v4001
    %v4006 = vand.u32 2147483647, %v3967
    %vm4007 = vcmp.eq.f32.partialorder %v4006, 8.507059e+37
    %v4008 = vand.u32 %v3967, 2147483648
    %v4009 = vor.u32 1.1754944e-38, %v4008
    %v4010 = vsel %vm4007, %v4009, %v4005
    %v4011 = vmul.f32 %v3923, %v4010
    %v4012 = vrcp.pop %v3968
    %v4013 = vmul.f32 %v3968, %v4012
    %v4014 = vsub.f32 1.0, %v4013
    %v4015 = vmul.f32 %v4012, %v4014
    %v4016 = vadd.f32 %v4012, %v4015
    %vm4017 = vweird.f32 %v3968
    %vm4018 = vweird.f32 %v4012
    %vm4019 = vmor %vm4017, %vm4018
    %v4020 = vsel %vm4019, %v4012, %v4016
    %v4021 = vand.u32 2147483647, %v3968
    %vm4022 = vcmp.eq.f32.partialorder %v4021, 8.507059e+37
    %v4023 = vand.u32 %v3968, 2147483648
    %v4024 = vor.u32 1.1754944e-38, %v4023
    %v4025 = vsel %vm4022, %v4024, %v4020
    %v4026 = vmul.f32 %v3926, %v4025
    %v4027 = vrcp.pop %v3969
    %v4028 = vmul.f32 %v3969, %v4027
    %v4029 = vsub.f32 1.0, %v4028
    %v4030 = vmul.f32 %v4027, %v4029
    %v4031 = vadd.f32 %v4027, %v4030
    %vm4032 = vweird.f32 %v3969
    %vm4033 = vweird.f32 %v4027
    %vm4034 = vmor %vm4032, %vm4033
    %v4035 = vsel %vm4034, %v4027, %v4031
    %v4036 = vand.u32 2147483647, %v3969
    %vm4037 = vcmp.eq.f32.partialorder %v4036, 8.507059e+37
    %v4038 = vand.u32 %v3969, 2147483648
    %v4039 = vor.u32 1.1754944e-38, %v4038
    %v4040 = vsel %vm4037, %v4039, %v4035
    %v4041 = vmul.f32 %v3929, %v4040
    %v4042 = vrcp.pop %v3970
    %v4043 = vmul.f32 %v3970, %v4042
    %v4044 = vsub.f32 1.0, %v4043
    %v4045 = vmul.f32 %v4042, %v4044
    %v4046 = vadd.f32 %v4042, %v4045
    %vm4047 = vweird.f32 %v3970
    %vm4048 = vweird.f32 %v4042
    %vm4049 = vmor %vm4047, %vm4048
    %v4050 = vsel %vm4049, %v4042, %v4046
    %v4051 = vand.u32 2147483647, %v3970
    %vm4052 = vcmp.eq.f32.partialorder %v4051, 8.507059e+37
    %v4053 = vand.u32 %v3970, 2147483648
    %v4054 = vor.u32 1.1754944e-38, %v4053
    %v4055 = vsel %vm4052, %v4054, %v4050
    %v4056 = vmul.f32 %v3932, %v4055
    %v4057 = vrcp.pop %v3971
    %v4058 = vmul.f32 %v3971, %v4057
    %v4059 = vsub.f32 1.0, %v4058
    %v4060 = vmul.f32 %v4057, %v4059
    %v4061 = vadd.f32 %v4057, %v4060
    %vm4062 = vweird.f32 %v3971
    %vm4063 = vweird.f32 %v4057
    %vm4064 = vmor %vm4062, %vm4063
    %v4065 = vsel %vm4064, %v4057, %v4061
    %v4066 = vand.u32 2147483647, %v3971
    %vm4067 = vcmp.eq.f32.partialorder %v4066, 8.507059e+37
    %v4068 = vand.u32 %v3971, 2147483648
    %v4069 = vor.u32 1.1754944e-38, %v4068
    %v4070 = vsel %vm4067, %v4069, %v4065
    %v4071 = vmul.f32 %v3935, %v4070
    %v4072 = vrcp.pop %v3972
    %v4073 = vmul.f32 %v3972, %v4072
    %v4074 = vsub.f32 1.0, %v4073
    %v4075 = vmul.f32 %v4072, %v4074
    %v4076 = vadd.f32 %v4072, %v4075
    %vm4077 = vweird.f32 %v3972
    %vm4078 = vweird.f32 %v4072
    %vm4079 = vmor %vm4077, %vm4078
    %v4080 = vsel %vm4079, %v4072, %v4076
    %v4081 = vand.u32 2147483647, %v3972
    %vm4082 = vcmp.eq.f32.partialorder %v4081, 8.507059e+37
    %v4083 = vand.u32 %v3972, 2147483648
    %v4084 = vor.u32 1.1754944e-38, %v4083
    %v4085 = vsel %vm4082, %v4084, %v4080
    %v4086 = vmul.f32 %v3938, %v4085
    %v4087 = vrcp.pop %v3973
    %v4088 = vmul.f32 %v3973, %v4087
    %v4089 = vsub.f32 1.0, %v4088
    %v4090 = vmul.f32 %v4087, %v4089
    %v4091 = vadd.f32 %v4087, %v4090
    %vm4092 = vweird.f32 %v3973
    %vm4093 = vweird.f32 %v4087
    %vm4094 = vmor %vm4092, %vm4093
    %v4095 = vsel %vm4094, %v4087, %v4091
    %v4096 = vand.u32 2147483647, %v3973
    %vm4097 = vcmp.eq.f32.partialorder %v4096, 8.507059e+37
    %v4098 = vand.u32 %v3973, 2147483648
    %v4099 = vor.u32 1.1754944e-38, %v4098
    %v4100 = vsel %vm4097, %v4099, %v4095
    %v4101 = vmul.f32 %v3941, %v4100
    %v4102 = vrcp.pop %v3974
    %v4103 = vmul.f32 %v3974, %v4102
    %v4104 = vsub.f32 1.0, %v4103
    %v4105 = vmul.f32 %v4102, %v4104
    %v4106 = vadd.f32 %v4102, %v4105
    %vm4107 = vweird.f32 %v3974
    %vm4108 = vweird.f32 %v4102
    %vm4109 = vmor %vm4107, %vm4108
    %v4110 = vsel %vm4109, %v4102, %v4106
    %v4111 = vand.u32 2147483647, %v3974
    %vm4112 = vcmp.eq.f32.partialorder %v4111, 8.507059e+37
    %v4113 = vand.u32 %v3974, 2147483648
    %v4114 = vor.u32 1.1754944e-38, %v4113
    %v4115 = vsel %vm4112, %v4114, %v4110
    %v4116 = vmul.f32 %v3944, %v4115
    %v4117 = vrcp.pop %v3975
    %v4118 = vmul.f32 %v3975, %v4117
    %v4119 = vsub.f32 1.0, %v4118
    %v4120 = vmul.f32 %v4117, %v4119
    %v4121 = vadd.f32 %v4117, %v4120
    %vm4122 = vweird.f32 %v3975
    %vm4123 = vweird.f32 %v4117
    %vm4124 = vmor %vm4122, %vm4123
    %v4125 = vsel %vm4124, %v4117, %v4121
    %v4126 = vand.u32 2147483647, %v3975
    %vm4127 = vcmp.eq.f32.partialorder %v4126, 8.507059e+37
    %v4128 = vand.u32 %v3975, 2147483648
    %v4129 = vor.u32 1.1754944e-38, %v4128
    %v4130 = vsel %vm4127, %v4129, %v4125
    %v4131 = vmul.f32 %v3947, %v4130
    %v4132 = vrcp.pop %v3976
    %v4133 = vmul.f32 %v3976, %v4132
    %v4134 = vsub.f32 1.0, %v4133
    %v4135 = vmul.f32 %v4132, %v4134
    %v4136 = vadd.f32 %v4132, %v4135
    %vm4137 = vweird.f32 %v3976
    %vm4138 = vweird.f32 %v4132
    %vm4139 = vmor %vm4137, %vm4138
    %v4140 = vsel %vm4139, %v4132, %v4136
    %v4141 = vand.u32 2147483647, %v3976
    %vm4142 = vcmp.eq.f32.partialorder %v4141, 8.507059e+37
    %v4143 = vand.u32 %v3976, 2147483648
    %v4144 = vor.u32 1.1754944e-38, %v4143
    %v4145 = vsel %vm4142, %v4144, %v4140
    %v4146 = vmul.f32 %v3950, %v4145
    %v4147 = vrcp.pop %v3977
    %v4148 = vmul.f32 %v3977, %v4147
    %v4149 = vsub.f32 1.0, %v4148
    %v4150 = vmul.f32 %v4147, %v4149
    %v4151 = vadd.f32 %v4147, %v4150
    %vm4152 = vweird.f32 %v3977
    %vm4153 = vweird.f32 %v4147
    %vm4154 = vmor %vm4152, %vm4153
    %v4155 = vsel %vm4154, %v4147, %v4151
    %v4156 = vand.u32 2147483647, %v3977
    %vm4157 = vcmp.eq.f32.partialorder %v4156, 8.507059e+37
    %v4158 = vand.u32 %v3977, 2147483648
    %v4159 = vor.u32 1.1754944e-38, %v4158
    %v4160 = vsel %vm4157, %v4159, %v4155
    %v4161 = vmul.f32 %v3953, %v4160
    %v4162 = vrcp.pop %v3978
    %v4163 = vmul.f32 %v3978, %v4162
    %v4164 = vsub.f32 1.0, %v4163
    %v4165 = vmul.f32 %v4162, %v4164
    %v4166 = vadd.f32 %v4162, %v4165
    %vm4167 = vweird.f32 %v3978
    %vm4168 = vweird.f32 %v4162
    %vm4169 = vmor %vm4167, %vm4168
    %v4170 = vsel %vm4169, %v4162, %v4166
    %v4171 = vand.u32 2147483647, %v3978
    %vm4172 = vcmp.eq.f32.partialorder %v4171, 8.507059e+37
    %v4173 = vand.u32 %v3978, 2147483648
    %v4174 = vor.u32 1.1754944e-38, %v4173
    %v4175 = vsel %vm4172, %v4174, %v4170
    %v4176 = vmul.f32 %v3956, %v4175
    %v4177 = vrcp.pop %v3979
    %v4178 = vmul.f32 %v3979, %v4177
    %v4179 = vsub.f32 1.0, %v4178
    %v4180 = vmul.f32 %v4177, %v4179
    %v4181 = vadd.f32 %v4177, %v4180
    %vm4182 = vweird.f32 %v3979
    %vm4183 = vweird.f32 %v4177
    %vm4184 = vmor %vm4182, %vm4183
    %v4185 = vsel %vm4184, %v4177, %v4181
    %v4186 = vand.u32 2147483647, %v3979
    %vm4187 = vcmp.eq.f32.partialorder %v4186, 8.507059e+37
    %v4188 = vand.u32 %v3979, 2147483648
    %v4189 = vor.u32 1.1754944e-38, %v4188
    %v4190 = vsel %vm4187, %v4189, %v4185
    %v4191 = vmul.f32 %v3959, %v4190
    %v4192 = vrcp.pop %v3980
    %v4193 = vmul.f32 %v3980, %v4192
    %v4194 = vsub.f32 1.0, %v4193
    %v4195 = vmul.f32 %v4192, %v4194
    %v4196 = vadd.f32 %v4192, %v4195
    %vm4197 = vweird.f32 %v3980
    %vm4198 = vweird.f32 %v4192
    %vm4199 = vmor %vm4197, %vm4198
    %v4200 = vsel %vm4199, %v4192, %v4196
    %v4201 = vand.u32 2147483647, %v3980
    %vm4202 = vcmp.eq.f32.partialorder %v4201, 8.507059e+37
    %v4203 = vand.u32 %v3980, 2147483648
    %v4204 = vor.u32 1.1754944e-38, %v4203
    %v4205 = vsel %vm4202, %v4204, %v4200
    %v4206 = vmul.f32 %v3962, %v4205
    %v4207 = vrcp.pop %v3981
    %v4208 = vmul.f32 %v3981, %v4207
    %v4209 = vsub.f32 1.0, %v4208
    %v4210 = vmul.f32 %v4207, %v4209
    %v4211 = vadd.f32 %v4207, %v4210
    %vm4212 = vweird.f32 %v3981
    %vm4213 = vweird.f32 %v4207
    %vm4214 = vmor %vm4212, %vm4213
    %v4215 = vsel %vm4214, %v4207, %v4211
    %v4216 = vand.u32 2147483647, %v3981
    %vm4217 = vcmp.eq.f32.partialorder %v4216, 8.507059e+37
    %v4218 = vand.u32 %v3981, 2147483648
    %v4219 = vor.u32 1.1754944e-38, %v4218
    %v4220 = vsel %vm4217, %v4219, %v4215
    %v4221 = vmul.f32 %v3965, %v4220
    %v4222 = vadd.f32 %v3920, 1e-08
    %v4223 = vadd.f32 %v3923, 1e-08
    %v4224 = vadd.f32 %v3926, 1e-08
    %v4225 = vadd.f32 %v3929, 1e-08
    %v4226 = vadd.f32 %v3932, 1e-08
    %v4227 = vadd.f32 %v3935, 1e-08
    %v4228 = vadd.f32 %v3938, 1e-08
    %v4229 = vadd.f32 %v3941, 1e-08
    %v4230 = vadd.f32 %v3944, 1e-08
    %v4231 = vadd.f32 %v3947, 1e-08
    %v4232 = vadd.f32 %v3950, 1e-08
    %v4233 = vadd.f32 %v3953, 1e-08
    %v4234 = vadd.f32 %v3956, 1e-08
    %v4235 = vadd.f32 %v3959, 1e-08
    %v4236 = vadd.f32 %v3962, 1e-08
    %v4237 = vadd.f32 %v3965, 1e-08
    %v4238 = vrsqrt.pop %v4222
    %v4239 = vmul.f32 %v4238, %v4222
    %v4240 = vmul.f32 %v4239, %v4238
    %v4241 = vmul.f32 0.5, %v4240
    %v4242 = vsub.f32 1.5, %v4241
    %v4243 = vmul.f32 %v4238, %v4242
    %v4244 = vmul.f32 %v4222, %v4243
    %vm4245 = vcmp.eq.f32.partialorder %v4222, inf
    %v4246 = vsel %vm4245, %v4222, %v4244
    %vm4247 = vcmp.eq.f32.partialorder %v4222, 0.0
    %v4248 = vand.u32 %v4222, 2147483648
    %v4249 = vsel %vm4247, %v4248, %v4246
    %v4250 = vrsqrt.pop %v4223
    %v4251 = vmul.f32 %v4250, %v4223
    %v4252 = vmul.f32 %v4251, %v4250
    %v4253 = vmul.f32 0.5, %v4252
    %v4254 = vsub.f32 1.5, %v4253
    %v4255 = vmul.f32 %v4250, %v4254
    %v4256 = vmul.f32 %v4223, %v4255
    %vm4257 = vcmp.eq.f32.partialorder %v4223, inf
    %v4258 = vsel %vm4257, %v4223, %v4256
    %vm4259 = vcmp.eq.f32.partialorder %v4223, 0.0
    %v4260 = vand.u32 %v4223, 2147483648
    %v4261 = vsel %vm4259, %v4260, %v4258
    %v4262 = vrsqrt.pop %v4224
    %v4263 = vmul.f32 %v4262, %v4224
    %v4264 = vmul.f32 %v4263, %v4262
    %v4265 = vmul.f32 0.5, %v4264
    %v4266 = vsub.f32 1.5, %v4265
    %v4267 = vmul.f32 %v4262, %v4266
    %v4268 = vmul.f32 %v4224, %v4267
    %vm4269 = vcmp.eq.f32.partialorder %v4224, inf
    %v4270 = vsel %vm4269, %v4224, %v4268
    %vm4271 = vcmp.eq.f32.partialorder %v4224, 0.0
    %v4272 = vand.u32 %v4224, 2147483648
    %v4273 = vsel %vm4271, %v4272, %v4270
    %v4274 = vrsqrt.pop %v4225
    %v4275 = vmul.f32 %v4274, %v4225
    %v4276 = vmul.f32 %v4275, %v4274
    %v4277 = vmul.f32 0.5, %v4276
    %v4278 = vsub.f32 1.5, %v4277
    %v4279 = vmul.f32 %v4274, %v4278
    %v4280 = vmul.f32 %v4225, %v4279
    %vm4281 = vcmp.eq.f32.partialorder %v4225, inf
    %v4282 = vsel %vm4281, %v4225, %v4280
    %vm4283 = vcmp.eq.f32.partialorder %v4225, 0.0
    %v4284 = vand.u32 %v4225, 2147483648
    %v4285 = vsel %vm4283, %v4284, %v4282
    %v4286 = vrsqrt.pop %v4226
    %v4287 = vmul.f32 %v4286, %v4226
    %v4288 = vmul.f32 %v4287, %v4286
    %v4289 = vmul.f32 0.5, %v4288
    %v4290 = vsub.f32 1.5, %v4289
    %v4291 = vmul.f32 %v4286, %v4290
    %v4292 = vmul.f32 %v4226, %v4291
    %vm4293 = vcmp.eq.f32.partialorder %v4226, inf
    %v4294 = vsel %vm4293, %v4226, %v4292
    %vm4295 = vcmp.eq.f32.partialorder %v4226, 0.0
    %v4296 = vand.u32 %v4226, 2147483648
    %v4297 = vsel %vm4295, %v4296, %v4294
    %v4298 = vrsqrt.pop %v4227
    %v4299 = vmul.f32 %v4298, %v4227
    %v4300 = vmul.f32 %v4299, %v4298
    %v4301 = vmul.f32 0.5, %v4300
    %v4302 = vsub.f32 1.5, %v4301
    %v4303 = vmul.f32 %v4298, %v4302
    %v4304 = vmul.f32 %v4227, %v4303
    %vm4305 = vcmp.eq.f32.partialorder %v4227, inf
    %v4306 = vsel %vm4305, %v4227, %v4304
    %vm4307 = vcmp.eq.f32.partialorder %v4227, 0.0
    %v4308 = vand.u32 %v4227, 2147483648
    %v4309 = vsel %vm4307, %v4308, %v4306
    %v4310 = vrsqrt.pop %v4228
    %v4311 = vmul.f32 %v4310, %v4228
    %v4312 = vmul.f32 %v4311, %v4310
    %v4313 = vmul.f32 0.5, %v4312
    %v4314 = vsub.f32 1.5, %v4313
    %v4315 = vmul.f32 %v4310, %v4314
    %v4316 = vmul.f32 %v4228, %v4315
    %vm4317 = vcmp.eq.f32.partialorder %v4228, inf
    %v4318 = vsel %vm4317, %v4228, %v4316
    %vm4319 = vcmp.eq.f32.partialorder %v4228, 0.0
    %v4320 = vand.u32 %v4228, 2147483648
    %v4321 = vsel %vm4319, %v4320, %v4318
    %v4322 = vrsqrt.pop %v4229
    %v4323 = vmul.f32 %v4322, %v4229
    %v4324 = vmul.f32 %v4323, %v4322
    %v4325 = vmul.f32 0.5, %v4324
    %v4326 = vsub.f32 1.5, %v4325
    %v4327 = vmul.f32 %v4322, %v4326
    %v4328 = vmul.f32 %v4229, %v4327
    %vm4329 = vcmp.eq.f32.partialorder %v4229, inf
    %v4330 = vsel %vm4329, %v4229, %v4328
    %vm4331 = vcmp.eq.f32.partialorder %v4229, 0.0
    %v4332 = vand.u32 %v4229, 2147483648
    %v4333 = vsel %vm4331, %v4332, %v4330
    %v4334 = vrsqrt.pop %v4230
    %v4335 = vmul.f32 %v4334, %v4230
    %v4336 = vmul.f32 %v4335, %v4334
    %v4337 = vmul.f32 0.5, %v4336
    %v4338 = vsub.f32 1.5, %v4337
    %v4339 = vmul.f32 %v4334, %v4338
    %v4340 = vmul.f32 %v4230, %v4339
    %vm4341 = vcmp.eq.f32.partialorder %v4230, inf
    %v4342 = vsel %vm4341, %v4230, %v4340
    %vm4343 = vcmp.eq.f32.partialorder %v4230, 0.0
    %v4344 = vand.u32 %v4230, 2147483648
    %v4345 = vsel %vm4343, %v4344, %v4342
    %v4346 = vrsqrt.pop %v4231
    %v4347 = vmul.f32 %v4346, %v4231
    %v4348 = vmul.f32 %v4347, %v4346
    %v4349 = vmul.f32 0.5, %v4348
    %v4350 = vsub.f32 1.5, %v4349
    %v4351 = vmul.f32 %v4346, %v4350
    %v4352 = vmul.f32 %v4231, %v4351
    %vm4353 = vcmp.eq.f32.partialorder %v4231, inf
    %v4354 = vsel %vm4353, %v4231, %v4352
    %vm4355 = vcmp.eq.f32.partialorder %v4231, 0.0
    %v4356 = vand.u32 %v4231, 2147483648
    %v4357 = vsel %vm4355, %v4356, %v4354
    %v4358 = vrsqrt.pop %v4232
    %v4359 = vmul.f32 %v4358, %v4232
    %v4360 = vmul.f32 %v4359, %v4358
    %v4361 = vmul.f32 0.5, %v4360
    %v4362 = vsub.f32 1.5, %v4361
    %v4363 = vmul.f32 %v4358, %v4362
    %v4364 = vmul.f32 %v4232, %v4363
    %vm4365 = vcmp.eq.f32.partialorder %v4232, inf
    %v4366 = vsel %vm4365, %v4232, %v4364
    %vm4367 = vcmp.eq.f32.partialorder %v4232, 0.0
    %v4368 = vand.u32 %v4232, 2147483648
    %v4369 = vsel %vm4367, %v4368, %v4366
    %v4370 = vrsqrt.pop %v4233
    %v4371 = vmul.f32 %v4370, %v4233
    %v4372 = vmul.f32 %v4371, %v4370
    %v4373 = vmul.f32 0.5, %v4372
    %v4374 = vsub.f32 1.5, %v4373
    %v4375 = vmul.f32 %v4370, %v4374
    %v4376 = vmul.f32 %v4233, %v4375
    %vm4377 = vcmp.eq.f32.partialorder %v4233, inf
    %v4378 = vsel %vm4377, %v4233, %v4376
    %vm4379 = vcmp.eq.f32.partialorder %v4233, 0.0
    %v4380 = vand.u32 %v4233, 2147483648
    %v4381 = vsel %vm4379, %v4380, %v4378
    %v4382 = vrsqrt.pop %v4234
    %v4383 = vmul.f32 %v4382, %v4234
    %v4384 = vmul.f32 %v4383, %v4382
    %v4385 = vmul.f32 0.5, %v4384
    %v4386 = vsub.f32 1.5, %v4385
    %v4387 = vmul.f32 %v4382, %v4386
    %v4388 = vmul.f32 %v4234, %v4387
    %vm4389 = vcmp.eq.f32.partialorder %v4234, inf
    %v4390 = vsel %vm4389, %v4234, %v4388
    %vm4391 = vcmp.eq.f32.partialorder %v4234, 0.0
    %v4392 = vand.u32 %v4234, 2147483648
    %v4393 = vsel %vm4391, %v4392, %v4390
    %v4394 = vrsqrt.pop %v4235
    %v4395 = vmul.f32 %v4394, %v4235
    %v4396 = vmul.f32 %v4395, %v4394
    %v4397 = vmul.f32 0.5, %v4396
    %v4398 = vsub.f32 1.5, %v4397
    %v4399 = vmul.f32 %v4394, %v4398
    %v4400 = vmul.f32 %v4235, %v4399
    %vm4401 = vcmp.eq.f32.partialorder %v4235, inf
    %v4402 = vsel %vm4401, %v4235, %v4400
    %vm4403 = vcmp.eq.f32.partialorder %v4235, 0.0
    %v4404 = vand.u32 %v4235, 2147483648
    %v4405 = vsel %vm4403, %v4404, %v4402
    %v4406 = vrsqrt.pop %v4236
    %v4407 = vmul.f32 %v4406, %v4236
    %v4408 = vmul.f32 %v4407, %v4406
    %v4409 = vmul.f32 0.5, %v4408
    %v4410 = vsub.f32 1.5, %v4409
    %v4411 = vmul.f32 %v4406, %v4410
    %v4412 = vmul.f32 %v4236, %v4411
    %vm4413 = vcmp.eq.f32.partialorder %v4236, inf
    %v4414 = vsel %vm4413, %v4236, %v4412
    %vm4415 = vcmp.eq.f32.partialorder %v4236, 0.0
    %v4416 = vand.u32 %v4236, 2147483648
    %v4417 = vsel %vm4415, %v4416, %v4414
    %v4418 = vrsqrt.pop %v4237
    %v4419 = vmul.f32 %v4418, %v4237
    %v4420 = vmul.f32 %v4419, %v4418
    %v4421 = vmul.f32 0.5, %v4420
    %v4422 = vsub.f32 1.5, %v4421
    %v4423 = vmul.f32 %v4418, %v4422
    %v4424 = vmul.f32 %v4237, %v4423
    %vm4425 = vcmp.eq.f32.partialorder %v4237, inf
    %v4426 = vsel %vm4425, %v4237, %v4424
    %vm4427 = vcmp.eq.f32.partialorder %v4237, 0.0
    %v4428 = vand.u32 %v4237, 2147483648
    %v4429 = vsel %vm4427, %v4428, %v4426
    %v4430 = vrcp.pop %v4249
    %v4431 = vmul.f32 %v4249, %v4430
    %v4432 = vsub.f32 1.0, %v4431
    %v4433 = vmul.f32 %v4430, %v4432
    %v4434 = vadd.f32 %v4430, %v4433
    %vm4435 = vweird.f32 %v4249
    %vm4436 = vweird.f32 %v4430
    %vm4437 = vmor %vm4435, %vm4436
    %v4438 = vsel %vm4437, %v4430, %v4434
    %v4439 = vand.u32 2147483647, %v4249
    %vm4440 = vcmp.eq.f32.partialorder %v4439, 8.507059e+37
    %v4441 = vand.u32 %v4249, 2147483648
    %v4442 = vor.u32 1.1754944e-38, %v4441
    %v4443 = vsel %vm4440, %v4442, %v4438
    %v4444 = vmul.f32 %v3996, %v4443
    %v4445 = vrcp.pop %v4261
    %v4446 = vmul.f32 %v4261, %v4445
    %v4447 = vsub.f32 1.0, %v4446
    %v4448 = vmul.f32 %v4445, %v4447
    %v4449 = vadd.f32 %v4445, %v4448
    %vm4450 = vweird.f32 %v4261
    %vm4451 = vweird.f32 %v4445
    %vm4452 = vmor %vm4450, %vm4451
    %v4453 = vsel %vm4452, %v4445, %v4449
    %v4454 = vand.u32 2147483647, %v4261
    %vm4455 = vcmp.eq.f32.partialorder %v4454, 8.507059e+37
    %v4456 = vand.u32 %v4261, 2147483648
    %v4457 = vor.u32 1.1754944e-38, %v4456
    %v4458 = vsel %vm4455, %v4457, %v4453
    %v4459 = vmul.f32 %v4011, %v4458
    %v4460 = vrcp.pop %v4273
    %v4461 = vmul.f32 %v4273, %v4460
    %v4462 = vsub.f32 1.0, %v4461
    %v4463 = vmul.f32 %v4460, %v4462
    %v4464 = vadd.f32 %v4460, %v4463
    %vm4465 = vweird.f32 %v4273
    %vm4466 = vweird.f32 %v4460
    %vm4467 = vmor %vm4465, %vm4466
    %v4468 = vsel %vm4467, %v4460, %v4464
    %v4469 = vand.u32 2147483647, %v4273
    %vm4470 = vcmp.eq.f32.partialorder %v4469, 8.507059e+37
    %v4471 = vand.u32 %v4273, 2147483648
    %v4472 = vor.u32 1.1754944e-38, %v4471
    %v4473 = vsel %vm4470, %v4472, %v4468
    %v4474 = vmul.f32 %v4026, %v4473
    %v4475 = vrcp.pop %v4285
    %v4476 = vmul.f32 %v4285, %v4475
    %v4477 = vsub.f32 1.0, %v4476
    %v4478 = vmul.f32 %v4475, %v4477
    %v4479 = vadd.f32 %v4475, %v4478
    %vm4480 = vweird.f32 %v4285
    %vm4481 = vweird.f32 %v4475
    %vm4482 = vmor %vm4480, %vm4481
    %v4483 = vsel %vm4482, %v4475, %v4479
    %v4484 = vand.u32 2147483647, %v4285
    %vm4485 = vcmp.eq.f32.partialorder %v4484, 8.507059e+37
    %v4486 = vand.u32 %v4285, 2147483648
    %v4487 = vor.u32 1.1754944e-38, %v4486
    %v4488 = vsel %vm4485, %v4487, %v4483
    %v4489 = vmul.f32 %v4041, %v4488
    %v4490 = vrcp.pop %v4297
    %v4491 = vmul.f32 %v4297, %v4490
    %v4492 = vsub.f32 1.0, %v4491
    %v4493 = vmul.f32 %v4490, %v4492
    %v4494 = vadd.f32 %v4490, %v4493
    %vm4495 = vweird.f32 %v4297
    %vm4496 = vweird.f32 %v4490
    %vm4497 = vmor %vm4495, %vm4496
    %v4498 = vsel %vm4497, %v4490, %v4494
    %v4499 = vand.u32 2147483647, %v4297
    %vm4500 = vcmp.eq.f32.partialorder %v4499, 8.507059e+37
    %v4501 = vand.u32 %v4297, 2147483648
    %v4502 = vor.u32 1.1754944e-38, %v4501
    %v4503 = vsel %vm4500, %v4502, %v4498
    %v4504 = vmul.f32 %v4056, %v4503
    %v4505 = vrcp.pop %v4309
    %v4506 = vmul.f32 %v4309, %v4505
    %v4507 = vsub.f32 1.0, %v4506
    %v4508 = vmul.f32 %v4505, %v4507
    %v4509 = vadd.f32 %v4505, %v4508
    %vm4510 = vweird.f32 %v4309
    %vm4511 = vweird.f32 %v4505
    %vm4512 = vmor %vm4510, %vm4511
    %v4513 = vsel %vm4512, %v4505, %v4509
    %v4514 = vand.u32 2147483647, %v4309
    %vm4515 = vcmp.eq.f32.partialorder %v4514, 8.507059e+37
    %v4516 = vand.u32 %v4309, 2147483648
    %v4517 = vor.u32 1.1754944e-38, %v4516
    %v4518 = vsel %vm4515, %v4517, %v4513
    %v4519 = vmul.f32 %v4071, %v4518
    %v4520 = vrcp.pop %v4321
    %v4521 = vmul.f32 %v4321, %v4520
    %v4522 = vsub.f32 1.0, %v4521
    %v4523 = vmul.f32 %v4520, %v4522
    %v4524 = vadd.f32 %v4520, %v4523
    %vm4525 = vweird.f32 %v4321
    %vm4526 = vweird.f32 %v4520
    %vm4527 = vmor %vm4525, %vm4526
    %v4528 = vsel %vm4527, %v4520, %v4524
    %v4529 = vand.u32 2147483647, %v4321
    %vm4530 = vcmp.eq.f32.partialorder %v4529, 8.507059e+37
    %v4531 = vand.u32 %v4321, 2147483648
    %v4532 = vor.u32 1.1754944e-38, %v4531
    %v4533 = vsel %vm4530, %v4532, %v4528
    %v4534 = vmul.f32 %v4086, %v4533
    %v4535 = vrcp.pop %v4333
    %v4536 = vmul.f32 %v4333, %v4535
    %v4537 = vsub.f32 1.0, %v4536
    %v4538 = vmul.f32 %v4535, %v4537
    %v4539 = vadd.f32 %v4535, %v4538
    %vm4540 = vweird.f32 %v4333
    %vm4541 = vweird.f32 %v4535
    %vm4542 = vmor %vm4540, %vm4541
    %v4543 = vsel %vm4542, %v4535, %v4539
    %v4544 = vand.u32 2147483647, %v4333
    %vm4545 = vcmp.eq.f32.partialorder %v4544, 8.507059e+37
    %v4546 = vand.u32 %v4333, 2147483648
    %v4547 = vor.u32 1.1754944e-38, %v4546
    %v4548 = vsel %vm4545, %v4547, %v4543
    %v4549 = vmul.f32 %v4101, %v4548
    %v4550 = vrcp.pop %v4345
    %v4551 = vmul.f32 %v4345, %v4550
    %v4552 = vsub.f32 1.0, %v4551
    %v4553 = vmul.f32 %v4550, %v4552
    %v4554 = vadd.f32 %v4550, %v4553
    %vm4555 = vweird.f32 %v4345
    %vm4556 = vweird.f32 %v4550
    %vm4557 = vmor %vm4555, %vm4556
    %v4558 = vsel %vm4557, %v4550, %v4554
    %v4559 = vand.u32 2147483647, %v4345
    %vm4560 = vcmp.eq.f32.partialorder %v4559, 8.507059e+37
    %v4561 = vand.u32 %v4345, 2147483648
    %v4562 = vor.u32 1.1754944e-38, %v4561
    %v4563 = vsel %vm4560, %v4562, %v4558
    %v4564 = vmul.f32 %v4116, %v4563
    %v4565 = vrcp.pop %v4357
    %v4566 = vmul.f32 %v4357, %v4565
    %v4567 = vsub.f32 1.0, %v4566
    %v4568 = vmul.f32 %v4565, %v4567
    %v4569 = vadd.f32 %v4565, %v4568
    %vm4570 = vweird.f32 %v4357
    %vm4571 = vweird.f32 %v4565
    %vm4572 = vmor %vm4570, %vm4571
    %v4573 = vsel %vm4572, %v4565, %v4569
    %v4574 = vand.u32 2147483647, %v4357
    %vm4575 = vcmp.eq.f32.partialorder %v4574, 8.507059e+37
    %v4576 = vand.u32 %v4357, 2147483648
    %v4577 = vor.u32 1.1754944e-38, %v4576
    %v4578 = vsel %vm4575, %v4577, %v4573
    %v4579 = vmul.f32 %v4131, %v4578
    %v4580 = vrcp.pop %v4369
    %v4581 = vmul.f32 %v4369, %v4580
    %v4582 = vsub.f32 1.0, %v4581
    %v4583 = vmul.f32 %v4580, %v4582
    %v4584 = vadd.f32 %v4580, %v4583
    %vm4585 = vweird.f32 %v4369
    %vm4586 = vweird.f32 %v4580
    %vm4587 = vmor %vm4585, %vm4586
    %v4588 = vsel %vm4587, %v4580, %v4584
    %v4589 = vand.u32 2147483647, %v4369
    %vm4590 = vcmp.eq.f32.partialorder %v4589, 8.507059e+37
    %v4591 = vand.u32 %v4369, 2147483648
    %v4592 = vor.u32 1.1754944e-38, %v4591
    %v4593 = vsel %vm4590, %v4592, %v4588
    %v4594 = vmul.f32 %v4146, %v4593
    %v4595 = vrcp.pop %v4381
    %v4596 = vmul.f32 %v4381, %v4595
    %v4597 = vsub.f32 1.0, %v4596
    %v4598 = vmul.f32 %v4595, %v4597
    %v4599 = vadd.f32 %v4595, %v4598
    %vm4600 = vweird.f32 %v4381
    %vm4601 = vweird.f32 %v4595
    %vm4602 = vmor %vm4600, %vm4601
    %v4603 = vsel %vm4602, %v4595, %v4599
    %v4604 = vand.u32 2147483647, %v4381
    %vm4605 = vcmp.eq.f32.partialorder %v4604, 8.507059e+37
    %v4606 = vand.u32 %v4381, 2147483648
    %v4607 = vor.u32 1.1754944e-38, %v4606
    %v4608 = vsel %vm4605, %v4607, %v4603
    %v4609 = vmul.f32 %v4161, %v4608
    %v4610 = vrcp.pop %v4393
    %v4611 = vmul.f32 %v4393, %v4610
    %v4612 = vsub.f32 1.0, %v4611
    %v4613 = vmul.f32 %v4610, %v4612
    %v4614 = vadd.f32 %v4610, %v4613
    %vm4615 = vweird.f32 %v4393
    %vm4616 = vweird.f32 %v4610
    %vm4617 = vmor %vm4615, %vm4616
    %v4618 = vsel %vm4617, %v4610, %v4614
    %v4619 = vand.u32 2147483647, %v4393
    %vm4620 = vcmp.eq.f32.partialorder %v4619, 8.507059e+37
    %v4621 = vand.u32 %v4393, 2147483648
    %v4622 = vor.u32 1.1754944e-38, %v4621
    %v4623 = vsel %vm4620, %v4622, %v4618
    %v4624 = vmul.f32 %v4176, %v4623
    %v4625 = vrcp.pop %v4405
    %v4626 = vmul.f32 %v4405, %v4625
    %v4627 = vsub.f32 1.0, %v4626
    %v4628 = vmul.f32 %v4625, %v4627
    %v4629 = vadd.f32 %v4625, %v4628
    %vm4630 = vweird.f32 %v4405
    %vm4631 = vweird.f32 %v4625
    %vm4632 = vmor %vm4630, %vm4631
    %v4633 = vsel %vm4632, %v4625, %v4629
    %v4634 = vand.u32 2147483647, %v4405
    %vm4635 = vcmp.eq.f32.partialorder %v4634, 8.507059e+37
    %v4636 = vand.u32 %v4405, 2147483648
    %v4637 = vor.u32 1.1754944e-38, %v4636
    %v4638 = vsel %vm4635, %v4637, %v4633
    %v4639 = vmul.f32 %v4191, %v4638
    %v4640 = vrcp.pop %v4417
    %v4641 = vmul.f32 %v4417, %v4640
    %v4642 = vsub.f32 1.0, %v4641
    %v4643 = vmul.f32 %v4640, %v4642
    %v4644 = vadd.f32 %v4640, %v4643
    %vm4645 = vweird.f32 %v4417
    %vm4646 = vweird.f32 %v4640
    %vm4647 = vmor %vm4645, %vm4646
    %v4648 = vsel %vm4647, %v4640, %v4644
    %v4649 = vand.u32 2147483647, %v4417
    %vm4650 = vcmp.eq.f32.partialorder %v4649, 8.507059e+37
    %v4651 = vand.u32 %v4417, 2147483648
    %v4652 = vor.u32 1.1754944e-38, %v4651
    %v4653 = vsel %vm4650, %v4652, %v4648
    %v4654 = vmul.f32 %v4206, %v4653
    %v4655 = vrcp.pop %v4429
    %v4656 = vmul.f32 %v4429, %v4655
    %v4657 = vsub.f32 1.0, %v4656
    %v4658 = vmul.f32 %v4655, %v4657
    %v4659 = vadd.f32 %v4655, %v4658
    %vm4660 = vweird.f32 %v4429
    %vm4661 = vweird.f32 %v4655
    %vm4662 = vmor %vm4660, %vm4661
    %v4663 = vsel %vm4662, %v4655, %v4659
    %v4664 = vand.u32 2147483647, %v4429
    %vm4665 = vcmp.eq.f32.partialorder %v4664, 8.507059e+37
    %v4666 = vand.u32 %v4429, 2147483648
    %v4667 = vor.u32 1.1754944e-38, %v4666
    %v4668 = vsel %vm4665, %v4667, %v4663
    %v4669 = vmul.f32 %v4221, %v4668
    %v4670 = vmul.f32 %v3857, %v4444
    %v4671 = vmul.f32 %v3858, %v4459
    %v4672 = vmul.f32 %v3864, %v4474
    %v4673 = vmul.f32 %v3866, %v4489
    %v4674 = vmul.f32 %v3870, %v4504
    %v4675 = vmul.f32 %v3872, %v4519
    %v4676 = vmul.f32 %v3876, %v4534
    %v4677 = vmul.f32 %v3878, %v4549
    %v4678 = vmul.f32 %v3859, %v4564
    %v4679 = vmul.f32 %v3860, %v4579
    %v4680 = vmul.f32 %v3884, %v4594
    %v4681 = vmul.f32 %v3886, %v4609
    %v4682 = vmul.f32 %v3890, %v4624
    %v4683 = vmul.f32 %v3892, %v4639
    %v4684 = vmul.f32 %v3896, %v4654
    %v4685 = vmul.f32 %v3898, %v4669
    %v4686 = vmul.f32 %v4670, %v4670
    %v4687 = vmul.f32 %v4671, %v4671
    %v4688 = vmul.f32 %v4672, %v4672
    %v4689 = vmul.f32 %v4673, %v4673
    %v4690 = vmul.f32 %v4674, %v4674
    %v4691 = vmul.f32 %v4675, %v4675
    %v4692 = vmul.f32 %v4676, %v4676
    %v4693 = vmul.f32 %v4677, %v4677
    %v4694 = vmul.f32 %v4678, %v4678
    %v4695 = vmul.f32 %v4679, %v4679
    %v4696 = vmul.f32 %v4680, %v4680
    %v4697 = vmul.f32 %v4681, %v4681
    %v4698 = vmul.f32 %v4682, %v4682
    %v4699 = vmul.f32 %v4683, %v4683
    %v4700 = vmul.f32 %v4684, %v4684
    %v4701 = vmul.f32 %v4685, %v4685
    %v4702 = vsel %vm3917, %v4686, 0.0
    %4703 = vadd.xlane.f32.xlu0 %v4702
    %v4704 = vpop.xlane.xlu0 %4703
    %v4705 = vsel %vm3917, %v4687, 0.0
    %4706 = vadd.xlane.f32.xlu0 %v4705
    %v4707 = vpop.xlane.xlu0 %4706
    %v4708 = vsel %vm3917, %v4688, 0.0
    %4709 = vadd.xlane.f32.xlu0 %v4708
    %v4710 = vpop.xlane.xlu0 %4709
    %v4711 = vsel %vm3917, %v4689, 0.0
    %4712 = vadd.xlane.f32.xlu0 %v4711
    %v4713 = vpop.xlane.xlu0 %4712
    %v4714 = vsel %vm3917, %v4690, 0.0
    %4715 = vadd.xlane.f32.xlu0 %v4714
    %v4716 = vpop.xlane.xlu0 %4715
    %v4717 = vsel %vm3917, %v4691, 0.0
    %4718 = vadd.xlane.f32.xlu0 %v4717
    %v4719 = vpop.xlane.xlu0 %4718
    %v4720 = vsel %vm3917, %v4692, 0.0
    %4721 = vadd.xlane.f32.xlu0 %v4720
    %v4722 = vpop.xlane.xlu0 %4721
    %v4723 = vsel %vm3917, %v4693, 0.0
    %4724 = vadd.xlane.f32.xlu0 %v4723
    %v4725 = vpop.xlane.xlu0 %4724
    %v4726 = vsel %vm3917, %v4694, 0.0
    %4727 = vadd.xlane.f32.xlu0 %v4726
    %v4728 = vpop.xlane.xlu0 %4727
    %v4729 = vsel %vm3917, %v4695, 0.0
    %4730 = vadd.xlane.f32.xlu0 %v4729
    %v4731 = vpop.xlane.xlu0 %4730
    %v4732 = vsel %vm3917, %v4696, 0.0
    %4733 = vadd.xlane.f32.xlu0 %v4732
    %v4734 = vpop.xlane.xlu0 %4733
    %v4735 = vsel %vm3917, %v4697, 0.0
    %4736 = vadd.xlane.f32.xlu0 %v4735
    %v4737 = vpop.xlane.xlu0 %4736
    %v4738 = vsel %vm3917, %v4698, 0.0
    %4739 = vadd.xlane.f32.xlu0 %v4738
    %v4740 = vpop.xlane.xlu0 %4739
    %v4741 = vsel %vm3917, %v4699, 0.0
    %4742 = vadd.xlane.f32.xlu0 %v4741
    %v4743 = vpop.xlane.xlu0 %4742
    %v4744 = vsel %vm3917, %v4700, 0.0
    %4745 = vadd.xlane.f32.xlu0 %v4744
    %v4746 = vpop.xlane.xlu0 %4745
    %v4747 = vsel %vm3917, %v4701, 0.0
    %4748 = vadd.xlane.f32.xlu0 %v4747
    %v4749 = vpop.xlane.xlu0 %4748
    %v4750 = vadd.f32 %v4704, 1e-08
    %v4751 = vadd.f32 %v4707, 1e-08
    %v4752 = vadd.f32 %v4710, 1e-08
    %v4753 = vadd.f32 %v4713, 1e-08
    %v4754 = vadd.f32 %v4716, 1e-08
    %v4755 = vadd.f32 %v4719, 1e-08
    %v4756 = vadd.f32 %v4722, 1e-08
    %v4757 = vadd.f32 %v4725, 1e-08
    %v4758 = vadd.f32 %v4728, 1e-08
    %v4759 = vadd.f32 %v4731, 1e-08
    %v4760 = vadd.f32 %v4734, 1e-08
    %v4761 = vadd.f32 %v4737, 1e-08
    %v4762 = vadd.f32 %v4740, 1e-08
    %v4763 = vadd.f32 %v4743, 1e-08
    %v4764 = vadd.f32 %v4746, 1e-08
    %v4765 = vadd.f32 %v4749, 1e-08
    %v4766 = vrsqrt.pop %v4750
    %v4767 = vmul.f32 %v4766, %v4750
    %v4768 = vmul.f32 %v4767, %v4766
    %v4769 = vmul.f32 0.5, %v4768
    %v4770 = vsub.f32 1.5, %v4769
    %v4771 = vmul.f32 %v4766, %v4770
    %v4772 = vmul.f32 %v4750, %v4771
    %vm4773 = vcmp.eq.f32.partialorder %v4750, inf
    %v4774 = vsel %vm4773, %v4750, %v4772
    %vm4775 = vcmp.eq.f32.partialorder %v4750, 0.0
    %v4776 = vand.u32 %v4750, 2147483648
    %v4777 = vsel %vm4775, %v4776, %v4774
    %v4778 = vrsqrt.pop %v4751
    %v4779 = vmul.f32 %v4778, %v4751
    %v4780 = vmul.f32 %v4779, %v4778
    %v4781 = vmul.f32 0.5, %v4780
    %v4782 = vsub.f32 1.5, %v4781
    %v4783 = vmul.f32 %v4778, %v4782
    %v4784 = vmul.f32 %v4751, %v4783
    %vm4785 = vcmp.eq.f32.partialorder %v4751, inf
    %v4786 = vsel %vm4785, %v4751, %v4784
    %vm4787 = vcmp.eq.f32.partialorder %v4751, 0.0
    %v4788 = vand.u32 %v4751, 2147483648
    %v4789 = vsel %vm4787, %v4788, %v4786
    %v4790 = vrsqrt.pop %v4752
    %v4791 = vmul.f32 %v4790, %v4752
    %v4792 = vmul.f32 %v4791, %v4790
    %v4793 = vmul.f32 0.5, %v4792
    %v4794 = vsub.f32 1.5, %v4793
    %v4795 = vmul.f32 %v4790, %v4794
    %v4796 = vmul.f32 %v4752, %v4795
    %vm4797 = vcmp.eq.f32.partialorder %v4752, inf
    %v4798 = vsel %vm4797, %v4752, %v4796
    %vm4799 = vcmp.eq.f32.partialorder %v4752, 0.0
    %v4800 = vand.u32 %v4752, 2147483648
    %v4801 = vsel %vm4799, %v4800, %v4798
    %v4802 = vrsqrt.pop %v4753
    %v4803 = vmul.f32 %v4802, %v4753
    %v4804 = vmul.f32 %v4803, %v4802
    %v4805 = vmul.f32 0.5, %v4804
    %v4806 = vsub.f32 1.5, %v4805
    %v4807 = vmul.f32 %v4802, %v4806
    %v4808 = vmul.f32 %v4753, %v4807
    %vm4809 = vcmp.eq.f32.partialorder %v4753, inf
    %v4810 = vsel %vm4809, %v4753, %v4808
    %vm4811 = vcmp.eq.f32.partialorder %v4753, 0.0
    %v4812 = vand.u32 %v4753, 2147483648
    %v4813 = vsel %vm4811, %v4812, %v4810
    %v4814 = vrsqrt.pop %v4754
    %v4815 = vmul.f32 %v4814, %v4754
    %v4816 = vmul.f32 %v4815, %v4814
    %v4817 = vmul.f32 0.5, %v4816
    %v4818 = vsub.f32 1.5, %v4817
    %v4819 = vmul.f32 %v4814, %v4818
    %v4820 = vmul.f32 %v4754, %v4819
    %vm4821 = vcmp.eq.f32.partialorder %v4754, inf
    %v4822 = vsel %vm4821, %v4754, %v4820
    %vm4823 = vcmp.eq.f32.partialorder %v4754, 0.0
    %v4824 = vand.u32 %v4754, 2147483648
    %v4825 = vsel %vm4823, %v4824, %v4822
    %v4826 = vrsqrt.pop %v4755
    %v4827 = vmul.f32 %v4826, %v4755
    %v4828 = vmul.f32 %v4827, %v4826
    %v4829 = vmul.f32 0.5, %v4828
    %v4830 = vsub.f32 1.5, %v4829
    %v4831 = vmul.f32 %v4826, %v4830
    %v4832 = vmul.f32 %v4755, %v4831
    %vm4833 = vcmp.eq.f32.partialorder %v4755, inf
    %v4834 = vsel %vm4833, %v4755, %v4832
    %vm4835 = vcmp.eq.f32.partialorder %v4755, 0.0
    %v4836 = vand.u32 %v4755, 2147483648
    %v4837 = vsel %vm4835, %v4836, %v4834
    %v4838 = vrsqrt.pop %v4756
    %v4839 = vmul.f32 %v4838, %v4756
    %v4840 = vmul.f32 %v4839, %v4838
    %v4841 = vmul.f32 0.5, %v4840
    %v4842 = vsub.f32 1.5, %v4841
    %v4843 = vmul.f32 %v4838, %v4842
    %v4844 = vmul.f32 %v4756, %v4843
    %vm4845 = vcmp.eq.f32.partialorder %v4756, inf
    %v4846 = vsel %vm4845, %v4756, %v4844
    %vm4847 = vcmp.eq.f32.partialorder %v4756, 0.0
    %v4848 = vand.u32 %v4756, 2147483648
    %v4849 = vsel %vm4847, %v4848, %v4846
    %v4850 = vrsqrt.pop %v4757
    %v4851 = vmul.f32 %v4850, %v4757
    %v4852 = vmul.f32 %v4851, %v4850
    %v4853 = vmul.f32 0.5, %v4852
    %v4854 = vsub.f32 1.5, %v4853
    %v4855 = vmul.f32 %v4850, %v4854
    %v4856 = vmul.f32 %v4757, %v4855
    %vm4857 = vcmp.eq.f32.partialorder %v4757, inf
    %v4858 = vsel %vm4857, %v4757, %v4856
    %vm4859 = vcmp.eq.f32.partialorder %v4757, 0.0
    %v4860 = vand.u32 %v4757, 2147483648
    %v4861 = vsel %vm4859, %v4860, %v4858
    %v4862 = vrsqrt.pop %v4758
    %v4863 = vmul.f32 %v4862, %v4758
    %v4864 = vmul.f32 %v4863, %v4862
    %v4865 = vmul.f32 0.5, %v4864
    %v4866 = vsub.f32 1.5, %v4865
    %v4867 = vmul.f32 %v4862, %v4866
    %v4868 = vmul.f32 %v4758, %v4867
    %vm4869 = vcmp.eq.f32.partialorder %v4758, inf
    %v4870 = vsel %vm4869, %v4758, %v4868
    %vm4871 = vcmp.eq.f32.partialorder %v4758, 0.0
    %v4872 = vand.u32 %v4758, 2147483648
    %v4873 = vsel %vm4871, %v4872, %v4870
    %v4874 = vrsqrt.pop %v4759
    %v4875 = vmul.f32 %v4874, %v4759
    %v4876 = vmul.f32 %v4875, %v4874
    %v4877 = vmul.f32 0.5, %v4876
    %v4878 = vsub.f32 1.5, %v4877
    %v4879 = vmul.f32 %v4874, %v4878
    %v4880 = vmul.f32 %v4759, %v4879
    %vm4881 = vcmp.eq.f32.partialorder %v4759, inf
    %v4882 = vsel %vm4881, %v4759, %v4880
    %vm4883 = vcmp.eq.f32.partialorder %v4759, 0.0
    %v4884 = vand.u32 %v4759, 2147483648
    %v4885 = vsel %vm4883, %v4884, %v4882
    %v4886 = vrsqrt.pop %v4760
    %v4887 = vmul.f32 %v4886, %v4760
    %v4888 = vmul.f32 %v4887, %v4886
    %v4889 = vmul.f32 0.5, %v4888
    %v4890 = vsub.f32 1.5, %v4889
    %v4891 = vmul.f32 %v4886, %v4890
    %v4892 = vmul.f32 %v4760, %v4891
    %vm4893 = vcmp.eq.f32.partialorder %v4760, inf
    %v4894 = vsel %vm4893, %v4760, %v4892
    %vm4895 = vcmp.eq.f32.partialorder %v4760, 0.0
    %v4896 = vand.u32 %v4760, 2147483648
    %v4897 = vsel %vm4895, %v4896, %v4894
    %v4898 = vrsqrt.pop %v4761
    %v4899 = vmul.f32 %v4898, %v4761
    %v4900 = vmul.f32 %v4899, %v4898
    %v4901 = vmul.f32 0.5, %v4900
    %v4902 = vsub.f32 1.5, %v4901
    %v4903 = vmul.f32 %v4898, %v4902
    %v4904 = vmul.f32 %v4761, %v4903
    %vm4905 = vcmp.eq.f32.partialorder %v4761, inf
    %v4906 = vsel %vm4905, %v4761, %v4904
    %vm4907 = vcmp.eq.f32.partialorder %v4761, 0.0
    %v4908 = vand.u32 %v4761, 2147483648
    %v4909 = vsel %vm4907, %v4908, %v4906
    %v4910 = vrsqrt.pop %v4762
    %v4911 = vmul.f32 %v4910, %v4762
    %v4912 = vmul.f32 %v4911, %v4910
    %v4913 = vmul.f32 0.5, %v4912
    %v4914 = vsub.f32 1.5, %v4913
    %v4915 = vmul.f32 %v4910, %v4914
    %v4916 = vmul.f32 %v4762, %v4915
    %vm4917 = vcmp.eq.f32.partialorder %v4762, inf
    %v4918 = vsel %vm4917, %v4762, %v4916
    %vm4919 = vcmp.eq.f32.partialorder %v4762, 0.0
    %v4920 = vand.u32 %v4762, 2147483648
    %v4921 = vsel %vm4919, %v4920, %v4918
    %v4922 = vrsqrt.pop %v4763
    %v4923 = vmul.f32 %v4922, %v4763
    %v4924 = vmul.f32 %v4923, %v4922
    %v4925 = vmul.f32 0.5, %v4924
    %v4926 = vsub.f32 1.5, %v4925
    %v4927 = vmul.f32 %v4922, %v4926
    %v4928 = vmul.f32 %v4763, %v4927
    %vm4929 = vcmp.eq.f32.partialorder %v4763, inf
    %v4930 = vsel %vm4929, %v4763, %v4928
    %vm4931 = vcmp.eq.f32.partialorder %v4763, 0.0
    %v4932 = vand.u32 %v4763, 2147483648
    %v4933 = vsel %vm4931, %v4932, %v4930
    %v4934 = vrsqrt.pop %v4764
    %v4935 = vmul.f32 %v4934, %v4764
    %v4936 = vmul.f32 %v4935, %v4934
    %v4937 = vmul.f32 0.5, %v4936
    %v4938 = vsub.f32 1.5, %v4937
    %v4939 = vmul.f32 %v4934, %v4938
    %v4940 = vmul.f32 %v4764, %v4939
    %vm4941 = vcmp.eq.f32.partialorder %v4764, inf
    %v4942 = vsel %vm4941, %v4764, %v4940
    %vm4943 = vcmp.eq.f32.partialorder %v4764, 0.0
    %v4944 = vand.u32 %v4764, 2147483648
    %v4945 = vsel %vm4943, %v4944, %v4942
    %v4946 = vrsqrt.pop %v4765
    %v4947 = vmul.f32 %v4946, %v4765
    %v4948 = vmul.f32 %v4947, %v4946
    %v4949 = vmul.f32 0.5, %v4948
    %v4950 = vsub.f32 1.5, %v4949
    %v4951 = vmul.f32 %v4946, %v4950
    %v4952 = vmul.f32 %v4765, %v4951
    %vm4953 = vcmp.eq.f32.partialorder %v4765, inf
    %v4954 = vsel %vm4953, %v4765, %v4952
    %vm4955 = vcmp.eq.f32.partialorder %v4765, 0.0
    %v4956 = vand.u32 %v4765, 2147483648
    %v4957 = vsel %vm4955, %v4956, %v4954
    %vm4958 = vcmask 7168
    %4959 = vst.msk [vmem:[%s14] sm:$0xff] %vm4958, %v4777
    %4960 = vst.msk [vmem:[%s14 + $0x8] sm:$0xff] %vm4958, %v4789
    %4961 = vst.msk [vmem:[%s14 + $0x10] sm:$0xff] %vm4958, %v4801
    %4962 = vst.msk [vmem:[%s14 + $0x18] sm:$0xff] %vm4958, %v4813
    %4963 = vst.msk [vmem:[%s14 + $0x20] sm:$0xff] %vm4958, %v4825
    %4964 = vst.msk [vmem:[%s14 + $0x28] sm:$0xff] %vm4958, %v4837
    %4965 = vst.msk [vmem:[%s14 + $0x30] sm:$0xff] %vm4958, %v4849
    %4966 = vst.msk [vmem:[%s14 + $0x38] sm:$0xff] %vm4958, %v4861
    %4967 = vst.msk [vmem:[%s14 + $0x40] sm:$0xff] %vm4958, %v4873
    %4968 = vst.msk [vmem:[%s14 + $0x48] sm:$0xff] %vm4958, %v4885
    %4969 = vst.msk [vmem:[%s14 + $0x50] sm:$0xff] %vm4958, %v4897
    %4970 = vst.msk [vmem:[%s14 + $0x58] sm:$0xff] %vm4958, %v4909
    %4971 = vst.msk [vmem:[%s14 + $0x60] sm:$0xff] %vm4958, %v4921
    %4972 = vst.msk [vmem:[%s14 + $0x68] sm:$0xff] %vm4958, %v4933
    %4973 = vst.msk [vmem:[%s14 + $0x70] sm:$0xff] %vm4958, %v4945
    %4974 = vst.msk [vmem:[%s14 + $0x78] sm:$0xff] %vm4958, %v4957
    %v4975 = vld [vmem:[%s6] sm:$0xff]
    %v4976 = vld [vmem:[%s6 + $0x8] sm:$0xff]
    %v4977 = vld [vmem:[%s6 + $0x10] sm:$0xff]
    %v4978 = vld [vmem:[%s6 + $0x18] sm:$0xff]
    %v4979 = vld [vmem:[%s6 + $0x20] sm:$0xff]
    %v4980 = vld [vmem:[%s6 + $0x28] sm:$0xff]
    %v4981 = vld [vmem:[%s6 + $0x30] sm:$0xff]
    %v4982 = vld [vmem:[%s6 + $0x38] sm:$0xff]
    %v4983 = vld [vmem:[%s6 + $0x40] sm:$0xff]
    %v4984 = vld [vmem:[%s6 + $0x48] sm:$0xff]
    %v4985 = vld [vmem:[%s6 + $0x50] sm:$0xff]
    %v4986 = vld [vmem:[%s6 + $0x58] sm:$0xff]
    %v4987 = vld [vmem:[%s6 + $0x60] sm:$0xff]
    %v4988 = vld [vmem:[%s6 + $0x68] sm:$0xff]
    %v4989 = vld [vmem:[%s6 + $0x70] sm:$0xff]
    %v4990 = vld [vmem:[%s6 + $0x78] sm:$0xff]
    %4992 = vset.pattern.permute.xlu0 0
    %4993 = vperm.xlu0 %4992, %v4670
    %v4994 = vpop.permute.xlu0 %4993
    %4997 = vset.pattern.permute.xlu0 0
    %4998 = vperm.xlu0 %4997, %v4671
    %v4999 = vpop.permute.xlu0 %4998
    %5002 = vset.pattern.permute.xlu0 0
    %5003 = vperm.xlu0 %5002, %v4672
    %v5004 = vpop.permute.xlu0 %5003
    %5007 = vset.pattern.permute.xlu0 0
    %5008 = vperm.xlu0 %5007, %v4673
    %v5009 = vpop.permute.xlu0 %5008
    %5012 = vset.pattern.permute.xlu0 0
    %5013 = vperm.xlu0 %5012, %v4674
    %v5014 = vpop.permute.xlu0 %5013
    %5017 = vset.pattern.permute.xlu0 0
    %5018 = vperm.xlu0 %5017, %v4675
    %v5019 = vpop.permute.xlu0 %5018
    %5022 = vset.pattern.permute.xlu0 0
    %5023 = vperm.xlu0 %5022, %v4676
    %v5024 = vpop.permute.xlu0 %5023
    %5027 = vset.pattern.permute.xlu0 0
    %5028 = vperm.xlu0 %5027, %v4677
    %v5029 = vpop.permute.xlu0 %5028
    %v5031 = vmul.f32 %v4994, %v4975
    %v5032 = vmul.f32 %v4994, %v4976
    %v5033 = vmul.f32 %v4999, %v4977
    %v5034 = vmul.f32 %v4999, %v4978
    %v5035 = vmul.f32 %v5004, %v4979
    %v5036 = vmul.f32 %v5004, %v4980
    %v5037 = vmul.f32 %v5009, %v4981
    %v5038 = vmul.f32 %v5009, %v4982
    %v5039 = vmul.f32 %v5014, %v4983
    %v5040 = vmul.f32 %v5014, %v4984
    %v5041 = vmul.f32 %v5019, %v4985
    %v5042 = vmul.f32 %v5019, %v4986
    %v5043 = vmul.f32 %v5024, %v4987
    %v5044 = vmul.f32 %v5024, %v4988
    %v5045 = vmul.f32 %v5029, %v4989
    %v5046 = vmul.f32 %v5029, %v4990
    %v5047 = vadd.f32 %v5031, 0.0
    %v5048 = vadd.f32 %v5032, 0.0
    %v5049 = vadd.f32 %v5033, 0.0
    %v5050 = vadd.f32 %v5034, 0.0
    %v5051 = vadd.f32 %v5035, 0.0
    %v5052 = vadd.f32 %v5036, 0.0
    %v5053 = vadd.f32 %v5037, 0.0
    %v5054 = vadd.f32 %v5038, 0.0
    %v5055 = vadd.f32 %v5039, 0.0
    %v5056 = vadd.f32 %v5040, 0.0
    %v5057 = vadd.f32 %v5041, 0.0
    %v5058 = vadd.f32 %v5042, 0.0
    %v5059 = vadd.f32 %v5043, 0.0
    %v5060 = vadd.f32 %v5044, 0.0
    %v5061 = vadd.f32 %v5045, 0.0
    %v5062 = vadd.f32 %v5046, 0.0
    %s5063 = scalar_lea.vmem %s6, 128
    %v5064 = vld [vmem:[%s5063] sm:$0xff]
    %v5065 = vld [vmem:[%s5063 + $0x8] sm:$0xff]
    %v5066 = vld [vmem:[%s5063 + $0x10] sm:$0xff]
    %v5067 = vld [vmem:[%s5063 + $0x18] sm:$0xff]
    %v5068 = vld [vmem:[%s5063 + $0x20] sm:$0xff]
    %v5069 = vld [vmem:[%s5063 + $0x28] sm:$0xff]
    %v5070 = vld [vmem:[%s5063 + $0x30] sm:$0xff]
    %v5071 = vld [vmem:[%s5063 + $0x38] sm:$0xff]
    %v5072 = vld [vmem:[%s5063 + $0x40] sm:$0xff]
    %v5073 = vld [vmem:[%s5063 + $0x48] sm:$0xff]
    %v5074 = vld [vmem:[%s5063 + $0x50] sm:$0xff]
    %v5075 = vld [vmem:[%s5063 + $0x58] sm:$0xff]
    %v5076 = vld [vmem:[%s5063 + $0x60] sm:$0xff]
    %v5077 = vld [vmem:[%s5063 + $0x68] sm:$0xff]
    %v5078 = vld [vmem:[%s5063 + $0x70] sm:$0xff]
    %v5079 = vld [vmem:[%s5063 + $0x78] sm:$0xff]
    %5080 = vset.pattern.permute.xlu0 1
    %5081 = vperm.xlu0 %5080, %v4670
    %v5082 = vpop.permute.xlu0 %5081
    %5084 = vset.pattern.permute.xlu0 1
    %5085 = vperm.xlu0 %5084, %v4671
    %v5086 = vpop.permute.xlu0 %5085
    %5088 = vset.pattern.permute.xlu0 1
    %5089 = vperm.xlu0 %5088, %v4672
    %v5090 = vpop.permute.xlu0 %5089
    %5092 = vset.pattern.permute.xlu0 1
    %5093 = vperm.xlu0 %5092, %v4673
    %v5094 = vpop.permute.xlu0 %5093
    %5096 = vset.pattern.permute.xlu0 1
    %5097 = vperm.xlu0 %5096, %v4674
    %v5098 = vpop.permute.xlu0 %5097
    %5100 = vset.pattern.permute.xlu0 1
    %5101 = vperm.xlu0 %5100, %v4675
    %v5102 = vpop.permute.xlu0 %5101
    %5104 = vset.pattern.permute.xlu0 1
    %5105 = vperm.xlu0 %5104, %v4676
    %v5106 = vpop.permute.xlu0 %5105
    %5108 = vset.pattern.permute.xlu0 1
    %5109 = vperm.xlu0 %5108, %v4677
    %v5110 = vpop.permute.xlu0 %5109
    %v5112 = vmul.f32 %v5082, %v5064
    %v5113 = vmul.f32 %v5082, %v5065
    %v5114 = vmul.f32 %v5086, %v5066
    %v5115 = vmul.f32 %v5086, %v5067
    %v5116 = vmul.f32 %v5090, %v5068
    %v5117 = vmul.f32 %v5090, %v5069
    %v5118 = vmul.f32 %v5094, %v5070
    %v5119 = vmul.f32 %v5094, %v5071
    %v5120 = vmul.f32 %v5098, %v5072
    %v5121 = vmul.f32 %v5098, %v5073
    %v5122 = vmul.f32 %v5102, %v5074
    %v5123 = vmul.f32 %v5102, %v5075
    %v5124 = vmul.f32 %v5106, %v5076
    %v5125 = vmul.f32 %v5106, %v5077
    %v5126 = vmul.f32 %v5110, %v5078
    %v5127 = vmul.f32 %v5110, %v5079
    %v5128 = vadd.f32 %v5047, %v5112
    %v5129 = vadd.f32 %v5048, %v5113
    %v5130 = vadd.f32 %v5049, %v5114
    %v5131 = vadd.f32 %v5050, %v5115
    %v5132 = vadd.f32 %v5051, %v5116
    %v5133 = vadd.f32 %v5052, %v5117
    %v5134 = vadd.f32 %v5053, %v5118
    %v5135 = vadd.f32 %v5054, %v5119
    %v5136 = vadd.f32 %v5055, %v5120
    %v5137 = vadd.f32 %v5056, %v5121
    %v5138 = vadd.f32 %v5057, %v5122
    %v5139 = vadd.f32 %v5058, %v5123
    %v5140 = vadd.f32 %v5059, %v5124
    %v5141 = vadd.f32 %v5060, %v5125
    %v5142 = vadd.f32 %v5061, %v5126
    %v5143 = vadd.f32 %v5062, %v5127
    %s5144 = scalar_lea.vmem %s6, 256
    %v5145 = vld [vmem:[%s5144] sm:$0xff]
    %v5146 = vld [vmem:[%s5144 + $0x8] sm:$0xff]
    %v5147 = vld [vmem:[%s5144 + $0x10] sm:$0xff]
    %v5148 = vld [vmem:[%s5144 + $0x18] sm:$0xff]
    %v5149 = vld [vmem:[%s5144 + $0x20] sm:$0xff]
    %v5150 = vld [vmem:[%s5144 + $0x28] sm:$0xff]
    %v5151 = vld [vmem:[%s5144 + $0x30] sm:$0xff]
    %v5152 = vld [vmem:[%s5144 + $0x38] sm:$0xff]
    %v5153 = vld [vmem:[%s5144 + $0x40] sm:$0xff]
    %v5154 = vld [vmem:[%s5144 + $0x48] sm:$0xff]
    %v5155 = vld [vmem:[%s5144 + $0x50] sm:$0xff]
    %v5156 = vld [vmem:[%s5144 + $0x58] sm:$0xff]
    %v5157 = vld [vmem:[%s5144 + $0x60] sm:$0xff]
    %v5158 = vld [vmem:[%s5144 + $0x68] sm:$0xff]
    %v5159 = vld [vmem:[%s5144 + $0x70] sm:$0xff]
    %v5160 = vld [vmem:[%s5144 + $0x78] sm:$0xff]
    %5161 = vset.pattern.permute.xlu0 2
    %5162 = vperm.xlu0 %5161, %v4670
    %v5163 = vpop.permute.xlu0 %5162
    %5165 = vset.pattern.permute.xlu0 2
    %5166 = vperm.xlu0 %5165, %v4671
    %v5167 = vpop.permute.xlu0 %5166
    %5169 = vset.pattern.permute.xlu0 2
    %5170 = vperm.xlu0 %5169, %v4672
    %v5171 = vpop.permute.xlu0 %5170
    %5173 = vset.pattern.permute.xlu0 2
    %5174 = vperm.xlu0 %5173, %v4673
    %v5175 = vpop.permute.xlu0 %5174
    %5177 = vset.pattern.permute.xlu0 2
    %5178 = vperm.xlu0 %5177, %v4674
    %v5179 = vpop.permute.xlu0 %5178
    %5181 = vset.pattern.permute.xlu0 2
    %5182 = vperm.xlu0 %5181, %v4675
    %v5183 = vpop.permute.xlu0 %5182
    %5185 = vset.pattern.permute.xlu0 2
    %5186 = vperm.xlu0 %5185, %v4676
    %v5187 = vpop.permute.xlu0 %5186
    %5189 = vset.pattern.permute.xlu0 2
    %5190 = vperm.xlu0 %5189, %v4677
    %v5191 = vpop.permute.xlu0 %5190
    %v5193 = vmul.f32 %v5163, %v5145
    %v5194 = vmul.f32 %v5163, %v5146
    %v5195 = vmul.f32 %v5167, %v5147
    %v5196 = vmul.f32 %v5167, %v5148
    %v5197 = vmul.f32 %v5171, %v5149
    %v5198 = vmul.f32 %v5171, %v5150
    %v5199 = vmul.f32 %v5175, %v5151
    %v5200 = vmul.f32 %v5175, %v5152
    %v5201 = vmul.f32 %v5179, %v5153
    %v5202 = vmul.f32 %v5179, %v5154
    %v5203 = vmul.f32 %v5183, %v5155
    %v5204 = vmul.f32 %v5183, %v5156
    %v5205 = vmul.f32 %v5187, %v5157
    %v5206 = vmul.f32 %v5187, %v5158
    %v5207 = vmul.f32 %v5191, %v5159
    %v5208 = vmul.f32 %v5191, %v5160
    %v5209 = vadd.f32 %v5128, %v5193
    %v5210 = vadd.f32 %v5129, %v5194
    %v5211 = vadd.f32 %v5130, %v5195
    %v5212 = vadd.f32 %v5131, %v5196
    %v5213 = vadd.f32 %v5132, %v5197
    %v5214 = vadd.f32 %v5133, %v5198
    %v5215 = vadd.f32 %v5134, %v5199
    %v5216 = vadd.f32 %v5135, %v5200
    %v5217 = vadd.f32 %v5136, %v5201
    %v5218 = vadd.f32 %v5137, %v5202
    %v5219 = vadd.f32 %v5138, %v5203
    %v5220 = vadd.f32 %v5139, %v5204
    %v5221 = vadd.f32 %v5140, %v5205
    %v5222 = vadd.f32 %v5141, %v5206
    %v5223 = vadd.f32 %v5142, %v5207
    %v5224 = vadd.f32 %v5143, %v5208
    %s5225 = scalar_lea.vmem %s6, 384
    %v5226 = vld [vmem:[%s5225] sm:$0xff]
    %v5227 = vld [vmem:[%s5225 + $0x8] sm:$0xff]
    %v5228 = vld [vmem:[%s5225 + $0x10] sm:$0xff]
    %v5229 = vld [vmem:[%s5225 + $0x18] sm:$0xff]
    %v5230 = vld [vmem:[%s5225 + $0x20] sm:$0xff]
    %v5231 = vld [vmem:[%s5225 + $0x28] sm:$0xff]
    %v5232 = vld [vmem:[%s5225 + $0x30] sm:$0xff]
    %v5233 = vld [vmem:[%s5225 + $0x38] sm:$0xff]
    %v5234 = vld [vmem:[%s5225 + $0x40] sm:$0xff]
    %v5235 = vld [vmem:[%s5225 + $0x48] sm:$0xff]
    %v5236 = vld [vmem:[%s5225 + $0x50] sm:$0xff]
    %v5237 = vld [vmem:[%s5225 + $0x58] sm:$0xff]
    %v5238 = vld [vmem:[%s5225 + $0x60] sm:$0xff]
    %v5239 = vld [vmem:[%s5225 + $0x68] sm:$0xff]
    %v5240 = vld [vmem:[%s5225 + $0x70] sm:$0xff]
    %v5241 = vld [vmem:[%s5225 + $0x78] sm:$0xff]
    %5242 = vset.pattern.permute.xlu0 3
    %5243 = vperm.xlu0 %5242, %v4670
    %v5244 = vpop.permute.xlu0 %5243
    %5246 = vset.pattern.permute.xlu0 3
    %5247 = vperm.xlu0 %5246, %v4671
    %v5248 = vpop.permute.xlu0 %5247
    %5250 = vset.pattern.permute.xlu0 3
    %5251 = vperm.xlu0 %5250, %v4672
    %v5252 = vpop.permute.xlu0 %5251
    %5254 = vset.pattern.permute.xlu0 3
    %5255 = vperm.xlu0 %5254, %v4673
    %v5256 = vpop.permute.xlu0 %5255
    %5258 = vset.pattern.permute.xlu0 3
    %5259 = vperm.xlu0 %5258, %v4674
    %v5260 = vpop.permute.xlu0 %5259
    %5262 = vset.pattern.permute.xlu0 3
    %5263 = vperm.xlu0 %5262, %v4675
    %v5264 = vpop.permute.xlu0 %5263
    %5266 = vset.pattern.permute.xlu0 3
    %5267 = vperm.xlu0 %5266, %v4676
    %v5268 = vpop.permute.xlu0 %5267
    %5270 = vset.pattern.permute.xlu0 3
    %5271 = vperm.xlu0 %5270, %v4677
    %v5272 = vpop.permute.xlu0 %5271
    %v5274 = vmul.f32 %v5244, %v5226
    %v5275 = vmul.f32 %v5244, %v5227
    %v5276 = vmul.f32 %v5248, %v5228
    %v5277 = vmul.f32 %v5248, %v5229
    %v5278 = vmul.f32 %v5252, %v5230
    %v5279 = vmul.f32 %v5252, %v5231
    %v5280 = vmul.f32 %v5256, %v5232
    %v5281 = vmul.f32 %v5256, %v5233
    %v5282 = vmul.f32 %v5260, %v5234
    %v5283 = vmul.f32 %v5260, %v5235
    %v5284 = vmul.f32 %v5264, %v5236
    %v5285 = vmul.f32 %v5264, %v5237
    %v5286 = vmul.f32 %v5268, %v5238
    %v5287 = vmul.f32 %v5268, %v5239
    %v5288 = vmul.f32 %v5272, %v5240
    %v5289 = vmul.f32 %v5272, %v5241
    %v5290 = vadd.f32 %v5209, %v5274
    %v5291 = vadd.f32 %v5210, %v5275
    %v5292 = vadd.f32 %v5211, %v5276
    %v5293 = vadd.f32 %v5212, %v5277
    %v5294 = vadd.f32 %v5213, %v5278
    %v5295 = vadd.f32 %v5214, %v5279
    %v5296 = vadd.f32 %v5215, %v5280
    %v5297 = vadd.f32 %v5216, %v5281
    %v5298 = vadd.f32 %v5217, %v5282
    %v5299 = vadd.f32 %v5218, %v5283
    %v5300 = vadd.f32 %v5219, %v5284
    %v5301 = vadd.f32 %v5220, %v5285
    %v5302 = vadd.f32 %v5221, %v5286
    %v5303 = vadd.f32 %v5222, %v5287
    %v5304 = vadd.f32 %v5223, %v5288
    %v5305 = vadd.f32 %v5224, %v5289
    %s5306 = scalar_lea.vmem %s6, 512
    %v5307 = vld [vmem:[%s5306] sm:$0xff]
    %v5308 = vld [vmem:[%s5306 + $0x8] sm:$0xff]
    %v5309 = vld [vmem:[%s5306 + $0x10] sm:$0xff]
    %v5310 = vld [vmem:[%s5306 + $0x18] sm:$0xff]
    %v5311 = vld [vmem:[%s5306 + $0x20] sm:$0xff]
    %v5312 = vld [vmem:[%s5306 + $0x28] sm:$0xff]
    %v5313 = vld [vmem:[%s5306 + $0x30] sm:$0xff]
    %v5314 = vld [vmem:[%s5306 + $0x38] sm:$0xff]
    %v5315 = vld [vmem:[%s5306 + $0x40] sm:$0xff]
    %v5316 = vld [vmem:[%s5306 + $0x48] sm:$0xff]
    %v5317 = vld [vmem:[%s5306 + $0x50] sm:$0xff]
    %v5318 = vld [vmem:[%s5306 + $0x58] sm:$0xff]
    %v5319 = vld [vmem:[%s5306 + $0x60] sm:$0xff]
    %v5320 = vld [vmem:[%s5306 + $0x68] sm:$0xff]
    %v5321 = vld [vmem:[%s5306 + $0x70] sm:$0xff]
    %v5322 = vld [vmem:[%s5306 + $0x78] sm:$0xff]
    %5323 = vset.pattern.permute.xlu0 4
    %5324 = vperm.xlu0 %5323, %v4670
    %v5325 = vpop.permute.xlu0 %5324
    %5327 = vset.pattern.permute.xlu0 4
    %5328 = vperm.xlu0 %5327, %v4671
    %v5329 = vpop.permute.xlu0 %5328
    %5331 = vset.pattern.permute.xlu0 4
    %5332 = vperm.xlu0 %5331, %v4672
    %v5333 = vpop.permute.xlu0 %5332
    %5335 = vset.pattern.permute.xlu0 4
    %5336 = vperm.xlu0 %5335, %v4673
    %v5337 = vpop.permute.xlu0 %5336
    %5339 = vset.pattern.permute.xlu0 4
    %5340 = vperm.xlu0 %5339, %v4674
    %v5341 = vpop.permute.xlu0 %5340
    %5343 = vset.pattern.permute.xlu0 4
    %5344 = vperm.xlu0 %5343, %v4675
    %v5345 = vpop.permute.xlu0 %5344
    %5347 = vset.pattern.permute.xlu0 4
    %5348 = vperm.xlu0 %5347, %v4676
    %v5349 = vpop.permute.xlu0 %5348
    %5351 = vset.pattern.permute.xlu0 4
    %5352 = vperm.xlu0 %5351, %v4677
    %v5353 = vpop.permute.xlu0 %5352
    %v5355 = vmul.f32 %v5325, %v5307
    %v5356 = vmul.f32 %v5325, %v5308
    %v5357 = vmul.f32 %v5329, %v5309
    %v5358 = vmul.f32 %v5329, %v5310
    %v5359 = vmul.f32 %v5333, %v5311
    %v5360 = vmul.f32 %v5333, %v5312
    %v5361 = vmul.f32 %v5337, %v5313
    %v5362 = vmul.f32 %v5337, %v5314
    %v5363 = vmul.f32 %v5341, %v5315
    %v5364 = vmul.f32 %v5341, %v5316
    %v5365 = vmul.f32 %v5345, %v5317
    %v5366 = vmul.f32 %v5345, %v5318
    %v5367 = vmul.f32 %v5349, %v5319
    %v5368 = vmul.f32 %v5349, %v5320
    %v5369 = vmul.f32 %v5353, %v5321
    %v5370 = vmul.f32 %v5353, %v5322
    %v5371 = vadd.f32 %v5290, %v5355
    %v5372 = vadd.f32 %v5291, %v5356
    %v5373 = vadd.f32 %v5292, %v5357
    %v5374 = vadd.f32 %v5293, %v5358
    %v5375 = vadd.f32 %v5294, %v5359
    %v5376 = vadd.f32 %v5295, %v5360
    %v5377 = vadd.f32 %v5296, %v5361
    %v5378 = vadd.f32 %v5297, %v5362
    %v5379 = vadd.f32 %v5298, %v5363
    %v5380 = vadd.f32 %v5299, %v5364
    %v5381 = vadd.f32 %v5300, %v5365
    %v5382 = vadd.f32 %v5301, %v5366
    %v5383 = vadd.f32 %v5302, %v5367
    %v5384 = vadd.f32 %v5303, %v5368
    %v5385 = vadd.f32 %v5304, %v5369
    %v5386 = vadd.f32 %v5305, %v5370
    %s5387 = scalar_lea.vmem %s6, 640
    %v5388 = vld [vmem:[%s5387] sm:$0xff]
    %v5389 = vld [vmem:[%s5387 + $0x8] sm:$0xff]
    %v5390 = vld [vmem:[%s5387 + $0x10] sm:$0xff]
    %v5391 = vld [vmem:[%s5387 + $0x18] sm:$0xff]
    %v5392 = vld [vmem:[%s5387 + $0x20] sm:$0xff]
    %v5393 = vld [vmem:[%s5387 + $0x28] sm:$0xff]
    %v5394 = vld [vmem:[%s5387 + $0x30] sm:$0xff]
    %v5395 = vld [vmem:[%s5387 + $0x38] sm:$0xff]
    %v5396 = vld [vmem:[%s5387 + $0x40] sm:$0xff]
    %v5397 = vld [vmem:[%s5387 + $0x48] sm:$0xff]
    %v5398 = vld [vmem:[%s5387 + $0x50] sm:$0xff]
    %v5399 = vld [vmem:[%s5387 + $0x58] sm:$0xff]
    %v5400 = vld [vmem:[%s5387 + $0x60] sm:$0xff]
    %v5401 = vld [vmem:[%s5387 + $0x68] sm:$0xff]
    %v5402 = vld [vmem:[%s5387 + $0x70] sm:$0xff]
    %v5403 = vld [vmem:[%s5387 + $0x78] sm:$0xff]
    %5404 = vset.pattern.permute.xlu0 5
    %5405 = vperm.xlu0 %5404, %v4670
    %v5406 = vpop.permute.xlu0 %5405
    %5408 = vset.pattern.permute.xlu0 5
    %5409 = vperm.xlu0 %5408, %v4671
    %v5410 = vpop.permute.xlu0 %5409
    %5412 = vset.pattern.permute.xlu0 5
    %5413 = vperm.xlu0 %5412, %v4672
    %v5414 = vpop.permute.xlu0 %5413
    %5416 = vset.pattern.permute.xlu0 5
    %5417 = vperm.xlu0 %5416, %v4673
    %v5418 = vpop.permute.xlu0 %5417
    %5420 = vset.pattern.permute.xlu0 5
    %5421 = vperm.xlu0 %5420, %v4674
    %v5422 = vpop.permute.xlu0 %5421
    %5424 = vset.pattern.permute.xlu0 5
    %5425 = vperm.xlu0 %5424, %v4675
    %v5426 = vpop.permute.xlu0 %5425
    %5428 = vset.pattern.permute.xlu0 5
    %5429 = vperm.xlu0 %5428, %v4676
    %v5430 = vpop.permute.xlu0 %5429
    %5432 = vset.pattern.permute.xlu0 5
    %5433 = vperm.xlu0 %5432, %v4677
    %v5434 = vpop.permute.xlu0 %5433
    %v5436 = vmul.f32 %v5406, %v5388
    %v5437 = vmul.f32 %v5406, %v5389
    %v5438 = vmul.f32 %v5410, %v5390
    %v5439 = vmul.f32 %v5410, %v5391
    %v5440 = vmul.f32 %v5414, %v5392
    %v5441 = vmul.f32 %v5414, %v5393
    %v5442 = vmul.f32 %v5418, %v5394
    %v5443 = vmul.f32 %v5418, %v5395
    %v5444 = vmul.f32 %v5422, %v5396
    %v5445 = vmul.f32 %v5422, %v5397
    %v5446 = vmul.f32 %v5426, %v5398
    %v5447 = vmul.f32 %v5426, %v5399
    %v5448 = vmul.f32 %v5430, %v5400
    %v5449 = vmul.f32 %v5430, %v5401
    %v5450 = vmul.f32 %v5434, %v5402
    %v5451 = vmul.f32 %v5434, %v5403
    %v5452 = vadd.f32 %v5371, %v5436
    %v5453 = vadd.f32 %v5372, %v5437
    %v5454 = vadd.f32 %v5373, %v5438
    %v5455 = vadd.f32 %v5374, %v5439
    %v5456 = vadd.f32 %v5375, %v5440
    %v5457 = vadd.f32 %v5376, %v5441
    %v5458 = vadd.f32 %v5377, %v5442
    %v5459 = vadd.f32 %v5378, %v5443
    %v5460 = vadd.f32 %v5379, %v5444
    %v5461 = vadd.f32 %v5380, %v5445
    %v5462 = vadd.f32 %v5381, %v5446
    %v5463 = vadd.f32 %v5382, %v5447
    %v5464 = vadd.f32 %v5383, %v5448
    %v5465 = vadd.f32 %v5384, %v5449
    %v5466 = vadd.f32 %v5385, %v5450
    %v5467 = vadd.f32 %v5386, %v5451
    %s5468 = scalar_lea.vmem %s6, 768
    %v5469 = vld [vmem:[%s5468] sm:$0xff]
    %v5470 = vld [vmem:[%s5468 + $0x8] sm:$0xff]
    %v5471 = vld [vmem:[%s5468 + $0x10] sm:$0xff]
    %v5472 = vld [vmem:[%s5468 + $0x18] sm:$0xff]
    %v5473 = vld [vmem:[%s5468 + $0x20] sm:$0xff]
    %v5474 = vld [vmem:[%s5468 + $0x28] sm:$0xff]
    %v5475 = vld [vmem:[%s5468 + $0x30] sm:$0xff]
    %v5476 = vld [vmem:[%s5468 + $0x38] sm:$0xff]
    %v5477 = vld [vmem:[%s5468 + $0x40] sm:$0xff]
    %v5478 = vld [vmem:[%s5468 + $0x48] sm:$0xff]
    %v5479 = vld [vmem:[%s5468 + $0x50] sm:$0xff]
    %v5480 = vld [vmem:[%s5468 + $0x58] sm:$0xff]
    %v5481 = vld [vmem:[%s5468 + $0x60] sm:$0xff]
    %v5482 = vld [vmem:[%s5468 + $0x68] sm:$0xff]
    %v5483 = vld [vmem:[%s5468 + $0x70] sm:$0xff]
    %v5484 = vld [vmem:[%s5468 + $0x78] sm:$0xff]
    %5485 = vset.pattern.permute.xlu0 6
    %5486 = vperm.xlu0 %5485, %v4670
    %v5487 = vpop.permute.xlu0 %5486
    %5489 = vset.pattern.permute.xlu0 6
    %5490 = vperm.xlu0 %5489, %v4671
    %v5491 = vpop.permute.xlu0 %5490
    %5493 = vset.pattern.permute.xlu0 6
    %5494 = vperm.xlu0 %5493, %v4672
    %v5495 = vpop.permute.xlu0 %5494
    %5497 = vset.pattern.permute.xlu0 6
    %5498 = vperm.xlu0 %5497, %v4673
    %v5499 = vpop.permute.xlu0 %5498
    %5501 = vset.pattern.permute.xlu0 6
    %5502 = vperm.xlu0 %5501, %v4674
    %v5503 = vpop.permute.xlu0 %5502
    %5505 = vset.pattern.permute.xlu0 6
    %5506 = vperm.xlu0 %5505, %v4675
    %v5507 = vpop.permute.xlu0 %5506
    %5509 = vset.pattern.permute.xlu0 6
    %5510 = vperm.xlu0 %5509, %v4676
    %v5511 = vpop.permute.xlu0 %5510
    %5513 = vset.pattern.permute.xlu0 6
    %5514 = vperm.xlu0 %5513, %v4677
    %v5515 = vpop.permute.xlu0 %5514
    %v5517 = vmul.f32 %v5487, %v5469
    %v5518 = vmul.f32 %v5487, %v5470
    %v5519 = vmul.f32 %v5491, %v5471
    %v5520 = vmul.f32 %v5491, %v5472
    %v5521 = vmul.f32 %v5495, %v5473
    %v5522 = vmul.f32 %v5495, %v5474
    %v5523 = vmul.f32 %v5499, %v5475
    %v5524 = vmul.f32 %v5499, %v5476
    %v5525 = vmul.f32 %v5503, %v5477
    %v5526 = vmul.f32 %v5503, %v5478
    %v5527 = vmul.f32 %v5507, %v5479
    %v5528 = vmul.f32 %v5507, %v5480
    %v5529 = vmul.f32 %v5511, %v5481
    %v5530 = vmul.f32 %v5511, %v5482
    %v5531 = vmul.f32 %v5515, %v5483
    %v5532 = vmul.f32 %v5515, %v5484
    %v5533 = vadd.f32 %v5452, %v5517
    %v5534 = vadd.f32 %v5453, %v5518
    %v5535 = vadd.f32 %v5454, %v5519
    %v5536 = vadd.f32 %v5455, %v5520
    %v5537 = vadd.f32 %v5456, %v5521
    %v5538 = vadd.f32 %v5457, %v5522
    %v5539 = vadd.f32 %v5458, %v5523
    %v5540 = vadd.f32 %v5459, %v5524
    %v5541 = vadd.f32 %v5460, %v5525
    %v5542 = vadd.f32 %v5461, %v5526
    %v5543 = vadd.f32 %v5462, %v5527
    %v5544 = vadd.f32 %v5463, %v5528
    %v5545 = vadd.f32 %v5464, %v5529
    %v5546 = vadd.f32 %v5465, %v5530
    %v5547 = vadd.f32 %v5466, %v5531
    %v5548 = vadd.f32 %v5467, %v5532
    %s5549 = scalar_lea.vmem %s6, 896
    %v5550 = vld [vmem:[%s5549] sm:$0xff]
    %v5551 = vld [vmem:[%s5549 + $0x8] sm:$0xff]
    %v5552 = vld [vmem:[%s5549 + $0x10] sm:$0xff]
    %v5553 = vld [vmem:[%s5549 + $0x18] sm:$0xff]
    %v5554 = vld [vmem:[%s5549 + $0x20] sm:$0xff]
    %v5555 = vld [vmem:[%s5549 + $0x28] sm:$0xff]
    %v5556 = vld [vmem:[%s5549 + $0x30] sm:$0xff]
    %v5557 = vld [vmem:[%s5549 + $0x38] sm:$0xff]
    %v5558 = vld [vmem:[%s5549 + $0x40] sm:$0xff]
    %v5559 = vld [vmem:[%s5549 + $0x48] sm:$0xff]
    %v5560 = vld [vmem:[%s5549 + $0x50] sm:$0xff]
    %v5561 = vld [vmem:[%s5549 + $0x58] sm:$0xff]
    %v5562 = vld [vmem:[%s5549 + $0x60] sm:$0xff]
    %v5563 = vld [vmem:[%s5549 + $0x68] sm:$0xff]
    %v5564 = vld [vmem:[%s5549 + $0x70] sm:$0xff]
    %v5565 = vld [vmem:[%s5549 + $0x78] sm:$0xff]
    %5566 = vset.pattern.permute.xlu0 7
    %5567 = vperm.xlu0 %5566, %v4670
    %v5568 = vpop.permute.xlu0 %5567
    %5570 = vset.pattern.permute.xlu0 7
    %5571 = vperm.xlu0 %5570, %v4671
    %v5572 = vpop.permute.xlu0 %5571
    %5574 = vset.pattern.permute.xlu0 7
    %5575 = vperm.xlu0 %5574, %v4672
    %v5576 = vpop.permute.xlu0 %5575
    %5578 = vset.pattern.permute.xlu0 7
    %5579 = vperm.xlu0 %5578, %v4673
    %v5580 = vpop.permute.xlu0 %5579
    %5582 = vset.pattern.permute.xlu0 7
    %5583 = vperm.xlu0 %5582, %v4674
    %v5584 = vpop.permute.xlu0 %5583
    %5586 = vset.pattern.permute.xlu0 7
    %5587 = vperm.xlu0 %5586, %v4675
    %v5588 = vpop.permute.xlu0 %5587
    %5590 = vset.pattern.permute.xlu0 7
    %5591 = vperm.xlu0 %5590, %v4676
    %v5592 = vpop.permute.xlu0 %5591
    %5594 = vset.pattern.permute.xlu0 7
    %5595 = vperm.xlu0 %5594, %v4677
    %v5596 = vpop.permute.xlu0 %5595
    %v5598 = vmul.f32 %v5568, %v5550
    %v5599 = vmul.f32 %v5568, %v5551
    %v5600 = vmul.f32 %v5572, %v5552
    %v5601 = vmul.f32 %v5572, %v5553
    %v5602 = vmul.f32 %v5576, %v5554
    %v5603 = vmul.f32 %v5576, %v5555
    %v5604 = vmul.f32 %v5580, %v5556
    %v5605 = vmul.f32 %v5580, %v5557
    %v5606 = vmul.f32 %v5584, %v5558
    %v5607 = vmul.f32 %v5584, %v5559
    %v5608 = vmul.f32 %v5588, %v5560
    %v5609 = vmul.f32 %v5588, %v5561
    %v5610 = vmul.f32 %v5592, %v5562
    %v5611 = vmul.f32 %v5592, %v5563
    %v5612 = vmul.f32 %v5596, %v5564
    %v5613 = vmul.f32 %v5596, %v5565
    %v5614 = vadd.f32 %v5533, %v5598
    %v5615 = vadd.f32 %v5534, %v5599
    %v5616 = vadd.f32 %v5535, %v5600
    %v5617 = vadd.f32 %v5536, %v5601
    %v5618 = vadd.f32 %v5537, %v5602
    %v5619 = vadd.f32 %v5538, %v5603
    %v5620 = vadd.f32 %v5539, %v5604
    %v5621 = vadd.f32 %v5540, %v5605
    %v5622 = vadd.f32 %v5541, %v5606
    %v5623 = vadd.f32 %v5542, %v5607
    %v5624 = vadd.f32 %v5543, %v5608
    %v5625 = vadd.f32 %v5544, %v5609
    %v5626 = vadd.f32 %v5545, %v5610
    %v5627 = vadd.f32 %v5546, %v5611
    %v5628 = vadd.f32 %v5547, %v5612
    %v5629 = vadd.f32 %v5548, %v5613
    %5631 = vset.pattern.permute.xlu0 0
    %5632 = vperm.xlu0 %5631, %v4678
    %v5633 = vpop.permute.xlu0 %5632
    %5636 = vset.pattern.permute.xlu0 0
    %5637 = vperm.xlu0 %5636, %v4679
    %v5638 = vpop.permute.xlu0 %5637
    %5641 = vset.pattern.permute.xlu0 0
    %5642 = vperm.xlu0 %5641, %v4680
    %v5643 = vpop.permute.xlu0 %5642
    %5646 = vset.pattern.permute.xlu0 0
    %5647 = vperm.xlu0 %5646, %v4681
    %v5648 = vpop.permute.xlu0 %5647
    %5651 = vset.pattern.permute.xlu0 0
    %5652 = vperm.xlu0 %5651, %v4682
    %v5653 = vpop.permute.xlu0 %5652
    %5656 = vset.pattern.permute.xlu0 0
    %5657 = vperm.xlu0 %5656, %v4683
    %v5658 = vpop.permute.xlu0 %5657
    %5661 = vset.pattern.permute.xlu0 0
    %5662 = vperm.xlu0 %5661, %v4684
    %v5663 = vpop.permute.xlu0 %5662
    %5666 = vset.pattern.permute.xlu0 0
    %5667 = vperm.xlu0 %5666, %v4685
    %v5668 = vpop.permute.xlu0 %5667
    %v5670 = vmul.f32 %v5633, %v4975
    %v5671 = vmul.f32 %v5633, %v4976
    %v5672 = vmul.f32 %v5638, %v4977
    %v5673 = vmul.f32 %v5638, %v4978
    %v5674 = vmul.f32 %v5643, %v4979
    %v5675 = vmul.f32 %v5643, %v4980
    %v5676 = vmul.f32 %v5648, %v4981
    %v5677 = vmul.f32 %v5648, %v4982
    %v5678 = vmul.f32 %v5653, %v4983
    %v5679 = vmul.f32 %v5653, %v4984
    %v5680 = vmul.f32 %v5658, %v4985
    %v5681 = vmul.f32 %v5658, %v4986
    %v5682 = vmul.f32 %v5663, %v4987
    %v5683 = vmul.f32 %v5663, %v4988
    %v5684 = vmul.f32 %v5668, %v4989
    %v5685 = vmul.f32 %v5668, %v4990
    %v5686 = vadd.f32 %v5670, 0.0
    %v5687 = vadd.f32 %v5671, 0.0
    %v5688 = vadd.f32 %v5672, 0.0
    %v5689 = vadd.f32 %v5673, 0.0
    %v5690 = vadd.f32 %v5674, 0.0
    %v5691 = vadd.f32 %v5675, 0.0
    %v5692 = vadd.f32 %v5676, 0.0
    %v5693 = vadd.f32 %v5677, 0.0
    %v5694 = vadd.f32 %v5678, 0.0
    %v5695 = vadd.f32 %v5679, 0.0
    %v5696 = vadd.f32 %v5680, 0.0
    %v5697 = vadd.f32 %v5681, 0.0
    %v5698 = vadd.f32 %v5682, 0.0
    %v5699 = vadd.f32 %v5683, 0.0
    %v5700 = vadd.f32 %v5684, 0.0
    %v5701 = vadd.f32 %v5685, 0.0
    %5702 = vset.pattern.permute.xlu0 1
    %5703 = vperm.xlu0 %5702, %v4678
    %v5704 = vpop.permute.xlu0 %5703
    %5706 = vset.pattern.permute.xlu0 1
    %5707 = vperm.xlu0 %5706, %v4679
    %v5708 = vpop.permute.xlu0 %5707
    %5710 = vset.pattern.permute.xlu0 1
    %5711 = vperm.xlu0 %5710, %v4680
    %v5712 = vpop.permute.xlu0 %5711
    %5714 = vset.pattern.permute.xlu0 1
    %5715 = vperm.xlu0 %5714, %v4681
    %v5716 = vpop.permute.xlu0 %5715
    %5718 = vset.pattern.permute.xlu0 1
    %5719 = vperm.xlu0 %5718, %v4682
    %v5720 = vpop.permute.xlu0 %5719
    %5722 = vset.pattern.permute.xlu0 1
    %5723 = vperm.xlu0 %5722, %v4683
    %v5724 = vpop.permute.xlu0 %5723
    %5726 = vset.pattern.permute.xlu0 1
    %5727 = vperm.xlu0 %5726, %v4684
    %v5728 = vpop.permute.xlu0 %5727
    %5730 = vset.pattern.permute.xlu0 1
    %5731 = vperm.xlu0 %5730, %v4685
    %v5732 = vpop.permute.xlu0 %5731
    %v5734 = vmul.f32 %v5704, %v5064
    %v5735 = vmul.f32 %v5704, %v5065
    %v5736 = vmul.f32 %v5708, %v5066
    %v5737 = vmul.f32 %v5708, %v5067
    %v5738 = vmul.f32 %v5712, %v5068
    %v5739 = vmul.f32 %v5712, %v5069
    %v5740 = vmul.f32 %v5716, %v5070
    %v5741 = vmul.f32 %v5716, %v5071
    %v5742 = vmul.f32 %v5720, %v5072
    %v5743 = vmul.f32 %v5720, %v5073
    %v5744 = vmul.f32 %v5724, %v5074
    %v5745 = vmul.f32 %v5724, %v5075
    %v5746 = vmul.f32 %v5728, %v5076
    %v5747 = vmul.f32 %v5728, %v5077
    %v5748 = vmul.f32 %v5732, %v5078
    %v5749 = vmul.f32 %v5732, %v5079
    %v5750 = vadd.f32 %v5686, %v5734
    %v5751 = vadd.f32 %v5687, %v5735
    %v5752 = vadd.f32 %v5688, %v5736
    %v5753 = vadd.f32 %v5689, %v5737
    %v5754 = vadd.f32 %v5690, %v5738
    %v5755 = vadd.f32 %v5691, %v5739
    %v5756 = vadd.f32 %v5692, %v5740
    %v5757 = vadd.f32 %v5693, %v5741
    %v5758 = vadd.f32 %v5694, %v5742
    %v5759 = vadd.f32 %v5695, %v5743
    %v5760 = vadd.f32 %v5696, %v5744
    %v5761 = vadd.f32 %v5697, %v5745
    %v5762 = vadd.f32 %v5698, %v5746
    %v5763 = vadd.f32 %v5699, %v5747
    %v5764 = vadd.f32 %v5700, %v5748
    %v5765 = vadd.f32 %v5701, %v5749
    %5766 = vset.pattern.permute.xlu0 2
    %5767 = vperm.xlu0 %5766, %v4678
    %v5768 = vpop.permute.xlu0 %5767
    %5770 = vset.pattern.permute.xlu0 2
    %5771 = vperm.xlu0 %5770, %v4679
    %v5772 = vpop.permute.xlu0 %5771
    %5774 = vset.pattern.permute.xlu0 2
    %5775 = vperm.xlu0 %5774, %v4680
    %v5776 = vpop.permute.xlu0 %5775
    %5778 = vset.pattern.permute.xlu0 2
    %5779 = vperm.xlu0 %5778, %v4681
    %v5780 = vpop.permute.xlu0 %5779
    %5782 = vset.pattern.permute.xlu0 2
    %5783 = vperm.xlu0 %5782, %v4682
    %v5784 = vpop.permute.xlu0 %5783
    %5786 = vset.pattern.permute.xlu0 2
    %5787 = vperm.xlu0 %5786, %v4683
    %v5788 = vpop.permute.xlu0 %5787
    %5790 = vset.pattern.permute.xlu0 2
    %5791 = vperm.xlu0 %5790, %v4684
    %v5792 = vpop.permute.xlu0 %5791
    %5794 = vset.pattern.permute.xlu0 2
    %5795 = vperm.xlu0 %5794, %v4685
    %v5796 = vpop.permute.xlu0 %5795
    %v5798 = vmul.f32 %v5768, %v5145
    %v5799 = vmul.f32 %v5768, %v5146
    %v5800 = vmul.f32 %v5772, %v5147
    %v5801 = vmul.f32 %v5772, %v5148
    %v5802 = vmul.f32 %v5776, %v5149
    %v5803 = vmul.f32 %v5776, %v5150
    %v5804 = vmul.f32 %v5780, %v5151
    %v5805 = vmul.f32 %v5780, %v5152
    %v5806 = vmul.f32 %v5784, %v5153
    %v5807 = vmul.f32 %v5784, %v5154
    %v5808 = vmul.f32 %v5788, %v5155
    %v5809 = vmul.f32 %v5788, %v5156
    %v5810 = vmul.f32 %v5792, %v5157
    %v5811 = vmul.f32 %v5792, %v5158
    %v5812 = vmul.f32 %v5796, %v5159
    %v5813 = vmul.f32 %v5796, %v5160
    %v5814 = vadd.f32 %v5750, %v5798
    %v5815 = vadd.f32 %v5751, %v5799
    %v5816 = vadd.f32 %v5752, %v5800
    %v5817 = vadd.f32 %v5753, %v5801
    %v5818 = vadd.f32 %v5754, %v5802
    %v5819 = vadd.f32 %v5755, %v5803
    %v5820 = vadd.f32 %v5756, %v5804
    %v5821 = vadd.f32 %v5757, %v5805
    %v5822 = vadd.f32 %v5758, %v5806
    %v5823 = vadd.f32 %v5759, %v5807
    %v5824 = vadd.f32 %v5760, %v5808
    %v5825 = vadd.f32 %v5761, %v5809
    %v5826 = vadd.f32 %v5762, %v5810
    %v5827 = vadd.f32 %v5763, %v5811
    %v5828 = vadd.f32 %v5764, %v5812
    %v5829 = vadd.f32 %v5765, %v5813
    %5830 = vset.pattern.permute.xlu0 3
    %5831 = vperm.xlu0 %5830, %v4678
    %v5832 = vpop.permute.xlu0 %5831
    %5834 = vset.pattern.permute.xlu0 3
    %5835 = vperm.xlu0 %5834, %v4679
    %v5836 = vpop.permute.xlu0 %5835
    %5838 = vset.pattern.permute.xlu0 3
    %5839 = vperm.xlu0 %5838, %v4680
    %v5840 = vpop.permute.xlu0 %5839
    %5842 = vset.pattern.permute.xlu0 3
    %5843 = vperm.xlu0 %5842, %v4681
    %v5844 = vpop.permute.xlu0 %5843
    %5846 = vset.pattern.permute.xlu0 3
    %5847 = vperm.xlu0 %5846, %v4682
    %v5848 = vpop.permute.xlu0 %5847
    %5850 = vset.pattern.permute.xlu0 3
    %5851 = vperm.xlu0 %5850, %v4683
    %v5852 = vpop.permute.xlu0 %5851
    %5854 = vset.pattern.permute.xlu0 3
    %5855 = vperm.xlu0 %5854, %v4684
    %v5856 = vpop.permute.xlu0 %5855
    %5858 = vset.pattern.permute.xlu0 3
    %5859 = vperm.xlu0 %5858, %v4685
    %v5860 = vpop.permute.xlu0 %5859
    %v5862 = vmul.f32 %v5832, %v5226
    %v5863 = vmul.f32 %v5832, %v5227
    %v5864 = vmul.f32 %v5836, %v5228
    %v5865 = vmul.f32 %v5836, %v5229
    %v5866 = vmul.f32 %v5840, %v5230
    %v5867 = vmul.f32 %v5840, %v5231
    %v5868 = vmul.f32 %v5844, %v5232
    %v5869 = vmul.f32 %v5844, %v5233
    %v5870 = vmul.f32 %v5848, %v5234
    %v5871 = vmul.f32 %v5848, %v5235
    %v5872 = vmul.f32 %v5852, %v5236
    %v5873 = vmul.f32 %v5852, %v5237
    %v5874 = vmul.f32 %v5856, %v5238
    %v5875 = vmul.f32 %v5856, %v5239
    %v5876 = vmul.f32 %v5860, %v5240
    %v5877 = vmul.f32 %v5860, %v5241
    %v5878 = vadd.f32 %v5814, %v5862
    %v5879 = vadd.f32 %v5815, %v5863
    %v5880 = vadd.f32 %v5816, %v5864
    %v5881 = vadd.f32 %v5817, %v5865
    %v5882 = vadd.f32 %v5818, %v5866
    %v5883 = vadd.f32 %v5819, %v5867
    %v5884 = vadd.f32 %v5820, %v5868
    %v5885 = vadd.f32 %v5821, %v5869
    %v5886 = vadd.f32 %v5822, %v5870
    %v5887 = vadd.f32 %v5823, %v5871
    %v5888 = vadd.f32 %v5824, %v5872
    %v5889 = vadd.f32 %v5825, %v5873
    %v5890 = vadd.f32 %v5826, %v5874
    %v5891 = vadd.f32 %v5827, %v5875
    %v5892 = vadd.f32 %v5828, %v5876
    %v5893 = vadd.f32 %v5829, %v5877
    %5894 = vset.pattern.permute.xlu0 4
    %5895 = vperm.xlu0 %5894, %v4678
    %v5896 = vpop.permute.xlu0 %5895
    %5898 = vset.pattern.permute.xlu0 4
    %5899 = vperm.xlu0 %5898, %v4679
    %v5900 = vpop.permute.xlu0 %5899
    %5902 = vset.pattern.permute.xlu0 4
    %5903 = vperm.xlu0 %5902, %v4680
    %v5904 = vpop.permute.xlu0 %5903
    %5906 = vset.pattern.permute.xlu0 4
    %5907 = vperm.xlu0 %5906, %v4681
    %v5908 = vpop.permute.xlu0 %5907
    %5910 = vset.pattern.permute.xlu0 4
    %5911 = vperm.xlu0 %5910, %v4682
    %v5912 = vpop.permute.xlu0 %5911
    %5914 = vset.pattern.permute.xlu0 4
    %5915 = vperm.xlu0 %5914, %v4683
    %v5916 = vpop.permute.xlu0 %5915
    %5918 = vset.pattern.permute.xlu0 4
    %5919 = vperm.xlu0 %5918, %v4684
    %v5920 = vpop.permute.xlu0 %5919
    %5922 = vset.pattern.permute.xlu0 4
    %5923 = vperm.xlu0 %5922, %v4685
    %v5924 = vpop.permute.xlu0 %5923
    %v5926 = vmul.f32 %v5896, %v5307
    %v5927 = vmul.f32 %v5896, %v5308
    %v5928 = vmul.f32 %v5900, %v5309
    %v5929 = vmul.f32 %v5900, %v5310
    %v5930 = vmul.f32 %v5904, %v5311
    %v5931 = vmul.f32 %v5904, %v5312
    %v5932 = vmul.f32 %v5908, %v5313
    %v5933 = vmul.f32 %v5908, %v5314
    %v5934 = vmul.f32 %v5912, %v5315
    %v5935 = vmul.f32 %v5912, %v5316
    %v5936 = vmul.f32 %v5916, %v5317
    %v5937 = vmul.f32 %v5916, %v5318
    %v5938 = vmul.f32 %v5920, %v5319
    %v5939 = vmul.f32 %v5920, %v5320
    %v5940 = vmul.f32 %v5924, %v5321
    %v5941 = vmul.f32 %v5924, %v5322
    %v5942 = vadd.f32 %v5878, %v5926
    %v5943 = vadd.f32 %v5879, %v5927
    %v5944 = vadd.f32 %v5880, %v5928
    %v5945 = vadd.f32 %v5881, %v5929
    %v5946 = vadd.f32 %v5882, %v5930
    %v5947 = vadd.f32 %v5883, %v5931
    %v5948 = vadd.f32 %v5884, %v5932
    %v5949 = vadd.f32 %v5885, %v5933
    %v5950 = vadd.f32 %v5886, %v5934
    %v5951 = vadd.f32 %v5887, %v5935
    %v5952 = vadd.f32 %v5888, %v5936
    %v5953 = vadd.f32 %v5889, %v5937
    %v5954 = vadd.f32 %v5890, %v5938
    %v5955 = vadd.f32 %v5891, %v5939
    %v5956 = vadd.f32 %v5892, %v5940
    %v5957 = vadd.f32 %v5893, %v5941
    %5958 = vset.pattern.permute.xlu0 5
    %5959 = vperm.xlu0 %5958, %v4678
    %v5960 = vpop.permute.xlu0 %5959
    %5962 = vset.pattern.permute.xlu0 5
    %5963 = vperm.xlu0 %5962, %v4679
    %v5964 = vpop.permute.xlu0 %5963
    %5966 = vset.pattern.permute.xlu0 5
    %5967 = vperm.xlu0 %5966, %v4680
    %v5968 = vpop.permute.xlu0 %5967
    %5970 = vset.pattern.permute.xlu0 5
    %5971 = vperm.xlu0 %5970, %v4681
    %v5972 = vpop.permute.xlu0 %5971
    %5974 = vset.pattern.permute.xlu0 5
    %5975 = vperm.xlu0 %5974, %v4682
    %v5976 = vpop.permute.xlu0 %5975
    %5978 = vset.pattern.permute.xlu0 5
    %5979 = vperm.xlu0 %5978, %v4683
    %v5980 = vpop.permute.xlu0 %5979
    %5982 = vset.pattern.permute.xlu0 5
    %5983 = vperm.xlu0 %5982, %v4684
    %v5984 = vpop.permute.xlu0 %5983
    %5986 = vset.pattern.permute.xlu0 5
    %5987 = vperm.xlu0 %5986, %v4685
    %v5988 = vpop.permute.xlu0 %5987
    %v5990 = vmul.f32 %v5960, %v5388
    %v5991 = vmul.f32 %v5960, %v5389
    %v5992 = vmul.f32 %v5964, %v5390
    %v5993 = vmul.f32 %v5964, %v5391
    %v5994 = vmul.f32 %v5968, %v5392
    %v5995 = vmul.f32 %v5968, %v5393
    %v5996 = vmul.f32 %v5972, %v5394
    %v5997 = vmul.f32 %v5972, %v5395
    %v5998 = vmul.f32 %v5976, %v5396
    %v5999 = vmul.f32 %v5976, %v5397
    %v6000 = vmul.f32 %v5980, %v5398
    %v6001 = vmul.f32 %v5980, %v5399
    %v6002 = vmul.f32 %v5984, %v5400
    %v6003 = vmul.f32 %v5984, %v5401
    %v6004 = vmul.f32 %v5988, %v5402
    %v6005 = vmul.f32 %v5988, %v5403
    %v6006 = vadd.f32 %v5942, %v5990
    %v6007 = vadd.f32 %v5943, %v5991
    %v6008 = vadd.f32 %v5944, %v5992
    %v6009 = vadd.f32 %v5945, %v5993
    %v6010 = vadd.f32 %v5946, %v5994
    %v6011 = vadd.f32 %v5947, %v5995
    %v6012 = vadd.f32 %v5948, %v5996
    %v6013 = vadd.f32 %v5949, %v5997
    %v6014 = vadd.f32 %v5950, %v5998
    %v6015 = vadd.f32 %v5951, %v5999
    %v6016 = vadd.f32 %v5952, %v6000
    %v6017 = vadd.f32 %v5953, %v6001
    %v6018 = vadd.f32 %v5954, %v6002
    %v6019 = vadd.f32 %v5955, %v6003
    %v6020 = vadd.f32 %v5956, %v6004
    %v6021 = vadd.f32 %v5957, %v6005
    %6022 = vset.pattern.permute.xlu0 6
    %6023 = vperm.xlu0 %6022, %v4678
    %v6024 = vpop.permute.xlu0 %6023
    %6026 = vset.pattern.permute.xlu0 6
    %6027 = vperm.xlu0 %6026, %v4679
    %v6028 = vpop.permute.xlu0 %6027
    %6030 = vset.pattern.permute.xlu0 6
    %6031 = vperm.xlu0 %6030, %v4680
    %v6032 = vpop.permute.xlu0 %6031
    %6034 = vset.pattern.permute.xlu0 6
    %6035 = vperm.xlu0 %6034, %v4681
    %v6036 = vpop.permute.xlu0 %6035
    %6038 = vset.pattern.permute.xlu0 6
    %6039 = vperm.xlu0 %6038, %v4682
    %v6040 = vpop.permute.xlu0 %6039
    %6042 = vset.pattern.permute.xlu0 6
    %6043 = vperm.xlu0 %6042, %v4683
    %v6044 = vpop.permute.xlu0 %6043
    %6046 = vset.pattern.permute.xlu0 6
    %6047 = vperm.xlu0 %6046, %v4684
    %v6048 = vpop.permute.xlu0 %6047
    %6050 = vset.pattern.permute.xlu0 6
    %6051 = vperm.xlu0 %6050, %v4685
    %v6052 = vpop.permute.xlu0 %6051
    %v6054 = vmul.f32 %v6024, %v5469
    %v6055 = vmul.f32 %v6024, %v5470
    %v6056 = vmul.f32 %v6028, %v5471
    %v6057 = vmul.f32 %v6028, %v5472
    %v6058 = vmul.f32 %v6032, %v5473
    %v6059 = vmul.f32 %v6032, %v5474
    %v6060 = vmul.f32 %v6036, %v5475
    %v6061 = vmul.f32 %v6036, %v5476
    %v6062 = vmul.f32 %v6040, %v5477
    %v6063 = vmul.f32 %v6040, %v5478
    %v6064 = vmul.f32 %v6044, %v5479
    %v6065 = vmul.f32 %v6044, %v5480
    %v6066 = vmul.f32 %v6048, %v5481
    %v6067 = vmul.f32 %v6048, %v5482
    %v6068 = vmul.f32 %v6052, %v5483
    %v6069 = vmul.f32 %v6052, %v5484
    %v6070 = vadd.f32 %v6006, %v6054
    %v6071 = vadd.f32 %v6007, %v6055
    %v6072 = vadd.f32 %v6008, %v6056
    %v6073 = vadd.f32 %v6009, %v6057
    %v6074 = vadd.f32 %v6010, %v6058
    %v6075 = vadd.f32 %v6011, %v6059
    %v6076 = vadd.f32 %v6012, %v6060
    %v6077 = vadd.f32 %v6013, %v6061
    %v6078 = vadd.f32 %v6014, %v6062
    %v6079 = vadd.f32 %v6015, %v6063
    %v6080 = vadd.f32 %v6016, %v6064
    %v6081 = vadd.f32 %v6017, %v6065
    %v6082 = vadd.f32 %v6018, %v6066
    %v6083 = vadd.f32 %v6019, %v6067
    %v6084 = vadd.f32 %v6020, %v6068
    %v6085 = vadd.f32 %v6021, %v6069
    %6086 = vset.pattern.permute.xlu0 7
    %6087 = vperm.xlu0 %6086, %v4678
    %v6088 = vpop.permute.xlu0 %6087
    %6090 = vset.pattern.permute.xlu0 7
    %6091 = vperm.xlu0 %6090, %v4679
    %v6092 = vpop.permute.xlu0 %6091
    %6094 = vset.pattern.permute.xlu0 7
    %6095 = vperm.xlu0 %6094, %v4680
    %v6096 = vpop.permute.xlu0 %6095
    %6098 = vset.pattern.permute.xlu0 7
    %6099 = vperm.xlu0 %6098, %v4681
    %v6100 = vpop.permute.xlu0 %6099
    %6102 = vset.pattern.permute.xlu0 7
    %6103 = vperm.xlu0 %6102, %v4682
    %v6104 = vpop.permute.xlu0 %6103
    %6106 = vset.pattern.permute.xlu0 7
    %6107 = vperm.xlu0 %6106, %v4683
    %v6108 = vpop.permute.xlu0 %6107
    %6110 = vset.pattern.permute.xlu0 7
    %6111 = vperm.xlu0 %6110, %v4684
    %v6112 = vpop.permute.xlu0 %6111
    %6114 = vset.pattern.permute.xlu0 7
    %6115 = vperm.xlu0 %6114, %v4685
    %v6116 = vpop.permute.xlu0 %6115
    %v6118 = vmul.f32 %v6088, %v5550
    %v6119 = vmul.f32 %v6088, %v5551
    %v6120 = vmul.f32 %v6092, %v5552
    %v6121 = vmul.f32 %v6092, %v5553
    %v6122 = vmul.f32 %v6096, %v5554
    %v6123 = vmul.f32 %v6096, %v5555
    %v6124 = vmul.f32 %v6100, %v5556
    %v6125 = vmul.f32 %v6100, %v5557
    %v6126 = vmul.f32 %v6104, %v5558
    %v6127 = vmul.f32 %v6104, %v5559
    %v6128 = vmul.f32 %v6108, %v5560
    %v6129 = vmul.f32 %v6108, %v5561
    %v6130 = vmul.f32 %v6112, %v5562
    %v6131 = vmul.f32 %v6112, %v5563
    %v6132 = vmul.f32 %v6116, %v5564
    %v6133 = vmul.f32 %v6116, %v5565
    %v6134 = vadd.f32 %v6070, %v6118
    %v6135 = vadd.f32 %v6071, %v6119
    %v6136 = vadd.f32 %v6072, %v6120
    %v6137 = vadd.f32 %v6073, %v6121
    %v6138 = vadd.f32 %v6074, %v6122
    %v6139 = vadd.f32 %v6075, %v6123
    %v6140 = vadd.f32 %v6076, %v6124
    %v6141 = vadd.f32 %v6077, %v6125
    %v6142 = vadd.f32 %v6078, %v6126
    %v6143 = vadd.f32 %v6079, %v6127
    %v6144 = vadd.f32 %v6080, %v6128
    %v6145 = vadd.f32 %v6081, %v6129
    %v6146 = vadd.f32 %v6082, %v6130
    %v6147 = vadd.f32 %v6083, %v6131
    %v6148 = vadd.f32 %v6084, %v6132
    %v6149 = vadd.f32 %v6085, %v6133
    %v6150 = vld [vmem:[%s7] sm:$0xff]
    %v6151 = vld [vmem:[%s7 + $0x8] sm:$0xff]
    %v6152 = vld [vmem:[%s7 + $0x10] sm:$0x3]
    %v6153 = vld [vmem:[%s7 + $0x18] sm:$0x3]
    %v6154 = vld [vmem:[%s8] sm:$0xff]
    %v6155 = vld [vmem:[%s8 + $0x8] sm:$0xff]
    %v6156 = vld [vmem:[%s8 + $0x10] sm:$0xff]
    %v6157 = vld [vmem:[%s8 + $0x18] sm:$0xff]
    %v6158 = vld [vmem:[%s8 + $0x20] sm:$0xff]
    %v6159 = vld [vmem:[%s8 + $0x28] sm:$0xff]
    %v6160 = vld [vmem:[%s8 + $0x30] sm:$0xff]
    %v6161 = vld [vmem:[%s8 + $0x38] sm:$0xff]
    %v6162 = vld [vmem:[%s8 + $0x40] sm:$0xff]
    %v6163 = vld [vmem:[%s8 + $0x48] sm:$0xff]
    %v6164 = vld [vmem:[%s8 + $0x50] sm:$0xff]
    %v6165 = vld [vmem:[%s8 + $0x58] sm:$0xff]
    %v6166 = vld [vmem:[%s8 + $0x60] sm:$0xff]
    %v6167 = vld [vmem:[%s8 + $0x68] sm:$0xff]
    %v6168 = vld [vmem:[%s8 + $0x70] sm:$0xff]
    %v6169 = vld [vmem:[%s8 + $0x78] sm:$0xff]
    %v6170 = vld [vmem:[%s8 + $0x80] sm:$0xff]
    %v6171 = vld [vmem:[%s8 + $0x88] sm:$0xff]
    %v6172 = vld [vmem:[%s8 + $0x90] sm:$0xff]
    %v6173 = vld [vmem:[%s8 + $0x98] sm:$0xff]
    %v6174 = vld [vmem:[%s9] sm:$0xff]
    %v6175 = vld [vmem:[%s9 + $0x8] sm:$0xff]
    %v6176 = vld [vmem:[%s9 + $0x10] sm:$0xff]
    %v6177 = vld [vmem:[%s9 + $0x18] sm:$0xff]
    %v6178 = vld [vmem:[%s9 + $0x20] sm:$0xff]
    %v6179 = vld [vmem:[%s9 + $0x28] sm:$0xff]
    %v6180 = vld [vmem:[%s9 + $0x30] sm:$0xff]
    %v6181 = vld [vmem:[%s9 + $0x38] sm:$0xff]
    %v6182 = vld [vmem:[%s9 + $0x40] sm:$0xff]
    %v6183 = vld [vmem:[%s9 + $0x48] sm:$0xff]
    %v6184 = vld [vmem:[%s9 + $0x50] sm:$0xff]
    %v6185 = vld [vmem:[%s9 + $0x58] sm:$0xff]
    %v6186 = vld [vmem:[%s9 + $0x60] sm:$0xff]
    %v6187 = vld [vmem:[%s9 + $0x68] sm:$0xff]
    %v6188 = vld [vmem:[%s9 + $0x70] sm:$0xff]
    %v6189 = vld [vmem:[%s9 + $0x78] sm:$0xff]
    %v6190 = vld [vmem:[%s10] sm:$0x3]
    %6191 = vmatpush.msra.mxu0 %v6148
    %6192 = vmatpush.msra.mxu0 %v6146
    %6193 = vmatpush.msra.mxu0 %v6144
    %6194 = vmatpush.msra.mxu0 %v6142
    %6195 = vmatpush.msra.mxu0 %v6140
    %6196 = vmatpush.msra.mxu0 %v6138
    %6197 = vmatpush.msra.mxu0 %v6136
    %6198 = vmatpush.msra.mxu0 %v6134
    %6199 = vmatpush.msra.mxu0 %v5628
    %6200 = vmatpush.msra.mxu0 %v5626
    %6201 = vmatpush.msra.mxu0 %v5624
    %6202 = vmatpush.msra.mxu0 %v5622
    %6203 = vmatpush.msra.mxu0 %v5620
    %6204 = vmatpush.msra.mxu0 %v5618
    %6205 = vmatpush.msra.mxu0 %v5616
    %6206 = vmatpush.msra.mxu0 %v5614
    %6207 = vmatmul.f32.gmra.mxu0 %v6190
    %v6208 = vpop.f32.mrf.mxu0
    %v6209 = vadd.f32 0.0, %v6208
    %6210 = vdwg.mxu0
    %6211 = vmatpush.msra.mxu0 %v6149
    %6212 = vmatpush.msra.mxu0 %v6147
    %6213 = vmatpush.msra.mxu0 %v6145
    %6214 = vmatpush.msra.mxu0 %v6143
    %6215 = vmatpush.msra.mxu0 %v6141
    %6216 = vmatpush.msra.mxu0 %v6139
    %6217 = vmatpush.msra.mxu0 %v6137
    %6218 = vmatpush.msra.mxu0 %v6135
    %6219 = vmatpush.msra.mxu0 %v5629
    %6220 = vmatpush.msra.mxu0 %v5627
    %6221 = vmatpush.msra.mxu0 %v5625
    %6222 = vmatpush.msra.mxu0 %v5623
    %6223 = vmatpush.msra.mxu0 %v5621
    %6224 = vmatpush.msra.mxu0 %v5619
    %6225 = vmatpush.msra.mxu0 %v5617
    %6226 = vmatpush.msra.mxu0 %v5615
    %6227 = vmatmul.f32.gmra.mxu0 %v6190
    %v6228 = vpop.f32.mrf.mxu0
    %v6229 = vadd.f32 0.0, %v6228
    %6230 = vdwg.mxu0
    %v6231 = vmul.f32 %v6209, 0.1
    %v6232 = vmul.f32 %v6229, 0.1
    %v6233 = vmul.f32 %v6231, %v6231
    %v6234 = vmul.f32 %v6232, %v6232
    %v6236 = vsel %vm1354, %v6234, 0
    %6238 = vmatpush.msra.mxu0 %v6169
    %6239 = vmatpush.msra.mxu0 %v6168
    %6240 = vmatpush.msra.mxu0 %v6167
    %6241 = vmatpush.msra.mxu0 %v6166
    %6242 = vmatpush.msra.mxu0 %v6165
    %6243 = vmatpush.msra.mxu0 %v6164
    %6244 = vmatpush.msra.mxu0 %v6163
    %6245 = vmatpush.msra.mxu0 %v6162
    %6246 = vmatpush.msra.mxu0 %v6161
    %6247 = vmatpush.msra.mxu0 %v6160
    %6248 = vmatpush.msra.mxu0 %v6159
    %6249 = vmatpush.msra.mxu0 %v6158
    %6250 = vmatpush.msra.mxu0 %v6157
    %6251 = vmatpush.msra.mxu0 %v6156
    %6252 = vmatpush.msra.mxu0 %v6155
    %6253 = vmatpush.msra.mxu0 %v6154
    %6254 = vmatmul.f32.gmra.mxu0 %v6233
    %v6255 = vpop.f32.mrf.mxu0
    %v6256 = vadd.f32 0.0, %v6255
    %6257 = vdwg.mxu0
    %6258 = vmatpush.msra.mxu0 0.0
    %6259 = vmatpush.msra.mxu0 0.0
    %6260 = vmatpush.msra.mxu0 0.0
    %6261 = vmatpush.msra.mxu0 0.0
    %6262 = vmatpush.msra.mxu0 0.0
    %6263 = vmatpush.msra.mxu0 0.0
    %6264 = vmatpush.msra.mxu0 0.0
    %6265 = vmatpush.msra.mxu0 0.0
    %6266 = vmatpush.msra.mxu0 0.0
    %6267 = vmatpush.msra.mxu0 0.0
    %6268 = vmatpush.msra.mxu0 0.0
    %6269 = vmatpush.msra.mxu0 0.0
    %6270 = vmatpush.msra.mxu0 %v6173
    %6271 = vmatpush.msra.mxu0 %v6172
    %6272 = vmatpush.msra.mxu0 %v6171
    %6273 = vmatpush.msra.mxu0 %v6170
    %6274 = vmatmul.f32.gmra.mxu0 %v6236
    %v6275 = vpop.f32.mrf.mxu0
    %v6276 = vadd.f32 %v6256, %v6275
    %6277 = vdwg.mxu0
    %v6278 = vadd.f32 %v6276, 1.0
    %v6279 = vrcp.pop %v6278
    %v6280 = vmul.f32 %v6278, %v6279
    %v6281 = vsub.f32 1.0, %v6280
    %v6282 = vmul.f32 %v6279, %v6281
    %v6283 = vadd.f32 %v6279, %v6282
    %vm6284 = vweird.f32 %v6278
    %vm6285 = vweird.f32 %v6279
    %vm6286 = vmor %vm6284, %vm6285
    %v6287 = vsel %vm6286, %v6279, %v6283
    %v6288 = vand.u32 2147483647, %v6278
    %vm6289 = vcmp.eq.f32.partialorder %v6288, 8.507059e+37
    %v6290 = vand.u32 %v6278, 2147483648
    %v6291 = vor.u32 1.1754944e-38, %v6290
    %v6292 = vsel %vm6289, %v6291, %v6287
    %v6293 = vmul.f32 %v6276, %v6292
    %v6294 = vadd.f32 %v6276, 1e-08
    %v6295 = vrsqrt.pop %v6294
    %v6296 = vmul.f32 %v6295, %v6294
    %v6297 = vmul.f32 %v6296, %v6295
    %v6298 = vmul.f32 0.5, %v6297
    %v6299 = vsub.f32 1.5, %v6298
    %v6300 = vmul.f32 %v6295, %v6299
    %v6301 = vmul.f32 %v6294, %v6300
    %vm6302 = vcmp.eq.f32.partialorder %v6294, inf
    %v6303 = vsel %vm6302, %v6294, %v6301
    %vm6304 = vcmp.eq.f32.partialorder %v6294, 0.0
    %v6305 = vand.u32 %v6294, 2147483648
    %v6306 = vsel %vm6304, %v6305, %v6303
    %v6307 = vrcp.pop %v6306
    %v6308 = vmul.f32 %v6306, %v6307
    %v6309 = vsub.f32 1.0, %v6308
    %v6310 = vmul.f32 %v6307, %v6309
    %v6311 = vadd.f32 %v6307, %v6310
    %vm6312 = vweird.f32 %v6306
    %vm6313 = vweird.f32 %v6307
    %vm6314 = vmor %vm6312, %vm6313
    %v6315 = vsel %vm6314, %v6307, %v6311
    %v6316 = vand.u32 2147483647, %v6306
    %vm6317 = vcmp.eq.f32.partialorder %v6316, 8.507059e+37
    %v6318 = vand.u32 %v6306, 2147483648
    %v6319 = vor.u32 1.1754944e-38, %v6318
    %v6320 = vsel %vm6317, %v6319, %v6315
    %v6321 = vmul.f32 %v6293, %v6320
    %vm6322 = vcmask 80896
    %v6324 = vsel %vm6322, %v6321, 0
    %vm6326 = vcmask 1041408
    %v6328 = vsel %vm6326, %v6152, 0
    %v6331 = vsel %vm6326, %v6153, 0
    %6333 = vmatpush.msra.mxu0 0.0
    %6334 = vmatpush.msra.mxu0 0.0
    %6335 = vmatpush.msra.mxu0 0.0
    %6336 = vmatpush.msra.mxu0 0.0
    %6337 = vmatpush.msra.mxu0 0.0
    %6338 = vmatpush.msra.mxu0 0.0
    %6339 = vmatpush.msra.mxu0 0.0
    %6340 = vmatpush.msra.mxu0 0.0
    %6341 = vmatpush.msra.mxu0 0.0
    %6342 = vmatpush.msra.mxu0 0.0
    %6343 = vmatpush.msra.mxu0 0.0
    %6344 = vmatpush.msra.mxu0 0.0
    %6345 = vmatpush.msra.mxu0 0.0
    %6346 = vmatpush.msra.mxu0 0.0
    %6347 = vmatpush.msra.mxu0 %v6328
    %6348 = vmatpush.msra.mxu0 %v6150
    %6349 = vmatmul.f32.gmra.mxu0 %v6324
    %v6350 = vpop.f32.mrf.mxu0
    %v6351 = vadd.f32 0.0, %v6350
    %6352 = vdwg.mxu0
    %6353 = vmatpush.msra.mxu0 0.0
    %6354 = vmatpush.msra.mxu0 0.0
    %6355 = vmatpush.msra.mxu0 0.0
    %6356 = vmatpush.msra.mxu0 0.0
    %6357 = vmatpush.msra.mxu0 0.0
    %6358 = vmatpush.msra.mxu0 0.0
    %6359 = vmatpush.msra.mxu0 0.0
    %6360 = vmatpush.msra.mxu0 0.0
    %6361 = vmatpush.msra.mxu0 0.0
    %6362 = vmatpush.msra.mxu0 0.0
    %6363 = vmatpush.msra.mxu0 0.0
    %6364 = vmatpush.msra.mxu0 0.0
    %6365 = vmatpush.msra.mxu0 0.0
    %6366 = vmatpush.msra.mxu0 0.0
    %6367 = vmatpush.msra.mxu0 %v6331
    %6368 = vmatpush.msra.mxu0 %v6151
    %6369 = vmatmul.f32.gmra.mxu0 %v6324
    %v6370 = vpop.f32.mrf.mxu0
    %v6371 = vadd.f32 0.0, %v6370
    %6372 = vdwg.mxu0
    %v6373 = vmul.f32 %v6231, %v6351
    %v6374 = vmul.f32 %v6232, %v6371
    %vm6375 = vcmask 15360
    %v6377 = vsel %vm6375, %v6174, 0
    %v6380 = vsel %vm6375, %v6175, 0
    %v6383 = vsel %vm6375, %v6176, 0
    %v6386 = vsel %vm6375, %v6177, 0
    %v6389 = vsel %vm6375, %v6178, 0
    %v6392 = vsel %vm6375, %v6179, 0
    %v6395 = vsel %vm6375, %v6180, 0
    %v6398 = vsel %vm6375, %v6181, 0
    %v6401 = vsel %vm6375, %v6182, 0
    %v6404 = vsel %vm6375, %v6183, 0
    %v6407 = vsel %vm6375, %v6184, 0
    %v6410 = vsel %vm6375, %v6185, 0
    %v6413 = vsel %vm6375, %v6186, 0
    %v6416 = vsel %vm6375, %v6187, 0
    %v6419 = vsel %vm6375, %v6188, 0
    %v6422 = vsel %vm6375, %v6189, 0
    %v6425 = vsel %vm6326, %v6373, 0
    %v6428 = vsel %vm6326, %v6374, 0
    %6430 = vmatpush.msra.mxu0 0.0
    %6431 = vmatpush.msra.mxu0 0.0
    %6432 = vmatpush.msra.mxu0 0.0
    %6433 = vmatpush.msra.mxu0 0.0
    %6434 = vmatpush.msra.mxu0 0.0
    %6435 = vmatpush.msra.mxu0 0.0
    %6436 = vmatpush.msra.mxu0 0.0
    %6437 = vmatpush.msra.mxu0 0.0
    %6438 = vmatpush.msra.mxu0 0.0
    %6439 = vmatpush.msra.mxu0 0.0
    %6440 = vmatpush.msra.mxu0 0.0
    %6441 = vmatpush.msra.mxu0 0.0
    %6442 = vmatpush.msra.mxu0 0.0
    %6443 = vmatpush.msra.mxu0 0.0
    %6444 = vmatpush.msra.mxu0 0.0
    %6445 = vmatpush.msra.mxu0 %v6425
    %6446 = vmatmul.f32.gmra.mxu0 %v6377
    %v6447 = vpop.f32.mrf.mxu0
    %v6448 = vadd.f32 0.0, %v6447
    %6449 = vmatmul.f32.gmra.mxu0 %v6380
    %v6450 = vpop.f32.mrf.mxu0
    %v6451 = vadd.f32 0.0, %v6450
    %6452 = vmatmul.f32.gmra.mxu0 %v6383
    %v6453 = vpop.f32.mrf.mxu0
    %v6454 = vadd.f32 0.0, %v6453
    %6455 = vmatmul.f32.gmra.mxu0 %v6386
    %v6456 = vpop.f32.mrf.mxu0
    %v6457 = vadd.f32 0.0, %v6456
    %6458 = vmatmul.f32.gmra.mxu0 %v6389
    %v6459 = vpop.f32.mrf.mxu0
    %v6460 = vadd.f32 0.0, %v6459
    %6461 = vmatmul.f32.gmra.mxu0 %v6392
    %v6462 = vpop.f32.mrf.mxu0
    %v6463 = vadd.f32 0.0, %v6462
    %6464 = vmatmul.f32.gmra.mxu0 %v6395
    %v6465 = vpop.f32.mrf.mxu0
    %v6466 = vadd.f32 0.0, %v6465
    %6467 = vmatmul.f32.gmra.mxu0 %v6398
    %v6468 = vpop.f32.mrf.mxu0
    %v6469 = vadd.f32 0.0, %v6468
    %6470 = vmatmul.f32.gmra.mxu0 %v6401
    %v6471 = vpop.f32.mrf.mxu0
    %v6472 = vadd.f32 0.0, %v6471
    %6473 = vmatmul.f32.gmra.mxu0 %v6404
    %v6474 = vpop.f32.mrf.mxu0
    %v6475 = vadd.f32 0.0, %v6474
    %6476 = vmatmul.f32.gmra.mxu0 %v6407
    %v6477 = vpop.f32.mrf.mxu0
    %v6478 = vadd.f32 0.0, %v6477
    %6479 = vmatmul.f32.gmra.mxu0 %v6410
    %v6480 = vpop.f32.mrf.mxu0
    %v6481 = vadd.f32 0.0, %v6480
    %6482 = vmatmul.f32.gmra.mxu0 %v6413
    %v6483 = vpop.f32.mrf.mxu0
    %v6484 = vadd.f32 0.0, %v6483
    %6485 = vmatmul.f32.gmra.mxu0 %v6416
    %v6486 = vpop.f32.mrf.mxu0
    %v6487 = vadd.f32 0.0, %v6486
    %6488 = vmatmul.f32.gmra.mxu0 %v6419
    %v6489 = vpop.f32.mrf.mxu0
    %v6490 = vadd.f32 0.0, %v6489
    %6491 = vmatmul.f32.gmra.mxu0 %v6422
    %v6492 = vpop.f32.mrf.mxu0
    %v6493 = vadd.f32 0.0, %v6492
    %6494 = vdwg.mxu0
    %6495 = vmatpush.msra.mxu0 0.0
    %6496 = vmatpush.msra.mxu0 0.0
    %6497 = vmatpush.msra.mxu0 0.0
    %6498 = vmatpush.msra.mxu0 0.0
    %6499 = vmatpush.msra.mxu0 0.0
    %6500 = vmatpush.msra.mxu0 0.0
    %6501 = vmatpush.msra.mxu0 0.0
    %6502 = vmatpush.msra.mxu0 0.0
    %6503 = vmatpush.msra.mxu0 0.0
    %6504 = vmatpush.msra.mxu0 0.0
    %6505 = vmatpush.msra.mxu0 0.0
    %6506 = vmatpush.msra.mxu0 0.0
    %6507 = vmatpush.msra.mxu0 0.0
    %6508 = vmatpush.msra.mxu0 0.0
    %6509 = vmatpush.msra.mxu0 0.0
    %6510 = vmatpush.msra.mxu0 %v6428
    %6511 = vmatmul.f32.gmra.mxu0 %v6377
    %v6512 = vpop.f32.mrf.mxu0
    %v6513 = vadd.f32 0.0, %v6512
    %6514 = vmatmul.f32.gmra.mxu0 %v6380
    %v6515 = vpop.f32.mrf.mxu0
    %v6516 = vadd.f32 0.0, %v6515
    %6517 = vmatmul.f32.gmra.mxu0 %v6383
    %v6518 = vpop.f32.mrf.mxu0
    %v6519 = vadd.f32 0.0, %v6518
    %6520 = vmatmul.f32.gmra.mxu0 %v6386
    %v6521 = vpop.f32.mrf.mxu0
    %v6522 = vadd.f32 0.0, %v6521
    %6523 = vmatmul.f32.gmra.mxu0 %v6389
    %v6524 = vpop.f32.mrf.mxu0
    %v6525 = vadd.f32 0.0, %v6524
    %6526 = vmatmul.f32.gmra.mxu0 %v6392
    %v6527 = vpop.f32.mrf.mxu0
    %v6528 = vadd.f32 0.0, %v6527
    %6529 = vmatmul.f32.gmra.mxu0 %v6395
    %v6530 = vpop.f32.mrf.mxu0
    %v6531 = vadd.f32 0.0, %v6530
    %6532 = vmatmul.f32.gmra.mxu0 %v6398
    %v6533 = vpop.f32.mrf.mxu0
    %v6534 = vadd.f32 0.0, %v6533
    %6535 = vmatmul.f32.gmra.mxu0 %v6401
    %v6536 = vpop.f32.mrf.mxu0
    %v6537 = vadd.f32 0.0, %v6536
    %6538 = vmatmul.f32.gmra.mxu0 %v6404
    %v6539 = vpop.f32.mrf.mxu0
    %v6540 = vadd.f32 0.0, %v6539
    %6541 = vmatmul.f32.gmra.mxu0 %v6407
    %v6542 = vpop.f32.mrf.mxu0
    %v6543 = vadd.f32 0.0, %v6542
    %6544 = vmatmul.f32.gmra.mxu0 %v6410
    %v6545 = vpop.f32.mrf.mxu0
    %v6546 = vadd.f32 0.0, %v6545
    %6547 = vmatmul.f32.gmra.mxu0 %v6413
    %v6548 = vpop.f32.mrf.mxu0
    %v6549 = vadd.f32 0.0, %v6548
    %6550 = vmatmul.f32.gmra.mxu0 %v6416
    %v6551 = vpop.f32.mrf.mxu0
    %v6552 = vadd.f32 0.0, %v6551
    %6553 = vmatmul.f32.gmra.mxu0 %v6419
    %v6554 = vpop.f32.mrf.mxu0
    %v6555 = vadd.f32 0.0, %v6554
    %6556 = vmatmul.f32.gmra.mxu0 %v6422
    %v6557 = vpop.f32.mrf.mxu0
    %v6558 = vadd.f32 0.0, %v6557
    %6559 = vdwg.mxu0
    %v6560 = vmul.f32 %v5614, %v6448
    %v6561 = vmul.f32 %v5615, %v6513
    %v6562 = vmul.f32 %v5616, %v6451
    %v6563 = vmul.f32 %v5617, %v6516
    %v6564 = vmul.f32 %v5618, %v6454
    %v6565 = vmul.f32 %v5619, %v6519
    %v6566 = vmul.f32 %v5620, %v6457
    %v6567 = vmul.f32 %v5621, %v6522
    %v6568 = vmul.f32 %v5622, %v6460
    %v6569 = vmul.f32 %v5623, %v6525
    %v6570 = vmul.f32 %v5624, %v6463
    %v6571 = vmul.f32 %v5625, %v6528
    %v6572 = vmul.f32 %v5626, %v6466
    %v6573 = vmul.f32 %v5627, %v6531
    %v6574 = vmul.f32 %v5628, %v6469
    %v6575 = vmul.f32 %v5629, %v6534
    %v6576 = vmul.f32 %v6134, %v6472
    %v6577 = vmul.f32 %v6135, %v6537
    %v6578 = vmul.f32 %v6136, %v6475
    %v6579 = vmul.f32 %v6137, %v6540
    %v6580 = vmul.f32 %v6138, %v6478
    %v6581 = vmul.f32 %v6139, %v6543
    %v6582 = vmul.f32 %v6140, %v6481
    %v6583 = vmul.f32 %v6141, %v6546
    %v6584 = vmul.f32 %v6142, %v6484
    %v6585 = vmul.f32 %v6143, %v6549
    %v6586 = vmul.f32 %v6144, %v6487
    %v6587 = vmul.f32 %v6145, %v6552
    %v6588 = vmul.f32 %v6146, %v6490
    %v6589 = vmul.f32 %v6147, %v6555
    %v6590 = vmul.f32 %v6148, %v6493
    %v6591 = vmul.f32 %v6149, %v6558
    %v6593 = vsel %vm1354, %v6561, 0
    %v6596 = vsel %vm1354, %v6563, 0
    %v6599 = vsel %vm1354, %v6565, 0
    %v6602 = vsel %vm1354, %v6567, 0
    %v6605 = vsel %vm1354, %v6569, 0
    %v6608 = vsel %vm1354, %v6571, 0
    %v6611 = vsel %vm1354, %v6573, 0
    %v6614 = vsel %vm1354, %v6575, 0
    %v6617 = vsel %vm1354, %v6577, 0
    %v6620 = vsel %vm1354, %v6579, 0
    %v6623 = vsel %vm1354, %v6581, 0
    %v6626 = vsel %vm1354, %v6583, 0
    %v6629 = vsel %vm1354, %v6585, 0
    %v6632 = vsel %vm1354, %v6587, 0
    %v6635 = vsel %vm1354, %v6589, 0
    %v6638 = vsel %vm1354, %v6591, 0
    %6640 = vmatpush.msra.mxu0 %v6169
    %6641 = vmatpush.msra.mxu0 %v6168
    %6642 = vmatpush.msra.mxu0 %v6167
    %6643 = vmatpush.msra.mxu0 %v6166
    %6644 = vmatpush.msra.mxu0 %v6165
    %6645 = vmatpush.msra.mxu0 %v6164
    %6646 = vmatpush.msra.mxu0 %v6163
    %6647 = vmatpush.msra.mxu0 %v6162
    %6648 = vmatpush.msra.mxu0 %v6161
    %6649 = vmatpush.msra.mxu0 %v6160
    %6650 = vmatpush.msra.mxu0 %v6159
    %6651 = vmatpush.msra.mxu0 %v6158
    %6652 = vmatpush.msra.mxu0 %v6157
    %6653 = vmatpush.msra.mxu0 %v6156
    %6654 = vmatpush.msra.mxu0 %v6155
    %6655 = vmatpush.msra.mxu0 %v6154
    %6656 = vmatmul.f32.gmra.mxu0 %v6560
    %v6657 = vpop.f32.mrf.mxu0
    %v6658 = vadd.f32 0.0, %v6657
    %6659 = vmatmul.f32.gmra.mxu0 %v6562
    %v6660 = vpop.f32.mrf.mxu0
    %v6661 = vadd.f32 0.0, %v6660
    %6662 = vmatmul.f32.gmra.mxu0 %v6564
    %v6663 = vpop.f32.mrf.mxu0
    %v6664 = vadd.f32 0.0, %v6663
    %6665 = vmatmul.f32.gmra.mxu0 %v6566
    %v6666 = vpop.f32.mrf.mxu0
    %v6667 = vadd.f32 0.0, %v6666
    %6668 = vmatmul.f32.gmra.mxu0 %v6568
    %v6669 = vpop.f32.mrf.mxu0
    %v6670 = vadd.f32 0.0, %v6669
    %6671 = vmatmul.f32.gmra.mxu0 %v6570
    %v6672 = vpop.f32.mrf.mxu0
    %v6673 = vadd.f32 0.0, %v6672
    %6674 = vmatmul.f32.gmra.mxu0 %v6572
    %v6675 = vpop.f32.mrf.mxu0
    %v6676 = vadd.f32 0.0, %v6675
    %6677 = vmatmul.f32.gmra.mxu0 %v6574
    %v6678 = vpop.f32.mrf.mxu0
    %v6679 = vadd.f32 0.0, %v6678
    %6680 = vmatmul.f32.gmra.mxu0 %v6576
    %v6681 = vpop.f32.mrf.mxu0
    %v6682 = vadd.f32 0.0, %v6681
    %6683 = vmatmul.f32.gmra.mxu0 %v6578
    %v6684 = vpop.f32.mrf.mxu0
    %v6685 = vadd.f32 0.0, %v6684
    %6686 = vmatmul.f32.gmra.mxu0 %v6580
    %v6687 = vpop.f32.mrf.mxu0
    %v6688 = vadd.f32 0.0, %v6687
    %6689 = vmatmul.f32.gmra.mxu0 %v6582
    %v6690 = vpop.f32.mrf.mxu0
    %v6691 = vadd.f32 0.0, %v6690
    %6692 = vmatmul.f32.gmra.mxu0 %v6584
    %v6693 = vpop.f32.mrf.mxu0
    %v6694 = vadd.f32 0.0, %v6693
    %6695 = vmatmul.f32.gmra.mxu0 %v6586
    %v6696 = vpop.f32.mrf.mxu0
    %v6697 = vadd.f32 0.0, %v6696
    %6698 = vmatmul.f32.gmra.mxu0 %v6588
    %v6699 = vpop.f32.mrf.mxu0
    %v6700 = vadd.f32 0.0, %v6699
    %6701 = vmatmul.f32.gmra.mxu0 %v6590
    %v6702 = vpop.f32.mrf.mxu0
    %v6703 = vadd.f32 0.0, %v6702
    %6704 = vdwg.mxu0
    %6705 = vmatpush.msra.mxu0 0.0
    %6706 = vmatpush.msra.mxu0 0.0
    %6707 = vmatpush.msra.mxu0 0.0
    %6708 = vmatpush.msra.mxu0 0.0
    %6709 = vmatpush.msra.mxu0 0.0
    %6710 = vmatpush.msra.mxu0 0.0
    %6711 = vmatpush.msra.mxu0 0.0
    %6712 = vmatpush.msra.mxu0 0.0
    %6713 = vmatpush.msra.mxu0 0.0
    %6714 = vmatpush.msra.mxu0 0.0
    %6715 = vmatpush.msra.mxu0 0.0
    %6716 = vmatpush.msra.mxu0 0.0
    %6717 = vmatpush.msra.mxu0 %v6173
    %6718 = vmatpush.msra.mxu0 %v6172
    %6719 = vmatpush.msra.mxu0 %v6171
    %6720 = vmatpush.msra.mxu0 %v6170
    %6721 = vmatmul.f32.gmra.mxu0 %v6593
    %v6722 = vpop.f32.mrf.mxu0
    %v6723 = vadd.f32 %v6658, %v6722
    %6724 = vmatmul.f32.gmra.mxu0 %v6596
    %v6725 = vpop.f32.mrf.mxu0
    %v6726 = vadd.f32 %v6661, %v6725
    %6727 = vmatmul.f32.gmra.mxu0 %v6599
    %v6728 = vpop.f32.mrf.mxu0
    %v6729 = vadd.f32 %v6664, %v6728
    %6730 = vmatmul.f32.gmra.mxu0 %v6602
    %v6731 = vpop.f32.mrf.mxu0
    %v6732 = vadd.f32 %v6667, %v6731
    %6733 = vmatmul.f32.gmra.mxu0 %v6605
    %v6734 = vpop.f32.mrf.mxu0
    %v6735 = vadd.f32 %v6670, %v6734
    %6736 = vmatmul.f32.gmra.mxu0 %v6608
    %v6737 = vpop.f32.mrf.mxu0
    %v6738 = vadd.f32 %v6673, %v6737
    %6739 = vmatmul.f32.gmra.mxu0 %v6611
    %v6740 = vpop.f32.mrf.mxu0
    %v6741 = vadd.f32 %v6676, %v6740
    %6742 = vmatmul.f32.gmra.mxu0 %v6614
    %v6743 = vpop.f32.mrf.mxu0
    %v6744 = vadd.f32 %v6679, %v6743
    %6745 = vmatmul.f32.gmra.mxu0 %v6617
    %v6746 = vpop.f32.mrf.mxu0
    %v6747 = vadd.f32 %v6682, %v6746
    %6748 = vmatmul.f32.gmra.mxu0 %v6620
    %v6749 = vpop.f32.mrf.mxu0
    %v6750 = vadd.f32 %v6685, %v6749
    %6751 = vmatmul.f32.gmra.mxu0 %v6623
    %v6752 = vpop.f32.mrf.mxu0
    %v6753 = vadd.f32 %v6688, %v6752
    %6754 = vmatmul.f32.gmra.mxu0 %v6626
    %v6755 = vpop.f32.mrf.mxu0
    %v6756 = vadd.f32 %v6691, %v6755
    %6757 = vmatmul.f32.gmra.mxu0 %v6629
    %v6758 = vpop.f32.mrf.mxu0
    %v6759 = vadd.f32 %v6694, %v6758
    %6760 = vmatmul.f32.gmra.mxu0 %v6632
    %v6761 = vpop.f32.mrf.mxu0
    %v6762 = vadd.f32 %v6697, %v6761
    %6763 = vmatmul.f32.gmra.mxu0 %v6635
    %v6764 = vpop.f32.mrf.mxu0
    %v6765 = vadd.f32 %v6700, %v6764
    %6766 = vmatmul.f32.gmra.mxu0 %v6638
    %v6767 = vpop.f32.mrf.mxu0
    %v6768 = vadd.f32 %v6703, %v6767
    %6769 = vdwg.mxu0
    %v6770 = vsel %vm6322, %v6723, -inf
    %6771 = vmax.xlane.f32.xlu0 %v6770
    %v6772 = vpop.xlane.xlu0 %6771
    %v6773 = vsel %vm6322, %v6726, -inf
    %6774 = vmax.xlane.f32.xlu0 %v6773
    %v6775 = vpop.xlane.xlu0 %6774
    %v6776 = vsel %vm6322, %v6729, -inf
    %6777 = vmax.xlane.f32.xlu0 %v6776
    %v6778 = vpop.xlane.xlu0 %6777
    %v6779 = vsel %vm6322, %v6732, -inf
    %6780 = vmax.xlane.f32.xlu0 %v6779
    %v6781 = vpop.xlane.xlu0 %6780
    %v6782 = vsel %vm6322, %v6735, -inf
    %6783 = vmax.xlane.f32.xlu0 %v6782
    %v6784 = vpop.xlane.xlu0 %6783
    %v6785 = vsel %vm6322, %v6738, -inf
    %6786 = vmax.xlane.f32.xlu0 %v6785
    %v6787 = vpop.xlane.xlu0 %6786
    %v6788 = vsel %vm6322, %v6741, -inf
    %6789 = vmax.xlane.f32.xlu0 %v6788
    %v6790 = vpop.xlane.xlu0 %6789
    %v6791 = vsel %vm6322, %v6744, -inf
    %6792 = vmax.xlane.f32.xlu0 %v6791
    %v6793 = vpop.xlane.xlu0 %6792
    %v6794 = vsel %vm6322, %v6747, -inf
    %6795 = vmax.xlane.f32.xlu0 %v6794
    %v6796 = vpop.xlane.xlu0 %6795
    %v6797 = vsel %vm6322, %v6750, -inf
    %6798 = vmax.xlane.f32.xlu0 %v6797
    %v6799 = vpop.xlane.xlu0 %6798
    %v6800 = vsel %vm6322, %v6753, -inf
    %6801 = vmax.xlane.f32.xlu0 %v6800
    %v6802 = vpop.xlane.xlu0 %6801
    %v6803 = vsel %vm6322, %v6756, -inf
    %6804 = vmax.xlane.f32.xlu0 %v6803
    %v6805 = vpop.xlane.xlu0 %6804
    %v6806 = vsel %vm6322, %v6759, -inf
    %6807 = vmax.xlane.f32.xlu0 %v6806
    %v6808 = vpop.xlane.xlu0 %6807
    %v6809 = vsel %vm6322, %v6762, -inf
    %6810 = vmax.xlane.f32.xlu0 %v6809
    %v6811 = vpop.xlane.xlu0 %6810
    %v6812 = vsel %vm6322, %v6765, -inf
    %6813 = vmax.xlane.f32.xlu0 %v6812
    %v6814 = vpop.xlane.xlu0 %6813
    %v6815 = vsel %vm6322, %v6768, -inf
    %6816 = vmax.xlane.f32.xlu0 %v6815
    %v6817 = vpop.xlane.xlu0 %6816
    %v6818 = vsub.f32 %v6723, %v6772
    %v6819 = vsub.f32 %v6726, %v6775
    %v6820 = vsub.f32 %v6729, %v6778
    %v6821 = vsub.f32 %v6732, %v6781
    %v6822 = vsub.f32 %v6735, %v6784
    %v6823 = vsub.f32 %v6738, %v6787
    %v6824 = vsub.f32 %v6741, %v6790
    %v6825 = vsub.f32 %v6744, %v6793
    %v6826 = vsub.f32 %v6747, %v6796
    %v6827 = vsub.f32 %v6750, %v6799
    %v6828 = vsub.f32 %v6753, %v6802
    %v6829 = vsub.f32 %v6756, %v6805
    %v6830 = vsub.f32 %v6759, %v6808
    %v6831 = vsub.f32 %v6762, %v6811
    %v6832 = vsub.f32 %v6765, %v6814
    %v6833 = vsub.f32 %v6768, %v6817
    %v6834 = vmul.f32 %v6818, 1.442695
    %v6835 = vpow.pop %v6834
    %v6836 = vmul.f32 %v6819, 1.442695
    %v6837 = vpow.pop %v6836
    %v6838 = vmul.f32 %v6820, 1.442695
    %v6839 = vpow.pop %v6838
    %v6840 = vmul.f32 %v6821, 1.442695
    %v6841 = vpow.pop %v6840
    %v6842 = vmul.f32 %v6822, 1.442695
    %v6843 = vpow.pop %v6842
    %v6844 = vmul.f32 %v6823, 1.442695
    %v6845 = vpow.pop %v6844
    %v6846 = vmul.f32 %v6824, 1.442695
    %v6847 = vpow.pop %v6846
    %v6848 = vmul.f32 %v6825, 1.442695
    %v6849 = vpow.pop %v6848
    %v6850 = vmul.f32 %v6826, 1.442695
    %v6851 = vpow.pop %v6850
    %v6852 = vmul.f32 %v6827, 1.442695
    %v6853 = vpow.pop %v6852
    %v6854 = vmul.f32 %v6828, 1.442695
    %v6855 = vpow.pop %v6854
    %v6856 = vmul.f32 %v6829, 1.442695
    %v6857 = vpow.pop %v6856
    %v6858 = vmul.f32 %v6830, 1.442695
    %v6859 = vpow.pop %v6858
    %v6860 = vmul.f32 %v6831, 1.442695
    %v6861 = vpow.pop %v6860
    %v6862 = vmul.f32 %v6832, 1.442695
    %v6863 = vpow.pop %v6862
    %v6864 = vmul.f32 %v6833, 1.442695
    %v6865 = vpow.pop %v6864
    %v6866 = vsel %vm6322, %v6835, 0.0
    %6867 = vadd.xlane.f32.xlu0 %v6866
    %v6868 = vpop.xlane.xlu0 %6867
    %v6869 = vsel %vm6322, %v6837, 0.0
    %6870 = vadd.xlane.f32.xlu0 %v6869
    %v6871 = vpop.xlane.xlu0 %6870
    %v6872 = vsel %vm6322, %v6839, 0.0
    %6873 = vadd.xlane.f32.xlu0 %v6872
    %v6874 = vpop.xlane.xlu0 %6873
    %v6875 = vsel %vm6322, %v6841, 0.0
    %6876 = vadd.xlane.f32.xlu0 %v6875
    %v6877 = vpop.xlane.xlu0 %6876
    %v6878 = vsel %vm6322, %v6843, 0.0
    %6879 = vadd.xlane.f32.xlu0 %v6878
    %v6880 = vpop.xlane.xlu0 %6879
    %v6881 = vsel %vm6322, %v6845, 0.0
    %6882 = vadd.xlane.f32.xlu0 %v6881
    %v6883 = vpop.xlane.xlu0 %6882
    %v6884 = vsel %vm6322, %v6847, 0.0
    %6885 = vadd.xlane.f32.xlu0 %v6884
    %v6886 = vpop.xlane.xlu0 %6885
    %v6887 = vsel %vm6322, %v6849, 0.0
    %6888 = vadd.xlane.f32.xlu0 %v6887
    %v6889 = vpop.xlane.xlu0 %6888
    %v6890 = vsel %vm6322, %v6851, 0.0
    %6891 = vadd.xlane.f32.xlu0 %v6890
    %v6892 = vpop.xlane.xlu0 %6891
    %v6893 = vsel %vm6322, %v6853, 0.0
    %6894 = vadd.xlane.f32.xlu0 %v6893
    %v6895 = vpop.xlane.xlu0 %6894
    %v6896 = vsel %vm6322, %v6855, 0.0
    %6897 = vadd.xlane.f32.xlu0 %v6896
    %v6898 = vpop.xlane.xlu0 %6897
    %v6899 = vsel %vm6322, %v6857, 0.0
    %6900 = vadd.xlane.f32.xlu0 %v6899
    %v6901 = vpop.xlane.xlu0 %6900
    %v6902 = vsel %vm6322, %v6859, 0.0
    %6903 = vadd.xlane.f32.xlu0 %v6902
    %v6904 = vpop.xlane.xlu0 %6903
    %v6905 = vsel %vm6322, %v6861, 0.0
    %6906 = vadd.xlane.f32.xlu0 %v6905
    %v6907 = vpop.xlane.xlu0 %6906
    %v6908 = vsel %vm6322, %v6863, 0.0
    %6909 = vadd.xlane.f32.xlu0 %v6908
    %v6910 = vpop.xlane.xlu0 %6909
    %v6911 = vsel %vm6322, %v6865, 0.0
    %6912 = vadd.xlane.f32.xlu0 %v6911
    %v6913 = vpop.xlane.xlu0 %6912
    %v6914 = vrcp.pop %v6868
    %v6915 = vmul.f32 %v6868, %v6914
    %v6916 = vsub.f32 1.0, %v6915
    %v6917 = vmul.f32 %v6914, %v6916
    %v6918 = vadd.f32 %v6914, %v6917
    %vm6919 = vweird.f32 %v6868
    %vm6920 = vweird.f32 %v6914
    %vm6921 = vmor %vm6919, %vm6920
    %v6922 = vsel %vm6921, %v6914, %v6918
    %v6923 = vand.u32 2147483647, %v6868
    %vm6924 = vcmp.eq.f32.partialorder %v6923, 8.507059e+37
    %v6925 = vand.u32 %v6868, 2147483648
    %v6926 = vor.u32 1.1754944e-38, %v6925
    %v6927 = vsel %vm6924, %v6926, %v6922
    %v6928 = vmul.f32 %v6835, %v6927
    %v6929 = vrcp.pop %v6871
    %v6930 = vmul.f32 %v6871, %v6929
    %v6931 = vsub.f32 1.0, %v6930
    %v6932 = vmul.f32 %v6929, %v6931
    %v6933 = vadd.f32 %v6929, %v6932
    %vm6934 = vweird.f32 %v6871
    %vm6935 = vweird.f32 %v6929
    %vm6936 = vmor %vm6934, %vm6935
    %v6937 = vsel %vm6936, %v6929, %v6933
    %v6938 = vand.u32 2147483647, %v6871
    %vm6939 = vcmp.eq.f32.partialorder %v6938, 8.507059e+37
    %v6940 = vand.u32 %v6871, 2147483648
    %v6941 = vor.u32 1.1754944e-38, %v6940
    %v6942 = vsel %vm6939, %v6941, %v6937
    %v6943 = vmul.f32 %v6837, %v6942
    %v6944 = vrcp.pop %v6874
    %v6945 = vmul.f32 %v6874, %v6944
    %v6946 = vsub.f32 1.0, %v6945
    %v6947 = vmul.f32 %v6944, %v6946
    %v6948 = vadd.f32 %v6944, %v6947
    %vm6949 = vweird.f32 %v6874
    %vm6950 = vweird.f32 %v6944
    %vm6951 = vmor %vm6949, %vm6950
    %v6952 = vsel %vm6951, %v6944, %v6948
    %v6953 = vand.u32 2147483647, %v6874
    %vm6954 = vcmp.eq.f32.partialorder %v6953, 8.507059e+37
    %v6955 = vand.u32 %v6874, 2147483648
    %v6956 = vor.u32 1.1754944e-38, %v6955
    %v6957 = vsel %vm6954, %v6956, %v6952
    %v6958 = vmul.f32 %v6839, %v6957
    %v6959 = vrcp.pop %v6877
    %v6960 = vmul.f32 %v6877, %v6959
    %v6961 = vsub.f32 1.0, %v6960
    %v6962 = vmul.f32 %v6959, %v6961
    %v6963 = vadd.f32 %v6959, %v6962
    %vm6964 = vweird.f32 %v6877
    %vm6965 = vweird.f32 %v6959
    %vm6966 = vmor %vm6964, %vm6965
    %v6967 = vsel %vm6966, %v6959, %v6963
    %v6968 = vand.u32 2147483647, %v6877
    %vm6969 = vcmp.eq.f32.partialorder %v6968, 8.507059e+37
    %v6970 = vand.u32 %v6877, 2147483648
    %v6971 = vor.u32 1.1754944e-38, %v6970
    %v6972 = vsel %vm6969, %v6971, %v6967
    %v6973 = vmul.f32 %v6841, %v6972
    %v6974 = vrcp.pop %v6880
    %v6975 = vmul.f32 %v6880, %v6974
    %v6976 = vsub.f32 1.0, %v6975
    %v6977 = vmul.f32 %v6974, %v6976
    %v6978 = vadd.f32 %v6974, %v6977
    %vm6979 = vweird.f32 %v6880
    %vm6980 = vweird.f32 %v6974
    %vm6981 = vmor %vm6979, %vm6980
    %v6982 = vsel %vm6981, %v6974, %v6978
    %v6983 = vand.u32 2147483647, %v6880
    %vm6984 = vcmp.eq.f32.partialorder %v6983, 8.507059e+37
    %v6985 = vand.u32 %v6880, 2147483648
    %v6986 = vor.u32 1.1754944e-38, %v6985
    %v6987 = vsel %vm6984, %v6986, %v6982
    %v6988 = vmul.f32 %v6843, %v6987
    %v6989 = vrcp.pop %v6883
    %v6990 = vmul.f32 %v6883, %v6989
    %v6991 = vsub.f32 1.0, %v6990
    %v6992 = vmul.f32 %v6989, %v6991
    %v6993 = vadd.f32 %v6989, %v6992
    %vm6994 = vweird.f32 %v6883
    %vm6995 = vweird.f32 %v6989
    %vm6996 = vmor %vm6994, %vm6995
    %v6997 = vsel %vm6996, %v6989, %v6993
    %v6998 = vand.u32 2147483647, %v6883
    %vm6999 = vcmp.eq.f32.partialorder %v6998, 8.507059e+37
    %v7000 = vand.u32 %v6883, 2147483648
    %v7001 = vor.u32 1.1754944e-38, %v7000
    %v7002 = vsel %vm6999, %v7001, %v6997
    %v7003 = vmul.f32 %v6845, %v7002
    %v7004 = vrcp.pop %v6886
    %v7005 = vmul.f32 %v6886, %v7004
    %v7006 = vsub.f32 1.0, %v7005
    %v7007 = vmul.f32 %v7004, %v7006
    %v7008 = vadd.f32 %v7004, %v7007
    %vm7009 = vweird.f32 %v6886
    %vm7010 = vweird.f32 %v7004
    %vm7011 = vmor %vm7009, %vm7010
    %v7012 = vsel %vm7011, %v7004, %v7008
    %v7013 = vand.u32 2147483647, %v6886
    %vm7014 = vcmp.eq.f32.partialorder %v7013, 8.507059e+37
    %v7015 = vand.u32 %v6886, 2147483648
    %v7016 = vor.u32 1.1754944e-38, %v7015
    %v7017 = vsel %vm7014, %v7016, %v7012
    %v7018 = vmul.f32 %v6847, %v7017
    %v7019 = vrcp.pop %v6889
    %v7020 = vmul.f32 %v6889, %v7019
    %v7021 = vsub.f32 1.0, %v7020
    %v7022 = vmul.f32 %v7019, %v7021
    %v7023 = vadd.f32 %v7019, %v7022
    %vm7024 = vweird.f32 %v6889
    %vm7025 = vweird.f32 %v7019
    %vm7026 = vmor %vm7024, %vm7025
    %v7027 = vsel %vm7026, %v7019, %v7023
    %v7028 = vand.u32 2147483647, %v6889
    %vm7029 = vcmp.eq.f32.partialorder %v7028, 8.507059e+37
    %v7030 = vand.u32 %v6889, 2147483648
    %v7031 = vor.u32 1.1754944e-38, %v7030
    %v7032 = vsel %vm7029, %v7031, %v7027
    %v7033 = vmul.f32 %v6849, %v7032
    %v7034 = vrcp.pop %v6892
    %v7035 = vmul.f32 %v6892, %v7034
    %v7036 = vsub.f32 1.0, %v7035
    %v7037 = vmul.f32 %v7034, %v7036
    %v7038 = vadd.f32 %v7034, %v7037
    %vm7039 = vweird.f32 %v6892
    %vm7040 = vweird.f32 %v7034
    %vm7041 = vmor %vm7039, %vm7040
    %v7042 = vsel %vm7041, %v7034, %v7038
    %v7043 = vand.u32 2147483647, %v6892
    %vm7044 = vcmp.eq.f32.partialorder %v7043, 8.507059e+37
    %v7045 = vand.u32 %v6892, 2147483648
    %v7046 = vor.u32 1.1754944e-38, %v7045
    %v7047 = vsel %vm7044, %v7046, %v7042
    %v7048 = vmul.f32 %v6851, %v7047
    %v7049 = vrcp.pop %v6895
    %v7050 = vmul.f32 %v6895, %v7049
    %v7051 = vsub.f32 1.0, %v7050
    %v7052 = vmul.f32 %v7049, %v7051
    %v7053 = vadd.f32 %v7049, %v7052
    %vm7054 = vweird.f32 %v6895
    %vm7055 = vweird.f32 %v7049
    %vm7056 = vmor %vm7054, %vm7055
    %v7057 = vsel %vm7056, %v7049, %v7053
    %v7058 = vand.u32 2147483647, %v6895
    %vm7059 = vcmp.eq.f32.partialorder %v7058, 8.507059e+37
    %v7060 = vand.u32 %v6895, 2147483648
    %v7061 = vor.u32 1.1754944e-38, %v7060
    %v7062 = vsel %vm7059, %v7061, %v7057
    %v7063 = vmul.f32 %v6853, %v7062
    %v7064 = vrcp.pop %v6898
    %v7065 = vmul.f32 %v6898, %v7064
    %v7066 = vsub.f32 1.0, %v7065
    %v7067 = vmul.f32 %v7064, %v7066
    %v7068 = vadd.f32 %v7064, %v7067
    %vm7069 = vweird.f32 %v6898
    %vm7070 = vweird.f32 %v7064
    %vm7071 = vmor %vm7069, %vm7070
    %v7072 = vsel %vm7071, %v7064, %v7068
    %v7073 = vand.u32 2147483647, %v6898
    %vm7074 = vcmp.eq.f32.partialorder %v7073, 8.507059e+37
    %v7075 = vand.u32 %v6898, 2147483648
    %v7076 = vor.u32 1.1754944e-38, %v7075
    %v7077 = vsel %vm7074, %v7076, %v7072
    %v7078 = vmul.f32 %v6855, %v7077
    %v7079 = vrcp.pop %v6901
    %v7080 = vmul.f32 %v6901, %v7079
    %v7081 = vsub.f32 1.0, %v7080
    %v7082 = vmul.f32 %v7079, %v7081
    %v7083 = vadd.f32 %v7079, %v7082
    %vm7084 = vweird.f32 %v6901
    %vm7085 = vweird.f32 %v7079
    %vm7086 = vmor %vm7084, %vm7085
    %v7087 = vsel %vm7086, %v7079, %v7083
    %v7088 = vand.u32 2147483647, %v6901
    %vm7089 = vcmp.eq.f32.partialorder %v7088, 8.507059e+37
    %v7090 = vand.u32 %v6901, 2147483648
    %v7091 = vor.u32 1.1754944e-38, %v7090
    %v7092 = vsel %vm7089, %v7091, %v7087
    %v7093 = vmul.f32 %v6857, %v7092
    %v7094 = vrcp.pop %v6904
    %v7095 = vmul.f32 %v6904, %v7094
    %v7096 = vsub.f32 1.0, %v7095
    %v7097 = vmul.f32 %v7094, %v7096
    %v7098 = vadd.f32 %v7094, %v7097
    %vm7099 = vweird.f32 %v6904
    %vm7100 = vweird.f32 %v7094
    %vm7101 = vmor %vm7099, %vm7100
    %v7102 = vsel %vm7101, %v7094, %v7098
    %v7103 = vand.u32 2147483647, %v6904
    %vm7104 = vcmp.eq.f32.partialorder %v7103, 8.507059e+37
    %v7105 = vand.u32 %v6904, 2147483648
    %v7106 = vor.u32 1.1754944e-38, %v7105
    %v7107 = vsel %vm7104, %v7106, %v7102
    %v7108 = vmul.f32 %v6859, %v7107
    %v7109 = vrcp.pop %v6907
    %v7110 = vmul.f32 %v6907, %v7109
    %v7111 = vsub.f32 1.0, %v7110
    %v7112 = vmul.f32 %v7109, %v7111
    %v7113 = vadd.f32 %v7109, %v7112
    %vm7114 = vweird.f32 %v6907
    %vm7115 = vweird.f32 %v7109
    %vm7116 = vmor %vm7114, %vm7115
    %v7117 = vsel %vm7116, %v7109, %v7113
    %v7118 = vand.u32 2147483647, %v6907
    %vm7119 = vcmp.eq.f32.partialorder %v7118, 8.507059e+37
    %v7120 = vand.u32 %v6907, 2147483648
    %v7121 = vor.u32 1.1754944e-38, %v7120
    %v7122 = vsel %vm7119, %v7121, %v7117
    %v7123 = vmul.f32 %v6861, %v7122
    %v7124 = vrcp.pop %v6910
    %v7125 = vmul.f32 %v6910, %v7124
    %v7126 = vsub.f32 1.0, %v7125
    %v7127 = vmul.f32 %v7124, %v7126
    %v7128 = vadd.f32 %v7124, %v7127
    %vm7129 = vweird.f32 %v6910
    %vm7130 = vweird.f32 %v7124
    %vm7131 = vmor %vm7129, %vm7130
    %v7132 = vsel %vm7131, %v7124, %v7128
    %v7133 = vand.u32 2147483647, %v6910
    %vm7134 = vcmp.eq.f32.partialorder %v7133, 8.507059e+37
    %v7135 = vand.u32 %v6910, 2147483648
    %v7136 = vor.u32 1.1754944e-38, %v7135
    %v7137 = vsel %vm7134, %v7136, %v7132
    %v7138 = vmul.f32 %v6863, %v7137
    %v7139 = vrcp.pop %v6913
    %v7140 = vmul.f32 %v6913, %v7139
    %v7141 = vsub.f32 1.0, %v7140
    %v7142 = vmul.f32 %v7139, %v7141
    %v7143 = vadd.f32 %v7139, %v7142
    %vm7144 = vweird.f32 %v6913
    %vm7145 = vweird.f32 %v7139
    %vm7146 = vmor %vm7144, %vm7145
    %v7147 = vsel %vm7146, %v7139, %v7143
    %v7148 = vand.u32 2147483647, %v6913
    %vm7149 = vcmp.eq.f32.partialorder %v7148, 8.507059e+37
    %v7150 = vand.u32 %v6913, 2147483648
    %v7151 = vor.u32 1.1754944e-38, %v7150
    %v7152 = vsel %vm7149, %v7151, %v7147
    %v7153 = vmul.f32 %v6865, %v7152
    %v7155 = vsel %vm6322, %v6928, 0
    %v7158 = vsel %vm6322, %v6943, 0
    %v7161 = vsel %vm6322, %v6958, 0
    %v7164 = vsel %vm6322, %v6973, 0
    %v7167 = vsel %vm6322, %v6988, 0
    %v7170 = vsel %vm6322, %v7003, 0
    %v7173 = vsel %vm6322, %v7018, 0
    %v7176 = vsel %vm6322, %v7033, 0
    %v7179 = vsel %vm6322, %v7048, 0
    %v7182 = vsel %vm6322, %v7063, 0
    %v7185 = vsel %vm6322, %v7078, 0
    %v7188 = vsel %vm6322, %v7093, 0
    %v7191 = vsel %vm6322, %v7108, 0
    %v7194 = vsel %vm6322, %v7123, 0
    %v7197 = vsel %vm6322, %v7138, 0
    %v7200 = vsel %vm6322, %v7153, 0
    %7202 = vmatpush.msra.mxu0 0.0
    %7203 = vmatpush.msra.mxu0 0.0
    %7204 = vmatpush.msra.mxu0 0.0
    %7205 = vmatpush.msra.mxu0 0.0
    %7206 = vmatpush.msra.mxu0 0.0
    %7207 = vmatpush.msra.mxu0 0.0
    %7208 = vmatpush.msra.mxu0 0.0
    %7209 = vmatpush.msra.mxu0 0.0
    %7210 = vmatpush.msra.mxu0 0.0
    %7211 = vmatpush.msra.mxu0 0.0
    %7212 = vmatpush.msra.mxu0 0.0
    %7213 = vmatpush.msra.mxu0 0.0
    %7214 = vmatpush.msra.mxu0 0.0
    %7215 = vmatpush.msra.mxu0 0.0
    %7216 = vmatpush.msra.mxu0 %v6328
    %7217 = vmatpush.msra.mxu0 %v6150
    %7218 = vmatmul.f32.gmra.mxu0 %v7155
    %v7219 = vpop.f32.mrf.mxu0
    %v7220 = vadd.f32 0.0, %v7219
    %7221 = vmatmul.f32.gmra.mxu0 %v7158
    %v7222 = vpop.f32.mrf.mxu0
    %v7223 = vadd.f32 0.0, %v7222
    %7224 = vmatmul.f32.gmra.mxu0 %v7161
    %v7225 = vpop.f32.mrf.mxu0
    %v7226 = vadd.f32 0.0, %v7225
    %7227 = vmatmul.f32.gmra.mxu0 %v7164
    %v7228 = vpop.f32.mrf.mxu0
    %v7229 = vadd.f32 0.0, %v7228
    %7230 = vmatmul.f32.gmra.mxu0 %v7167
    %v7231 = vpop.f32.mrf.mxu0
    %v7232 = vadd.f32 0.0, %v7231
    %7233 = vmatmul.f32.gmra.mxu0 %v7170
    %v7234 = vpop.f32.mrf.mxu0
    %v7235 = vadd.f32 0.0, %v7234
    %7236 = vmatmul.f32.gmra.mxu0 %v7173
    %v7237 = vpop.f32.mrf.mxu0
    %v7238 = vadd.f32 0.0, %v7237
    %7239 = vmatmul.f32.gmra.mxu0 %v7176
    %v7240 = vpop.f32.mrf.mxu0
    %v7241 = vadd.f32 0.0, %v7240
    %7242 = vmatmul.f32.gmra.mxu0 %v7179
    %v7243 = vpop.f32.mrf.mxu0
    %v7244 = vadd.f32 0.0, %v7243
    %7245 = vmatmul.f32.gmra.mxu0 %v7182
    %v7246 = vpop.f32.mrf.mxu0
    %v7247 = vadd.f32 0.0, %v7246
    %7248 = vmatmul.f32.gmra.mxu0 %v7185
    %v7249 = vpop.f32.mrf.mxu0
    %v7250 = vadd.f32 0.0, %v7249
    %7251 = vmatmul.f32.gmra.mxu0 %v7188
    %v7252 = vpop.f32.mrf.mxu0
    %v7253 = vadd.f32 0.0, %v7252
    %7254 = vmatmul.f32.gmra.mxu0 %v7191
    %v7255 = vpop.f32.mrf.mxu0
    %v7256 = vadd.f32 0.0, %v7255
    %7257 = vmatmul.f32.gmra.mxu0 %v7194
    %v7258 = vpop.f32.mrf.mxu0
    %v7259 = vadd.f32 0.0, %v7258
    %7260 = vmatmul.f32.gmra.mxu0 %v7197
    %v7261 = vpop.f32.mrf.mxu0
    %v7262 = vadd.f32 0.0, %v7261
    %7263 = vmatmul.f32.gmra.mxu0 %v7200
    %v7264 = vpop.f32.mrf.mxu0
    %v7265 = vadd.f32 0.0, %v7264
    %7266 = vdwg.mxu0
    %7267 = vmatpush.msra.mxu0 0.0
    %7268 = vmatpush.msra.mxu0 0.0
    %7269 = vmatpush.msra.mxu0 0.0
    %7270 = vmatpush.msra.mxu0 0.0
    %7271 = vmatpush.msra.mxu0 0.0
    %7272 = vmatpush.msra.mxu0 0.0
    %7273 = vmatpush.msra.mxu0 0.0
    %7274 = vmatpush.msra.mxu0 0.0
    %7275 = vmatpush.msra.mxu0 0.0
    %7276 = vmatpush.msra.mxu0 0.0
    %7277 = vmatpush.msra.mxu0 0.0
    %7278 = vmatpush.msra.mxu0 0.0
    %7279 = vmatpush.msra.mxu0 0.0
    %7280 = vmatpush.msra.mxu0 0.0
    %7281 = vmatpush.msra.mxu0 %v6331
    %7282 = vmatpush.msra.mxu0 %v6151
    %7283 = vmatmul.f32.gmra.mxu0 %v7155
    %v7284 = vpop.f32.mrf.mxu0
    %v7285 = vadd.f32 0.0, %v7284
    %7286 = vmatmul.f32.gmra.mxu0 %v7158
    %v7287 = vpop.f32.mrf.mxu0
    %v7288 = vadd.f32 0.0, %v7287
    %7289 = vmatmul.f32.gmra.mxu0 %v7161
    %v7290 = vpop.f32.mrf.mxu0
    %v7291 = vadd.f32 0.0, %v7290
    %7292 = vmatmul.f32.gmra.mxu0 %v7164
    %v7293 = vpop.f32.mrf.mxu0
    %v7294 = vadd.f32 0.0, %v7293
    %7295 = vmatmul.f32.gmra.mxu0 %v7167
    %v7296 = vpop.f32.mrf.mxu0
    %v7297 = vadd.f32 0.0, %v7296
    %7298 = vmatmul.f32.gmra.mxu0 %v7170
    %v7299 = vpop.f32.mrf.mxu0
    %v7300 = vadd.f32 0.0, %v7299
    %7301 = vmatmul.f32.gmra.mxu0 %v7173
    %v7302 = vpop.f32.mrf.mxu0
    %v7303 = vadd.f32 0.0, %v7302
    %7304 = vmatmul.f32.gmra.mxu0 %v7176
    %v7305 = vpop.f32.mrf.mxu0
    %v7306 = vadd.f32 0.0, %v7305
    %7307 = vmatmul.f32.gmra.mxu0 %v7179
    %v7308 = vpop.f32.mrf.mxu0
    %v7309 = vadd.f32 0.0, %v7308
    %7310 = vmatmul.f32.gmra.mxu0 %v7182
    %v7311 = vpop.f32.mrf.mxu0
    %v7312 = vadd.f32 0.0, %v7311
    %7313 = vmatmul.f32.gmra.mxu0 %v7185
    %v7314 = vpop.f32.mrf.mxu0
    %v7315 = vadd.f32 0.0, %v7314
    %7316 = vmatmul.f32.gmra.mxu0 %v7188
    %v7317 = vpop.f32.mrf.mxu0
    %v7318 = vadd.f32 0.0, %v7317
    %7319 = vmatmul.f32.gmra.mxu0 %v7191
    %v7320 = vpop.f32.mrf.mxu0
    %v7321 = vadd.f32 0.0, %v7320
    %7322 = vmatmul.f32.gmra.mxu0 %v7194
    %v7323 = vpop.f32.mrf.mxu0
    %v7324 = vadd.f32 0.0, %v7323
    %7325 = vmatmul.f32.gmra.mxu0 %v7197
    %v7326 = vpop.f32.mrf.mxu0
    %v7327 = vadd.f32 0.0, %v7326
    %7328 = vmatmul.f32.gmra.mxu0 %v7200
    %v7329 = vpop.f32.mrf.mxu0
    %v7330 = vadd.f32 0.0, %v7329
    %7331 = vdwg.mxu0
    %v7332 = vmul.f32 %v7220, %v5614
    %v7333 = vmul.f32 %v7285, %v5615
    %v7334 = vmul.f32 %v7223, %v5616
    %v7335 = vmul.f32 %v7288, %v5617
    %v7336 = vmul.f32 %v7226, %v5618
    %v7337 = vmul.f32 %v7291, %v5619
    %v7338 = vmul.f32 %v7229, %v5620
    %v7339 = vmul.f32 %v7294, %v5621
    %v7340 = vmul.f32 %v7232, %v5622
    %v7341 = vmul.f32 %v7297, %v5623
    %v7342 = vmul.f32 %v7235, %v5624
    %v7343 = vmul.f32 %v7300, %v5625
    %v7344 = vmul.f32 %v7238, %v5626
    %v7345 = vmul.f32 %v7303, %v5627
    %v7346 = vmul.f32 %v7241, %v5628
    %v7347 = vmul.f32 %v7306, %v5629
    %v7348 = vmul.f32 %v7244, %v6134
    %v7349 = vmul.f32 %v7309, %v6135
    %v7350 = vmul.f32 %v7247, %v6136
    %v7351 = vmul.f32 %v7312, %v6137
    %v7352 = vmul.f32 %v7250, %v6138
    %v7353 = vmul.f32 %v7315, %v6139
    %v7354 = vmul.f32 %v7253, %v6140
    %v7355 = vmul.f32 %v7318, %v6141
    %v7356 = vmul.f32 %v7256, %v6142
    %v7357 = vmul.f32 %v7321, %v6143
    %v7358 = vmul.f32 %v7259, %v6144
    %v7359 = vmul.f32 %v7324, %v6145
    %v7360 = vmul.f32 %v7262, %v6146
    %v7361 = vmul.f32 %v7327, %v6147
    %v7362 = vmul.f32 %v7265, %v6148
    %v7363 = vmul.f32 %v7330, %v6149
    %7364 = vmatpush.msra.mxu0 %v7362
    %7365 = vmatpush.msra.mxu0 %v7360
    %7366 = vmatpush.msra.mxu0 %v7358
    %7367 = vmatpush.msra.mxu0 %v7356
    %7368 = vmatpush.msra.mxu0 %v7354
    %7369 = vmatpush.msra.mxu0 %v7352
    %7370 = vmatpush.msra.mxu0 %v7350
    %7371 = vmatpush.msra.mxu0 %v7348
    %7372 = vmatpush.msra.mxu0 %v7346
    %7373 = vmatpush.msra.mxu0 %v7344
    %7374 = vmatpush.msra.mxu0 %v7342
    %7375 = vmatpush.msra.mxu0 %v7340
    %7376 = vmatpush.msra.mxu0 %v7338
    %7377 = vmatpush.msra.mxu0 %v7336
    %7378 = vmatpush.msra.mxu0 %v7334
    %7379 = vmatpush.msra.mxu0 %v7332
    %7380 = vmatmul.f32.gmra.mxu0 %v6190
    %v7381 = vpop.f32.mrf.mxu0
    %v7382 = vadd.f32 0.0, %v7381
    %7383 = vdwg.mxu0
    %7384 = vmatpush.msra.mxu0 %v7363
    %7385 = vmatpush.msra.mxu0 %v7361
    %7386 = vmatpush.msra.mxu0 %v7359
    %7387 = vmatpush.msra.mxu0 %v7357
    %7388 = vmatpush.msra.mxu0 %v7355
    %7389 = vmatpush.msra.mxu0 %v7353
    %7390 = vmatpush.msra.mxu0 %v7351
    %7391 = vmatpush.msra.mxu0 %v7349
    %7392 = vmatpush.msra.mxu0 %v7347
    %7393 = vmatpush.msra.mxu0 %v7345
    %7394 = vmatpush.msra.mxu0 %v7343
    %7395 = vmatpush.msra.mxu0 %v7341
    %7396 = vmatpush.msra.mxu0 %v7339
    %7397 = vmatpush.msra.mxu0 %v7337
    %7398 = vmatpush.msra.mxu0 %v7335
    %7399 = vmatpush.msra.mxu0 %v7333
    %7400 = vmatmul.f32.gmra.mxu0 %v6190
    %v7401 = vpop.f32.mrf.mxu0
    %v7402 = vadd.f32 0.0, %v7401
    %7403 = vdwg.mxu0
    %v7404 = vmul.f32 %v7382, %v7382
    %v7405 = vmul.f32 %v7402, %v7402
    %v7407 = vsel %vm1354, %v7405, 0
    %7409 = vmatpush.msra.mxu0 %v6169
    %7410 = vmatpush.msra.mxu0 %v6168
    %7411 = vmatpush.msra.mxu0 %v6167
    %7412 = vmatpush.msra.mxu0 %v6166
    %7413 = vmatpush.msra.mxu0 %v6165
    %7414 = vmatpush.msra.mxu0 %v6164
    %7415 = vmatpush.msra.mxu0 %v6163
    %7416 = vmatpush.msra.mxu0 %v6162
    %7417 = vmatpush.msra.mxu0 %v6161
    %7418 = vmatpush.msra.mxu0 %v6160
    %7419 = vmatpush.msra.mxu0 %v6159
    %7420 = vmatpush.msra.mxu0 %v6158
    %7421 = vmatpush.msra.mxu0 %v6157
    %7422 = vmatpush.msra.mxu0 %v6156
    %7423 = vmatpush.msra.mxu0 %v6155
    %7424 = vmatpush.msra.mxu0 %v6154
    %7425 = vmatmul.f32.gmra.mxu0 %v7404
    %v7426 = vpop.f32.mrf.mxu0
    %v7427 = vadd.f32 0.0, %v7426
    %7428 = vdwg.mxu0
    %7429 = vmatpush.msra.mxu0 0.0
    %7430 = vmatpush.msra.mxu0 0.0
    %7431 = vmatpush.msra.mxu0 0.0
    %7432 = vmatpush.msra.mxu0 0.0
    %7433 = vmatpush.msra.mxu0 0.0
    %7434 = vmatpush.msra.mxu0 0.0
    %7435 = vmatpush.msra.mxu0 0.0
    %7436 = vmatpush.msra.mxu0 0.0
    %7437 = vmatpush.msra.mxu0 0.0
    %7438 = vmatpush.msra.mxu0 0.0
    %7439 = vmatpush.msra.mxu0 0.0
    %7440 = vmatpush.msra.mxu0 0.0
    %7441 = vmatpush.msra.mxu0 %v6173
    %7442 = vmatpush.msra.mxu0 %v6172
    %7443 = vmatpush.msra.mxu0 %v6171
    %7444 = vmatpush.msra.mxu0 %v6170
    %7445 = vmatmul.f32.gmra.mxu0 %v7407
    %v7446 = vpop.f32.mrf.mxu0
    %v7447 = vadd.f32 %v7427, %v7446
    %7448 = vdwg.mxu0
    %v7449 = vadd.f32 %v7447, 1.0
    %v7450 = vrcp.pop %v7449
    %v7451 = vmul.f32 %v7449, %v7450
    %v7452 = vsub.f32 1.0, %v7451
    %v7453 = vmul.f32 %v7450, %v7452
    %v7454 = vadd.f32 %v7450, %v7453
    %vm7455 = vweird.f32 %v7449
    %vm7456 = vweird.f32 %v7450
    %vm7457 = vmor %vm7455, %vm7456
    %v7458 = vsel %vm7457, %v7450, %v7454
    %v7459 = vand.u32 2147483647, %v7449
    %vm7460 = vcmp.eq.f32.partialorder %v7459, 8.507059e+37
    %v7461 = vand.u32 %v7449, 2147483648
    %v7462 = vor.u32 1.1754944e-38, %v7461
    %v7463 = vsel %vm7460, %v7462, %v7458
    %v7464 = vmul.f32 %v7447, %v7463
    %v7465 = vadd.f32 %v7447, 1e-08
    %v7466 = vrsqrt.pop %v7465
    %v7467 = vmul.f32 %v7466, %v7465
    %v7468 = vmul.f32 %v7467, %v7466
    %v7469 = vmul.f32 0.5, %v7468
    %v7470 = vsub.f32 1.5, %v7469
    %v7471 = vmul.f32 %v7466, %v7470
    %v7472 = vmul.f32 %v7465, %v7471
    %vm7473 = vcmp.eq.f32.partialorder %v7465, inf
    %v7474 = vsel %vm7473, %v7465, %v7472
    %vm7475 = vcmp.eq.f32.partialorder %v7465, 0.0
    %v7476 = vand.u32 %v7465, 2147483648
    %v7477 = vsel %vm7475, %v7476, %v7474
    %v7478 = vrcp.pop %v7477
    %v7479 = vmul.f32 %v7477, %v7478
    %v7480 = vsub.f32 1.0, %v7479
    %v7481 = vmul.f32 %v7478, %v7480
    %v7482 = vadd.f32 %v7478, %v7481
    %vm7483 = vweird.f32 %v7477
    %vm7484 = vweird.f32 %v7478
    %vm7485 = vmor %vm7483, %vm7484
    %v7486 = vsel %vm7485, %v7478, %v7482
    %v7487 = vand.u32 2147483647, %v7477
    %vm7488 = vcmp.eq.f32.partialorder %v7487, 8.507059e+37
    %v7489 = vand.u32 %v7477, 2147483648
    %v7490 = vor.u32 1.1754944e-38, %v7489
    %v7491 = vsel %vm7488, %v7490, %v7486
    %v7492 = vmul.f32 %v7464, %v7491
    %v7494 = vsel %vm6322, %v7492, 0
    %7496 = vmatpush.msra.mxu0 0.0
    %7497 = vmatpush.msra.mxu0 0.0
    %7498 = vmatpush.msra.mxu0 0.0
    %7499 = vmatpush.msra.mxu0 0.0
    %7500 = vmatpush.msra.mxu0 0.0
    %7501 = vmatpush.msra.mxu0 0.0
    %7502 = vmatpush.msra.mxu0 0.0
    %7503 = vmatpush.msra.mxu0 0.0
    %7504 = vmatpush.msra.mxu0 0.0
    %7505 = vmatpush.msra.mxu0 0.0
    %7506 = vmatpush.msra.mxu0 0.0
    %7507 = vmatpush.msra.mxu0 0.0
    %7508 = vmatpush.msra.mxu0 0.0
    %7509 = vmatpush.msra.mxu0 0.0
    %7510 = vmatpush.msra.mxu0 %v6328
    %7511 = vmatpush.msra.mxu0 %v6150
    %7512 = vmatmul.f32.gmra.mxu0 %v7494
    %v7513 = vpop.f32.mrf.mxu0
    %v7514 = vadd.f32 0.0, %v7513
    %7515 = vdwg.mxu0
    %7516 = vmatpush.msra.mxu0 0.0
    %7517 = vmatpush.msra.mxu0 0.0
    %7518 = vmatpush.msra.mxu0 0.0
    %7519 = vmatpush.msra.mxu0 0.0
    %7520 = vmatpush.msra.mxu0 0.0
    %7521 = vmatpush.msra.mxu0 0.0
    %7522 = vmatpush.msra.mxu0 0.0
    %7523 = vmatpush.msra.mxu0 0.0
    %7524 = vmatpush.msra.mxu0 0.0
    %7525 = vmatpush.msra.mxu0 0.0
    %7526 = vmatpush.msra.mxu0 0.0
    %7527 = vmatpush.msra.mxu0 0.0
    %7528 = vmatpush.msra.mxu0 0.0
    %7529 = vmatpush.msra.mxu0 0.0
    %7530 = vmatpush.msra.mxu0 %v6331
    %7531 = vmatpush.msra.mxu0 %v6151
    %7532 = vmatmul.f32.gmra.mxu0 %v7494
    %v7533 = vpop.f32.mrf.mxu0
    %v7534 = vadd.f32 0.0, %v7533
    %7535 = vdwg.mxu0
    %v7536 = vmul.f32 %v7382, %v7514
    %v7537 = vmul.f32 %v7402, %v7534
    %v7539 = vsel %vm6326, %v7536, 0
    %v7542 = vsel %vm6326, %v7537, 0
    %7544 = vmatpush.msra.mxu0 0.0
    %7545 = vmatpush.msra.mxu0 0.0
    %7546 = vmatpush.msra.mxu0 0.0
    %7547 = vmatpush.msra.mxu0 0.0
    %7548 = vmatpush.msra.mxu0 0.0
    %7549 = vmatpush.msra.mxu0 0.0
    %7550 = vmatpush.msra.mxu0 0.0
    %7551 = vmatpush.msra.mxu0 0.0
    %7552 = vmatpush.msra.mxu0 0.0
    %7553 = vmatpush.msra.mxu0 0.0
    %7554 = vmatpush.msra.mxu0 0.0
    %7555 = vmatpush.msra.mxu0 0.0
    %7556 = vmatpush.msra.mxu0 0.0
    %7557 = vmatpush.msra.mxu0 0.0
    %7558 = vmatpush.msra.mxu0 0.0
    %7559 = vmatpush.msra.mxu0 %v7539
    %7560 = vmatmul.f32.gmra.mxu0 %v6377
    %v7561 = vpop.f32.mrf.mxu0
    %v7562 = vadd.f32 0.0, %v7561
    %7563 = vmatmul.f32.gmra.mxu0 %v6380
    %v7564 = vpop.f32.mrf.mxu0
    %v7565 = vadd.f32 0.0, %v7564
    %7566 = vmatmul.f32.gmra.mxu0 %v6383
    %v7567 = vpop.f32.mrf.mxu0
    %v7568 = vadd.f32 0.0, %v7567
    %7569 = vmatmul.f32.gmra.mxu0 %v6386
    %v7570 = vpop.f32.mrf.mxu0
    %v7571 = vadd.f32 0.0, %v7570
    %7572 = vmatmul.f32.gmra.mxu0 %v6389
    %v7573 = vpop.f32.mrf.mxu0
    %v7574 = vadd.f32 0.0, %v7573
    %7575 = vmatmul.f32.gmra.mxu0 %v6392
    %v7576 = vpop.f32.mrf.mxu0
    %v7577 = vadd.f32 0.0, %v7576
    %7578 = vmatmul.f32.gmra.mxu0 %v6395
    %v7579 = vpop.f32.mrf.mxu0
    %v7580 = vadd.f32 0.0, %v7579
    %7581 = vmatmul.f32.gmra.mxu0 %v6398
    %v7582 = vpop.f32.mrf.mxu0
    %v7583 = vadd.f32 0.0, %v7582
    %7584 = vmatmul.f32.gmra.mxu0 %v6401
    %v7585 = vpop.f32.mrf.mxu0
    %v7586 = vadd.f32 0.0, %v7585
    %7587 = vmatmul.f32.gmra.mxu0 %v6404
    %v7588 = vpop.f32.mrf.mxu0
    %v7589 = vadd.f32 0.0, %v7588
    %7590 = vmatmul.f32.gmra.mxu0 %v6407
    %v7591 = vpop.f32.mrf.mxu0
    %v7592 = vadd.f32 0.0, %v7591
    %7593 = vmatmul.f32.gmra.mxu0 %v6410
    %v7594 = vpop.f32.mrf.mxu0
    %v7595 = vadd.f32 0.0, %v7594
    %7596 = vmatmul.f32.gmra.mxu0 %v6413
    %v7597 = vpop.f32.mrf.mxu0
    %v7598 = vadd.f32 0.0, %v7597
    %7599 = vmatmul.f32.gmra.mxu0 %v6416
    %v7600 = vpop.f32.mrf.mxu0
    %v7601 = vadd.f32 0.0, %v7600
    %7602 = vmatmul.f32.gmra.mxu0 %v6419
    %v7603 = vpop.f32.mrf.mxu0
    %v7604 = vadd.f32 0.0, %v7603
    %7605 = vmatmul.f32.gmra.mxu0 %v6422
    %v7606 = vpop.f32.mrf.mxu0
    %v7607 = vadd.f32 0.0, %v7606
    %7608 = vdwg.mxu0
    %7609 = vmatpush.msra.mxu0 0.0
    %7610 = vmatpush.msra.mxu0 0.0
    %7611 = vmatpush.msra.mxu0 0.0
    %7612 = vmatpush.msra.mxu0 0.0
    %7613 = vmatpush.msra.mxu0 0.0
    %7614 = vmatpush.msra.mxu0 0.0
    %7615 = vmatpush.msra.mxu0 0.0
    %7616 = vmatpush.msra.mxu0 0.0
    %7617 = vmatpush.msra.mxu0 0.0
    %7618 = vmatpush.msra.mxu0 0.0
    %7619 = vmatpush.msra.mxu0 0.0
    %7620 = vmatpush.msra.mxu0 0.0
    %7621 = vmatpush.msra.mxu0 0.0
    %7622 = vmatpush.msra.mxu0 0.0
    %7623 = vmatpush.msra.mxu0 0.0
    %7624 = vmatpush.msra.mxu0 %v7542
    %7625 = vmatmul.f32.gmra.mxu0 %v6377
    %v7626 = vpop.f32.mrf.mxu0
    %v7627 = vadd.f32 0.0, %v7626
    %7628 = vmatmul.f32.gmra.mxu0 %v6380
    %v7629 = vpop.f32.mrf.mxu0
    %v7630 = vadd.f32 0.0, %v7629
    %7631 = vmatmul.f32.gmra.mxu0 %v6383
    %v7632 = vpop.f32.mrf.mxu0
    %v7633 = vadd.f32 0.0, %v7632
    %7634 = vmatmul.f32.gmra.mxu0 %v6386
    %v7635 = vpop.f32.mrf.mxu0
    %v7636 = vadd.f32 0.0, %v7635
    %7637 = vmatmul.f32.gmra.mxu0 %v6389
    %v7638 = vpop.f32.mrf.mxu0
    %v7639 = vadd.f32 0.0, %v7638
    %7640 = vmatmul.f32.gmra.mxu0 %v6392
    %v7641 = vpop.f32.mrf.mxu0
    %v7642 = vadd.f32 0.0, %v7641
    %7643 = vmatmul.f32.gmra.mxu0 %v6395
    %v7644 = vpop.f32.mrf.mxu0
    %v7645 = vadd.f32 0.0, %v7644
    %7646 = vmatmul.f32.gmra.mxu0 %v6398
    %v7647 = vpop.f32.mrf.mxu0
    %v7648 = vadd.f32 0.0, %v7647
    %7649 = vmatmul.f32.gmra.mxu0 %v6401
    %v7650 = vpop.f32.mrf.mxu0
    %v7651 = vadd.f32 0.0, %v7650
    %7652 = vmatmul.f32.gmra.mxu0 %v6404
    %v7653 = vpop.f32.mrf.mxu0
    %v7654 = vadd.f32 0.0, %v7653
    %7655 = vmatmul.f32.gmra.mxu0 %v6407
    %v7656 = vpop.f32.mrf.mxu0
    %v7657 = vadd.f32 0.0, %v7656
    %7658 = vmatmul.f32.gmra.mxu0 %v6410
    %v7659 = vpop.f32.mrf.mxu0
    %v7660 = vadd.f32 0.0, %v7659
    %7661 = vmatmul.f32.gmra.mxu0 %v6413
    %v7662 = vpop.f32.mrf.mxu0
    %v7663 = vadd.f32 0.0, %v7662
    %7664 = vmatmul.f32.gmra.mxu0 %v6416
    %v7665 = vpop.f32.mrf.mxu0
    %v7666 = vadd.f32 0.0, %v7665
    %7667 = vmatmul.f32.gmra.mxu0 %v6419
    %v7668 = vpop.f32.mrf.mxu0
    %v7669 = vadd.f32 0.0, %v7668
    %7670 = vmatmul.f32.gmra.mxu0 %v6422
    %v7671 = vpop.f32.mrf.mxu0
    %v7672 = vadd.f32 0.0, %v7671
    %7673 = vdwg.mxu0
    %v7674 = vmul.f32 %v5614, %v7562
    %v7675 = vmul.f32 %v5615, %v7627
    %v7676 = vmul.f32 %v5616, %v7565
    %v7677 = vmul.f32 %v5617, %v7630
    %v7678 = vmul.f32 %v5618, %v7568
    %v7679 = vmul.f32 %v5619, %v7633
    %v7680 = vmul.f32 %v5620, %v7571
    %v7681 = vmul.f32 %v5621, %v7636
    %v7682 = vmul.f32 %v5622, %v7574
    %v7683 = vmul.f32 %v5623, %v7639
    %v7684 = vmul.f32 %v5624, %v7577
    %v7685 = vmul.f32 %v5625, %v7642
    %v7686 = vmul.f32 %v5626, %v7580
    %v7687 = vmul.f32 %v5627, %v7645
    %v7688 = vmul.f32 %v5628, %v7583
    %v7689 = vmul.f32 %v5629, %v7648
    %v7690 = vmul.f32 %v6134, %v7586
    %v7691 = vmul.f32 %v6135, %v7651
    %v7692 = vmul.f32 %v6136, %v7589
    %v7693 = vmul.f32 %v6137, %v7654
    %v7694 = vmul.f32 %v6138, %v7592
    %v7695 = vmul.f32 %v6139, %v7657
    %v7696 = vmul.f32 %v6140, %v7595
    %v7697 = vmul.f32 %v6141, %v7660
    %v7698 = vmul.f32 %v6142, %v7598
    %v7699 = vmul.f32 %v6143, %v7663
    %v7700 = vmul.f32 %v6144, %v7601
    %v7701 = vmul.f32 %v6145, %v7666
    %v7702 = vmul.f32 %v6146, %v7604
    %v7703 = vmul.f32 %v6147, %v7669
    %v7704 = vmul.f32 %v6148, %v7607
    %v7705 = vmul.f32 %v6149, %v7672
    %v7707 = vsel %vm1354, %v7675, 0
    %v7710 = vsel %vm1354, %v7677, 0
    %v7713 = vsel %vm1354, %v7679, 0
    %v7716 = vsel %vm1354, %v7681, 0
    %v7719 = vsel %vm1354, %v7683, 0
    %v7722 = vsel %vm1354, %v7685, 0
    %v7725 = vsel %vm1354, %v7687, 0
    %v7728 = vsel %vm1354, %v7689, 0
    %v7731 = vsel %vm1354, %v7691, 0
    %v7734 = vsel %vm1354, %v7693, 0
    %v7737 = vsel %vm1354, %v7695, 0
    %v7740 = vsel %vm1354, %v7697, 0
    %v7743 = vsel %vm1354, %v7699, 0
    %v7746 = vsel %vm1354, %v7701, 0
    %v7749 = vsel %vm1354, %v7703, 0
    %v7752 = vsel %vm1354, %v7705, 0
    %7754 = vmatpush.msra.mxu0 %v6169
    %7755 = vmatpush.msra.mxu0 %v6168
    %7756 = vmatpush.msra.mxu0 %v6167
    %7757 = vmatpush.msra.mxu0 %v6166
    %7758 = vmatpush.msra.mxu0 %v6165
    %7759 = vmatpush.msra.mxu0 %v6164
    %7760 = vmatpush.msra.mxu0 %v6163
    %7761 = vmatpush.msra.mxu0 %v6162
    %7762 = vmatpush.msra.mxu0 %v6161
    %7763 = vmatpush.msra.mxu0 %v6160
    %7764 = vmatpush.msra.mxu0 %v6159
    %7765 = vmatpush.msra.mxu0 %v6158
    %7766 = vmatpush.msra.mxu0 %v6157
    %7767 = vmatpush.msra.mxu0 %v6156
    %7768 = vmatpush.msra.mxu0 %v6155
    %7769 = vmatpush.msra.mxu0 %v6154
    %7770 = vmatmul.f32.gmra.mxu0 %v7674
    %v7771 = vpop.f32.mrf.mxu0
    %v7772 = vadd.f32 0.0, %v7771
    %7773 = vmatmul.f32.gmra.mxu0 %v7676
    %v7774 = vpop.f32.mrf.mxu0
    %v7775 = vadd.f32 0.0, %v7774
    %7776 = vmatmul.f32.gmra.mxu0 %v7678
    %v7777 = vpop.f32.mrf.mxu0
    %v7778 = vadd.f32 0.0, %v7777
    %7779 = vmatmul.f32.gmra.mxu0 %v7680
    %v7780 = vpop.f32.mrf.mxu0
    %v7781 = vadd.f32 0.0, %v7780
    %7782 = vmatmul.f32.gmra.mxu0 %v7682
    %v7783 = vpop.f32.mrf.mxu0
    %v7784 = vadd.f32 0.0, %v7783
    %7785 = vmatmul.f32.gmra.mxu0 %v7684
    %v7786 = vpop.f32.mrf.mxu0
    %v7787 = vadd.f32 0.0, %v7786
    %7788 = vmatmul.f32.gmra.mxu0 %v7686
    %v7789 = vpop.f32.mrf.mxu0
    %v7790 = vadd.f32 0.0, %v7789
    %7791 = vmatmul.f32.gmra.mxu0 %v7688
    %v7792 = vpop.f32.mrf.mxu0
    %v7793 = vadd.f32 0.0, %v7792
    %7794 = vmatmul.f32.gmra.mxu0 %v7690
    %v7795 = vpop.f32.mrf.mxu0
    %v7796 = vadd.f32 0.0, %v7795
    %7797 = vmatmul.f32.gmra.mxu0 %v7692
    %v7798 = vpop.f32.mrf.mxu0
    %v7799 = vadd.f32 0.0, %v7798
    %7800 = vmatmul.f32.gmra.mxu0 %v7694
    %v7801 = vpop.f32.mrf.mxu0
    %v7802 = vadd.f32 0.0, %v7801
    %7803 = vmatmul.f32.gmra.mxu0 %v7696
    %v7804 = vpop.f32.mrf.mxu0
    %v7805 = vadd.f32 0.0, %v7804
    %7806 = vmatmul.f32.gmra.mxu0 %v7698
    %v7807 = vpop.f32.mrf.mxu0
    %v7808 = vadd.f32 0.0, %v7807
    %7809 = vmatmul.f32.gmra.mxu0 %v7700
    %v7810 = vpop.f32.mrf.mxu0
    %v7811 = vadd.f32 0.0, %v7810
    %7812 = vmatmul.f32.gmra.mxu0 %v7702
    %v7813 = vpop.f32.mrf.mxu0
    %v7814 = vadd.f32 0.0, %v7813
    %7815 = vmatmul.f32.gmra.mxu0 %v7704
    %v7816 = vpop.f32.mrf.mxu0
    %v7817 = vadd.f32 0.0, %v7816
    %7818 = vdwg.mxu0
    %7819 = vmatpush.msra.mxu0 0.0
    %7820 = vmatpush.msra.mxu0 0.0
    %7821 = vmatpush.msra.mxu0 0.0
    %7822 = vmatpush.msra.mxu0 0.0
    %7823 = vmatpush.msra.mxu0 0.0
    %7824 = vmatpush.msra.mxu0 0.0
    %7825 = vmatpush.msra.mxu0 0.0
    %7826 = vmatpush.msra.mxu0 0.0
    %7827 = vmatpush.msra.mxu0 0.0
    %7828 = vmatpush.msra.mxu0 0.0
    %7829 = vmatpush.msra.mxu0 0.0
    %7830 = vmatpush.msra.mxu0 0.0
    %7831 = vmatpush.msra.mxu0 %v6173
    %7832 = vmatpush.msra.mxu0 %v6172
    %7833 = vmatpush.msra.mxu0 %v6171
    %7834 = vmatpush.msra.mxu0 %v6170
    %7835 = vmatmul.f32.gmra.mxu0 %v7707
    %v7836 = vpop.f32.mrf.mxu0
    %v7837 = vadd.f32 %v7772, %v7836
    %7838 = vmatmul.f32.gmra.mxu0 %v7710
    %v7839 = vpop.f32.mrf.mxu0
    %v7840 = vadd.f32 %v7775, %v7839
    %7841 = vmatmul.f32.gmra.mxu0 %v7713
    %v7842 = vpop.f32.mrf.mxu0
    %v7843 = vadd.f32 %v7778, %v7842
    %7844 = vmatmul.f32.gmra.mxu0 %v7716
    %v7845 = vpop.f32.mrf.mxu0
    %v7846 = vadd.f32 %v7781, %v7845
    %7847 = vmatmul.f32.gmra.mxu0 %v7719
    %v7848 = vpop.f32.mrf.mxu0
    %v7849 = vadd.f32 %v7784, %v7848
    %7850 = vmatmul.f32.gmra.mxu0 %v7722
    %v7851 = vpop.f32.mrf.mxu0
    %v7852 = vadd.f32 %v7787, %v7851
    %7853 = vmatmul.f32.gmra.mxu0 %v7725
    %v7854 = vpop.f32.mrf.mxu0
    %v7855 = vadd.f32 %v7790, %v7854
    %7856 = vmatmul.f32.gmra.mxu0 %v7728
    %v7857 = vpop.f32.mrf.mxu0
    %v7858 = vadd.f32 %v7793, %v7857
    %7859 = vmatmul.f32.gmra.mxu0 %v7731
    %v7860 = vpop.f32.mrf.mxu0
    %v7861 = vadd.f32 %v7796, %v7860
    %7862 = vmatmul.f32.gmra.mxu0 %v7734
    %v7863 = vpop.f32.mrf.mxu0
    %v7864 = vadd.f32 %v7799, %v7863
    %7865 = vmatmul.f32.gmra.mxu0 %v7737
    %v7866 = vpop.f32.mrf.mxu0
    %v7867 = vadd.f32 %v7802, %v7866
    %7868 = vmatmul.f32.gmra.mxu0 %v7740
    %v7869 = vpop.f32.mrf.mxu0
    %v7870 = vadd.f32 %v7805, %v7869
    %7871 = vmatmul.f32.gmra.mxu0 %v7743
    %v7872 = vpop.f32.mrf.mxu0
    %v7873 = vadd.f32 %v7808, %v7872
    %7874 = vmatmul.f32.gmra.mxu0 %v7746
    %v7875 = vpop.f32.mrf.mxu0
    %v7876 = vadd.f32 %v7811, %v7875
    %7877 = vmatmul.f32.gmra.mxu0 %v7749
    %v7878 = vpop.f32.mrf.mxu0
    %v7879 = vadd.f32 %v7814, %v7878
    %7880 = vmatmul.f32.gmra.mxu0 %v7752
    %v7881 = vpop.f32.mrf.mxu0
    %v7882 = vadd.f32 %v7817, %v7881
    %7883 = vdwg.mxu0
    %v7884 = vadd.f32 %v6723, %v7837
    %v7885 = vadd.f32 %v6726, %v7840
    %v7886 = vadd.f32 %v6729, %v7843
    %v7887 = vadd.f32 %v6732, %v7846
    %v7888 = vadd.f32 %v6735, %v7849
    %v7889 = vadd.f32 %v6738, %v7852
    %v7890 = vadd.f32 %v6741, %v7855
    %v7891 = vadd.f32 %v6744, %v7858
    %v7892 = vadd.f32 %v6747, %v7861
    %v7893 = vadd.f32 %v6750, %v7864
    %v7894 = vadd.f32 %v6753, %v7867
    %v7895 = vadd.f32 %v6756, %v7870
    %v7896 = vadd.f32 %v6759, %v7873
    %v7897 = vadd.f32 %v6762, %v7876
    %v7898 = vadd.f32 %v6765, %v7879
    %v7899 = vadd.f32 %v6768, %v7882
    %v7900 = vsel %vm6322, %v7884, -inf
    %7901 = vmax.xlane.f32.xlu0 %v7900
    %v7902 = vpop.xlane.xlu0 %7901
    %v7903 = vsel %vm6322, %v7885, -inf
    %7904 = vmax.xlane.f32.xlu0 %v7903
    %v7905 = vpop.xlane.xlu0 %7904
    %v7906 = vsel %vm6322, %v7886, -inf
    %7907 = vmax.xlane.f32.xlu0 %v7906
    %v7908 = vpop.xlane.xlu0 %7907
    %v7909 = vsel %vm6322, %v7887, -inf
    %7910 = vmax.xlane.f32.xlu0 %v7909
    %v7911 = vpop.xlane.xlu0 %7910
    %v7912 = vsel %vm6322, %v7888, -inf
    %7913 = vmax.xlane.f32.xlu0 %v7912
    %v7914 = vpop.xlane.xlu0 %7913
    %v7915 = vsel %vm6322, %v7889, -inf
    %7916 = vmax.xlane.f32.xlu0 %v7915
    %v7917 = vpop.xlane.xlu0 %7916
    %v7918 = vsel %vm6322, %v7890, -inf
    %7919 = vmax.xlane.f32.xlu0 %v7918
    %v7920 = vpop.xlane.xlu0 %7919
    %v7921 = vsel %vm6322, %v7891, -inf
    %7922 = vmax.xlane.f32.xlu0 %v7921
    %v7923 = vpop.xlane.xlu0 %7922
    %v7924 = vsel %vm6322, %v7892, -inf
    %7925 = vmax.xlane.f32.xlu0 %v7924
    %v7926 = vpop.xlane.xlu0 %7925
    %v7927 = vsel %vm6322, %v7893, -inf
    %7928 = vmax.xlane.f32.xlu0 %v7927
    %v7929 = vpop.xlane.xlu0 %7928
    %v7930 = vsel %vm6322, %v7894, -inf
    %7931 = vmax.xlane.f32.xlu0 %v7930
    %v7932 = vpop.xlane.xlu0 %7931
    %v7933 = vsel %vm6322, %v7895, -inf
    %7934 = vmax.xlane.f32.xlu0 %v7933
    %v7935 = vpop.xlane.xlu0 %7934
    %v7936 = vsel %vm6322, %v7896, -inf
    %7937 = vmax.xlane.f32.xlu0 %v7936
    %v7938 = vpop.xlane.xlu0 %7937
    %v7939 = vsel %vm6322, %v7897, -inf
    %7940 = vmax.xlane.f32.xlu0 %v7939
    %v7941 = vpop.xlane.xlu0 %7940
    %v7942 = vsel %vm6322, %v7898, -inf
    %7943 = vmax.xlane.f32.xlu0 %v7942
    %v7944 = vpop.xlane.xlu0 %7943
    %v7945 = vsel %vm6322, %v7899, -inf
    %7946 = vmax.xlane.f32.xlu0 %v7945
    %v7947 = vpop.xlane.xlu0 %7946
    %v7948 = vsub.f32 %v7884, %v7902
    %v7949 = vsub.f32 %v7885, %v7905
    %v7950 = vsub.f32 %v7886, %v7908
    %v7951 = vsub.f32 %v7887, %v7911
    %v7952 = vsub.f32 %v7888, %v7914
    %v7953 = vsub.f32 %v7889, %v7917
    %v7954 = vsub.f32 %v7890, %v7920
    %v7955 = vsub.f32 %v7891, %v7923
    %v7956 = vsub.f32 %v7892, %v7926
    %v7957 = vsub.f32 %v7893, %v7929
    %v7958 = vsub.f32 %v7894, %v7932
    %v7959 = vsub.f32 %v7895, %v7935
    %v7960 = vsub.f32 %v7896, %v7938
    %v7961 = vsub.f32 %v7897, %v7941
    %v7962 = vsub.f32 %v7898, %v7944
    %v7963 = vsub.f32 %v7899, %v7947
    %v7964 = vmul.f32 %v7948, 1.442695
    %v7965 = vpow.pop %v7964
    %v7966 = vmul.f32 %v7949, 1.442695
    %v7967 = vpow.pop %v7966
    %v7968 = vmul.f32 %v7950, 1.442695
    %v7969 = vpow.pop %v7968
    %v7970 = vmul.f32 %v7951, 1.442695
    %v7971 = vpow.pop %v7970
    %v7972 = vmul.f32 %v7952, 1.442695
    %v7973 = vpow.pop %v7972
    %v7974 = vmul.f32 %v7953, 1.442695
    %v7975 = vpow.pop %v7974
    %v7976 = vmul.f32 %v7954, 1.442695
    %v7977 = vpow.pop %v7976
    %v7978 = vmul.f32 %v7955, 1.442695
    %v7979 = vpow.pop %v7978
    %v7980 = vmul.f32 %v7956, 1.442695
    %v7981 = vpow.pop %v7980
    %v7982 = vmul.f32 %v7957, 1.442695
    %v7983 = vpow.pop %v7982
    %v7984 = vmul.f32 %v7958, 1.442695
    %v7985 = vpow.pop %v7984
    %v7986 = vmul.f32 %v7959, 1.442695
    %v7987 = vpow.pop %v7986
    %v7988 = vmul.f32 %v7960, 1.442695
    %v7989 = vpow.pop %v7988
    %v7990 = vmul.f32 %v7961, 1.442695
    %v7991 = vpow.pop %v7990
    %v7992 = vmul.f32 %v7962, 1.442695
    %v7993 = vpow.pop %v7992
    %v7994 = vmul.f32 %v7963, 1.442695
    %v7995 = vpow.pop %v7994
    %v7996 = vsel %vm6322, %v7965, 0.0
    %7997 = vadd.xlane.f32.xlu0 %v7996
    %v7998 = vpop.xlane.xlu0 %7997
    %v7999 = vsel %vm6322, %v7967, 0.0
    %8000 = vadd.xlane.f32.xlu0 %v7999
    %v8001 = vpop.xlane.xlu0 %8000
    %v8002 = vsel %vm6322, %v7969, 0.0
    %8003 = vadd.xlane.f32.xlu0 %v8002
    %v8004 = vpop.xlane.xlu0 %8003
    %v8005 = vsel %vm6322, %v7971, 0.0
    %8006 = vadd.xlane.f32.xlu0 %v8005
    %v8007 = vpop.xlane.xlu0 %8006
    %v8008 = vsel %vm6322, %v7973, 0.0
    %8009 = vadd.xlane.f32.xlu0 %v8008
    %v8010 = vpop.xlane.xlu0 %8009
    %v8011 = vsel %vm6322, %v7975, 0.0
    %8012 = vadd.xlane.f32.xlu0 %v8011
    %v8013 = vpop.xlane.xlu0 %8012
    %v8014 = vsel %vm6322, %v7977, 0.0
    %8015 = vadd.xlane.f32.xlu0 %v8014
    %v8016 = vpop.xlane.xlu0 %8015
    %v8017 = vsel %vm6322, %v7979, 0.0
    %8018 = vadd.xlane.f32.xlu0 %v8017
    %v8019 = vpop.xlane.xlu0 %8018
    %v8020 = vsel %vm6322, %v7981, 0.0
    %8021 = vadd.xlane.f32.xlu0 %v8020
    %v8022 = vpop.xlane.xlu0 %8021
    %v8023 = vsel %vm6322, %v7983, 0.0
    %8024 = vadd.xlane.f32.xlu0 %v8023
    %v8025 = vpop.xlane.xlu0 %8024
    %v8026 = vsel %vm6322, %v7985, 0.0
    %8027 = vadd.xlane.f32.xlu0 %v8026
    %v8028 = vpop.xlane.xlu0 %8027
    %v8029 = vsel %vm6322, %v7987, 0.0
    %8030 = vadd.xlane.f32.xlu0 %v8029
    %v8031 = vpop.xlane.xlu0 %8030
    %v8032 = vsel %vm6322, %v7989, 0.0
    %8033 = vadd.xlane.f32.xlu0 %v8032
    %v8034 = vpop.xlane.xlu0 %8033
    %v8035 = vsel %vm6322, %v7991, 0.0
    %8036 = vadd.xlane.f32.xlu0 %v8035
    %v8037 = vpop.xlane.xlu0 %8036
    %v8038 = vsel %vm6322, %v7993, 0.0
    %8039 = vadd.xlane.f32.xlu0 %v8038
    %v8040 = vpop.xlane.xlu0 %8039
    %v8041 = vsel %vm6322, %v7995, 0.0
    %8042 = vadd.xlane.f32.xlu0 %v8041
    %v8043 = vpop.xlane.xlu0 %8042
    %v8044 = vrcp.pop %v7998
    %v8045 = vmul.f32 %v7998, %v8044
    %v8046 = vsub.f32 1.0, %v8045
    %v8047 = vmul.f32 %v8044, %v8046
    %v8048 = vadd.f32 %v8044, %v8047
    %vm8049 = vweird.f32 %v7998
    %vm8050 = vweird.f32 %v8044
    %vm8051 = vmor %vm8049, %vm8050
    %v8052 = vsel %vm8051, %v8044, %v8048
    %v8053 = vand.u32 2147483647, %v7998
    %vm8054 = vcmp.eq.f32.partialorder %v8053, 8.507059e+37
    %v8055 = vand.u32 %v7998, 2147483648
    %v8056 = vor.u32 1.1754944e-38, %v8055
    %v8057 = vsel %vm8054, %v8056, %v8052
    %v8058 = vmul.f32 %v7965, %v8057
    %v8059 = vrcp.pop %v8001
    %v8060 = vmul.f32 %v8001, %v8059
    %v8061 = vsub.f32 1.0, %v8060
    %v8062 = vmul.f32 %v8059, %v8061
    %v8063 = vadd.f32 %v8059, %v8062
    %vm8064 = vweird.f32 %v8001
    %vm8065 = vweird.f32 %v8059
    %vm8066 = vmor %vm8064, %vm8065
    %v8067 = vsel %vm8066, %v8059, %v8063
    %v8068 = vand.u32 2147483647, %v8001
    %vm8069 = vcmp.eq.f32.partialorder %v8068, 8.507059e+37
    %v8070 = vand.u32 %v8001, 2147483648
    %v8071 = vor.u32 1.1754944e-38, %v8070
    %v8072 = vsel %vm8069, %v8071, %v8067
    %v8073 = vmul.f32 %v7967, %v8072
    %v8074 = vrcp.pop %v8004
    %v8075 = vmul.f32 %v8004, %v8074
    %v8076 = vsub.f32 1.0, %v8075
    %v8077 = vmul.f32 %v8074, %v8076
    %v8078 = vadd.f32 %v8074, %v8077
    %vm8079 = vweird.f32 %v8004
    %vm8080 = vweird.f32 %v8074
    %vm8081 = vmor %vm8079, %vm8080
    %v8082 = vsel %vm8081, %v8074, %v8078
    %v8083 = vand.u32 2147483647, %v8004
    %vm8084 = vcmp.eq.f32.partialorder %v8083, 8.507059e+37
    %v8085 = vand.u32 %v8004, 2147483648
    %v8086 = vor.u32 1.1754944e-38, %v8085
    %v8087 = vsel %vm8084, %v8086, %v8082
    %v8088 = vmul.f32 %v7969, %v8087
    %v8089 = vrcp.pop %v8007
    %v8090 = vmul.f32 %v8007, %v8089
    %v8091 = vsub.f32 1.0, %v8090
    %v8092 = vmul.f32 %v8089, %v8091
    %v8093 = vadd.f32 %v8089, %v8092
    %vm8094 = vweird.f32 %v8007
    %vm8095 = vweird.f32 %v8089
    %vm8096 = vmor %vm8094, %vm8095
    %v8097 = vsel %vm8096, %v8089, %v8093
    %v8098 = vand.u32 2147483647, %v8007
    %vm8099 = vcmp.eq.f32.partialorder %v8098, 8.507059e+37
    %v8100 = vand.u32 %v8007, 2147483648
    %v8101 = vor.u32 1.1754944e-38, %v8100
    %v8102 = vsel %vm8099, %v8101, %v8097
    %v8103 = vmul.f32 %v7971, %v8102
    %v8104 = vrcp.pop %v8010
    %v8105 = vmul.f32 %v8010, %v8104
    %v8106 = vsub.f32 1.0, %v8105
    %v8107 = vmul.f32 %v8104, %v8106
    %v8108 = vadd.f32 %v8104, %v8107
    %vm8109 = vweird.f32 %v8010
    %vm8110 = vweird.f32 %v8104
    %vm8111 = vmor %vm8109, %vm8110
    %v8112 = vsel %vm8111, %v8104, %v8108
    %v8113 = vand.u32 2147483647, %v8010
    %vm8114 = vcmp.eq.f32.partialorder %v8113, 8.507059e+37
    %v8115 = vand.u32 %v8010, 2147483648
    %v8116 = vor.u32 1.1754944e-38, %v8115
    %v8117 = vsel %vm8114, %v8116, %v8112
    %v8118 = vmul.f32 %v7973, %v8117
    %v8119 = vrcp.pop %v8013
    %v8120 = vmul.f32 %v8013, %v8119
    %v8121 = vsub.f32 1.0, %v8120
    %v8122 = vmul.f32 %v8119, %v8121
    %v8123 = vadd.f32 %v8119, %v8122
    %vm8124 = vweird.f32 %v8013
    %vm8125 = vweird.f32 %v8119
    %vm8126 = vmor %vm8124, %vm8125
    %v8127 = vsel %vm8126, %v8119, %v8123
    %v8128 = vand.u32 2147483647, %v8013
    %vm8129 = vcmp.eq.f32.partialorder %v8128, 8.507059e+37
    %v8130 = vand.u32 %v8013, 2147483648
    %v8131 = vor.u32 1.1754944e-38, %v8130
    %v8132 = vsel %vm8129, %v8131, %v8127
    %v8133 = vmul.f32 %v7975, %v8132
    %v8134 = vrcp.pop %v8016
    %v8135 = vmul.f32 %v8016, %v8134
    %v8136 = vsub.f32 1.0, %v8135
    %v8137 = vmul.f32 %v8134, %v8136
    %v8138 = vadd.f32 %v8134, %v8137
    %vm8139 = vweird.f32 %v8016
    %vm8140 = vweird.f32 %v8134
    %vm8141 = vmor %vm8139, %vm8140
    %v8142 = vsel %vm8141, %v8134, %v8138
    %v8143 = vand.u32 2147483647, %v8016
    %vm8144 = vcmp.eq.f32.partialorder %v8143, 8.507059e+37
    %v8145 = vand.u32 %v8016, 2147483648
    %v8146 = vor.u32 1.1754944e-38, %v8145
    %v8147 = vsel %vm8144, %v8146, %v8142
    %v8148 = vmul.f32 %v7977, %v8147
    %v8149 = vrcp.pop %v8019
    %v8150 = vmul.f32 %v8019, %v8149
    %v8151 = vsub.f32 1.0, %v8150
    %v8152 = vmul.f32 %v8149, %v8151
    %v8153 = vadd.f32 %v8149, %v8152
    %vm8154 = vweird.f32 %v8019
    %vm8155 = vweird.f32 %v8149
    %vm8156 = vmor %vm8154, %vm8155
    %v8157 = vsel %vm8156, %v8149, %v8153
    %v8158 = vand.u32 2147483647, %v8019
    %vm8159 = vcmp.eq.f32.partialorder %v8158, 8.507059e+37
    %v8160 = vand.u32 %v8019, 2147483648
    %v8161 = vor.u32 1.1754944e-38, %v8160
    %v8162 = vsel %vm8159, %v8161, %v8157
    %v8163 = vmul.f32 %v7979, %v8162
    %v8164 = vrcp.pop %v8022
    %v8165 = vmul.f32 %v8022, %v8164
    %v8166 = vsub.f32 1.0, %v8165
    %v8167 = vmul.f32 %v8164, %v8166
    %v8168 = vadd.f32 %v8164, %v8167
    %vm8169 = vweird.f32 %v8022
    %vm8170 = vweird.f32 %v8164
    %vm8171 = vmor %vm8169, %vm8170
    %v8172 = vsel %vm8171, %v8164, %v8168
    %v8173 = vand.u32 2147483647, %v8022
    %vm8174 = vcmp.eq.f32.partialorder %v8173, 8.507059e+37
    %v8175 = vand.u32 %v8022, 2147483648
    %v8176 = vor.u32 1.1754944e-38, %v8175
    %v8177 = vsel %vm8174, %v8176, %v8172
    %v8178 = vmul.f32 %v7981, %v8177
    %v8179 = vrcp.pop %v8025
    %v8180 = vmul.f32 %v8025, %v8179
    %v8181 = vsub.f32 1.0, %v8180
    %v8182 = vmul.f32 %v8179, %v8181
    %v8183 = vadd.f32 %v8179, %v8182
    %vm8184 = vweird.f32 %v8025
    %vm8185 = vweird.f32 %v8179
    %vm8186 = vmor %vm8184, %vm8185
    %v8187 = vsel %vm8186, %v8179, %v8183
    %v8188 = vand.u32 2147483647, %v8025
    %vm8189 = vcmp.eq.f32.partialorder %v8188, 8.507059e+37
    %v8190 = vand.u32 %v8025, 2147483648
    %v8191 = vor.u32 1.1754944e-38, %v8190
    %v8192 = vsel %vm8189, %v8191, %v8187
    %v8193 = vmul.f32 %v7983, %v8192
    %v8194 = vrcp.pop %v8028
    %v8195 = vmul.f32 %v8028, %v8194
    %v8196 = vsub.f32 1.0, %v8195
    %v8197 = vmul.f32 %v8194, %v8196
    %v8198 = vadd.f32 %v8194, %v8197
    %vm8199 = vweird.f32 %v8028
    %vm8200 = vweird.f32 %v8194
    %vm8201 = vmor %vm8199, %vm8200
    %v8202 = vsel %vm8201, %v8194, %v8198
    %v8203 = vand.u32 2147483647, %v8028
    %vm8204 = vcmp.eq.f32.partialorder %v8203, 8.507059e+37
    %v8205 = vand.u32 %v8028, 2147483648
    %v8206 = vor.u32 1.1754944e-38, %v8205
    %v8207 = vsel %vm8204, %v8206, %v8202
    %v8208 = vmul.f32 %v7985, %v8207
    %v8209 = vrcp.pop %v8031
    %v8210 = vmul.f32 %v8031, %v8209
    %v8211 = vsub.f32 1.0, %v8210
    %v8212 = vmul.f32 %v8209, %v8211
    %v8213 = vadd.f32 %v8209, %v8212
    %vm8214 = vweird.f32 %v8031
    %vm8215 = vweird.f32 %v8209
    %vm8216 = vmor %vm8214, %vm8215
    %v8217 = vsel %vm8216, %v8209, %v8213
    %v8218 = vand.u32 2147483647, %v8031
    %vm8219 = vcmp.eq.f32.partialorder %v8218, 8.507059e+37
    %v8220 = vand.u32 %v8031, 2147483648
    %v8221 = vor.u32 1.1754944e-38, %v8220
    %v8222 = vsel %vm8219, %v8221, %v8217
    %v8223 = vmul.f32 %v7987, %v8222
    %v8224 = vrcp.pop %v8034
    %v8225 = vmul.f32 %v8034, %v8224
    %v8226 = vsub.f32 1.0, %v8225
    %v8227 = vmul.f32 %v8224, %v8226
    %v8228 = vadd.f32 %v8224, %v8227
    %vm8229 = vweird.f32 %v8034
    %vm8230 = vweird.f32 %v8224
    %vm8231 = vmor %vm8229, %vm8230
    %v8232 = vsel %vm8231, %v8224, %v8228
    %v8233 = vand.u32 2147483647, %v8034
    %vm8234 = vcmp.eq.f32.partialorder %v8233, 8.507059e+37
    %v8235 = vand.u32 %v8034, 2147483648
    %v8236 = vor.u32 1.1754944e-38, %v8235
    %v8237 = vsel %vm8234, %v8236, %v8232
    %v8238 = vmul.f32 %v7989, %v8237
    %v8239 = vrcp.pop %v8037
    %v8240 = vmul.f32 %v8037, %v8239
    %v8241 = vsub.f32 1.0, %v8240
    %v8242 = vmul.f32 %v8239, %v8241
    %v8243 = vadd.f32 %v8239, %v8242
    %vm8244 = vweird.f32 %v8037
    %vm8245 = vweird.f32 %v8239
    %vm8246 = vmor %vm8244, %vm8245
    %v8247 = vsel %vm8246, %v8239, %v8243
    %v8248 = vand.u32 2147483647, %v8037
    %vm8249 = vcmp.eq.f32.partialorder %v8248, 8.507059e+37
    %v8250 = vand.u32 %v8037, 2147483648
    %v8251 = vor.u32 1.1754944e-38, %v8250
    %v8252 = vsel %vm8249, %v8251, %v8247
    %v8253 = vmul.f32 %v7991, %v8252
    %v8254 = vrcp.pop %v8040
    %v8255 = vmul.f32 %v8040, %v8254
    %v8256 = vsub.f32 1.0, %v8255
    %v8257 = vmul.f32 %v8254, %v8256
    %v8258 = vadd.f32 %v8254, %v8257
    %vm8259 = vweird.f32 %v8040
    %vm8260 = vweird.f32 %v8254
    %vm8261 = vmor %vm8259, %vm8260
    %v8262 = vsel %vm8261, %v8254, %v8258
    %v8263 = vand.u32 2147483647, %v8040
    %vm8264 = vcmp.eq.f32.partialorder %v8263, 8.507059e+37
    %v8265 = vand.u32 %v8040, 2147483648
    %v8266 = vor.u32 1.1754944e-38, %v8265
    %v8267 = vsel %vm8264, %v8266, %v8262
    %v8268 = vmul.f32 %v7993, %v8267
    %v8269 = vrcp.pop %v8043
    %v8270 = vmul.f32 %v8043, %v8269
    %v8271 = vsub.f32 1.0, %v8270
    %v8272 = vmul.f32 %v8269, %v8271
    %v8273 = vadd.f32 %v8269, %v8272
    %vm8274 = vweird.f32 %v8043
    %vm8275 = vweird.f32 %v8269
    %vm8276 = vmor %vm8274, %vm8275
    %v8277 = vsel %vm8276, %v8269, %v8273
    %v8278 = vand.u32 2147483647, %v8043
    %vm8279 = vcmp.eq.f32.partialorder %v8278, 8.507059e+37
    %v8280 = vand.u32 %v8043, 2147483648
    %v8281 = vor.u32 1.1754944e-38, %v8280
    %v8282 = vsel %vm8279, %v8281, %v8277
    %v8283 = vmul.f32 %v7995, %v8282
    %v8285 = vsel %vm6322, %v8058, 0
    %v8288 = vsel %vm6322, %v8073, 0
    %v8291 = vsel %vm6322, %v8088, 0
    %v8294 = vsel %vm6322, %v8103, 0
    %v8297 = vsel %vm6322, %v8118, 0
    %v8300 = vsel %vm6322, %v8133, 0
    %v8303 = vsel %vm6322, %v8148, 0
    %v8306 = vsel %vm6322, %v8163, 0
    %v8309 = vsel %vm6322, %v8178, 0
    %v8312 = vsel %vm6322, %v8193, 0
    %v8315 = vsel %vm6322, %v8208, 0
    %v8318 = vsel %vm6322, %v8223, 0
    %v8321 = vsel %vm6322, %v8238, 0
    %v8324 = vsel %vm6322, %v8253, 0
    %v8327 = vsel %vm6322, %v8268, 0
    %v8330 = vsel %vm6322, %v8283, 0
    %8332 = vmatpush.msra.mxu0 0.0
    %8333 = vmatpush.msra.mxu0 0.0
    %8334 = vmatpush.msra.mxu0 0.0
    %8335 = vmatpush.msra.mxu0 0.0
    %8336 = vmatpush.msra.mxu0 0.0
    %8337 = vmatpush.msra.mxu0 0.0
    %8338 = vmatpush.msra.mxu0 0.0
    %8339 = vmatpush.msra.mxu0 0.0
    %8340 = vmatpush.msra.mxu0 0.0
    %8341 = vmatpush.msra.mxu0 0.0
    %8342 = vmatpush.msra.mxu0 0.0
    %8343 = vmatpush.msra.mxu0 0.0
    %8344 = vmatpush.msra.mxu0 0.0
    %8345 = vmatpush.msra.mxu0 0.0
    %8346 = vmatpush.msra.mxu0 %v6328
    %8347 = vmatpush.msra.mxu0 %v6150
    %8348 = vmatmul.f32.gmra.mxu0 %v8285
    %v8349 = vpop.f32.mrf.mxu0
    %v8350 = vadd.f32 0.0, %v8349
    %8351 = vmatmul.f32.gmra.mxu0 %v8288
    %v8352 = vpop.f32.mrf.mxu0
    %v8353 = vadd.f32 0.0, %v8352
    %8354 = vmatmul.f32.gmra.mxu0 %v8291
    %v8355 = vpop.f32.mrf.mxu0
    %v8356 = vadd.f32 0.0, %v8355
    %8357 = vmatmul.f32.gmra.mxu0 %v8294
    %v8358 = vpop.f32.mrf.mxu0
    %v8359 = vadd.f32 0.0, %v8358
    %8360 = vmatmul.f32.gmra.mxu0 %v8297
    %v8361 = vpop.f32.mrf.mxu0
    %v8362 = vadd.f32 0.0, %v8361
    %8363 = vmatmul.f32.gmra.mxu0 %v8300
    %v8364 = vpop.f32.mrf.mxu0
    %v8365 = vadd.f32 0.0, %v8364
    %8366 = vmatmul.f32.gmra.mxu0 %v8303
    %v8367 = vpop.f32.mrf.mxu0
    %v8368 = vadd.f32 0.0, %v8367
    %8369 = vmatmul.f32.gmra.mxu0 %v8306
    %v8370 = vpop.f32.mrf.mxu0
    %v8371 = vadd.f32 0.0, %v8370
    %8372 = vmatmul.f32.gmra.mxu0 %v8309
    %v8373 = vpop.f32.mrf.mxu0
    %v8374 = vadd.f32 0.0, %v8373
    %8375 = vmatmul.f32.gmra.mxu0 %v8312
    %v8376 = vpop.f32.mrf.mxu0
    %v8377 = vadd.f32 0.0, %v8376
    %8378 = vmatmul.f32.gmra.mxu0 %v8315
    %v8379 = vpop.f32.mrf.mxu0
    %v8380 = vadd.f32 0.0, %v8379
    %8381 = vmatmul.f32.gmra.mxu0 %v8318
    %v8382 = vpop.f32.mrf.mxu0
    %v8383 = vadd.f32 0.0, %v8382
    %8384 = vmatmul.f32.gmra.mxu0 %v8321
    %v8385 = vpop.f32.mrf.mxu0
    %v8386 = vadd.f32 0.0, %v8385
    %8387 = vmatmul.f32.gmra.mxu0 %v8324
    %v8388 = vpop.f32.mrf.mxu0
    %v8389 = vadd.f32 0.0, %v8388
    %8390 = vmatmul.f32.gmra.mxu0 %v8327
    %v8391 = vpop.f32.mrf.mxu0
    %v8392 = vadd.f32 0.0, %v8391
    %8393 = vmatmul.f32.gmra.mxu0 %v8330
    %v8394 = vpop.f32.mrf.mxu0
    %v8395 = vadd.f32 0.0, %v8394
    %8396 = vdwg.mxu0
    %8397 = vmatpush.msra.mxu0 0.0
    %8398 = vmatpush.msra.mxu0 0.0
    %8399 = vmatpush.msra.mxu0 0.0
    %8400 = vmatpush.msra.mxu0 0.0
    %8401 = vmatpush.msra.mxu0 0.0
    %8402 = vmatpush.msra.mxu0 0.0
    %8403 = vmatpush.msra.mxu0 0.0
    %8404 = vmatpush.msra.mxu0 0.0
    %8405 = vmatpush.msra.mxu0 0.0
    %8406 = vmatpush.msra.mxu0 0.0
    %8407 = vmatpush.msra.mxu0 0.0
    %8408 = vmatpush.msra.mxu0 0.0
    %8409 = vmatpush.msra.mxu0 0.0
    %8410 = vmatpush.msra.mxu0 0.0
    %8411 = vmatpush.msra.mxu0 %v6331
    %8412 = vmatpush.msra.mxu0 %v6151
    %8413 = vmatmul.f32.gmra.mxu0 %v8285
    %v8414 = vpop.f32.mrf.mxu0
    %v8415 = vadd.f32 0.0, %v8414
    %8416 = vmatmul.f32.gmra.mxu0 %v8288
    %v8417 = vpop.f32.mrf.mxu0
    %v8418 = vadd.f32 0.0, %v8417
    %8419 = vmatmul.f32.gmra.mxu0 %v8291
    %v8420 = vpop.f32.mrf.mxu0
    %v8421 = vadd.f32 0.0, %v8420
    %8422 = vmatmul.f32.gmra.mxu0 %v8294
    %v8423 = vpop.f32.mrf.mxu0
    %v8424 = vadd.f32 0.0, %v8423
    %8425 = vmatmul.f32.gmra.mxu0 %v8297
    %v8426 = vpop.f32.mrf.mxu0
    %v8427 = vadd.f32 0.0, %v8426
    %8428 = vmatmul.f32.gmra.mxu0 %v8300
    %v8429 = vpop.f32.mrf.mxu0
    %v8430 = vadd.f32 0.0, %v8429
    %8431 = vmatmul.f32.gmra.mxu0 %v8303
    %v8432 = vpop.f32.mrf.mxu0
    %v8433 = vadd.f32 0.0, %v8432
    %8434 = vmatmul.f32.gmra.mxu0 %v8306
    %v8435 = vpop.f32.mrf.mxu0
    %v8436 = vadd.f32 0.0, %v8435
    %8437 = vmatmul.f32.gmra.mxu0 %v8309
    %v8438 = vpop.f32.mrf.mxu0
    %v8439 = vadd.f32 0.0, %v8438
    %8440 = vmatmul.f32.gmra.mxu0 %v8312
    %v8441 = vpop.f32.mrf.mxu0
    %v8442 = vadd.f32 0.0, %v8441
    %8443 = vmatmul.f32.gmra.mxu0 %v8315
    %v8444 = vpop.f32.mrf.mxu0
    %v8445 = vadd.f32 0.0, %v8444
    %8446 = vmatmul.f32.gmra.mxu0 %v8318
    %v8447 = vpop.f32.mrf.mxu0
    %v8448 = vadd.f32 0.0, %v8447
    %8449 = vmatmul.f32.gmra.mxu0 %v8321
    %v8450 = vpop.f32.mrf.mxu0
    %v8451 = vadd.f32 0.0, %v8450
    %8452 = vmatmul.f32.gmra.mxu0 %v8324
    %v8453 = vpop.f32.mrf.mxu0
    %v8454 = vadd.f32 0.0, %v8453
    %8455 = vmatmul.f32.gmra.mxu0 %v8327
    %v8456 = vpop.f32.mrf.mxu0
    %v8457 = vadd.f32 0.0, %v8456
    %8458 = vmatmul.f32.gmra.mxu0 %v8330
    %v8459 = vpop.f32.mrf.mxu0
    %v8460 = vadd.f32 0.0, %v8459
    %8461 = vdwg.mxu0
    %v8462 = vmul.f32 %v8350, %v5614
    %v8463 = vmul.f32 %v8415, %v5615
    %v8464 = vmul.f32 %v8353, %v5616
    %v8465 = vmul.f32 %v8418, %v5617
    %v8466 = vmul.f32 %v8356, %v5618
    %v8467 = vmul.f32 %v8421, %v5619
    %v8468 = vmul.f32 %v8359, %v5620
    %v8469 = vmul.f32 %v8424, %v5621
    %v8470 = vmul.f32 %v8362, %v5622
    %v8471 = vmul.f32 %v8427, %v5623
    %v8472 = vmul.f32 %v8365, %v5624
    %v8473 = vmul.f32 %v8430, %v5625
    %v8474 = vmul.f32 %v8368, %v5626
    %v8475 = vmul.f32 %v8433, %v5627
    %v8476 = vmul.f32 %v8371, %v5628
    %v8477 = vmul.f32 %v8436, %v5629
    %v8478 = vmul.f32 %v8374, %v6134
    %v8479 = vmul.f32 %v8439, %v6135
    %v8480 = vmul.f32 %v8377, %v6136
    %v8481 = vmul.f32 %v8442, %v6137
    %v8482 = vmul.f32 %v8380, %v6138
    %v8483 = vmul.f32 %v8445, %v6139
    %v8484 = vmul.f32 %v8383, %v6140
    %v8485 = vmul.f32 %v8448, %v6141
    %v8486 = vmul.f32 %v8386, %v6142
    %v8487 = vmul.f32 %v8451, %v6143
    %v8488 = vmul.f32 %v8389, %v6144
    %v8489 = vmul.f32 %v8454, %v6145
    %v8490 = vmul.f32 %v8392, %v6146
    %v8491 = vmul.f32 %v8457, %v6147
    %v8492 = vmul.f32 %v8395, %v6148
    %v8493 = vmul.f32 %v8460, %v6149
    %8494 = vmatpush.msra.mxu0 %v8492
    %8495 = vmatpush.msra.mxu0 %v8490
    %8496 = vmatpush.msra.mxu0 %v8488
    %8497 = vmatpush.msra.mxu0 %v8486
    %8498 = vmatpush.msra.mxu0 %v8484
    %8499 = vmatpush.msra.mxu0 %v8482
    %8500 = vmatpush.msra.mxu0 %v8480
    %8501 = vmatpush.msra.mxu0 %v8478
    %8502 = vmatpush.msra.mxu0 %v8476
    %8503 = vmatpush.msra.mxu0 %v8474
    %8504 = vmatpush.msra.mxu0 %v8472
    %8505 = vmatpush.msra.mxu0 %v8470
    %8506 = vmatpush.msra.mxu0 %v8468
    %8507 = vmatpush.msra.mxu0 %v8466
    %8508 = vmatpush.msra.mxu0 %v8464
    %8509 = vmatpush.msra.mxu0 %v8462
    %8510 = vmatmul.f32.gmra.mxu0 %v6190
    %v8511 = vpop.f32.mrf.mxu0
    %v8512 = vadd.f32 0.0, %v8511
    %8513 = vdwg.mxu0
    %8514 = vmatpush.msra.mxu0 %v8493
    %8515 = vmatpush.msra.mxu0 %v8491
    %8516 = vmatpush.msra.mxu0 %v8489
    %8517 = vmatpush.msra.mxu0 %v8487
    %8518 = vmatpush.msra.mxu0 %v8485
    %8519 = vmatpush.msra.mxu0 %v8483
    %8520 = vmatpush.msra.mxu0 %v8481
    %8521 = vmatpush.msra.mxu0 %v8479
    %8522 = vmatpush.msra.mxu0 %v8477
    %8523 = vmatpush.msra.mxu0 %v8475
    %8524 = vmatpush.msra.mxu0 %v8473
    %8525 = vmatpush.msra.mxu0 %v8471
    %8526 = vmatpush.msra.mxu0 %v8469
    %8527 = vmatpush.msra.mxu0 %v8467
    %8528 = vmatpush.msra.mxu0 %v8465
    %8529 = vmatpush.msra.mxu0 %v8463
    %8530 = vmatmul.f32.gmra.mxu0 %v6190
    %v8531 = vpop.f32.mrf.mxu0
    %v8532 = vadd.f32 0.0, %v8531
    %8533 = vdwg.mxu0
    %v8534 = vmul.f32 %v8512, %v8512
    %v8535 = vmul.f32 %v8532, %v8532
    %v8537 = vsel %vm1354, %v8535, 0
    %8539 = vmatpush.msra.mxu0 %v6169
    %8540 = vmatpush.msra.mxu0 %v6168
    %8541 = vmatpush.msra.mxu0 %v6167
    %8542 = vmatpush.msra.mxu0 %v6166
    %8543 = vmatpush.msra.mxu0 %v6165
    %8544 = vmatpush.msra.mxu0 %v6164
    %8545 = vmatpush.msra.mxu0 %v6163
    %8546 = vmatpush.msra.mxu0 %v6162
    %8547 = vmatpush.msra.mxu0 %v6161
    %8548 = vmatpush.msra.mxu0 %v6160
    %8549 = vmatpush.msra.mxu0 %v6159
    %8550 = vmatpush.msra.mxu0 %v6158
    %8551 = vmatpush.msra.mxu0 %v6157
    %8552 = vmatpush.msra.mxu0 %v6156
    %8553 = vmatpush.msra.mxu0 %v6155
    %8554 = vmatpush.msra.mxu0 %v6154
    %8555 = vmatmul.f32.gmra.mxu0 %v8534
    %v8556 = vpop.f32.mrf.mxu0
    %v8557 = vadd.f32 0.0, %v8556
    %8558 = vdwg.mxu0
    %8559 = vmatpush.msra.mxu0 0.0
    %8560 = vmatpush.msra.mxu0 0.0
    %8561 = vmatpush.msra.mxu0 0.0
    %8562 = vmatpush.msra.mxu0 0.0
    %8563 = vmatpush.msra.mxu0 0.0
    %8564 = vmatpush.msra.mxu0 0.0
    %8565 = vmatpush.msra.mxu0 0.0
    %8566 = vmatpush.msra.mxu0 0.0
    %8567 = vmatpush.msra.mxu0 0.0
    %8568 = vmatpush.msra.mxu0 0.0
    %8569 = vmatpush.msra.mxu0 0.0
    %8570 = vmatpush.msra.mxu0 0.0
    %8571 = vmatpush.msra.mxu0 %v6173
    %8572 = vmatpush.msra.mxu0 %v6172
    %8573 = vmatpush.msra.mxu0 %v6171
    %8574 = vmatpush.msra.mxu0 %v6170
    %8575 = vmatmul.f32.gmra.mxu0 %v8537
    %v8576 = vpop.f32.mrf.mxu0
    %v8577 = vadd.f32 %v8557, %v8576
    %8578 = vdwg.mxu0
    %v8579 = vadd.f32 %v8577, 1.0
    %v8580 = vrcp.pop %v8579
    %v8581 = vmul.f32 %v8579, %v8580
    %v8582 = vsub.f32 1.0, %v8581
    %v8583 = vmul.f32 %v8580, %v8582
    %v8584 = vadd.f32 %v8580, %v8583
    %vm8585 = vweird.f32 %v8579
    %vm8586 = vweird.f32 %v8580
    %vm8587 = vmor %vm8585, %vm8586
    %v8588 = vsel %vm8587, %v8580, %v8584
    %v8589 = vand.u32 2147483647, %v8579
    %vm8590 = vcmp.eq.f32.partialorder %v8589, 8.507059e+37
    %v8591 = vand.u32 %v8579, 2147483648
    %v8592 = vor.u32 1.1754944e-38, %v8591
    %v8593 = vsel %vm8590, %v8592, %v8588
    %v8594 = vmul.f32 %v8577, %v8593
    %v8595 = vadd.f32 %v8577, 1e-08
    %v8596 = vrsqrt.pop %v8595
    %v8597 = vmul.f32 %v8596, %v8595
    %v8598 = vmul.f32 %v8597, %v8596
    %v8599 = vmul.f32 0.5, %v8598
    %v8600 = vsub.f32 1.5, %v8599
    %v8601 = vmul.f32 %v8596, %v8600
    %v8602 = vmul.f32 %v8595, %v8601
    %vm8603 = vcmp.eq.f32.partialorder %v8595, inf
    %v8604 = vsel %vm8603, %v8595, %v8602
    %vm8605 = vcmp.eq.f32.partialorder %v8595, 0.0
    %v8606 = vand.u32 %v8595, 2147483648
    %v8607 = vsel %vm8605, %v8606, %v8604
    %v8608 = vrcp.pop %v8607
    %v8609 = vmul.f32 %v8607, %v8608
    %v8610 = vsub.f32 1.0, %v8609
    %v8611 = vmul.f32 %v8608, %v8610
    %v8612 = vadd.f32 %v8608, %v8611
    %vm8613 = vweird.f32 %v8607
    %vm8614 = vweird.f32 %v8608
    %vm8615 = vmor %vm8613, %vm8614
    %v8616 = vsel %vm8615, %v8608, %v8612
    %v8617 = vand.u32 2147483647, %v8607
    %vm8618 = vcmp.eq.f32.partialorder %v8617, 8.507059e+37
    %v8619 = vand.u32 %v8607, 2147483648
    %v8620 = vor.u32 1.1754944e-38, %v8619
    %v8621 = vsel %vm8618, %v8620, %v8616
    %v8622 = vmul.f32 %v8594, %v8621
    %v8624 = vsel %vm6322, %v8622, 0
    %8626 = vmatpush.msra.mxu0 0.0
    %8627 = vmatpush.msra.mxu0 0.0
    %8628 = vmatpush.msra.mxu0 0.0
    %8629 = vmatpush.msra.mxu0 0.0
    %8630 = vmatpush.msra.mxu0 0.0
    %8631 = vmatpush.msra.mxu0 0.0
    %8632 = vmatpush.msra.mxu0 0.0
    %8633 = vmatpush.msra.mxu0 0.0
    %8634 = vmatpush.msra.mxu0 0.0
    %8635 = vmatpush.msra.mxu0 0.0
    %8636 = vmatpush.msra.mxu0 0.0
    %8637 = vmatpush.msra.mxu0 0.0
    %8638 = vmatpush.msra.mxu0 0.0
    %8639 = vmatpush.msra.mxu0 0.0
    %8640 = vmatpush.msra.mxu0 %v6328
    %8641 = vmatpush.msra.mxu0 %v6150
    %8642 = vmatmul.f32.gmra.mxu0 %v8624
    %v8643 = vpop.f32.mrf.mxu0
    %v8644 = vadd.f32 0.0, %v8643
    %8645 = vdwg.mxu0
    %8646 = vmatpush.msra.mxu0 0.0
    %8647 = vmatpush.msra.mxu0 0.0
    %8648 = vmatpush.msra.mxu0 0.0
    %8649 = vmatpush.msra.mxu0 0.0
    %8650 = vmatpush.msra.mxu0 0.0
    %8651 = vmatpush.msra.mxu0 0.0
    %8652 = vmatpush.msra.mxu0 0.0
    %8653 = vmatpush.msra.mxu0 0.0
    %8654 = vmatpush.msra.mxu0 0.0
    %8655 = vmatpush.msra.mxu0 0.0
    %8656 = vmatpush.msra.mxu0 0.0
    %8657 = vmatpush.msra.mxu0 0.0
    %8658 = vmatpush.msra.mxu0 0.0
    %8659 = vmatpush.msra.mxu0 0.0
    %8660 = vmatpush.msra.mxu0 %v6331
    %8661 = vmatpush.msra.mxu0 %v6151
    %8662 = vmatmul.f32.gmra.mxu0 %v8624
    %v8663 = vpop.f32.mrf.mxu0
    %v8664 = vadd.f32 0.0, %v8663
    %8665 = vdwg.mxu0
    %v8666 = vmul.f32 %v8512, %v8644
    %v8667 = vmul.f32 %v8532, %v8664
    %v8670 = vrot.slane %v8667, 6
    %v8671 = vsel %vm6326, %v8666, %v8670
    %vm8673 = vcmask 257026
    %vm8674 = vmor %vm8673, %vm6326
    %8675 = vst.msk [vmem:[%s11] sm:$0xf] %vm8674, %v8671
    %v8676 = vmul.f32 %v8666, %v8666
    %v8677 = vmul.f32 %v8667, %v8667
    %v8679 = vsel %vm1354, %v8677, 0
    %8681 = vmatpush.msra.mxu0 %v6169
    %8682 = vmatpush.msra.mxu0 %v6168
    %8683 = vmatpush.msra.mxu0 %v6167
    %8684 = vmatpush.msra.mxu0 %v6166
    %8685 = vmatpush.msra.mxu0 %v6165
    %8686 = vmatpush.msra.mxu0 %v6164
    %8687 = vmatpush.msra.mxu0 %v6163
    %8688 = vmatpush.msra.mxu0 %v6162
    %8689 = vmatpush.msra.mxu0 %v6161
    %8690 = vmatpush.msra.mxu0 %v6160
    %8691 = vmatpush.msra.mxu0 %v6159
    %8692 = vmatpush.msra.mxu0 %v6158
    %8693 = vmatpush.msra.mxu0 %v6157
    %8694 = vmatpush.msra.mxu0 %v6156
    %8695 = vmatpush.msra.mxu0 %v6155
    %8696 = vmatpush.msra.mxu0 %v6154
    %8697 = vmatmul.f32.gmra.mxu0 %v8676
    %v8698 = vpop.f32.mrf.mxu0
    %v8699 = vadd.f32 1e-08, %v8698
    %8700 = vdwg.mxu0
    %8701 = vmatpush.msra.mxu0 0.0
    %8702 = vmatpush.msra.mxu0 0.0
    %8703 = vmatpush.msra.mxu0 0.0
    %8704 = vmatpush.msra.mxu0 0.0
    %8705 = vmatpush.msra.mxu0 0.0
    %8706 = vmatpush.msra.mxu0 0.0
    %8707 = vmatpush.msra.mxu0 0.0
    %8708 = vmatpush.msra.mxu0 0.0
    %8709 = vmatpush.msra.mxu0 0.0
    %8710 = vmatpush.msra.mxu0 0.0
    %8711 = vmatpush.msra.mxu0 0.0
    %8712 = vmatpush.msra.mxu0 0.0
    %8713 = vmatpush.msra.mxu0 %v6173
    %8714 = vmatpush.msra.mxu0 %v6172
    %8715 = vmatpush.msra.mxu0 %v6171
    %8716 = vmatpush.msra.mxu0 %v6170
    %8717 = vmatmul.f32.gmra.mxu0 %v8679
    %v8718 = vpop.f32.mrf.mxu0
    %v8719 = vadd.f32 %v8699, %v8718
    %8720 = vdwg.mxu0
    %v8721 = vrsqrt.pop %v8719
    %v8722 = vmul.f32 %v8721, %v8719
    %v8723 = vmul.f32 %v8722, %v8721
    %v8724 = vmul.f32 0.5, %v8723
    %v8725 = vsub.f32 1.5, %v8724
    %v8726 = vmul.f32 %v8721, %v8725
    %v8727 = vmul.f32 %v8719, %v8726
    %vm8728 = vcmp.eq.f32.partialorder %v8719, inf
    %v8729 = vsel %vm8728, %v8719, %v8727
    %vm8730 = vcmp.eq.f32.partialorder %v8719, 0.0
    %v8731 = vand.u32 %v8719, 2147483648
    %v8732 = vsel %vm8730, %v8731, %v8729
    %vm8733 = vcmask 74752
    %8734 = vst.msk [vmem:[#allocation2] sm:$0x3] %vm8733, %v8732
    %8735 = vst.msk [vmem:[%s13] sm:$0xff] %vm6322, %v8058
    %8736 = vst.msk [vmem:[%s13 + $0x8] sm:$0xff] %vm6322, %v8073
    %8737 = vst.msk [vmem:[%s13 + $0x10] sm:$0xff] %vm6322, %v8088
    %8738 = vst.msk [vmem:[%s13 + $0x18] sm:$0xff] %vm6322, %v8103
    %8739 = vst.msk [vmem:[%s13 + $0x20] sm:$0xff] %vm6322, %v8118
    %8740 = vst.msk [vmem:[%s13 + $0x28] sm:$0xff] %vm6322, %v8133
    %8741 = vst.msk [vmem:[%s13 + $0x30] sm:$0xff] %vm6322, %v8148
    %8742 = vst.msk [vmem:[%s13 + $0x38] sm:$0xff] %vm6322, %v8163
    %8743 = vst.msk [vmem:[%s13 + $0x40] sm:$0xff] %vm6322, %v8178
    %8744 = vst.msk [vmem:[%s13 + $0x48] sm:$0xff] %vm6322, %v8193
    %8745 = vst.msk [vmem:[%s13 + $0x50] sm:$0xff] %vm6322, %v8208
    %8746 = vst.msk [vmem:[%s13 + $0x58] sm:$0xff] %vm6322, %v8223
    %8747 = vst.msk [vmem:[%s13 + $0x60] sm:$0xff] %vm6322, %v8238
    %8748 = vst.msk [vmem:[%s13 + $0x68] sm:$0xff] %vm6322, %v8253
    %8749 = vst.msk [vmem:[%s13 + $0x70] sm:$0xff] %vm6322, %v8268
    %8750 = vst.msk [vmem:[%s13 + $0x78] sm:$0xff] %vm6322, %v8283
    // Predicated region
    $region46: #{vector_caps_net_forward.1} parent=1 // pred_check
      _
    $region47: #{vector_caps_net_forward.1} parent=1 // pred_check_branch
      %8752 = sbr.rel (0) target = $region49
    $region48: #{vector_caps_net_forward.1} parent=1 // pred_region
      _
    $region49: #{vector_caps_net_forward.1} parent=1 // pred_fallthru
      _
    // Predicated region
    $region50: #{vector_caps_net_forward.1} parent=1 // pred_check
      _
    $region51: #{vector_caps_net_forward.1} parent=1 // pred_check_branch
      %8754 = sbr.rel (0) target = $region53
    $region52: #{vector_caps_net_forward.1} parent=1 // pred_region
      %8756 = vsyncadd [#allocation3], 0
      %s8758 = sshll.u32 [#allocation2], 4
      %s8759 = int_to_ptr.vmem [resolvable:$true] %s8758
      %s8760 = sshll.u32 %s12, 4
      %s8761 = int_to_ptr.hbm [resolvable:$true] %s8760
      %8763 = dma.vmem_to_hbm [thread:$0]  %s8759, 32, %s8761, [#allocation3]
    $region53: #{vector_caps_net_forward.1} parent=1 // pred_fallthru
      _
    // Predicated region
    $region54: #{vector_caps_net_forward.1} parent=1 // pred_check
      _
    $region55: #{vector_caps_net_forward.1} parent=1 // pred_check_branch
      %8765 = sbr.rel (0) target = $region57
    $region56: #{vector_caps_net_forward.1} parent=1 // pred_region
      _
    $region57: #{vector_caps_net_forward.1} parent=1 // pred_fallthru
      _
    // Predicated region
    $region58: #{vector_caps_net_forward.1} parent=1 // pred_check
      _
    $region59: #{vector_caps_net_forward.1} parent=1 // pred_check_branch
      %8767 = sbr.rel (0) target = $region61
    $region60: #{vector_caps_net_forward.1} parent=1 // pred_region
      _
    $region61: #{vector_caps_net_forward.1} parent=1 // pred_fallthru
      _
    // Predicated region
    $region62: #{vector_caps_net_forward.1} parent=1 // pred_check
      _
    $region63: #{vector_caps_net_forward.1} parent=1 // pred_check_branch
      %8769 = sbr.rel (0) target = $region65
    $region64: #{vector_caps_net_forward.1} parent=1 // pred_region
      _
    $region65: #{vector_caps_net_forward.1} parent=1 // pred_fallthru
      _
    // Predicated region
    $region66: #{vector_caps_net_forward.1} parent=1 // pred_check
      _
    $region67: #{vector_caps_net_forward.1} parent=1 // pred_check_branch
      %8771 = sbr.rel (0) target = $region69
    $region68: #{vector_caps_net_forward.1} parent=1 // pred_region
      %8773 = dma.done [#allocation3], 32
    $region69: #{vector_caps_net_forward.1} parent=1 // pred_fallthru
      _
    // Predicated region
    $region70: #{vector_caps_net_forward.1} parent=1 // pred_check
      _
    $region71: #{vector_caps_net_forward.1} parent=1 // pred_check_branch
      %8775 = sbr.rel (0) target = $region73
    $region72: #{vector_caps_net_forward.1} parent=1 // pred_region
      _
    $region73: #{vector_caps_net_forward.1} parent=1 // pred_fallthru
      _
    // Predicated region
    $region74: #{vector_caps_net_forward.1} parent=1 // pred_check
      _
    $region75: #{vector_caps_net_forward.1} parent=1 // pred_check_branch
      %8777 = sbr.rel (0) target = $region77
    $region76: #{vector_caps_net_forward.1} parent=1 // pred_region
      _
    $region77: #{vector_caps_net_forward.1} parent=1 // pred_fallthru
      _
    %8778 = vsyncpa [#allocation3], 1

</llo_original>
